<compile_context>
chip_gen: v7x
topology: tpu7x:2x2x1
jax: 0.10.0
libtpu: 0.0.40
codegen_flags: <defaults>
</compile_context>

<pallas_src>
import functools

import jax
import jax.numpy as jnp
from jax.experimental import pallas as pl
from jax.experimental.pallas import tpu as pltpu

TM = 512          # token rows per grid step (multiple of 8)
VOCAB = 11
VOCAB_PAD = 128   # padded vocab / padded output lanes


def _vae_kernel(ids_ref, eps_ref, table_ref,
                w1_ref, b1_ref, w2_ref, b2_ref,
                wms_ref, bms_ref,
                w3_ref, b3_ref, w4_ref, b4_ref,
                wp_ref, bp_ref,
                out_ref):
    tm = ids_ref.shape[0]

    # --- Embedding lookup as one-hot matmul on the MXU -----------------------
    ids = ids_ref[...]                                           # (TM, 1) int32
    lane = jax.lax.broadcasted_iota(jnp.int32, (tm, VOCAB_PAD), 1)
    onehot = (lane == ids).astype(jnp.bfloat16)                  # (TM, 128)
    x = jnp.dot(onehot, table_ref[...],
                preferred_element_type=jnp.float32)              # (TM, 512)

    # --- Encoder: Linear(512,256)+ReLU, Linear(256,128)+ReLU ----------------
    h = jnp.dot(x.astype(jnp.bfloat16), w1_ref[...],
                preferred_element_type=jnp.float32) + b1_ref[...]
    h = jnp.maximum(h, 0.0)                                      # (TM, 256)
    f = jnp.dot(h.astype(jnp.bfloat16), w2_ref[...],
                preferred_element_type=jnp.float32) + b2_ref[...]
    f = jnp.maximum(f, 0.0)                                      # (TM, 128)

    # --- Fused mu/sigma heads + reparameterization ---------------------------
    ms = jnp.dot(f.astype(jnp.bfloat16), wms_ref[...],
                 preferred_element_type=jnp.float32) + bms_ref[...]   # (TM, 256)
    mu = ms[:, :128]
    sig = ms[:, 128:]
    std = jnp.exp(0.5 * sig)
    z = mu + std * eps_ref[...]                                  # (TM, 128) f32

    # --- Decoder: Linear(128,256)+ReLU, Linear(256,512)+ReLU ----------------
    d = jnp.dot(z.astype(jnp.bfloat16), w3_ref[...],
                preferred_element_type=jnp.float32) + b3_ref[...]
    d = jnp.maximum(d, 0.0)                                      # (TM, 256)
    d = jnp.dot(d.astype(jnp.bfloat16), w4_ref[...],
                preferred_element_type=jnp.float32) + b4_ref[...]
    d = jnp.maximum(d, 0.0)                                      # (TM, 512)

    # --- Projection to (lane-padded) vocab: unmasked lane-dense store --------
    out_ref[...] = (jnp.dot(d.astype(jnp.bfloat16), wp_ref[...],
                            preferred_element_type=jnp.float32)
                    + bp_ref[...])                               # (TM, 128)


def _resident(shape):
    # Weight / bias block resident across the whole grid (same block index).
    return pl.BlockSpec(shape, lambda i: tuple(0 for _ in shape))


def vae_forward(x_idx, params, eps_key):
    """x_idx: int array of shape (B, 1, 30, 30) (or (1, 30, 30)), values in [0, 11)."""
    if x_idx.ndim > 3:
        bsz = x_idx.shape[0]
    else:
        bsz = 1
    ids = x_idx.reshape(bsz, 900).astype(jnp.int32).reshape(-1, 1)   # (N, 1)
    n_tok = ids.shape[0]

    # eps ~ N(0,1) for the reparameterization trick (torch.randn_like).
    eps = jax.random.normal(eps_key, (n_tok, 128), dtype=jnp.float32)

    # Pad token dim to a multiple of TM (padded rows are sliced off afterwards).
    n_pad = ((n_tok + TM - 1) // TM) * TM
    pad = n_pad - n_tok
    ids_p = jnp.pad(ids, ((0, pad), (0, 0)))
    eps_p = jnp.pad(eps, ((0, pad), (0, 0)))

    grid = (n_pad // TM,)

    in_specs = [
        pl.BlockSpec((TM, 1), lambda i: (i, 0)),        # token ids tile
        pl.BlockSpec((TM, 128), lambda i: (i, 0)),      # eps tile
        _resident((VOCAB_PAD, 512)),                    # padded embedding table
        _resident((512, 256)), _resident((1, 256)),     # encoder L1
        _resident((256, 128)), _resident((1, 128)),     # encoder L2
        _resident((128, 256)), _resident((1, 256)),     # fused mu|sigma
        _resident((128, 256)), _resident((1, 256)),     # decoder L1
        _resident((256, 512)), _resident((1, 512)),     # decoder L2
        _resident((512, VOCAB_PAD)), _resident((1, VOCAB_PAD)),  # padded proj
    ]

    out = pl.pallas_call(
        _vae_kernel,
        out_shape=jax.ShapeDtypeStruct((n_pad, VOCAB_PAD), jnp.float32),
        grid_spec=pltpu.PrefetchScalarGridSpec(
            num_scalar_prefetch=0,
            grid=grid,
            in_specs=in_specs,
            out_specs=pl.BlockSpec((TM, VOCAB_PAD), lambda i: (i, 0)),
        ),
        compiler_params=pltpu.CompilerParams(
            dimension_semantics=("parallel",)),
    )(
        ids_p, eps_p, params["table"],
        params["w1"], params["b1"], params["w2"], params["b2"],
        params["wms"], params["bms"],
        params["w3"], params["b3"], params["w4"], params["b4"],
        params["wp"], params["bp"],
    )

    logits = out[:n_tok, :VOCAB]                         # (B*900, 11)
    logits = logits.reshape(bsz, 30, 30, VOCAB)          # (B, 30, 30, 11)
    return jnp.transpose(logits, (0, 3, 1, 2))           # (B, 11, 30, 30) NCHW


def init_params(key):
    ks = jax.random.split(key, 8)

    def lin(kw, fan_in, fan_out):
        scale = 1.0 / jnp.sqrt(fan_in)
        w = jax.random.uniform(kw, (fan_in, fan_out), jnp.float32, -scale, scale)
        b = jnp.zeros((1, fan_out), jnp.float32)
        return w.astype(jnp.bfloat16), b

    p = {}
    emb = jax.random.normal(ks[0], (VOCAB, 512), jnp.float32)
    p["table"] = (jnp.zeros((VOCAB_PAD, 512), jnp.float32)
                  .at[:VOCAB].set(emb).astype(jnp.bfloat16))

    p["w1"], p["b1"] = lin(ks[1], 512, 256)
    p["w2"], p["b2"] = lin(ks[2], 256, 128)

    wmu, bmu = lin(ks[3], 128, 128)
    wsig, bsig = lin(ks[4], 128, 128)
    p["wms"] = jnp.concatenate([wmu, wsig], axis=1)      # (128, 256) bf16
    p["bms"] = jnp.concatenate([bmu, bsig], axis=1)      # (1, 256) f32

    p["w3"], p["b3"] = lin(ks[5], 128, 256)
    p["w4"], p["b4"] = lin(ks[6], 256, 512)

    wp, bp = lin(ks[7], 512, VOCAB)
    p["wp"] = jnp.zeros((512, VOCAB_PAD), jnp.bfloat16).at[:, :VOCAB].set(wp)
    p["bp"] = jnp.zeros((1, VOCAB_PAD), jnp.float32).at[:, :VOCAB].set(bp)
    return p


if __name__ == "__main__":
    key = jax.random.PRNGKey(0)
    k_param, k_data, k_eps = jax.random.split(key, 3)

    params = init_params(k_param)

    # Input: batch=2, (B, 1, 30, 30) integer "token" grid with values in [0, 11).
    x = jax.random.randint(k_data, (2, 1, 30, 30), 0, 11, dtype=jnp.int32)

    fwd = jax.jit(functools.partial(vae_forward, params=params, eps_key=k_eps))
    out = fwd(x)
    jax.block_until_ready(out)

    assert out.shape == (2, 11, 30, 30), out.shape
    assert out.dtype == jnp.float32
    assert bool(jnp.all(jnp.isfinite(out)))
    print("KERNEL_OK")
</pallas_src>

<mosaic_0001>
module attributes {stable_mosaic.version = 11 : i64} {
  func.func @_vae_kernel(%arg0: i32, %arg1: memref<512x1xi32, #tpu.memory_space<vmem>>, %arg2: memref<512x128xf32, #tpu.memory_space<vmem>>, %arg3: memref<128x512xbf16, #tpu.memory_space<vmem>>, %arg4: memref<512x256xbf16, #tpu.memory_space<vmem>>, %arg5: memref<1x256xf32, #tpu.memory_space<vmem>>, %arg6: memref<256x128xbf16, #tpu.memory_space<vmem>>, %arg7: memref<1x128xf32, #tpu.memory_space<vmem>>, %arg8: memref<128x256xbf16, #tpu.memory_space<vmem>>, %arg9: memref<1x256xf32, #tpu.memory_space<vmem>>, %arg10: memref<128x256xbf16, #tpu.memory_space<vmem>>, %arg11: memref<1x256xf32, #tpu.memory_space<vmem>>, %arg12: memref<256x512xbf16, #tpu.memory_space<vmem>>, %arg13: memref<1x512xf32, #tpu.memory_space<vmem>>, %arg14: memref<512x128xbf16, #tpu.memory_space<vmem>>, %arg15: memref<1x128xf32, #tpu.memory_space<vmem>>, %arg16: memref<512x128xf32, #tpu.memory_space<vmem>>) attributes {dimension_semantics = [#tpu.dimension_semantics<parallel>], iteration_bounds = array<i64: 4>, scalar_prefetch = 0 : i64, scratch_operands = 0 : i64, tpu.core_type = #tpu.core_type<tc>, window_params = [{transform_indices = @transform_0, window_bounds = array<i64: 512, 1>}, {transform_indices = @transform_1, window_bounds = array<i64: 512, 128>}, {pipeline_mode = #tpu.pipeline_mode<synchronous>, transform_indices = @transform_2, window_bounds = array<i64: 128, 512>}, {pipeline_mode = #tpu.pipeline_mode<synchronous>, transform_indices = @transform_3, window_bounds = array<i64: 512, 256>}, {pipeline_mode = #tpu.pipeline_mode<synchronous>, transform_indices = @transform_4, window_bounds = array<i64: 1, 256>}, {pipeline_mode = #tpu.pipeline_mode<synchronous>, transform_indices = @transform_5, window_bounds = array<i64: 256, 128>}, {pipeline_mode = #tpu.pipeline_mode<synchronous>, transform_indices = @transform_6, window_bounds = array<i64: 1, 128>}, {pipeline_mode = #tpu.pipeline_mode<synchronous>, transform_indices = @transform_7, window_bounds = array<i64: 128, 256>}, {pipeline_mode = #tpu.pipeline_mode<synchronous>, transform_indices = @transform_8, window_bounds = array<i64: 1, 256>}, {pipeline_mode = #tpu.pipeline_mode<synchronous>, transform_indices = @transform_9, window_bounds = array<i64: 128, 256>}, {pipeline_mode = #tpu.pipeline_mode<synchronous>, transform_indices = @transform_10, window_bounds = array<i64: 1, 256>}, {pipeline_mode = #tpu.pipeline_mode<synchronous>, transform_indices = @transform_11, window_bounds = array<i64: 256, 512>}, {pipeline_mode = #tpu.pipeline_mode<synchronous>, transform_indices = @transform_12, window_bounds = array<i64: 1, 512>}, {pipeline_mode = #tpu.pipeline_mode<synchronous>, transform_indices = @transform_13, window_bounds = array<i64: 512, 128>}, {pipeline_mode = #tpu.pipeline_mode<synchronous>, transform_indices = @transform_14, window_bounds = array<i64: 1, 128>}, {transform_indices = @transform_15, window_bounds = array<i64: 512, 128>}]} {
    %c0 = arith.constant 0 : index
    %c0_0 = arith.constant 0 : index
    %0 = vector.load %arg1[%c0, %c0_0] : memref<512x1xi32, #tpu.memory_space<vmem>>, vector<512x1xi32>
    %1 = tpu.iota {dimensions = array<i32: 1>} : vector<512x128xi32>
    %2 = vector.broadcast %0 : vector<512x1xi32> to vector<512x128xi32>
    %3 = arith.cmpi eq, %1, %2 : vector<512x128xi32>
    %4 = arith.extui %3 : vector<512x128xi1> to vector<512x128xi32>
    %5 = arith.sitofp %4 : vector<512x128xi32> to vector<512x128xf32>
    %6 = arith.truncf %5 : vector<512x128xf32> to vector<512x128xbf16>
    %c0_1 = arith.constant 0 : index
    %c0_2 = arith.constant 0 : index
    %7 = vector.load %arg3[%c0_1, %c0_2] : memref<128x512xbf16, #tpu.memory_space<vmem>>, vector<128x512xbf16>
    %cst = arith.constant dense<0.000000e+00> : vector<512x512xf32>
    %8 = tpu.matmul %6, %7, %cst {dimension_numbers = #tpu.dot_dimension_numbers<[1], [0], [0], [1], [0, 0, 1, 1], [], []>} : vector<512x128xbf16>, vector<128x512xbf16>, vector<512x512xf32> -> vector<512x512xf32>
    %9 = arith.truncf %8 : vector<512x512xf32> to vector<512x512xbf16>
    %c0_3 = arith.constant 0 : index
    %c0_4 = arith.constant 0 : index
    %10 = vector.load %arg4[%c0_3, %c0_4] : memref<512x256xbf16, #tpu.memory_space<vmem>>, vector<512x256xbf16>
    %cst_5 = arith.constant dense<0.000000e+00> : vector<512x256xf32>
    %11 = tpu.matmul %9, %10, %cst_5 {dimension_numbers = #tpu.dot_dimension_numbers<[1], [0], [0], [1], [0, 0, 1, 1], [], []>} : vector<512x512xbf16>, vector<512x256xbf16>, vector<512x256xf32> -> vector<512x256xf32>
    %c0_6 = arith.constant 0 : index
    %c0_7 = arith.constant 0 : index
    %12 = vector.load %arg5[%c0_6, %c0_7] : memref<1x256xf32, #tpu.memory_space<vmem>>, vector<1x256xf32>
    %13 = vector.broadcast %12 : vector<1x256xf32> to vector<512x256xf32>
    %14 = arith.addf %11, %13 : vector<512x256xf32>
    %cst_8 = arith.constant 0.000000e+00 : f32
    %15 = vector.broadcast %cst_8 : f32 to vector<512x256xf32>
    %16 = arith.maximumf %14, %15 : vector<512x256xf32>
    %17 = arith.truncf %16 : vector<512x256xf32> to vector<512x256xbf16>
    %c0_9 = arith.constant 0 : index
    %c0_10 = arith.constant 0 : index
    %18 = vector.load %arg6[%c0_9, %c0_10] : memref<256x128xbf16, #tpu.memory_space<vmem>>, vector<256x128xbf16>
    %cst_11 = arith.constant dense<0.000000e+00> : vector<512x128xf32>
    %19 = tpu.matmul %17, %18, %cst_11 {dimension_numbers = #tpu.dot_dimension_numbers<[1], [0], [0], [1], [0, 0, 1, 1], [], []>} : vector<512x256xbf16>, vector<256x128xbf16>, vector<512x128xf32> -> vector<512x128xf32>
    %c0_12 = arith.constant 0 : index
    %c0_13 = arith.constant 0 : index
    %20 = vector.load %arg7[%c0_12, %c0_13] : memref<1x128xf32, #tpu.memory_space<vmem>>, vector<1x128xf32>
    %21 = vector.broadcast %20 : vector<1x128xf32> to vector<512x128xf32>
    %22 = arith.addf %19, %21 : vector<512x128xf32>
    %cst_14 = arith.constant 0.000000e+00 : f32
    %23 = vector.broadcast %cst_14 : f32 to vector<512x128xf32>
    %24 = arith.maximumf %22, %23 : vector<512x128xf32>
    %25 = arith.truncf %24 : vector<512x128xf32> to vector<512x128xbf16>
    %c0_15 = arith.constant 0 : index
    %c0_16 = arith.constant 0 : index
    %26 = vector.load %arg8[%c0_15, %c0_16] : memref<128x256xbf16, #tpu.memory_space<vmem>>, vector<128x256xbf16>
    %cst_17 = arith.constant dense<0.000000e+00> : vector<512x256xf32>
    %27 = tpu.matmul %25, %26, %cst_17 {dimension_numbers = #tpu.dot_dimension_numbers<[1], [0], [0], [1], [0, 0, 1, 1], [], []>} : vector<512x128xbf16>, vector<128x256xbf16>, vector<512x256xf32> -> vector<512x256xf32>
    %c0_18 = arith.constant 0 : index
    %c0_19 = arith.constant 0 : index
    %28 = vector.load %arg9[%c0_18, %c0_19] : memref<1x256xf32, #tpu.memory_space<vmem>>, vector<1x256xf32>
    %29 = vector.broadcast %28 : vector<1x256xf32> to vector<512x256xf32>
    %30 = arith.addf %27, %29 : vector<512x256xf32>
    %31 = vector.extract_strided_slice %30 {offsets = [0, 0], sizes = [512, 128], strides = [1, 1]} : vector<512x256xf32> to vector<512x128xf32>
    %32 = vector.extract_strided_slice %30 {offsets = [0, 128], sizes = [512, 128], strides = [1, 1]} : vector<512x256xf32> to vector<512x128xf32>
    %cst_20 = arith.constant 5.000000e-01 : f32
    %33 = vector.broadcast %cst_20 : f32 to vector<512x128xf32>
    %34 = arith.mulf %33, %32 : vector<512x128xf32>
    %35 = math.exp %34 : vector<512x128xf32>
    %c0_21 = arith.constant 0 : index
    %c0_22 = arith.constant 0 : index
    %36 = vector.load %arg2[%c0_21, %c0_22] : memref<512x128xf32, #tpu.memory_space<vmem>>, vector<512x128xf32>
    %37 = arith.mulf %35, %36 : vector<512x128xf32>
    %38 = arith.addf %31, %37 : vector<512x128xf32>
    %39 = arith.truncf %38 : vector<512x128xf32> to vector<512x128xbf16>
    %c0_23 = arith.constant 0 : index
    %c0_24 = arith.constant 0 : index
    %40 = vector.load %arg10[%c0_23, %c0_24] : memref<128x256xbf16, #tpu.memory_space<vmem>>, vector<128x256xbf16>
    %cst_25 = arith.constant dense<0.000000e+00> : vector<512x256xf32>
    %41 = tpu.matmul %39, %40, %cst_25 {dimension_numbers = #tpu.dot_dimension_numbers<[1], [0], [0], [1], [0, 0, 1, 1], [], []>} : vector<512x128xbf16>, vector<128x256xbf16>, vector<512x256xf32> -> vector<512x256xf32>
    %c0_26 = arith.constant 0 : index
    %c0_27 = arith.constant 0 : index
    %42 = vector.load %arg11[%c0_26, %c0_27] : memref<1x256xf32, #tpu.memory_space<vmem>>, vector<1x256xf32>
    %43 = vector.broadcast %42 : vector<1x256xf32> to vector<512x256xf32>
    %44 = arith.addf %41, %43 : vector<512x256xf32>
    %cst_28 = arith.constant 0.000000e+00 : f32
    %45 = vector.broadcast %cst_28 : f32 to vector<512x256xf32>
    %46 = arith.maximumf %44, %45 : vector<512x256xf32>
    %47 = arith.truncf %46 : vector<512x256xf32> to vector<512x256xbf16>
    %c0_29 = arith.constant 0 : index
    %c0_30 = arith.constant 0 : index
    %48 = vector.load %arg12[%c0_29, %c0_30] : memref<256x512xbf16, #tpu.memory_space<vmem>>, vector<256x512xbf16>
    %cst_31 = arith.constant dense<0.000000e+00> : vector<512x512xf32>
    %49 = tpu.matmul %47, %48, %cst_31 {dimension_numbers = #tpu.dot_dimension_numbers<[1], [0], [0], [1], [0, 0, 1, 1], [], []>} : vector<512x256xbf16>, vector<256x512xbf16>, vector<512x512xf32> -> vector<512x512xf32>
    %c0_32 = arith.constant 0 : index
    %c0_33 = arith.constant 0 : index
    %50 = vector.load %arg13[%c0_32, %c0_33] : memref<1x512xf32, #tpu.memory_space<vmem>>, vector<1x512xf32>
    %51 = vector.broadcast %50 : vector<1x512xf32> to vector<512x512xf32>
    %52 = arith.addf %49, %51 : vector<512x512xf32>
    %cst_34 = arith.constant 0.000000e+00 : f32
    %53 = vector.broadcast %cst_34 : f32 to vector<512x512xf32>
    %54 = arith.maximumf %52, %53 : vector<512x512xf32>
    %55 = arith.truncf %54 : vector<512x512xf32> to vector<512x512xbf16>
    %c0_35 = arith.constant 0 : index
    %c0_36 = arith.constant 0 : index
    %56 = vector.load %arg14[%c0_35, %c0_36] : memref<512x128xbf16, #tpu.memory_space<vmem>>, vector<512x128xbf16>
    %cst_37 = arith.constant dense<0.000000e+00> : vector<512x128xf32>
    %57 = tpu.matmul %55, %56, %cst_37 {dimension_numbers = #tpu.dot_dimension_numbers<[1], [0], [0], [1], [0, 0, 1, 1], [], []>} : vector<512x512xbf16>, vector<512x128xbf16>, vector<512x128xf32> -> vector<512x128xf32>
    %c0_38 = arith.constant 0 : index
    %c0_39 = arith.constant 0 : index
    %58 = vector.load %arg15[%c0_38, %c0_39] : memref<1x128xf32, #tpu.memory_space<vmem>>, vector<1x128xf32>
    %59 = vector.broadcast %58 : vector<1x128xf32> to vector<512x128xf32>
    %60 = arith.addf %57, %59 : vector<512x128xf32>
    %c0_40 = arith.constant 0 : index
    %c0_41 = arith.constant 0 : index
    %61 = vector.load %arg16[%c0_40, %c0_41] : memref<512x128xf32, #tpu.memory_space<vmem>>, vector<512x128xf32>
    tpu.vector_store %arg16[%c0_40, %c0_41], %60 {strides = array<i32>} : memref<512x128xf32, #tpu.memory_space<vmem>>, vector<512x128xf32>,
    return
  }
  func.func @transform_0(%arg0: i32) -> (i32, i32) {
    %c0_i32 = arith.constant 0 : i32
    %c0_i32_0 = arith.constant 0 : i32
    return %arg0, %c0_i32 : i32, i32
  }
  func.func @transform_1(%arg0: i32) -> (i32, i32) {
    %c0_i32 = arith.constant 0 : i32
    %c0_i32_0 = arith.constant 0 : i32
    return %arg0, %c0_i32 : i32, i32
  }
  func.func @transform_2(%arg0: i32) -> (i32, i32) {
    %c0_i32 = arith.constant 0 : i32
    %c0_i32_0 = arith.constant 0 : i32
    %c0_i32_1 = arith.constant 0 : i32
    return %c0_i32, %c0_i32_0 : i32, i32
  }
  func.func @transform_3(%arg0: i32) -> (i32, i32) {
    %c0_i32 = arith.constant 0 : i32
    %c0_i32_0 = arith.constant 0 : i32
    %c0_i32_1 = arith.constant 0 : i32
    return %c0_i32, %c0_i32_0 : i32, i32
  }
  func.func @transform_4(%arg0: i32) -> (i32, i32) {
    %c0_i32 = arith.constant 0 : i32
    %c0_i32_0 = arith.constant 0 : i32
    %c0_i32_1 = arith.constant 0 : i32
    return %c0_i32, %c0_i32_0 : i32, i32
  }
  func.func @transform_5(%arg0: i32) -> (i32, i32) {
    %c0_i32 = arith.constant 0 : i32
    %c0_i32_0 = arith.constant 0 : i32
    %c0_i32_1 = arith.constant 0 : i32
    return %c0_i32, %c0_i32_0 : i32, i32
  }
  func.func @transform_6(%arg0: i32) -> (i32, i32) {
    %c0_i32 = arith.constant 0 : i32
    %c0_i32_0 = arith.constant 0 : i32
    %c0_i32_1 = arith.constant 0 : i32
    return %c0_i32, %c0_i32_0 : i32, i32
  }
  func.func @transform_7(%arg0: i32) -> (i32, i32) {
    %c0_i32 = arith.constant 0 : i32
    %c0_i32_0 = arith.constant 0 : i32
    %c0_i32_1 = arith.constant 0 : i32
    return %c0_i32, %c0_i32_0 : i32, i32
  }
  func.func @transform_8(%arg0: i32) -> (i32, i32) {
    %c0_i32 = arith.constant 0 : i32
    %c0_i32_0 = arith.constant 0 : i32
    %c0_i32_1 = arith.constant 0 : i32
    return %c0_i32, %c0_i32_0 : i32, i32
  }
  func.func @transform_9(%arg0: i32) -> (i32, i32) {
    %c0_i32 = arith.constant 0 : i32
    %c0_i32_0 = arith.constant 0 : i32
    %c0_i32_1 = arith.constant 0 : i32
    return %c0_i32, %c0_i32_0 : i32, i32
  }
  func.func @transform_10(%arg0: i32) -> (i32, i32) {
    %c0_i32 = arith.constant 0 : i32
    %c0_i32_0 = arith.constant 0 : i32
    %c0_i32_1 = arith.constant 0 : i32
    return %c0_i32, %c0_i32_0 : i32, i32
  }
  func.func @transform_11(%arg0: i32) -> (i32, i32) {
    %c0_i32 = arith.constant 0 : i32
    %c0_i32_0 = arith.constant 0 : i32
    %c0_i32_1 = arith.constant 0 : i32
    return %c0_i32, %c0_i32_0 : i32, i32
  }
  func.func @transform_12(%arg0: i32) -> (i32, i32) {
    %c0_i32 = arith.constant 0 : i32
    %c0_i32_0 = arith.constant 0 : i32
    %c0_i32_1 = arith.constant 0 : i32
    return %c0_i32, %c0_i32_0 : i32, i32
  }
  func.func @transform_13(%arg0: i32) -> (i32, i32) {
    %c0_i32 = arith.constant 0 : i32
    %c0_i32_0 = arith.constant 0 : i32
    %c0_i32_1 = arith.constant 0 : i32
    return %c0_i32, %c0_i32_0 : i32, i32
  }
  func.func @transform_14(%arg0: i32) -> (i32, i32) {
    %c0_i32 = arith.constant 0 : i32
    %c0_i32_0 = arith.constant 0 : i32
    %c0_i32_1 = arith.constant 0 : i32
    return %c0_i32, %c0_i32_0 : i32, i32
  }
  func.func @transform_15(%arg0: i32) -> (i32, i32) {
    %c0_i32 = arith.constant 0 : i32
    %c0_i32_0 = arith.constant 0 : i32
    return %arg0, %c0_i32 : i32, i32
  }
}

</mosaic_0001>

<llo_original>
// kernel: vae_forward.1
$region0: #{vae_forward.1}
  #allocation0 [shape = 'u32[]', space=smem, size = 0x4, offset = 0x4, fixed_abs, tag = 'smem constant byte address 0x4 - core index']
  #allocation1 [shape = 'u32[144,128]{1,0:T(1,128)}', space=vmem, size = 0x12000, scoped, tag = 'internal scratch']
  %s0 = inlined_call_operand.vmem [shape: s32[2048,1], index: 0, kind: input, shape index: {}]
  %s1 = inlined_call_operand.vmem [shape: f32[2048,128], index: 1, kind: input, shape index: {}]
  %s2 = inlined_call_operand.vmem [shape: bf16[128,512], index: 2, kind: input, shape index: {}]
  %s3 = inlined_call_operand.vmem [shape: bf16[512,256], index: 3, kind: input, shape index: {}]
  %s4 = inlined_call_operand.vmem [shape: f32[1,256], index: 4, kind: input, shape index: {}, may-alias: {4,8,10}]
  %s5 = inlined_call_operand.vmem [shape: bf16[256,128], index: 5, kind: input, shape index: {}]
  %s6 = inlined_call_operand.vmem [shape: f32[1,128], index: 6, kind: input, shape index: {}, may-alias: {6,14}]
  %s7 = inlined_call_operand.vmem [shape: bf16[128,256], index: 7, kind: input, shape index: {}]
  %s8 = inlined_call_operand.vmem [shape: f32[1,256], index: 8, kind: input, shape index: {}, may-alias: {4,8,10}]
  %s9 = inlined_call_operand.vmem [shape: bf16[128,256], index: 9, kind: input, shape index: {}]
  %s10 = inlined_call_operand.vmem [shape: f32[1,256], index: 10, kind: input, shape index: {}, may-alias: {4,8,10}]
  %s11 = inlined_call_operand.vmem [shape: bf16[256,512], index: 11, kind: input, shape index: {}]
  %s12 = inlined_call_operand.vmem [shape: f32[1,512], index: 12, kind: input, shape index: {}]
  %s13 = inlined_call_operand.vmem [shape: bf16[512,128], index: 13, kind: input, shape index: {}]
  %s14 = inlined_call_operand.vmem [shape: f32[1,128], index: 14, kind: input, shape index: {}, may-alias: {6,14}]
  %s15 = inlined_call_operand.vmem [shape: f32[2048,128], index: 15, kind: output, shape index: {}]
  %s16 = sld [smem:[#allocation0]]
  $region93: #{vae_forward.1} parent=0
    _
  %s18 = ssub.s32 1, %s16
  %s19 = scalar_select 0, %s18, %s16
  loop: start=0, step=1, limit=6
  $region2: #{vae_forward.1} parent=0 // loop_pre_header
    _
  $region3: #{vae_forward.1} parent=0 // loop_header
    %s21 = sphi 0, %s25
    %p22 = scmp.ge.s32.totalorder %s21, 6
    %s31 = sphi 0, %s33
    %s34 = sphi 0, %s31
    %s35 = sphi 0, %s34
    %s51 = sphi 0, %s35
    %s57 = sphi 0, %s59
    %s60 = sphi 0, %s57
    %s61 = sphi 0, %s60
    %s77 = sphi 0, %s61
    %s81 = sphi 0, %s81
    %s83 = sphi 0, %s81
    %s84 = sphi 0, %s83
    %s98 = sphi 0, %s84
    %s102 = sphi 0, %s102
    %s104 = sphi 0, %s102
    %s105 = sphi 0, %s104
    %s119 = sphi 0, %s105
    %s123 = sphi 0, %s123
    %s125 = sphi 0, %s123
    %s126 = sphi 0, %s125
    %s140 = sphi 0, %s126
    %s144 = sphi 0, %s144
    %s146 = sphi 0, %s144
    %s147 = sphi 0, %s146
    %s161 = sphi 0, %s147
    %s165 = sphi 0, %s165
    %s167 = sphi 0, %s165
    %s168 = sphi 0, %s167
    %s182 = sphi 0, %s168
    %s186 = sphi 0, %s186
    %s188 = sphi 0, %s186
    %s189 = sphi 0, %s188
    %s203 = sphi 0, %s189
    %s207 = sphi 0, %s207
    %s209 = sphi 0, %s207
    %s210 = sphi 0, %s209
    %s224 = sphi 0, %s210
    %s228 = sphi 0, %s228
    %s230 = sphi 0, %s228
    %s231 = sphi 0, %s230
    %s245 = sphi 0, %s231
    %s249 = sphi 0, %s249
    %s251 = sphi 0, %s249
    %s252 = sphi 0, %s251
    %s266 = sphi 0, %s252
    %s270 = sphi 0, %s270
    %s272 = sphi 0, %s270
    %s273 = sphi 0, %s272
    %s287 = sphi 0, %s273
    %s291 = sphi 0, %s291
    %s293 = sphi 0, %s291
    %s294 = sphi 0, %s293
    %s308 = sphi 0, %s294
    %s312 = sphi 0, %s312
    %s314 = sphi 0, %s312
    %s315 = sphi 0, %s314
    %s329 = sphi 0, %s315
    %s333 = sphi 0, %s333
    %s335 = sphi 0, %s333
    %s336 = sphi 0, %s335
    %s350 = sphi 0, %s336
    %s356 = sphi 0, %s358
    %s359 = sphi 0, %s356
    %s360 = sphi 0, %s359
    %s376 = sphi 0, %s360
  $region4: #{vae_forward.1} parent=0 // loop_header_branch
    %24 = sbr.rel (%p22) target = $region8
  $region5: #{vae_forward.1} parent=0 // loop_body
    %s26 = ssub.s32 %s21, 1
    %s27 = ssub.s32 %s21, 2
    %s28 = sadd.s32 %s21, 1
    %s29 = ssub.s32 %s21, %s28
    %p30 = scmp.eq.s32.totalorder %s29, 0
    %s32 = sadd.s32 %s31, 1
    %s33 = scalar_select %p30, %s31, %s32
    %p36 = pneg %p30
    %p37 = scmp.eq.s32.totalorder %s21, 3
    %p38 = por %p36, %p37
    %p39 = scmp.ne.s32.totalorder %s31, %s34
    %p40 = scmp.eq.s32.totalorder %s21, 0
    %p41 = por %p39, %p40
    %p42 = scmp.ne.s32.totalorder %s31, %s34
    %p43 = scmp.eq.s32.totalorder %s26, 3
    %p44 = por %p42, %p43
    %p45 = scmp.ne.s32.totalorder %s34, %s35
    %p46 = scmp.eq.s32.totalorder %s26, 0
    %p47 = por %p45, %p46
    %p48 = scmp.ne.s32.totalorder %s34, %s35
    %p49 = scmp.eq.s32.totalorder %s27, 3
    %p50 = por %p48, %p49
    %p52 = scmp.ne.s32.totalorder %s35, %s51
    %p53 = scmp.eq.s32.totalorder %s27, 0
    %p54 = por %p52, %p53
    %s55 = ssub.s32 %s21, %s28
    %p56 = scmp.eq.s32.totalorder %s55, 0
    %s58 = sadd.s32 %s57, 1
    %s59 = scalar_select %p56, %s57, %s58
    %p62 = pneg %p56
    %p63 = scmp.eq.s32.totalorder %s21, 3
    %p64 = por %p62, %p63
    %p65 = scmp.ne.s32.totalorder %s57, %s60
    %p66 = scmp.eq.s32.totalorder %s21, 0
    %p67 = por %p65, %p66
    %p68 = scmp.ne.s32.totalorder %s57, %s60
    %p69 = scmp.eq.s32.totalorder %s26, 3
    %p70 = por %p68, %p69
    %p71 = scmp.ne.s32.totalorder %s60, %s61
    %p72 = scmp.eq.s32.totalorder %s26, 0
    %p73 = por %p71, %p72
    %p74 = scmp.ne.s32.totalorder %s60, %s61
    %p75 = scmp.eq.s32.totalorder %s27, 3
    %p76 = por %p74, %p75
    %p78 = scmp.ne.s32.totalorder %s61, %s77
    %p79 = scmp.eq.s32.totalorder %s27, 0
    %p80 = por %p78, %p79
    %s82 = sadd.s32 %s81, 1
    %p85 = scmp.eq.s32.totalorder %s21, 3
    %p86 = scmp.ne.s32.totalorder %s81, %s83
    %p87 = scmp.eq.s32.totalorder %s21, 0
    %p88 = por %p86, %p87
    %p89 = scmp.ne.s32.totalorder %s81, %s83
    %p90 = scmp.eq.s32.totalorder %s26, 3
    %p91 = por %p89, %p90
    %p92 = scmp.ne.s32.totalorder %s83, %s84
    %p93 = scmp.eq.s32.totalorder %s26, 0
    %p94 = por %p92, %p93
    %p95 = scmp.ne.s32.totalorder %s83, %s84
    %p96 = scmp.eq.s32.totalorder %s27, 3
    %p97 = por %p95, %p96
    %p99 = scmp.ne.s32.totalorder %s84, %s98
    %p100 = scmp.eq.s32.totalorder %s27, 0
    %p101 = por %p99, %p100
    %s103 = sadd.s32 %s102, 1
    %p106 = scmp.eq.s32.totalorder %s21, 3
    %p107 = scmp.ne.s32.totalorder %s102, %s104
    %p108 = scmp.eq.s32.totalorder %s21, 0
    %p109 = por %p107, %p108
    %p110 = scmp.ne.s32.totalorder %s102, %s104
    %p111 = scmp.eq.s32.totalorder %s26, 3
    %p112 = por %p110, %p111
    %p113 = scmp.ne.s32.totalorder %s104, %s105
    %p114 = scmp.eq.s32.totalorder %s26, 0
    %p115 = por %p113, %p114
    %p116 = scmp.ne.s32.totalorder %s104, %s105
    %p117 = scmp.eq.s32.totalorder %s27, 3
    %p118 = por %p116, %p117
    %p120 = scmp.ne.s32.totalorder %s105, %s119
    %p121 = scmp.eq.s32.totalorder %s27, 0
    %p122 = por %p120, %p121
    %s124 = sadd.s32 %s123, 1
    %p127 = scmp.eq.s32.totalorder %s21, 3
    %p128 = scmp.ne.s32.totalorder %s123, %s125
    %p129 = scmp.eq.s32.totalorder %s21, 0
    %p130 = por %p128, %p129
    %p131 = scmp.ne.s32.totalorder %s123, %s125
    %p132 = scmp.eq.s32.totalorder %s26, 3
    %p133 = por %p131, %p132
    %p134 = scmp.ne.s32.totalorder %s125, %s126
    %p135 = scmp.eq.s32.totalorder %s26, 0
    %p136 = por %p134, %p135
    %p137 = scmp.ne.s32.totalorder %s125, %s126
    %p138 = scmp.eq.s32.totalorder %s27, 3
    %p139 = por %p137, %p138
    %p141 = scmp.ne.s32.totalorder %s126, %s140
    %p142 = scmp.eq.s32.totalorder %s27, 0
    %p143 = por %p141, %p142
    %s145 = sadd.s32 %s144, 1
    %p148 = scmp.eq.s32.totalorder %s21, 3
    %p149 = scmp.ne.s32.totalorder %s144, %s146
    %p150 = scmp.eq.s32.totalorder %s21, 0
    %p151 = por %p149, %p150
    %p152 = scmp.ne.s32.totalorder %s144, %s146
    %p153 = scmp.eq.s32.totalorder %s26, 3
    %p154 = por %p152, %p153
    %p155 = scmp.ne.s32.totalorder %s146, %s147
    %p156 = scmp.eq.s32.totalorder %s26, 0
    %p157 = por %p155, %p156
    %p158 = scmp.ne.s32.totalorder %s146, %s147
    %p159 = scmp.eq.s32.totalorder %s27, 3
    %p160 = por %p158, %p159
    %p162 = scmp.ne.s32.totalorder %s147, %s161
    %p163 = scmp.eq.s32.totalorder %s27, 0
    %p164 = por %p162, %p163
    %s166 = sadd.s32 %s165, 1
    %p169 = scmp.eq.s32.totalorder %s21, 3
    %p170 = scmp.ne.s32.totalorder %s165, %s167
    %p171 = scmp.eq.s32.totalorder %s21, 0
    %p172 = por %p170, %p171
    %p173 = scmp.ne.s32.totalorder %s165, %s167
    %p174 = scmp.eq.s32.totalorder %s26, 3
    %p175 = por %p173, %p174
    %p176 = scmp.ne.s32.totalorder %s167, %s168
    %p177 = scmp.eq.s32.totalorder %s26, 0
    %p178 = por %p176, %p177
    %p179 = scmp.ne.s32.totalorder %s167, %s168
    %p180 = scmp.eq.s32.totalorder %s27, 3
    %p181 = por %p179, %p180
    %p183 = scmp.ne.s32.totalorder %s168, %s182
    %p184 = scmp.eq.s32.totalorder %s27, 0
    %p185 = por %p183, %p184
    %s187 = sadd.s32 %s186, 1
    %p190 = scmp.eq.s32.totalorder %s21, 3
    %p191 = scmp.ne.s32.totalorder %s186, %s188
    %p192 = scmp.eq.s32.totalorder %s21, 0
    %p193 = por %p191, %p192
    %p194 = scmp.ne.s32.totalorder %s186, %s188
    %p195 = scmp.eq.s32.totalorder %s26, 3
    %p196 = por %p194, %p195
    %p197 = scmp.ne.s32.totalorder %s188, %s189
    %p198 = scmp.eq.s32.totalorder %s26, 0
    %p199 = por %p197, %p198
    %p200 = scmp.ne.s32.totalorder %s188, %s189
    %p201 = scmp.eq.s32.totalorder %s27, 3
    %p202 = por %p200, %p201
    %p204 = scmp.ne.s32.totalorder %s189, %s203
    %p205 = scmp.eq.s32.totalorder %s27, 0
    %p206 = por %p204, %p205
    %s208 = sadd.s32 %s207, 1
    %p211 = scmp.eq.s32.totalorder %s21, 3
    %p212 = scmp.ne.s32.totalorder %s207, %s209
    %p213 = scmp.eq.s32.totalorder %s21, 0
    %p214 = por %p212, %p213
    %p215 = scmp.ne.s32.totalorder %s207, %s209
    %p216 = scmp.eq.s32.totalorder %s26, 3
    %p217 = por %p215, %p216
    %p218 = scmp.ne.s32.totalorder %s209, %s210
    %p219 = scmp.eq.s32.totalorder %s26, 0
    %p220 = por %p218, %p219
    %p221 = scmp.ne.s32.totalorder %s209, %s210
    %p222 = scmp.eq.s32.totalorder %s27, 3
    %p223 = por %p221, %p222
    %p225 = scmp.ne.s32.totalorder %s210, %s224
    %p226 = scmp.eq.s32.totalorder %s27, 0
    %p227 = por %p225, %p226
    %s229 = sadd.s32 %s228, 1
    %p232 = scmp.eq.s32.totalorder %s21, 3
    %p233 = scmp.ne.s32.totalorder %s228, %s230
    %p234 = scmp.eq.s32.totalorder %s21, 0
    %p235 = por %p233, %p234
    %p236 = scmp.ne.s32.totalorder %s228, %s230
    %p237 = scmp.eq.s32.totalorder %s26, 3
    %p238 = por %p236, %p237
    %p239 = scmp.ne.s32.totalorder %s230, %s231
    %p240 = scmp.eq.s32.totalorder %s26, 0
    %p241 = por %p239, %p240
    %p242 = scmp.ne.s32.totalorder %s230, %s231
    %p243 = scmp.eq.s32.totalorder %s27, 3
    %p244 = por %p242, %p243
    %p246 = scmp.ne.s32.totalorder %s231, %s245
    %p247 = scmp.eq.s32.totalorder %s27, 0
    %p248 = por %p246, %p247
    %s250 = sadd.s32 %s249, 1
    %p253 = scmp.eq.s32.totalorder %s21, 3
    %p254 = scmp.ne.s32.totalorder %s249, %s251
    %p255 = scmp.eq.s32.totalorder %s21, 0
    %p256 = por %p254, %p255
    %p257 = scmp.ne.s32.totalorder %s249, %s251
    %p258 = scmp.eq.s32.totalorder %s26, 3
    %p259 = por %p257, %p258
    %p260 = scmp.ne.s32.totalorder %s251, %s252
    %p261 = scmp.eq.s32.totalorder %s26, 0
    %p262 = por %p260, %p261
    %p263 = scmp.ne.s32.totalorder %s251, %s252
    %p264 = scmp.eq.s32.totalorder %s27, 3
    %p265 = por %p263, %p264
    %p267 = scmp.ne.s32.totalorder %s252, %s266
    %p268 = scmp.eq.s32.totalorder %s27, 0
    %p269 = por %p267, %p268
    %s271 = sadd.s32 %s270, 1
    %p274 = scmp.eq.s32.totalorder %s21, 3
    %p275 = scmp.ne.s32.totalorder %s270, %s272
    %p276 = scmp.eq.s32.totalorder %s21, 0
    %p277 = por %p275, %p276
    %p278 = scmp.ne.s32.totalorder %s270, %s272
    %p279 = scmp.eq.s32.totalorder %s26, 3
    %p280 = por %p278, %p279
    %p281 = scmp.ne.s32.totalorder %s272, %s273
    %p282 = scmp.eq.s32.totalorder %s26, 0
    %p283 = por %p281, %p282
    %p284 = scmp.ne.s32.totalorder %s272, %s273
    %p285 = scmp.eq.s32.totalorder %s27, 3
    %p286 = por %p284, %p285
    %p288 = scmp.ne.s32.totalorder %s273, %s287
    %p289 = scmp.eq.s32.totalorder %s27, 0
    %p290 = por %p288, %p289
    %s292 = sadd.s32 %s291, 1
    %p295 = scmp.eq.s32.totalorder %s21, 3
    %p296 = scmp.ne.s32.totalorder %s291, %s293
    %p297 = scmp.eq.s32.totalorder %s21, 0
    %p298 = por %p296, %p297
    %p299 = scmp.ne.s32.totalorder %s291, %s293
    %p300 = scmp.eq.s32.totalorder %s26, 3
    %p301 = por %p299, %p300
    %p302 = scmp.ne.s32.totalorder %s293, %s294
    %p303 = scmp.eq.s32.totalorder %s26, 0
    %p304 = por %p302, %p303
    %p305 = scmp.ne.s32.totalorder %s293, %s294
    %p306 = scmp.eq.s32.totalorder %s27, 3
    %p307 = por %p305, %p306
    %p309 = scmp.ne.s32.totalorder %s294, %s308
    %p310 = scmp.eq.s32.totalorder %s27, 0
    %p311 = por %p309, %p310
    %s313 = sadd.s32 %s312, 1
    %p316 = scmp.eq.s32.totalorder %s21, 3
    %p317 = scmp.ne.s32.totalorder %s312, %s314
    %p318 = scmp.eq.s32.totalorder %s21, 0
    %p319 = por %p317, %p318
    %p320 = scmp.ne.s32.totalorder %s312, %s314
    %p321 = scmp.eq.s32.totalorder %s26, 3
    %p322 = por %p320, %p321
    %p323 = scmp.ne.s32.totalorder %s314, %s315
    %p324 = scmp.eq.s32.totalorder %s26, 0
    %p325 = por %p323, %p324
    %p326 = scmp.ne.s32.totalorder %s314, %s315
    %p327 = scmp.eq.s32.totalorder %s27, 3
    %p328 = por %p326, %p327
    %p330 = scmp.ne.s32.totalorder %s315, %s329
    %p331 = scmp.eq.s32.totalorder %s27, 0
    %p332 = por %p330, %p331
    %s334 = sadd.s32 %s333, 1
    %p337 = scmp.eq.s32.totalorder %s21, 3
    %p338 = scmp.ne.s32.totalorder %s333, %s335
    %p339 = scmp.eq.s32.totalorder %s21, 0
    %p340 = por %p338, %p339
    %p341 = scmp.ne.s32.totalorder %s333, %s335
    %p342 = scmp.eq.s32.totalorder %s26, 3
    %p343 = por %p341, %p342
    %p344 = scmp.ne.s32.totalorder %s335, %s336
    %p345 = scmp.eq.s32.totalorder %s26, 0
    %p346 = por %p344, %p345
    %p347 = scmp.ne.s32.totalorder %s335, %s336
    %p348 = scmp.eq.s32.totalorder %s27, 3
    %p349 = por %p347, %p348
    %p351 = scmp.ne.s32.totalorder %s336, %s350
    %p352 = scmp.eq.s32.totalorder %s27, 0
    %p353 = por %p351, %p352
    %s354 = ssub.s32 %s21, %s28
    %p355 = scmp.eq.s32.totalorder %s354, 0
    %s357 = sadd.s32 %s356, 1
    %s358 = scalar_select %p355, %s356, %s357
    %p361 = pneg %p355
    %p362 = scmp.eq.s32.totalorder %s21, 3
    %p363 = por %p361, %p362
    %p364 = scmp.ne.s32.totalorder %s356, %s359
    %p365 = scmp.eq.s32.totalorder %s21, 0
    %p366 = por %p364, %p365
    %p367 = scmp.ne.s32.totalorder %s356, %s359
    %p368 = scmp.eq.s32.totalorder %s26, 3
    %p369 = por %p367, %p368
    %p370 = scmp.ne.s32.totalorder %s359, %s360
    %p371 = scmp.eq.s32.totalorder %s26, 0
    %p372 = por %p370, %p371
    %p373 = scmp.ne.s32.totalorder %s359, %s360
    %p374 = scmp.eq.s32.totalorder %s27, 3
    %p375 = por %p373, %p374
    %p377 = scmp.ne.s32.totalorder %s360, %s376
    %p378 = scmp.eq.s32.totalorder %s27, 0
    %p379 = por %p377, %p378
    %p380 = scmp.le.s32.totalorder 1, %s21
    %p381 = scmp.lt.s32.totalorder %s21, 5
    %p382 = pnand %p380, %p381
    %p383 = pneg %p382
    // Predicated region
    $region9: #{vae_forward.1} parent=5 // pred_check
      _
    $region10: #{vae_forward.1} parent=5 // pred_check_branch
      %385 = sbr.rel (%p382) target = $region12
    $region11: #{vae_forward.1} parent=5 // pred_region
      %s386 = ssub.s32 %s21, 1
      // Predicated region
      $region13: #{vae_forward.1} parent=11 // pred_check
        %p387 = pneg %p94
      $region14: #{vae_forward.1} parent=11 // pred_check_branch
        %389 = sbr.rel (%p387) target = $region16
      $region15: #{vae_forward.1} parent=11 // pred_region
        _
      $region16: #{vae_forward.1} parent=11 // pred_fallthru
        _
      // Predicated region
      $region17: #{vae_forward.1} parent=11 // pred_check
        %p390 = pneg %p115
      $region18: #{vae_forward.1} parent=11 // pred_check_branch
        %392 = sbr.rel (%p390) target = $region20
      $region19: #{vae_forward.1} parent=11 // pred_region
        _
      $region20: #{vae_forward.1} parent=11 // pred_fallthru
        _
      // Predicated region
      $region21: #{vae_forward.1} parent=11 // pred_check
        %p393 = pneg %p136
      $region22: #{vae_forward.1} parent=11 // pred_check_branch
        %395 = sbr.rel (%p393) target = $region24
      $region23: #{vae_forward.1} parent=11 // pred_region
        _
      $region24: #{vae_forward.1} parent=11 // pred_fallthru
        _
      // Predicated region
      $region25: #{vae_forward.1} parent=11 // pred_check
        %p396 = pneg %p157
      $region26: #{vae_forward.1} parent=11 // pred_check_branch
        %398 = sbr.rel (%p396) target = $region28
      $region27: #{vae_forward.1} parent=11 // pred_region
        _
      $region28: #{vae_forward.1} parent=11 // pred_fallthru
        _
      // Predicated region
      $region29: #{vae_forward.1} parent=11 // pred_check
        %p399 = pneg %p178
      $region30: #{vae_forward.1} parent=11 // pred_check_branch
        %401 = sbr.rel (%p399) target = $region32
      $region31: #{vae_forward.1} parent=11 // pred_region
        _
      $region32: #{vae_forward.1} parent=11 // pred_fallthru
        _
      // Predicated region
      $region33: #{vae_forward.1} parent=11 // pred_check
        %p402 = pneg %p199
      $region34: #{vae_forward.1} parent=11 // pred_check_branch
        %404 = sbr.rel (%p402) target = $region36
      $region35: #{vae_forward.1} parent=11 // pred_region
        _
      $region36: #{vae_forward.1} parent=11 // pred_fallthru
        _
      // Predicated region
      $region37: #{vae_forward.1} parent=11 // pred_check
        %p405 = pneg %p220
      $region38: #{vae_forward.1} parent=11 // pred_check_branch
        %407 = sbr.rel (%p405) target = $region40
      $region39: #{vae_forward.1} parent=11 // pred_region
        _
      $region40: #{vae_forward.1} parent=11 // pred_fallthru
        _
      // Predicated region
      $region41: #{vae_forward.1} parent=11 // pred_check
        %p408 = pneg %p241
      $region42: #{vae_forward.1} parent=11 // pred_check_branch
        %410 = sbr.rel (%p408) target = $region44
      $region43: #{vae_forward.1} parent=11 // pred_region
        _
      $region44: #{vae_forward.1} parent=11 // pred_fallthru
        _
      // Predicated region
      $region45: #{vae_forward.1} parent=11 // pred_check
        %p411 = pneg %p262
      $region46: #{vae_forward.1} parent=11 // pred_check_branch
        %413 = sbr.rel (%p411) target = $region48
      $region47: #{vae_forward.1} parent=11 // pred_region
        _
      $region48: #{vae_forward.1} parent=11 // pred_fallthru
        _
      // Predicated region
      $region49: #{vae_forward.1} parent=11 // pred_check
        %p414 = pneg %p283
      $region50: #{vae_forward.1} parent=11 // pred_check_branch
        %416 = sbr.rel (%p414) target = $region52
      $region51: #{vae_forward.1} parent=11 // pred_region
        _
      $region52: #{vae_forward.1} parent=11 // pred_fallthru
        _
      // Predicated region
      $region53: #{vae_forward.1} parent=11 // pred_check
        %p417 = pneg %p304
      $region54: #{vae_forward.1} parent=11 // pred_check_branch
        %419 = sbr.rel (%p417) target = $region56
      $region55: #{vae_forward.1} parent=11 // pred_region
        _
      $region56: #{vae_forward.1} parent=11 // pred_fallthru
        _
      // Predicated region
      $region57: #{vae_forward.1} parent=11 // pred_check
        %p420 = pneg %p325
      $region58: #{vae_forward.1} parent=11 // pred_check_branch
        %422 = sbr.rel (%p420) target = $region60
      $region59: #{vae_forward.1} parent=11 // pred_region
        _
      $region60: #{vae_forward.1} parent=11 // pred_fallthru
        _
      // Predicated region
      $region61: #{vae_forward.1} parent=11 // pred_check
        %p423 = pneg %p346
      $region62: #{vae_forward.1} parent=11 // pred_check_branch
        %425 = sbr.rel (%p423) target = $region64
      $region63: #{vae_forward.1} parent=11 // pred_region
        _
      $region64: #{vae_forward.1} parent=11 // pred_fallthru
        _
    $region12: #{vae_forward.1} parent=5 // pred_fallthru
      _
    %p426 = scmp.lt.s32.totalorder %s21, 4
    // Predicated region
    $region65: #{vae_forward.1} parent=5 // pred_check
      %p427 = pneg %p426
    $region66: #{vae_forward.1} parent=5 // pred_check_branch
      %429 = sbr.rel (%p427) target = $region68
    $region67: #{vae_forward.1} parent=5 // pred_region
      // Predicated region
      $region69: #{vae_forward.1} parent=67 // pred_check
        %p430 = pneg %p41
      $region70: #{vae_forward.1} parent=67 // pred_check_branch
        %432 = sbr.rel (%p430) target = $region72
      $region71: #{vae_forward.1} parent=67 // pred_region
        %s433 = smul.u32 64, %s21
        %p434 = scmp.lt.s32.totalorder %s433, 255
        %s435 = scalar_select %p434, %s433, 255
        %s436 = smul.addr %s435, 8
        %s437 = scalar_lea.vmem %s0, %s436
        %s438 = smul.u32 64, %s21
      $region72: #{vae_forward.1} parent=67 // pred_fallthru
        _
      // Predicated region
      $region73: #{vae_forward.1} parent=67 // pred_check
        %p439 = pneg %p67
      $region74: #{vae_forward.1} parent=67 // pred_check_branch
        %441 = sbr.rel (%p439) target = $region76
      $region75: #{vae_forward.1} parent=67 // pred_region
        %s442 = smul.u32 64, %s21
        %p443 = scmp.lt.s32.totalorder %s442, 255
        %s444 = scalar_select %p443, %s442, 255
        %s445 = smul.addr %s444, 8
        %s446 = scalar_lea.vmem %s1, %s445
        %s447 = smul.u32 64, %s21
      $region76: #{vae_forward.1} parent=67 // pred_fallthru
        _
    $region68: #{vae_forward.1} parent=5 // pred_fallthru
      _
    %p448 = scmp.le.s32.totalorder 1, %s21
    %p449 = scmp.lt.s32.totalorder %s21, 5
    %p450 = pnand %p448, %p449
    %p451 = pneg %p450
    // Predicated region
    $region77: #{vae_forward.1} parent=5 // pred_check
      _
    $region78: #{vae_forward.1} parent=5 // pred_check_branch
      %453 = sbr.rel (%p450) target = $region80
    $region79: #{vae_forward.1} parent=5 // pred_region
      %s454 = ssub.s32 %s21, 1
      %s455 = smul.u32 64, %s26
      %p456 = scmp.lt.s32.totalorder %s455, 255
      %s457 = scalar_select %p456, %s455, 255
      %s458 = smul.addr %s457, 8
      %s459 = scalar_lea.vmem %s0, %s458
      %p460 = pneg %p47
      %p461 = pneg %p44
      %s462 = smul.u32 64, %s26
      %p463 = scmp.lt.s32.totalorder %s462, 255
      %s464 = scalar_select %p463, %s462, 255
      %s465 = smul.addr %s464, 8
      %s466 = scalar_lea.vmem %s1, %s465
      %p467 = pneg %p73
      %p468 = pneg %p70
      %p469 = pneg %p94
      %p470 = pneg %p91
      %p471 = pneg %p115
      %p472 = pneg %p112
      %p473 = pneg %p136
      %p474 = pneg %p133
      %p475 = pneg %p157
      %p476 = pneg %p154
      %p477 = pneg %p178
      %p478 = pneg %p175
      %p479 = pneg %p199
      %p480 = pneg %p196
      %p481 = pneg %p220
      %p482 = pneg %p217
      %p483 = pneg %p241
      %p484 = pneg %p238
      %p485 = pneg %p262
      %p486 = pneg %p259
      %p487 = pneg %p283
      %p488 = pneg %p280
      %p489 = pneg %p304
      %p490 = pneg %p301
      %p491 = pneg %p325
      %p492 = pneg %p322
      %p493 = pneg %p346
      %p494 = pneg %p343
      %p495 = pneg %p372
      %p496 = pneg %p369
      %s497 = smul.u32 64, %s26
      %p498 = scmp.lt.s32.totalorder %s497, 255
      %s499 = scalar_select %p498, %s497, 255
      %s500 = smul.addr %s499, 8
      %s501 = scalar_lea.vmem %s15, %s500
      %s502 = smul.u32 64, %s26
      %p503 = scmp.lt.s32.totalorder %s502, 255
      %s504 = scalar_select %p503, %s502, 255
      %s505 = smul.addr %s504, 8
      %s506 = scalar_lea.vmem %s0, %s505
      %s507 = smul.u32 64, %s26
      %s508 = smul.u32 64, %s26
      %p509 = scmp.lt.s32.totalorder %s508, 255
      %s510 = scalar_select %p509, %s508, 255
      %s511 = smul.addr %s510, 8
      %s512 = scalar_lea.vmem %s1, %s511
      %s513 = smul.u32 64, %s26
      %s514 = smul.u32 64, %s26
      %p515 = scmp.lt.s32.totalorder %s514, 255
      %s516 = scalar_select %p515, %s514, 255
      %s517 = smul.addr %s516, 8
      %s518 = scalar_lea.vmem %s15, %s517
      %s519 = smul.u32 64, %s26
      %v521 = vld [vmem:[%s506] sm:$0xff]
      %v522 = vld [vmem:[%s506 + $0x8] sm:$0xff]
      %v523 = vld [vmem:[%s506 + $0x10] sm:$0xff]
      %v524 = vld [vmem:[%s506 + $0x18] sm:$0xff]
      %v525 = vld [vmem:[%s506 + $0x20] sm:$0xff]
      %v526 = vld [vmem:[%s506 + $0x28] sm:$0xff]
      %v527 = vld [vmem:[%s506 + $0x30] sm:$0xff]
      %v528 = vld [vmem:[%s506 + $0x38] sm:$0xff]
      %v529 = vld [vmem:[%s506 + $0x40] sm:$0xff]
      %v530 = vld [vmem:[%s506 + $0x48] sm:$0xff]
      %v531 = vld [vmem:[%s506 + $0x50] sm:$0xff]
      %v532 = vld [vmem:[%s506 + $0x58] sm:$0xff]
      %v533 = vld [vmem:[%s506 + $0x60] sm:$0xff]
      %v534 = vld [vmem:[%s506 + $0x68] sm:$0xff]
      %v535 = vld [vmem:[%s506 + $0x70] sm:$0xff]
      %v536 = vld [vmem:[%s506 + $0x78] sm:$0xff]
      %v537 = vld [vmem:[%s506 + $0x80] sm:$0xff]
      %v538 = vld [vmem:[%s506 + $0x88] sm:$0xff]
      %v539 = vld [vmem:[%s506 + $0x90] sm:$0xff]
      %v540 = vld [vmem:[%s506 + $0x98] sm:$0xff]
      %v541 = vld [vmem:[%s506 + $0xa0] sm:$0xff]
      %v542 = vld [vmem:[%s506 + $0xa8] sm:$0xff]
      %v543 = vld [vmem:[%s506 + $0xb0] sm:$0xff]
      %v544 = vld [vmem:[%s506 + $0xb8] sm:$0xff]
      %v545 = vld [vmem:[%s506 + $0xc0] sm:$0xff]
      %v546 = vld [vmem:[%s506 + $0xc8] sm:$0xff]
      %v547 = vld [vmem:[%s506 + $0xd0] sm:$0xff]
      %v548 = vld [vmem:[%s506 + $0xd8] sm:$0xff]
      %v549 = vld [vmem:[%s506 + $0xe0] sm:$0xff]
      %v550 = vld [vmem:[%s506 + $0xe8] sm:$0xff]
      %v551 = vld [vmem:[%s506 + $0xf0] sm:$0xff]
      %v552 = vld [vmem:[%s506 + $0xf8] sm:$0xff]
      %v553 = vld [vmem:[%s506 + $0x100] sm:$0xff]
      %v554 = vld [vmem:[%s506 + $0x108] sm:$0xff]
      %v555 = vld [vmem:[%s506 + $0x110] sm:$0xff]
      %v556 = vld [vmem:[%s506 + $0x118] sm:$0xff]
      %v557 = vld [vmem:[%s506 + $0x120] sm:$0xff]
      %v558 = vld [vmem:[%s506 + $0x128] sm:$0xff]
      %v559 = vld [vmem:[%s506 + $0x130] sm:$0xff]
      %v560 = vld [vmem:[%s506 + $0x138] sm:$0xff]
      %v561 = vld [vmem:[%s506 + $0x140] sm:$0xff]
      %v562 = vld [vmem:[%s506 + $0x148] sm:$0xff]
      %v563 = vld [vmem:[%s506 + $0x150] sm:$0xff]
      %v564 = vld [vmem:[%s506 + $0x158] sm:$0xff]
      %v565 = vld [vmem:[%s506 + $0x160] sm:$0xff]
      %v566 = vld [vmem:[%s506 + $0x168] sm:$0xff]
      %v567 = vld [vmem:[%s506 + $0x170] sm:$0xff]
      %v568 = vld [vmem:[%s506 + $0x178] sm:$0xff]
      %v569 = vld [vmem:[%s506 + $0x180] sm:$0xff]
      %v570 = vld [vmem:[%s506 + $0x188] sm:$0xff]
      %v571 = vld [vmem:[%s506 + $0x190] sm:$0xff]
      %v572 = vld [vmem:[%s506 + $0x198] sm:$0xff]
      %v573 = vld [vmem:[%s506 + $0x1a0] sm:$0xff]
      %v574 = vld [vmem:[%s506 + $0x1a8] sm:$0xff]
      %v575 = vld [vmem:[%s506 + $0x1b0] sm:$0xff]
      %v576 = vld [vmem:[%s506 + $0x1b8] sm:$0xff]
      %v577 = vld [vmem:[%s506 + $0x1c0] sm:$0xff]
      %v578 = vld [vmem:[%s506 + $0x1c8] sm:$0xff]
      %v579 = vld [vmem:[%s506 + $0x1d0] sm:$0xff]
      %v580 = vld [vmem:[%s506 + $0x1d8] sm:$0xff]
      %v581 = vld [vmem:[%s506 + $0x1e0] sm:$0xff]
      %v582 = vld [vmem:[%s506 + $0x1e8] sm:$0xff]
      %v583 = vld [vmem:[%s506 + $0x1f0] sm:$0xff]
      %v584 = vld [vmem:[%s506 + $0x1f8] sm:$0xff]
      %v585 = vlaneseq
      %v586 = vand.u32 %v585, 127
      %587 = vset.pattern.permute.xlu0 0
      %588 = vperm.xlu0 %587, %v521
      %v589 = vpop.permute.xlu0 %588
      %590 = vset.pattern.permute.xlu0 0
      %591 = vperm.xlu0 %590, %v522
      %v592 = vpop.permute.xlu0 %591
      %593 = vset.pattern.permute.xlu0 0
      %594 = vperm.xlu0 %593, %v523
      %v595 = vpop.permute.xlu0 %594
      %596 = vset.pattern.permute.xlu0 0
      %597 = vperm.xlu0 %596, %v524
      %v598 = vpop.permute.xlu0 %597
      %599 = vset.pattern.permute.xlu0 0
      %600 = vperm.xlu0 %599, %v525
      %v601 = vpop.permute.xlu0 %600
      %602 = vset.pattern.permute.xlu0 0
      %603 = vperm.xlu0 %602, %v526
      %v604 = vpop.permute.xlu0 %603
      %605 = vset.pattern.permute.xlu0 0
      %606 = vperm.xlu0 %605, %v527
      %v607 = vpop.permute.xlu0 %606
      %608 = vset.pattern.permute.xlu0 0
      %609 = vperm.xlu0 %608, %v528
      %v610 = vpop.permute.xlu0 %609
      %611 = vset.pattern.permute.xlu0 0
      %612 = vperm.xlu0 %611, %v529
      %v613 = vpop.permute.xlu0 %612
      %614 = vset.pattern.permute.xlu0 0
      %615 = vperm.xlu0 %614, %v530
      %v616 = vpop.permute.xlu0 %615
      %617 = vset.pattern.permute.xlu0 0
      %618 = vperm.xlu0 %617, %v531
      %v619 = vpop.permute.xlu0 %618
      %620 = vset.pattern.permute.xlu0 0
      %621 = vperm.xlu0 %620, %v532
      %v622 = vpop.permute.xlu0 %621
      %623 = vset.pattern.permute.xlu0 0
      %624 = vperm.xlu0 %623, %v533
      %v625 = vpop.permute.xlu0 %624
      %626 = vset.pattern.permute.xlu0 0
      %627 = vperm.xlu0 %626, %v534
      %v628 = vpop.permute.xlu0 %627
      %629 = vset.pattern.permute.xlu0 0
      %630 = vperm.xlu0 %629, %v535
      %v631 = vpop.permute.xlu0 %630
      %632 = vset.pattern.permute.xlu0 0
      %633 = vperm.xlu0 %632, %v536
      %v634 = vpop.permute.xlu0 %633
      %635 = vset.pattern.permute.xlu0 0
      %636 = vperm.xlu0 %635, %v537
      %v637 = vpop.permute.xlu0 %636
      %638 = vset.pattern.permute.xlu0 0
      %639 = vperm.xlu0 %638, %v538
      %v640 = vpop.permute.xlu0 %639
      %641 = vset.pattern.permute.xlu0 0
      %642 = vperm.xlu0 %641, %v539
      %v643 = vpop.permute.xlu0 %642
      %644 = vset.pattern.permute.xlu0 0
      %645 = vperm.xlu0 %644, %v540
      %v646 = vpop.permute.xlu0 %645
      %647 = vset.pattern.permute.xlu0 0
      %648 = vperm.xlu0 %647, %v541
      %v649 = vpop.permute.xlu0 %648
      %650 = vset.pattern.permute.xlu0 0
      %651 = vperm.xlu0 %650, %v542
      %v652 = vpop.permute.xlu0 %651
      %653 = vset.pattern.permute.xlu0 0
      %654 = vperm.xlu0 %653, %v543
      %v655 = vpop.permute.xlu0 %654
      %656 = vset.pattern.permute.xlu0 0
      %657 = vperm.xlu0 %656, %v544
      %v658 = vpop.permute.xlu0 %657
      %659 = vset.pattern.permute.xlu0 0
      %660 = vperm.xlu0 %659, %v545
      %v661 = vpop.permute.xlu0 %660
      %662 = vset.pattern.permute.xlu0 0
      %663 = vperm.xlu0 %662, %v546
      %v664 = vpop.permute.xlu0 %663
      %665 = vset.pattern.permute.xlu0 0
      %666 = vperm.xlu0 %665, %v547
      %v667 = vpop.permute.xlu0 %666
      %668 = vset.pattern.permute.xlu0 0
      %669 = vperm.xlu0 %668, %v548
      %v670 = vpop.permute.xlu0 %669
      %671 = vset.pattern.permute.xlu0 0
      %672 = vperm.xlu0 %671, %v549
      %v673 = vpop.permute.xlu0 %672
      %674 = vset.pattern.permute.xlu0 0
      %675 = vperm.xlu0 %674, %v550
      %v676 = vpop.permute.xlu0 %675
      %677 = vset.pattern.permute.xlu0 0
      %678 = vperm.xlu0 %677, %v551
      %v679 = vpop.permute.xlu0 %678
      %680 = vset.pattern.permute.xlu0 0
      %681 = vperm.xlu0 %680, %v552
      %v682 = vpop.permute.xlu0 %681
      %683 = vset.pattern.permute.xlu0 0
      %684 = vperm.xlu0 %683, %v553
      %v685 = vpop.permute.xlu0 %684
      %686 = vset.pattern.permute.xlu0 0
      %687 = vperm.xlu0 %686, %v554
      %v688 = vpop.permute.xlu0 %687
      %689 = vset.pattern.permute.xlu0 0
      %690 = vperm.xlu0 %689, %v555
      %v691 = vpop.permute.xlu0 %690
      %692 = vset.pattern.permute.xlu0 0
      %693 = vperm.xlu0 %692, %v556
      %v694 = vpop.permute.xlu0 %693
      %695 = vset.pattern.permute.xlu0 0
      %696 = vperm.xlu0 %695, %v557
      %v697 = vpop.permute.xlu0 %696
      %698 = vset.pattern.permute.xlu0 0
      %699 = vperm.xlu0 %698, %v558
      %v700 = vpop.permute.xlu0 %699
      %701 = vset.pattern.permute.xlu0 0
      %702 = vperm.xlu0 %701, %v559
      %v703 = vpop.permute.xlu0 %702
      %704 = vset.pattern.permute.xlu0 0
      %705 = vperm.xlu0 %704, %v560
      %v706 = vpop.permute.xlu0 %705
      %707 = vset.pattern.permute.xlu0 0
      %708 = vperm.xlu0 %707, %v561
      %v709 = vpop.permute.xlu0 %708
      %710 = vset.pattern.permute.xlu0 0
      %711 = vperm.xlu0 %710, %v562
      %v712 = vpop.permute.xlu0 %711
      %713 = vset.pattern.permute.xlu0 0
      %714 = vperm.xlu0 %713, %v563
      %v715 = vpop.permute.xlu0 %714
      %716 = vset.pattern.permute.xlu0 0
      %717 = vperm.xlu0 %716, %v564
      %v718 = vpop.permute.xlu0 %717
      %719 = vset.pattern.permute.xlu0 0
      %720 = vperm.xlu0 %719, %v565
      %v721 = vpop.permute.xlu0 %720
      %722 = vset.pattern.permute.xlu0 0
      %723 = vperm.xlu0 %722, %v566
      %v724 = vpop.permute.xlu0 %723
      %725 = vset.pattern.permute.xlu0 0
      %726 = vperm.xlu0 %725, %v567
      %v727 = vpop.permute.xlu0 %726
      %728 = vset.pattern.permute.xlu0 0
      %729 = vperm.xlu0 %728, %v568
      %v730 = vpop.permute.xlu0 %729
      %731 = vset.pattern.permute.xlu0 0
      %732 = vperm.xlu0 %731, %v569
      %v733 = vpop.permute.xlu0 %732
      %734 = vset.pattern.permute.xlu0 0
      %735 = vperm.xlu0 %734, %v570
      %v736 = vpop.permute.xlu0 %735
      %737 = vset.pattern.permute.xlu0 0
      %738 = vperm.xlu0 %737, %v571
      %v739 = vpop.permute.xlu0 %738
      %740 = vset.pattern.permute.xlu0 0
      %741 = vperm.xlu0 %740, %v572
      %v742 = vpop.permute.xlu0 %741
      %743 = vset.pattern.permute.xlu0 0
      %744 = vperm.xlu0 %743, %v573
      %v745 = vpop.permute.xlu0 %744
      %746 = vset.pattern.permute.xlu0 0
      %747 = vperm.xlu0 %746, %v574
      %v748 = vpop.permute.xlu0 %747
      %749 = vset.pattern.permute.xlu0 0
      %750 = vperm.xlu0 %749, %v575
      %v751 = vpop.permute.xlu0 %750
      %752 = vset.pattern.permute.xlu0 0
      %753 = vperm.xlu0 %752, %v576
      %v754 = vpop.permute.xlu0 %753
      %755 = vset.pattern.permute.xlu0 0
      %756 = vperm.xlu0 %755, %v577
      %v757 = vpop.permute.xlu0 %756
      %758 = vset.pattern.permute.xlu0 0
      %759 = vperm.xlu0 %758, %v578
      %v760 = vpop.permute.xlu0 %759
      %761 = vset.pattern.permute.xlu0 0
      %762 = vperm.xlu0 %761, %v579
      %v763 = vpop.permute.xlu0 %762
      %764 = vset.pattern.permute.xlu0 0
      %765 = vperm.xlu0 %764, %v580
      %v766 = vpop.permute.xlu0 %765
      %767 = vset.pattern.permute.xlu0 0
      %768 = vperm.xlu0 %767, %v581
      %v769 = vpop.permute.xlu0 %768
      %770 = vset.pattern.permute.xlu0 0
      %771 = vperm.xlu0 %770, %v582
      %v772 = vpop.permute.xlu0 %771
      %773 = vset.pattern.permute.xlu0 0
      %774 = vperm.xlu0 %773, %v583
      %v775 = vpop.permute.xlu0 %774
      %776 = vset.pattern.permute.xlu0 0
      %777 = vperm.xlu0 %776, %v584
      %v778 = vpop.permute.xlu0 %777
      %vm779 = vcmp.eq.s32.totalorder %v586, %v589
      %vm780 = vcmp.eq.s32.totalorder %v586, %v592
      %vm781 = vcmp.eq.s32.totalorder %v586, %v595
      %vm782 = vcmp.eq.s32.totalorder %v586, %v598
      %vm783 = vcmp.eq.s32.totalorder %v586, %v601
      %vm784 = vcmp.eq.s32.totalorder %v586, %v604
      %vm785 = vcmp.eq.s32.totalorder %v586, %v607
      %vm786 = vcmp.eq.s32.totalorder %v586, %v610
      %vm787 = vcmp.eq.s32.totalorder %v586, %v613
      %vm788 = vcmp.eq.s32.totalorder %v586, %v616
      %vm789 = vcmp.eq.s32.totalorder %v586, %v619
      %vm790 = vcmp.eq.s32.totalorder %v586, %v622
      %vm791 = vcmp.eq.s32.totalorder %v586, %v625
      %vm792 = vcmp.eq.s32.totalorder %v586, %v628
      %vm793 = vcmp.eq.s32.totalorder %v586, %v631
      %vm794 = vcmp.eq.s32.totalorder %v586, %v634
      %vm795 = vcmp.eq.s32.totalorder %v586, %v637
      %vm796 = vcmp.eq.s32.totalorder %v586, %v640
      %vm797 = vcmp.eq.s32.totalorder %v586, %v643
      %vm798 = vcmp.eq.s32.totalorder %v586, %v646
      %vm799 = vcmp.eq.s32.totalorder %v586, %v649
      %vm800 = vcmp.eq.s32.totalorder %v586, %v652
      %vm801 = vcmp.eq.s32.totalorder %v586, %v655
      %vm802 = vcmp.eq.s32.totalorder %v586, %v658
      %vm803 = vcmp.eq.s32.totalorder %v586, %v661
      %vm804 = vcmp.eq.s32.totalorder %v586, %v664
      %vm805 = vcmp.eq.s32.totalorder %v586, %v667
      %vm806 = vcmp.eq.s32.totalorder %v586, %v670
      %vm807 = vcmp.eq.s32.totalorder %v586, %v673
      %vm808 = vcmp.eq.s32.totalorder %v586, %v676
      %vm809 = vcmp.eq.s32.totalorder %v586, %v679
      %vm810 = vcmp.eq.s32.totalorder %v586, %v682
      %vm811 = vcmp.eq.s32.totalorder %v586, %v685
      %vm812 = vcmp.eq.s32.totalorder %v586, %v688
      %vm813 = vcmp.eq.s32.totalorder %v586, %v691
      %vm814 = vcmp.eq.s32.totalorder %v586, %v694
      %vm815 = vcmp.eq.s32.totalorder %v586, %v697
      %vm816 = vcmp.eq.s32.totalorder %v586, %v700
      %vm817 = vcmp.eq.s32.totalorder %v586, %v703
      %vm818 = vcmp.eq.s32.totalorder %v586, %v706
      %vm819 = vcmp.eq.s32.totalorder %v586, %v709
      %vm820 = vcmp.eq.s32.totalorder %v586, %v712
      %vm821 = vcmp.eq.s32.totalorder %v586, %v715
      %vm822 = vcmp.eq.s32.totalorder %v586, %v718
      %vm823 = vcmp.eq.s32.totalorder %v586, %v721
      %vm824 = vcmp.eq.s32.totalorder %v586, %v724
      %vm825 = vcmp.eq.s32.totalorder %v586, %v727
      %vm826 = vcmp.eq.s32.totalorder %v586, %v730
      %vm827 = vcmp.eq.s32.totalorder %v586, %v733
      %vm828 = vcmp.eq.s32.totalorder %v586, %v736
      %vm829 = vcmp.eq.s32.totalorder %v586, %v739
      %vm830 = vcmp.eq.s32.totalorder %v586, %v742
      %vm831 = vcmp.eq.s32.totalorder %v586, %v745
      %vm832 = vcmp.eq.s32.totalorder %v586, %v748
      %vm833 = vcmp.eq.s32.totalorder %v586, %v751
      %vm834 = vcmp.eq.s32.totalorder %v586, %v754
      %vm835 = vcmp.eq.s32.totalorder %v586, %v757
      %vm836 = vcmp.eq.s32.totalorder %v586, %v760
      %vm837 = vcmp.eq.s32.totalorder %v586, %v763
      %vm838 = vcmp.eq.s32.totalorder %v586, %v766
      %vm839 = vcmp.eq.s32.totalorder %v586, %v769
      %vm840 = vcmp.eq.s32.totalorder %v586, %v772
      %vm841 = vcmp.eq.s32.totalorder %v586, %v775
      %vm842 = vcmp.eq.s32.totalorder %v586, %v778
      %v843 = vsel %vm779, 1, 0
      %v844 = vsel %vm780, 1, 0
      %v845 = vsel %vm781, 1, 0
      %v846 = vsel %vm782, 1, 0
      %v847 = vsel %vm783, 1, 0
      %v848 = vsel %vm784, 1, 0
      %v849 = vsel %vm785, 1, 0
      %v850 = vsel %vm786, 1, 0
      %v851 = vsel %vm787, 1, 0
      %v852 = vsel %vm788, 1, 0
      %v853 = vsel %vm789, 1, 0
      %v854 = vsel %vm790, 1, 0
      %v855 = vsel %vm791, 1, 0
      %v856 = vsel %vm792, 1, 0
      %v857 = vsel %vm793, 1, 0
      %v858 = vsel %vm794, 1, 0
      %v859 = vsel %vm795, 1, 0
      %v860 = vsel %vm796, 1, 0
      %v861 = vsel %vm797, 1, 0
      %v862 = vsel %vm798, 1, 0
      %v863 = vsel %vm799, 1, 0
      %v864 = vsel %vm800, 1, 0
      %v865 = vsel %vm801, 1, 0
      %v866 = vsel %vm802, 1, 0
      %v867 = vsel %vm803, 1, 0
      %v868 = vsel %vm804, 1, 0
      %v869 = vsel %vm805, 1, 0
      %v870 = vsel %vm806, 1, 0
      %v871 = vsel %vm807, 1, 0
      %v872 = vsel %vm808, 1, 0
      %v873 = vsel %vm809, 1, 0
      %v874 = vsel %vm810, 1, 0
      %v875 = vsel %vm811, 1, 0
      %v876 = vsel %vm812, 1, 0
      %v877 = vsel %vm813, 1, 0
      %v878 = vsel %vm814, 1, 0
      %v879 = vsel %vm815, 1, 0
      %v880 = vsel %vm816, 1, 0
      %v881 = vsel %vm817, 1, 0
      %v882 = vsel %vm818, 1, 0
      %v883 = vsel %vm819, 1, 0
      %v884 = vsel %vm820, 1, 0
      %v885 = vsel %vm821, 1, 0
      %v886 = vsel %vm822, 1, 0
      %v887 = vsel %vm823, 1, 0
      %v888 = vsel %vm824, 1, 0
      %v889 = vsel %vm825, 1, 0
      %v890 = vsel %vm826, 1, 0
      %v891 = vsel %vm827, 1, 0
      %v892 = vsel %vm828, 1, 0
      %v893 = vsel %vm829, 1, 0
      %v894 = vsel %vm830, 1, 0
      %v895 = vsel %vm831, 1, 0
      %v896 = vsel %vm832, 1, 0
      %v897 = vsel %vm833, 1, 0
      %v898 = vsel %vm834, 1, 0
      %v899 = vsel %vm835, 1, 0
      %v900 = vsel %vm836, 1, 0
      %v901 = vsel %vm837, 1, 0
      %v902 = vsel %vm838, 1, 0
      %v903 = vsel %vm839, 1, 0
      %v904 = vsel %vm840, 1, 0
      %v905 = vsel %vm841, 1, 0
      %v906 = vsel %vm842, 1, 0
      %v907 = vcvt.s32.f32 %v843
      %v908 = vcvt.s32.f32 %v844
      %v909 = vcvt.s32.f32 %v845
      %v910 = vcvt.s32.f32 %v846
      %v911 = vcvt.s32.f32 %v847
      %v912 = vcvt.s32.f32 %v848
      %v913 = vcvt.s32.f32 %v849
      %v914 = vcvt.s32.f32 %v850
      %v915 = vcvt.s32.f32 %v851
      %v916 = vcvt.s32.f32 %v852
      %v917 = vcvt.s32.f32 %v853
      %v918 = vcvt.s32.f32 %v854
      %v919 = vcvt.s32.f32 %v855
      %v920 = vcvt.s32.f32 %v856
      %v921 = vcvt.s32.f32 %v857
      %v922 = vcvt.s32.f32 %v858
      %v923 = vcvt.s32.f32 %v859
      %v924 = vcvt.s32.f32 %v860
      %v925 = vcvt.s32.f32 %v861
      %v926 = vcvt.s32.f32 %v862
      %v927 = vcvt.s32.f32 %v863
      %v928 = vcvt.s32.f32 %v864
      %v929 = vcvt.s32.f32 %v865
      %v930 = vcvt.s32.f32 %v866
      %v931 = vcvt.s32.f32 %v867
      %v932 = vcvt.s32.f32 %v868
      %v933 = vcvt.s32.f32 %v869
      %v934 = vcvt.s32.f32 %v870
      %v935 = vcvt.s32.f32 %v871
      %v936 = vcvt.s32.f32 %v872
      %v937 = vcvt.s32.f32 %v873
      %v938 = vcvt.s32.f32 %v874
      %v939 = vcvt.s32.f32 %v875
      %v940 = vcvt.s32.f32 %v876
      %v941 = vcvt.s32.f32 %v877
      %v942 = vcvt.s32.f32 %v878
      %v943 = vcvt.s32.f32 %v879
      %v944 = vcvt.s32.f32 %v880
      %v945 = vcvt.s32.f32 %v881
      %v946 = vcvt.s32.f32 %v882
      %v947 = vcvt.s32.f32 %v883
      %v948 = vcvt.s32.f32 %v884
      %v949 = vcvt.s32.f32 %v885
      %v950 = vcvt.s32.f32 %v886
      %v951 = vcvt.s32.f32 %v887
      %v952 = vcvt.s32.f32 %v888
      %v953 = vcvt.s32.f32 %v889
      %v954 = vcvt.s32.f32 %v890
      %v955 = vcvt.s32.f32 %v891
      %v956 = vcvt.s32.f32 %v892
      %v957 = vcvt.s32.f32 %v893
      %v958 = vcvt.s32.f32 %v894
      %v959 = vcvt.s32.f32 %v895
      %v960 = vcvt.s32.f32 %v896
      %v961 = vcvt.s32.f32 %v897
      %v962 = vcvt.s32.f32 %v898
      %v963 = vcvt.s32.f32 %v899
      %v964 = vcvt.s32.f32 %v900
      %v965 = vcvt.s32.f32 %v901
      %v966 = vcvt.s32.f32 %v902
      %v967 = vcvt.s32.f32 %v903
      %v968 = vcvt.s32.f32 %v904
      %v969 = vcvt.s32.f32 %v905
      %v970 = vcvt.s32.f32 %v906
      %v971 = vpack.c.bf16 %v908, %v907
      %v972 = vpack.c.bf16 %v910, %v909
      %v973 = vpack.c.bf16 %v912, %v911
      %v974 = vpack.c.bf16 %v914, %v913
      %v975 = vpack.c.bf16 %v916, %v915
      %v976 = vpack.c.bf16 %v918, %v917
      %v977 = vpack.c.bf16 %v920, %v919
      %v978 = vpack.c.bf16 %v922, %v921
      %v979 = vpack.c.bf16 %v924, %v923
      %v980 = vpack.c.bf16 %v926, %v925
      %v981 = vpack.c.bf16 %v928, %v927
      %v982 = vpack.c.bf16 %v930, %v929
      %v983 = vpack.c.bf16 %v932, %v931
      %v984 = vpack.c.bf16 %v934, %v933
      %v985 = vpack.c.bf16 %v936, %v935
      %v986 = vpack.c.bf16 %v938, %v937
      %v987 = vpack.c.bf16 %v940, %v939
      %v988 = vpack.c.bf16 %v942, %v941
      %v989 = vpack.c.bf16 %v944, %v943
      %v990 = vpack.c.bf16 %v946, %v945
      %v991 = vpack.c.bf16 %v948, %v947
      %v992 = vpack.c.bf16 %v950, %v949
      %v993 = vpack.c.bf16 %v952, %v951
      %v994 = vpack.c.bf16 %v954, %v953
      %v995 = vpack.c.bf16 %v956, %v955
      %v996 = vpack.c.bf16 %v958, %v957
      %v997 = vpack.c.bf16 %v960, %v959
      %v998 = vpack.c.bf16 %v962, %v961
      %v999 = vpack.c.bf16 %v964, %v963
      %v1000 = vpack.c.bf16 %v966, %v965
      %v1001 = vpack.c.bf16 %v968, %v967
      %v1002 = vpack.c.bf16 %v970, %v969
      %v1003 = vld [vmem:[%s2] sm:$0xff]
      %v1004 = vld [vmem:[%s2 + $0x8] sm:$0xff]
      %v1005 = vld [vmem:[%s2 + $0x10] sm:$0xff]
      %v1006 = vld [vmem:[%s2 + $0x18] sm:$0xff]
      %v1007 = vld [vmem:[%s2 + $0x20] sm:$0xff]
      %v1008 = vld [vmem:[%s2 + $0x28] sm:$0xff]
      %v1009 = vld [vmem:[%s2 + $0x30] sm:$0xff]
      %v1010 = vld [vmem:[%s2 + $0x38] sm:$0xff]
      %v1011 = vld [vmem:[%s2 + $0x40] sm:$0xff]
      %v1012 = vld [vmem:[%s2 + $0x48] sm:$0xff]
      %v1013 = vld [vmem:[%s2 + $0x50] sm:$0xff]
      %v1014 = vld [vmem:[%s2 + $0x58] sm:$0xff]
      %v1015 = vld [vmem:[%s2 + $0x60] sm:$0xff]
      %v1016 = vld [vmem:[%s2 + $0x68] sm:$0xff]
      %v1017 = vld [vmem:[%s2 + $0x70] sm:$0xff]
      %v1018 = vld [vmem:[%s2 + $0x78] sm:$0xff]
      %v1019 = vld [vmem:[%s2 + $0x80] sm:$0xff]
      %v1020 = vld [vmem:[%s2 + $0x88] sm:$0xff]
      %v1021 = vld [vmem:[%s2 + $0x90] sm:$0xff]
      %v1022 = vld [vmem:[%s2 + $0x98] sm:$0xff]
      %v1023 = vld [vmem:[%s2 + $0xa0] sm:$0xff]
      %v1024 = vld [vmem:[%s2 + $0xa8] sm:$0xff]
      %v1025 = vld [vmem:[%s2 + $0xb0] sm:$0xff]
      %v1026 = vld [vmem:[%s2 + $0xb8] sm:$0xff]
      %v1027 = vld [vmem:[%s2 + $0xc0] sm:$0xff]
      %v1028 = vld [vmem:[%s2 + $0xc8] sm:$0xff]
      %v1029 = vld [vmem:[%s2 + $0xd0] sm:$0xff]
      %v1030 = vld [vmem:[%s2 + $0xd8] sm:$0xff]
      %v1031 = vld [vmem:[%s2 + $0xe0] sm:$0xff]
      %v1032 = vld [vmem:[%s2 + $0xe8] sm:$0xff]
      %v1033 = vld [vmem:[%s2 + $0xf0] sm:$0xff]
      %v1034 = vld [vmem:[%s2 + $0xf8] sm:$0xff]
      %v1067 = vunpack.c.l.b16 %v1003
      %v1068 = vunpack.c.h.b16 %v1003
      %v1069 = vunpack.c.l.b16 %v1004
      %v1070 = vunpack.c.h.b16 %v1004
      %v1071 = vunpack.c.l.b16 %v1005
      %v1072 = vunpack.c.h.b16 %v1005
      %v1073 = vunpack.c.l.b16 %v1006
      %v1074 = vunpack.c.h.b16 %v1006
      %v1075 = vunpack.c.l.b16 %v1007
      %v1076 = vunpack.c.h.b16 %v1007
      %v1077 = vunpack.c.l.b16 %v1008
      %v1078 = vunpack.c.h.b16 %v1008
      %v1079 = vunpack.c.l.b16 %v1009
      %v1080 = vunpack.c.h.b16 %v1009
      %v1081 = vunpack.c.l.b16 %v1010
      %v1082 = vunpack.c.h.b16 %v1010
      %v1083 = vunpack.c.l.b16 %v1011
      %v1084 = vunpack.c.h.b16 %v1011
      %v1085 = vunpack.c.l.b16 %v1012
      %v1086 = vunpack.c.h.b16 %v1012
      %v1087 = vunpack.c.l.b16 %v1013
      %v1088 = vunpack.c.h.b16 %v1013
      %v1089 = vunpack.c.l.b16 %v1014
      %v1090 = vunpack.c.h.b16 %v1014
      %v1091 = vunpack.c.l.b16 %v1015
      %v1092 = vunpack.c.h.b16 %v1015
      %v1093 = vunpack.c.l.b16 %v1016
      %v1094 = vunpack.c.h.b16 %v1016
      %v1095 = vunpack.c.l.b16 %v1017
      %v1096 = vunpack.c.h.b16 %v1017
      %v1097 = vunpack.c.l.b16 %v1018
      %v1098 = vunpack.c.h.b16 %v1018
      %v1099 = vunpack.c.l.b16 %v1019
      %v1100 = vunpack.c.h.b16 %v1019
      %v1101 = vunpack.c.l.b16 %v1020
      %v1102 = vunpack.c.h.b16 %v1020
      %v1103 = vunpack.c.l.b16 %v1021
      %v1104 = vunpack.c.h.b16 %v1021
      %v1105 = vunpack.c.l.b16 %v1022
      %v1106 = vunpack.c.h.b16 %v1022
      %v1107 = vunpack.c.l.b16 %v1023
      %v1108 = vunpack.c.h.b16 %v1023
      %v1109 = vunpack.c.l.b16 %v1024
      %v1110 = vunpack.c.h.b16 %v1024
      %v1111 = vunpack.c.l.b16 %v1025
      %v1112 = vunpack.c.h.b16 %v1025
      %v1113 = vunpack.c.l.b16 %v1026
      %v1114 = vunpack.c.h.b16 %v1026
      %v1115 = vunpack.c.l.b16 %v1027
      %v1116 = vunpack.c.h.b16 %v1027
      %v1117 = vunpack.c.l.b16 %v1028
      %v1118 = vunpack.c.h.b16 %v1028
      %v1119 = vunpack.c.l.b16 %v1029
      %v1120 = vunpack.c.h.b16 %v1029
      %v1121 = vunpack.c.l.b16 %v1030
      %v1122 = vunpack.c.h.b16 %v1030
      %v1123 = vunpack.c.l.b16 %v1031
      %v1124 = vunpack.c.h.b16 %v1031
      %v1125 = vunpack.c.l.b16 %v1032
      %v1126 = vunpack.c.h.b16 %v1032
      %v1127 = vunpack.c.l.b16 %v1033
      %v1128 = vunpack.c.h.b16 %v1033
      %v1129 = vunpack.c.l.b16 %v1034
      %v1130 = vunpack.c.h.b16 %v1034
      %v1131 = vpack.c.b16 %v1071, %v1067
      %v1132 = vpack.c.b16 %v1072, %v1068
      %v1133 = vpack.c.b16 %v1073, %v1069
      %v1134 = vpack.c.b16 %v1074, %v1070
      %v1135 = vpack.c.b16 %v1079, %v1075
      %v1136 = vpack.c.b16 %v1080, %v1076
      %v1137 = vpack.c.b16 %v1081, %v1077
      %v1138 = vpack.c.b16 %v1082, %v1078
      %v1139 = vpack.c.b16 %v1087, %v1083
      %v1140 = vpack.c.b16 %v1088, %v1084
      %v1141 = vpack.c.b16 %v1089, %v1085
      %v1142 = vpack.c.b16 %v1090, %v1086
      %v1143 = vpack.c.b16 %v1095, %v1091
      %v1144 = vpack.c.b16 %v1096, %v1092
      %v1145 = vpack.c.b16 %v1097, %v1093
      %v1146 = vpack.c.b16 %v1098, %v1094
      %v1147 = vpack.c.b16 %v1103, %v1099
      %v1148 = vpack.c.b16 %v1104, %v1100
      %v1149 = vpack.c.b16 %v1105, %v1101
      %v1150 = vpack.c.b16 %v1106, %v1102
      %v1151 = vpack.c.b16 %v1111, %v1107
      %v1152 = vpack.c.b16 %v1112, %v1108
      %v1153 = vpack.c.b16 %v1113, %v1109
      %v1154 = vpack.c.b16 %v1114, %v1110
      %v1155 = vpack.c.b16 %v1119, %v1115
      %v1156 = vpack.c.b16 %v1120, %v1116
      %v1157 = vpack.c.b16 %v1121, %v1117
      %v1158 = vpack.c.b16 %v1122, %v1118
      %v1159 = vpack.c.b16 %v1127, %v1123
      %v1160 = vpack.c.b16 %v1128, %v1124
      %v1161 = vpack.c.b16 %v1129, %v1125
      %v1162 = vpack.c.b16 %v1130, %v1126
      %1195 = vmatprep.subr.bf16.mxu0 %v1132
      %1196 = vmatpush1.bf16.msra.mxu0 %v1131
      %1197 = vmatprep.subr.bf16.mxu0 %v1136
      %1198 = vmatpush1.bf16.msra.mxu0 %v1135
      %1199 = vmatprep.subr.bf16.mxu0 %v1140
      %1200 = vmatpush1.bf16.msra.mxu0 %v1139
      %1201 = vmatprep.subr.bf16.mxu0 %v1144
      %1202 = vmatpush1.bf16.msra.mxu0 %v1143
      %1203 = vmatprep.subr.bf16.mxu0 %v1148
      %1204 = vmatpush1.bf16.msra.mxu0 %v1147
      %1205 = vmatprep.subr.bf16.mxu0 %v1152
      %1206 = vmatpush1.bf16.msra.mxu0 %v1151
      %1207 = vmatprep.subr.bf16.mxu0 %v1156
      %1208 = vmatpush1.bf16.msra.mxu0 %v1155
      %1209 = vmatprep.subr.bf16.mxu0 %v1160
      %1210 = vmatpush1.bf16.msra.mxu0 %v1159
      %1211 = vmatprep.subr.bf16.mxu0 0
      %1212 = vmatpush1.bf16.msra.mxu0 0
      %1213 = vmatprep.subr.bf16.mxu0 0
      %1214 = vmatpush1.bf16.msra.mxu0 0
      %1215 = vmatprep.subr.bf16.mxu0 0
      %1216 = vmatpush1.bf16.msra.mxu0 0
      %1217 = vmatprep.subr.bf16.mxu0 0
      %1218 = vmatpush1.bf16.msra.mxu0 0
      %1219 = vmatprep.subr.bf16.mxu0 0
      %1220 = vmatpush1.bf16.msra.mxu0 0
      %1221 = vmatprep.subr.bf16.mxu0 0
      %1222 = vmatpush1.bf16.msra.mxu0 0
      %1223 = vmatprep.subr.bf16.mxu0 0
      %1224 = vmatpush1.bf16.msra.mxu0 0
      %1225 = vmatprep.subr.bf16.mxu0 0
      %1226 = vmatpush1.bf16.msra.mxu0 0
      %1227 = vmatprep.mubr.bf16.mxu0 0
      %1228 = vmatmul.mubr.bf16.gmra.mrb[0].mxu0 %v971
      %v1229 = vpop.f32.mrb[0].mxu0
      %v1230 = vadd.f32 0.0, %v1229
      %v1231 = vpop.f32.mrb[0].mxu0
      %v1232 = vadd.f32 0.0, %v1231
      %v1233 = vpop.f32.mrb[0].mxu0
      %v1234 = vadd.f32 0.0, %v1233
      %v1235 = vpop.f32.mrb[0].mxu0
      %v1236 = vadd.f32 0.0, %v1235
      %1237 = vmatprep.mubr.bf16.mxu0 0
      %1238 = vmatmul.mubr.bf16.gmra.mrb[0].mxu0 %v972
      %v1239 = vpop.f32.mrb[0].mxu0
      %v1240 = vadd.f32 0.0, %v1239
      %v1241 = vpop.f32.mrb[0].mxu0
      %v1242 = vadd.f32 0.0, %v1241
      %v1243 = vpop.f32.mrb[0].mxu0
      %v1244 = vadd.f32 0.0, %v1243
      %v1245 = vpop.f32.mrb[0].mxu0
      %v1246 = vadd.f32 0.0, %v1245
      %1247 = vmatprep.mubr.bf16.mxu0 0
      %1248 = vmatmul.mubr.bf16.gmra.mrb[0].mxu0 %v973
      %v1249 = vpop.f32.mrb[0].mxu0
      %v1250 = vadd.f32 0.0, %v1249
      %v1251 = vpop.f32.mrb[0].mxu0
      %v1252 = vadd.f32 0.0, %v1251
      %v1253 = vpop.f32.mrb[0].mxu0
      %v1254 = vadd.f32 0.0, %v1253
      %v1255 = vpop.f32.mrb[0].mxu0
      %v1256 = vadd.f32 0.0, %v1255
      %1257 = vmatprep.mubr.bf16.mxu0 0
      %1258 = vmatmul.mubr.bf16.gmra.mrb[0].mxu0 %v974
      %v1259 = vpop.f32.mrb[0].mxu0
      %v1260 = vadd.f32 0.0, %v1259
      %v1261 = vpop.f32.mrb[0].mxu0
      %v1262 = vadd.f32 0.0, %v1261
      %v1263 = vpop.f32.mrb[0].mxu0
      %v1264 = vadd.f32 0.0, %v1263
      %v1265 = vpop.f32.mrb[0].mxu0
      %v1266 = vadd.f32 0.0, %v1265
      %1267 = vmatprep.mubr.bf16.mxu0 0
      %1268 = vmatmul.mubr.bf16.gmra.mrb[0].mxu0 %v975
      %v1269 = vpop.f32.mrb[0].mxu0
      %v1270 = vadd.f32 0.0, %v1269
      %v1271 = vpop.f32.mrb[0].mxu0
      %v1272 = vadd.f32 0.0, %v1271
      %v1273 = vpop.f32.mrb[0].mxu0
      %v1274 = vadd.f32 0.0, %v1273
      %v1275 = vpop.f32.mrb[0].mxu0
      %v1276 = vadd.f32 0.0, %v1275
      %1277 = vmatprep.mubr.bf16.mxu0 0
      %1278 = vmatmul.mubr.bf16.gmra.mrb[0].mxu0 %v976
      %v1279 = vpop.f32.mrb[0].mxu0
      %v1280 = vadd.f32 0.0, %v1279
      %v1281 = vpop.f32.mrb[0].mxu0
      %v1282 = vadd.f32 0.0, %v1281
      %v1283 = vpop.f32.mrb[0].mxu0
      %v1284 = vadd.f32 0.0, %v1283
      %v1285 = vpop.f32.mrb[0].mxu0
      %v1286 = vadd.f32 0.0, %v1285
      %1287 = vmatprep.mubr.bf16.mxu0 0
      %1288 = vmatmul.mubr.bf16.gmra.mrb[0].mxu0 %v977
      %v1289 = vpop.f32.mrb[0].mxu0
      %v1290 = vadd.f32 0.0, %v1289
      %v1291 = vpop.f32.mrb[0].mxu0
      %v1292 = vadd.f32 0.0, %v1291
      %v1293 = vpop.f32.mrb[0].mxu0
      %v1294 = vadd.f32 0.0, %v1293
      %v1295 = vpop.f32.mrb[0].mxu0
      %v1296 = vadd.f32 0.0, %v1295
      %1297 = vmatprep.mubr.bf16.mxu0 0
      %1298 = vmatmul.mubr.bf16.gmra.mrb[0].mxu0 %v978
      %v1299 = vpop.f32.mrb[0].mxu0
      %v1300 = vadd.f32 0.0, %v1299
      %v1301 = vpop.f32.mrb[0].mxu0
      %v1302 = vadd.f32 0.0, %v1301
      %v1303 = vpop.f32.mrb[0].mxu0
      %v1304 = vadd.f32 0.0, %v1303
      %v1305 = vpop.f32.mrb[0].mxu0
      %v1306 = vadd.f32 0.0, %v1305
      %1307 = vmatprep.mubr.bf16.mxu0 0
      %1308 = vmatmul.mubr.bf16.gmra.mrb[0].mxu0 %v979
      %v1309 = vpop.f32.mrb[0].mxu0
      %v1310 = vadd.f32 0.0, %v1309
      %v1311 = vpop.f32.mrb[0].mxu0
      %v1312 = vadd.f32 0.0, %v1311
      %v1313 = vpop.f32.mrb[0].mxu0
      %v1314 = vadd.f32 0.0, %v1313
      %v1315 = vpop.f32.mrb[0].mxu0
      %v1316 = vadd.f32 0.0, %v1315
      %1317 = vmatprep.mubr.bf16.mxu0 0
      %1318 = vmatmul.mubr.bf16.gmra.mrb[0].mxu0 %v980
      %v1319 = vpop.f32.mrb[0].mxu0
      %v1320 = vadd.f32 0.0, %v1319
      %v1321 = vpop.f32.mrb[0].mxu0
      %v1322 = vadd.f32 0.0, %v1321
      %v1323 = vpop.f32.mrb[0].mxu0
      %v1324 = vadd.f32 0.0, %v1323
      %v1325 = vpop.f32.mrb[0].mxu0
      %v1326 = vadd.f32 0.0, %v1325
      %1327 = vmatprep.mubr.bf16.mxu0 0
      %1328 = vmatmul.mubr.bf16.gmra.mrb[0].mxu0 %v981
      %v1329 = vpop.f32.mrb[0].mxu0
      %v1330 = vadd.f32 0.0, %v1329
      %v1331 = vpop.f32.mrb[0].mxu0
      %v1332 = vadd.f32 0.0, %v1331
      %v1333 = vpop.f32.mrb[0].mxu0
      %v1334 = vadd.f32 0.0, %v1333
      %v1335 = vpop.f32.mrb[0].mxu0
      %v1336 = vadd.f32 0.0, %v1335
      %1337 = vmatprep.mubr.bf16.mxu0 0
      %1338 = vmatmul.mubr.bf16.gmra.mrb[0].mxu0 %v982
      %v1339 = vpop.f32.mrb[0].mxu0
      %v1340 = vadd.f32 0.0, %v1339
      %v1341 = vpop.f32.mrb[0].mxu0
      %v1342 = vadd.f32 0.0, %v1341
      %v1343 = vpop.f32.mrb[0].mxu0
      %v1344 = vadd.f32 0.0, %v1343
      %v1345 = vpop.f32.mrb[0].mxu0
      %v1346 = vadd.f32 0.0, %v1345
      %1347 = vmatprep.mubr.bf16.mxu0 0
      %1348 = vmatmul.mubr.bf16.gmra.mrb[0].mxu0 %v983
      %v1349 = vpop.f32.mrb[0].mxu0
      %v1350 = vadd.f32 0.0, %v1349
      %v1351 = vpop.f32.mrb[0].mxu0
      %v1352 = vadd.f32 0.0, %v1351
      %v1353 = vpop.f32.mrb[0].mxu0
      %v1354 = vadd.f32 0.0, %v1353
      %v1355 = vpop.f32.mrb[0].mxu0
      %v1356 = vadd.f32 0.0, %v1355
      %1357 = vmatprep.mubr.bf16.mxu0 0
      %1358 = vmatmul.mubr.bf16.gmra.mrb[0].mxu0 %v984
      %v1359 = vpop.f32.mrb[0].mxu0
      %v1360 = vadd.f32 0.0, %v1359
      %v1361 = vpop.f32.mrb[0].mxu0
      %v1362 = vadd.f32 0.0, %v1361
      %v1363 = vpop.f32.mrb[0].mxu0
      %v1364 = vadd.f32 0.0, %v1363
      %v1365 = vpop.f32.mrb[0].mxu0
      %v1366 = vadd.f32 0.0, %v1365
      %1367 = vmatprep.mubr.bf16.mxu0 0
      %1368 = vmatmul.mubr.bf16.gmra.mrb[0].mxu0 %v985
      %v1369 = vpop.f32.mrb[0].mxu0
      %v1370 = vadd.f32 0.0, %v1369
      %v1371 = vpop.f32.mrb[0].mxu0
      %v1372 = vadd.f32 0.0, %v1371
      %v1373 = vpop.f32.mrb[0].mxu0
      %v1374 = vadd.f32 0.0, %v1373
      %v1375 = vpop.f32.mrb[0].mxu0
      %v1376 = vadd.f32 0.0, %v1375
      %1377 = vmatprep.mubr.bf16.mxu0 0
      %1378 = vmatmul.mubr.bf16.gmra.mrb[0].mxu0 %v986
      %v1379 = vpop.f32.mrb[0].mxu0
      %v1380 = vadd.f32 0.0, %v1379
      %v1381 = vpop.f32.mrb[0].mxu0
      %v1382 = vadd.f32 0.0, %v1381
      %v1383 = vpop.f32.mrb[0].mxu0
      %v1384 = vadd.f32 0.0, %v1383
      %v1385 = vpop.f32.mrb[0].mxu0
      %v1386 = vadd.f32 0.0, %v1385
      %1387 = vmatprep.mubr.bf16.mxu0 0
      %1388 = vmatmul.mubr.bf16.gmra.mrb[0].mxu0 %v987
      %v1389 = vpop.f32.mrb[0].mxu0
      %v1390 = vadd.f32 0.0, %v1389
      %v1391 = vpop.f32.mrb[0].mxu0
      %v1392 = vadd.f32 0.0, %v1391
      %v1393 = vpop.f32.mrb[0].mxu0
      %v1394 = vadd.f32 0.0, %v1393
      %v1395 = vpop.f32.mrb[0].mxu0
      %v1396 = vadd.f32 0.0, %v1395
      %1397 = vmatprep.mubr.bf16.mxu0 0
      %1398 = vmatmul.mubr.bf16.gmra.mrb[0].mxu0 %v988
      %v1399 = vpop.f32.mrb[0].mxu0
      %v1400 = vadd.f32 0.0, %v1399
      %v1401 = vpop.f32.mrb[0].mxu0
      %v1402 = vadd.f32 0.0, %v1401
      %v1403 = vpop.f32.mrb[0].mxu0
      %v1404 = vadd.f32 0.0, %v1403
      %v1405 = vpop.f32.mrb[0].mxu0
      %v1406 = vadd.f32 0.0, %v1405
      %1407 = vmatprep.mubr.bf16.mxu0 0
      %1408 = vmatmul.mubr.bf16.gmra.mrb[0].mxu0 %v989
      %v1409 = vpop.f32.mrb[0].mxu0
      %v1410 = vadd.f32 0.0, %v1409
      %v1411 = vpop.f32.mrb[0].mxu0
      %v1412 = vadd.f32 0.0, %v1411
      %v1413 = vpop.f32.mrb[0].mxu0
      %v1414 = vadd.f32 0.0, %v1413
      %v1415 = vpop.f32.mrb[0].mxu0
      %v1416 = vadd.f32 0.0, %v1415
      %1417 = vmatprep.mubr.bf16.mxu0 0
      %1418 = vmatmul.mubr.bf16.gmra.mrb[0].mxu0 %v990
      %v1419 = vpop.f32.mrb[0].mxu0
      %v1420 = vadd.f32 0.0, %v1419
      %v1421 = vpop.f32.mrb[0].mxu0
      %v1422 = vadd.f32 0.0, %v1421
      %v1423 = vpop.f32.mrb[0].mxu0
      %v1424 = vadd.f32 0.0, %v1423
      %v1425 = vpop.f32.mrb[0].mxu0
      %v1426 = vadd.f32 0.0, %v1425
      %1427 = vmatprep.mubr.bf16.mxu0 0
      %1428 = vmatmul.mubr.bf16.gmra.mrb[0].mxu0 %v991
      %v1429 = vpop.f32.mrb[0].mxu0
      %v1430 = vadd.f32 0.0, %v1429
      %v1431 = vpop.f32.mrb[0].mxu0
      %v1432 = vadd.f32 0.0, %v1431
      %v1433 = vpop.f32.mrb[0].mxu0
      %v1434 = vadd.f32 0.0, %v1433
      %v1435 = vpop.f32.mrb[0].mxu0
      %v1436 = vadd.f32 0.0, %v1435
      %1437 = vmatprep.mubr.bf16.mxu0 0
      %1438 = vmatmul.mubr.bf16.gmra.mrb[0].mxu0 %v992
      %v1439 = vpop.f32.mrb[0].mxu0
      %v1440 = vadd.f32 0.0, %v1439
      %v1441 = vpop.f32.mrb[0].mxu0
      %v1442 = vadd.f32 0.0, %v1441
      %v1443 = vpop.f32.mrb[0].mxu0
      %v1444 = vadd.f32 0.0, %v1443
      %v1445 = vpop.f32.mrb[0].mxu0
      %v1446 = vadd.f32 0.0, %v1445
      %1447 = vmatprep.mubr.bf16.mxu0 0
      %1448 = vmatmul.mubr.bf16.gmra.mrb[0].mxu0 %v993
      %v1449 = vpop.f32.mrb[0].mxu0
      %v1450 = vadd.f32 0.0, %v1449
      %v1451 = vpop.f32.mrb[0].mxu0
      %v1452 = vadd.f32 0.0, %v1451
      %v1453 = vpop.f32.mrb[0].mxu0
      %v1454 = vadd.f32 0.0, %v1453
      %v1455 = vpop.f32.mrb[0].mxu0
      %v1456 = vadd.f32 0.0, %v1455
      %1457 = vmatprep.mubr.bf16.mxu0 0
      %1458 = vmatmul.mubr.bf16.gmra.mrb[0].mxu0 %v994
      %v1459 = vpop.f32.mrb[0].mxu0
      %v1460 = vadd.f32 0.0, %v1459
      %v1461 = vpop.f32.mrb[0].mxu0
      %v1462 = vadd.f32 0.0, %v1461
      %v1463 = vpop.f32.mrb[0].mxu0
      %v1464 = vadd.f32 0.0, %v1463
      %v1465 = vpop.f32.mrb[0].mxu0
      %v1466 = vadd.f32 0.0, %v1465
      %1467 = vmatprep.mubr.bf16.mxu0 0
      %1468 = vmatmul.mubr.bf16.gmra.mrb[0].mxu0 %v995
      %v1469 = vpop.f32.mrb[0].mxu0
      %v1470 = vadd.f32 0.0, %v1469
      %v1471 = vpop.f32.mrb[0].mxu0
      %v1472 = vadd.f32 0.0, %v1471
      %v1473 = vpop.f32.mrb[0].mxu0
      %v1474 = vadd.f32 0.0, %v1473
      %v1475 = vpop.f32.mrb[0].mxu0
      %v1476 = vadd.f32 0.0, %v1475
      %1477 = vmatprep.mubr.bf16.mxu0 0
      %1478 = vmatmul.mubr.bf16.gmra.mrb[0].mxu0 %v996
      %v1479 = vpop.f32.mrb[0].mxu0
      %v1480 = vadd.f32 0.0, %v1479
      %v1481 = vpop.f32.mrb[0].mxu0
      %v1482 = vadd.f32 0.0, %v1481
      %v1483 = vpop.f32.mrb[0].mxu0
      %v1484 = vadd.f32 0.0, %v1483
      %v1485 = vpop.f32.mrb[0].mxu0
      %v1486 = vadd.f32 0.0, %v1485
      %1487 = vmatprep.mubr.bf16.mxu0 0
      %1488 = vmatmul.mubr.bf16.gmra.mrb[0].mxu0 %v997
      %v1489 = vpop.f32.mrb[0].mxu0
      %v1490 = vadd.f32 0.0, %v1489
      %v1491 = vpop.f32.mrb[0].mxu0
      %v1492 = vadd.f32 0.0, %v1491
      %v1493 = vpop.f32.mrb[0].mxu0
      %v1494 = vadd.f32 0.0, %v1493
      %v1495 = vpop.f32.mrb[0].mxu0
      %v1496 = vadd.f32 0.0, %v1495
      %1497 = vmatprep.mubr.bf16.mxu0 0
      %1498 = vmatmul.mubr.bf16.gmra.mrb[0].mxu0 %v998
      %v1499 = vpop.f32.mrb[0].mxu0
      %v1500 = vadd.f32 0.0, %v1499
      %v1501 = vpop.f32.mrb[0].mxu0
      %v1502 = vadd.f32 0.0, %v1501
      %v1503 = vpop.f32.mrb[0].mxu0
      %v1504 = vadd.f32 0.0, %v1503
      %v1505 = vpop.f32.mrb[0].mxu0
      %v1506 = vadd.f32 0.0, %v1505
      %1507 = vmatprep.mubr.bf16.mxu0 0
      %1508 = vmatmul.mubr.bf16.gmra.mrb[0].mxu0 %v999
      %v1509 = vpop.f32.mrb[0].mxu0
      %v1510 = vadd.f32 0.0, %v1509
      %v1511 = vpop.f32.mrb[0].mxu0
      %v1512 = vadd.f32 0.0, %v1511
      %v1513 = vpop.f32.mrb[0].mxu0
      %v1514 = vadd.f32 0.0, %v1513
      %v1515 = vpop.f32.mrb[0].mxu0
      %v1516 = vadd.f32 0.0, %v1515
      %1517 = vmatprep.mubr.bf16.mxu0 0
      %1518 = vmatmul.mubr.bf16.gmra.mrb[0].mxu0 %v1000
      %v1519 = vpop.f32.mrb[0].mxu0
      %v1520 = vadd.f32 0.0, %v1519
      %v1521 = vpop.f32.mrb[0].mxu0
      %v1522 = vadd.f32 0.0, %v1521
      %v1523 = vpop.f32.mrb[0].mxu0
      %v1524 = vadd.f32 0.0, %v1523
      %v1525 = vpop.f32.mrb[0].mxu0
      %v1526 = vadd.f32 0.0, %v1525
      %1527 = vmatprep.mubr.bf16.mxu0 0
      %1528 = vmatmul.mubr.bf16.gmra.mrb[0].mxu0 %v1001
      %v1529 = vpop.f32.mrb[0].mxu0
      %v1530 = vadd.f32 0.0, %v1529
      %v1531 = vpop.f32.mrb[0].mxu0
      %v1532 = vadd.f32 0.0, %v1531
      %v1533 = vpop.f32.mrb[0].mxu0
      %v1534 = vadd.f32 0.0, %v1533
      %v1535 = vpop.f32.mrb[0].mxu0
      %v1536 = vadd.f32 0.0, %v1535
      %1537 = vmatprep.mubr.bf16.mxu0 0
      %1538 = vmatmul.mubr.bf16.gmra.mrb[0].mxu0 %v1002
      %v1539 = vpop.f32.mrb[0].mxu0
      %v1540 = vadd.f32 0.0, %v1539
      %v1541 = vpop.f32.mrb[0].mxu0
      %v1542 = vadd.f32 0.0, %v1541
      %v1543 = vpop.f32.mrb[0].mxu0
      %v1544 = vadd.f32 0.0, %v1543
      %v1545 = vpop.f32.mrb[0].mxu0
      %v1546 = vadd.f32 0.0, %v1545
      %1547 = vdwg.mxu0
      %1548 = vmatprep.subr.bf16.mxu0 %v1134
      %1549 = vmatpush1.bf16.msra.mxu0 %v1133
      %1550 = vmatprep.subr.bf16.mxu0 %v1138
      %1551 = vmatpush1.bf16.msra.mxu0 %v1137
      %1552 = vmatprep.subr.bf16.mxu0 %v1142
      %1553 = vmatpush1.bf16.msra.mxu0 %v1141
      %1554 = vmatprep.subr.bf16.mxu0 %v1146
      %1555 = vmatpush1.bf16.msra.mxu0 %v1145
      %1556 = vmatprep.subr.bf16.mxu0 %v1150
      %1557 = vmatpush1.bf16.msra.mxu0 %v1149
      %1558 = vmatprep.subr.bf16.mxu0 %v1154
      %1559 = vmatpush1.bf16.msra.mxu0 %v1153
      %1560 = vmatprep.subr.bf16.mxu0 %v1158
      %1561 = vmatpush1.bf16.msra.mxu0 %v1157
      %1562 = vmatprep.subr.bf16.mxu0 %v1162
      %1563 = vmatpush1.bf16.msra.mxu0 %v1161
      %1564 = vmatprep.subr.bf16.mxu0 0
      %1565 = vmatpush1.bf16.msra.mxu0 0
      %1566 = vmatprep.subr.bf16.mxu0 0
      %1567 = vmatpush1.bf16.msra.mxu0 0
      %1568 = vmatprep.subr.bf16.mxu0 0
      %1569 = vmatpush1.bf16.msra.mxu0 0
      %1570 = vmatprep.subr.bf16.mxu0 0
      %1571 = vmatpush1.bf16.msra.mxu0 0
      %1572 = vmatprep.subr.bf16.mxu0 0
      %1573 = vmatpush1.bf16.msra.mxu0 0
      %1574 = vmatprep.subr.bf16.mxu0 0
      %1575 = vmatpush1.bf16.msra.mxu0 0
      %1576 = vmatprep.subr.bf16.mxu0 0
      %1577 = vmatpush1.bf16.msra.mxu0 0
      %1578 = vmatprep.subr.bf16.mxu0 0
      %1579 = vmatpush1.bf16.msra.mxu0 0
      %1580 = vmatprep.mubr.bf16.mxu0 0
      %1581 = vmatmul.mubr.bf16.gmra.mrb[0].mxu0 %v971
      %v1582 = vpop.f32.mrb[0].mxu0
      %v1583 = vadd.f32 0.0, %v1582
      %v1584 = vpop.f32.mrb[0].mxu0
      %v1585 = vadd.f32 0.0, %v1584
      %v1586 = vpop.f32.mrb[0].mxu0
      %v1587 = vadd.f32 0.0, %v1586
      %v1588 = vpop.f32.mrb[0].mxu0
      %v1589 = vadd.f32 0.0, %v1588
      %1590 = vmatprep.mubr.bf16.mxu0 0
      %1591 = vmatmul.mubr.bf16.gmra.mrb[0].mxu0 %v972
      %v1592 = vpop.f32.mrb[0].mxu0
      %v1593 = vadd.f32 0.0, %v1592
      %v1594 = vpop.f32.mrb[0].mxu0
      %v1595 = vadd.f32 0.0, %v1594
      %v1596 = vpop.f32.mrb[0].mxu0
      %v1597 = vadd.f32 0.0, %v1596
      %v1598 = vpop.f32.mrb[0].mxu0
      %v1599 = vadd.f32 0.0, %v1598
      %1600 = vmatprep.mubr.bf16.mxu0 0
      %1601 = vmatmul.mubr.bf16.gmra.mrb[0].mxu0 %v973
      %v1602 = vpop.f32.mrb[0].mxu0
      %v1603 = vadd.f32 0.0, %v1602
      %v1604 = vpop.f32.mrb[0].mxu0
      %v1605 = vadd.f32 0.0, %v1604
      %v1606 = vpop.f32.mrb[0].mxu0
      %v1607 = vadd.f32 0.0, %v1606
      %v1608 = vpop.f32.mrb[0].mxu0
      %v1609 = vadd.f32 0.0, %v1608
      %1610 = vmatprep.mubr.bf16.mxu0 0
      %1611 = vmatmul.mubr.bf16.gmra.mrb[0].mxu0 %v974
      %v1612 = vpop.f32.mrb[0].mxu0
      %v1613 = vadd.f32 0.0, %v1612
      %v1614 = vpop.f32.mrb[0].mxu0
      %v1615 = vadd.f32 0.0, %v1614
      %v1616 = vpop.f32.mrb[0].mxu0
      %v1617 = vadd.f32 0.0, %v1616
      %v1618 = vpop.f32.mrb[0].mxu0
      %v1619 = vadd.f32 0.0, %v1618
      %1620 = vmatprep.mubr.bf16.mxu0 0
      %1621 = vmatmul.mubr.bf16.gmra.mrb[0].mxu0 %v975
      %v1622 = vpop.f32.mrb[0].mxu0
      %v1623 = vadd.f32 0.0, %v1622
      %v1624 = vpop.f32.mrb[0].mxu0
      %v1625 = vadd.f32 0.0, %v1624
      %v1626 = vpop.f32.mrb[0].mxu0
      %v1627 = vadd.f32 0.0, %v1626
      %v1628 = vpop.f32.mrb[0].mxu0
      %v1629 = vadd.f32 0.0, %v1628
      %1630 = vmatprep.mubr.bf16.mxu0 0
      %1631 = vmatmul.mubr.bf16.gmra.mrb[0].mxu0 %v976
      %v1632 = vpop.f32.mrb[0].mxu0
      %v1633 = vadd.f32 0.0, %v1632
      %v1634 = vpop.f32.mrb[0].mxu0
      %v1635 = vadd.f32 0.0, %v1634
      %v1636 = vpop.f32.mrb[0].mxu0
      %v1637 = vadd.f32 0.0, %v1636
      %v1638 = vpop.f32.mrb[0].mxu0
      %v1639 = vadd.f32 0.0, %v1638
      %1640 = vmatprep.mubr.bf16.mxu0 0
      %1641 = vmatmul.mubr.bf16.gmra.mrb[0].mxu0 %v977
      %v1642 = vpop.f32.mrb[0].mxu0
      %v1643 = vadd.f32 0.0, %v1642
      %v1644 = vpop.f32.mrb[0].mxu0
      %v1645 = vadd.f32 0.0, %v1644
      %v1646 = vpop.f32.mrb[0].mxu0
      %v1647 = vadd.f32 0.0, %v1646
      %v1648 = vpop.f32.mrb[0].mxu0
      %v1649 = vadd.f32 0.0, %v1648
      %1650 = vmatprep.mubr.bf16.mxu0 0
      %1651 = vmatmul.mubr.bf16.gmra.mrb[0].mxu0 %v978
      %v1652 = vpop.f32.mrb[0].mxu0
      %v1653 = vadd.f32 0.0, %v1652
      %v1654 = vpop.f32.mrb[0].mxu0
      %v1655 = vadd.f32 0.0, %v1654
      %v1656 = vpop.f32.mrb[0].mxu0
      %v1657 = vadd.f32 0.0, %v1656
      %v1658 = vpop.f32.mrb[0].mxu0
      %v1659 = vadd.f32 0.0, %v1658
      %1660 = vmatprep.mubr.bf16.mxu0 0
      %1661 = vmatmul.mubr.bf16.gmra.mrb[0].mxu0 %v979
      %v1662 = vpop.f32.mrb[0].mxu0
      %v1663 = vadd.f32 0.0, %v1662
      %v1664 = vpop.f32.mrb[0].mxu0
      %v1665 = vadd.f32 0.0, %v1664
      %v1666 = vpop.f32.mrb[0].mxu0
      %v1667 = vadd.f32 0.0, %v1666
      %v1668 = vpop.f32.mrb[0].mxu0
      %v1669 = vadd.f32 0.0, %v1668
      %1670 = vmatprep.mubr.bf16.mxu0 0
      %1671 = vmatmul.mubr.bf16.gmra.mrb[0].mxu0 %v980
      %v1672 = vpop.f32.mrb[0].mxu0
      %v1673 = vadd.f32 0.0, %v1672
      %v1674 = vpop.f32.mrb[0].mxu0
      %v1675 = vadd.f32 0.0, %v1674
      %v1676 = vpop.f32.mrb[0].mxu0
      %v1677 = vadd.f32 0.0, %v1676
      %v1678 = vpop.f32.mrb[0].mxu0
      %v1679 = vadd.f32 0.0, %v1678
      %1680 = vmatprep.mubr.bf16.mxu0 0
      %1681 = vmatmul.mubr.bf16.gmra.mrb[0].mxu0 %v981
      %v1682 = vpop.f32.mrb[0].mxu0
      %v1683 = vadd.f32 0.0, %v1682
      %v1684 = vpop.f32.mrb[0].mxu0
      %v1685 = vadd.f32 0.0, %v1684
      %v1686 = vpop.f32.mrb[0].mxu0
      %v1687 = vadd.f32 0.0, %v1686
      %v1688 = vpop.f32.mrb[0].mxu0
      %v1689 = vadd.f32 0.0, %v1688
      %1690 = vmatprep.mubr.bf16.mxu0 0
      %1691 = vmatmul.mubr.bf16.gmra.mrb[0].mxu0 %v982
      %v1692 = vpop.f32.mrb[0].mxu0
      %v1693 = vadd.f32 0.0, %v1692
      %v1694 = vpop.f32.mrb[0].mxu0
      %v1695 = vadd.f32 0.0, %v1694
      %v1696 = vpop.f32.mrb[0].mxu0
      %v1697 = vadd.f32 0.0, %v1696
      %v1698 = vpop.f32.mrb[0].mxu0
      %v1699 = vadd.f32 0.0, %v1698
      %1700 = vmatprep.mubr.bf16.mxu0 0
      %1701 = vmatmul.mubr.bf16.gmra.mrb[0].mxu0 %v983
      %v1702 = vpop.f32.mrb[0].mxu0
      %v1703 = vadd.f32 0.0, %v1702
      %v1704 = vpop.f32.mrb[0].mxu0
      %v1705 = vadd.f32 0.0, %v1704
      %v1706 = vpop.f32.mrb[0].mxu0
      %v1707 = vadd.f32 0.0, %v1706
      %v1708 = vpop.f32.mrb[0].mxu0
      %v1709 = vadd.f32 0.0, %v1708
      %1710 = vmatprep.mubr.bf16.mxu0 0
      %1711 = vmatmul.mubr.bf16.gmra.mrb[0].mxu0 %v984
      %v1712 = vpop.f32.mrb[0].mxu0
      %v1713 = vadd.f32 0.0, %v1712
      %v1714 = vpop.f32.mrb[0].mxu0
      %v1715 = vadd.f32 0.0, %v1714
      %v1716 = vpop.f32.mrb[0].mxu0
      %v1717 = vadd.f32 0.0, %v1716
      %v1718 = vpop.f32.mrb[0].mxu0
      %v1719 = vadd.f32 0.0, %v1718
      %1720 = vmatprep.mubr.bf16.mxu0 0
      %1721 = vmatmul.mubr.bf16.gmra.mrb[0].mxu0 %v985
      %v1722 = vpop.f32.mrb[0].mxu0
      %v1723 = vadd.f32 0.0, %v1722
      %v1724 = vpop.f32.mrb[0].mxu0
      %v1725 = vadd.f32 0.0, %v1724
      %v1726 = vpop.f32.mrb[0].mxu0
      %v1727 = vadd.f32 0.0, %v1726
      %v1728 = vpop.f32.mrb[0].mxu0
      %v1729 = vadd.f32 0.0, %v1728
      %1730 = vmatprep.mubr.bf16.mxu0 0
      %1731 = vmatmul.mubr.bf16.gmra.mrb[0].mxu0 %v986
      %v1732 = vpop.f32.mrb[0].mxu0
      %v1733 = vadd.f32 0.0, %v1732
      %v1734 = vpop.f32.mrb[0].mxu0
      %v1735 = vadd.f32 0.0, %v1734
      %v1736 = vpop.f32.mrb[0].mxu0
      %v1737 = vadd.f32 0.0, %v1736
      %v1738 = vpop.f32.mrb[0].mxu0
      %v1739 = vadd.f32 0.0, %v1738
      %1740 = vmatprep.mubr.bf16.mxu0 0
      %1741 = vmatmul.mubr.bf16.gmra.mrb[0].mxu0 %v987
      %v1742 = vpop.f32.mrb[0].mxu0
      %v1743 = vadd.f32 0.0, %v1742
      %v1744 = vpop.f32.mrb[0].mxu0
      %v1745 = vadd.f32 0.0, %v1744
      %v1746 = vpop.f32.mrb[0].mxu0
      %v1747 = vadd.f32 0.0, %v1746
      %v1748 = vpop.f32.mrb[0].mxu0
      %v1749 = vadd.f32 0.0, %v1748
      %1750 = vmatprep.mubr.bf16.mxu0 0
      %1751 = vmatmul.mubr.bf16.gmra.mrb[0].mxu0 %v988
      %v1752 = vpop.f32.mrb[0].mxu0
      %v1753 = vadd.f32 0.0, %v1752
      %v1754 = vpop.f32.mrb[0].mxu0
      %v1755 = vadd.f32 0.0, %v1754
      %v1756 = vpop.f32.mrb[0].mxu0
      %v1757 = vadd.f32 0.0, %v1756
      %v1758 = vpop.f32.mrb[0].mxu0
      %v1759 = vadd.f32 0.0, %v1758
      %1760 = vmatprep.mubr.bf16.mxu0 0
      %1761 = vmatmul.mubr.bf16.gmra.mrb[0].mxu0 %v989
      %v1762 = vpop.f32.mrb[0].mxu0
      %v1763 = vadd.f32 0.0, %v1762
      %v1764 = vpop.f32.mrb[0].mxu0
      %v1765 = vadd.f32 0.0, %v1764
      %v1766 = vpop.f32.mrb[0].mxu0
      %v1767 = vadd.f32 0.0, %v1766
      %v1768 = vpop.f32.mrb[0].mxu0
      %v1769 = vadd.f32 0.0, %v1768
      %1770 = vmatprep.mubr.bf16.mxu0 0
      %1771 = vmatmul.mubr.bf16.gmra.mrb[0].mxu0 %v990
      %v1772 = vpop.f32.mrb[0].mxu0
      %v1773 = vadd.f32 0.0, %v1772
      %v1774 = vpop.f32.mrb[0].mxu0
      %v1775 = vadd.f32 0.0, %v1774
      %v1776 = vpop.f32.mrb[0].mxu0
      %v1777 = vadd.f32 0.0, %v1776
      %v1778 = vpop.f32.mrb[0].mxu0
      %v1779 = vadd.f32 0.0, %v1778
      %1780 = vmatprep.mubr.bf16.mxu0 0
      %1781 = vmatmul.mubr.bf16.gmra.mrb[0].mxu0 %v991
      %v1782 = vpop.f32.mrb[0].mxu0
      %v1783 = vadd.f32 0.0, %v1782
      %v1784 = vpop.f32.mrb[0].mxu0
      %v1785 = vadd.f32 0.0, %v1784
      %v1786 = vpop.f32.mrb[0].mxu0
      %v1787 = vadd.f32 0.0, %v1786
      %v1788 = vpop.f32.mrb[0].mxu0
      %v1789 = vadd.f32 0.0, %v1788
      %1790 = vmatprep.mubr.bf16.mxu0 0
      %1791 = vmatmul.mubr.bf16.gmra.mrb[0].mxu0 %v992
      %v1792 = vpop.f32.mrb[0].mxu0
      %v1793 = vadd.f32 0.0, %v1792
      %v1794 = vpop.f32.mrb[0].mxu0
      %v1795 = vadd.f32 0.0, %v1794
      %v1796 = vpop.f32.mrb[0].mxu0
      %v1797 = vadd.f32 0.0, %v1796
      %v1798 = vpop.f32.mrb[0].mxu0
      %v1799 = vadd.f32 0.0, %v1798
      %1800 = vmatprep.mubr.bf16.mxu0 0
      %1801 = vmatmul.mubr.bf16.gmra.mrb[0].mxu0 %v993
      %v1802 = vpop.f32.mrb[0].mxu0
      %v1803 = vadd.f32 0.0, %v1802
      %v1804 = vpop.f32.mrb[0].mxu0
      %v1805 = vadd.f32 0.0, %v1804
      %v1806 = vpop.f32.mrb[0].mxu0
      %v1807 = vadd.f32 0.0, %v1806
      %v1808 = vpop.f32.mrb[0].mxu0
      %v1809 = vadd.f32 0.0, %v1808
      %1810 = vmatprep.mubr.bf16.mxu0 0
      %1811 = vmatmul.mubr.bf16.gmra.mrb[0].mxu0 %v994
      %v1812 = vpop.f32.mrb[0].mxu0
      %v1813 = vadd.f32 0.0, %v1812
      %v1814 = vpop.f32.mrb[0].mxu0
      %v1815 = vadd.f32 0.0, %v1814
      %v1816 = vpop.f32.mrb[0].mxu0
      %v1817 = vadd.f32 0.0, %v1816
      %v1818 = vpop.f32.mrb[0].mxu0
      %v1819 = vadd.f32 0.0, %v1818
      %1820 = vmatprep.mubr.bf16.mxu0 0
      %1821 = vmatmul.mubr.bf16.gmra.mrb[0].mxu0 %v995
      %v1822 = vpop.f32.mrb[0].mxu0
      %v1823 = vadd.f32 0.0, %v1822
      %v1824 = vpop.f32.mrb[0].mxu0
      %v1825 = vadd.f32 0.0, %v1824
      %v1826 = vpop.f32.mrb[0].mxu0
      %v1827 = vadd.f32 0.0, %v1826
      %v1828 = vpop.f32.mrb[0].mxu0
      %v1829 = vadd.f32 0.0, %v1828
      %1830 = vmatprep.mubr.bf16.mxu0 0
      %1831 = vmatmul.mubr.bf16.gmra.mrb[0].mxu0 %v996
      %v1832 = vpop.f32.mrb[0].mxu0
      %v1833 = vadd.f32 0.0, %v1832
      %v1834 = vpop.f32.mrb[0].mxu0
      %v1835 = vadd.f32 0.0, %v1834
      %v1836 = vpop.f32.mrb[0].mxu0
      %v1837 = vadd.f32 0.0, %v1836
      %v1838 = vpop.f32.mrb[0].mxu0
      %v1839 = vadd.f32 0.0, %v1838
      %1840 = vmatprep.mubr.bf16.mxu0 0
      %1841 = vmatmul.mubr.bf16.gmra.mrb[0].mxu0 %v997
      %v1842 = vpop.f32.mrb[0].mxu0
      %v1843 = vadd.f32 0.0, %v1842
      %v1844 = vpop.f32.mrb[0].mxu0
      %v1845 = vadd.f32 0.0, %v1844
      %v1846 = vpop.f32.mrb[0].mxu0
      %v1847 = vadd.f32 0.0, %v1846
      %v1848 = vpop.f32.mrb[0].mxu0
      %v1849 = vadd.f32 0.0, %v1848
      %1850 = vmatprep.mubr.bf16.mxu0 0
      %1851 = vmatmul.mubr.bf16.gmra.mrb[0].mxu0 %v998
      %v1852 = vpop.f32.mrb[0].mxu0
      %v1853 = vadd.f32 0.0, %v1852
      %v1854 = vpop.f32.mrb[0].mxu0
      %v1855 = vadd.f32 0.0, %v1854
      %v1856 = vpop.f32.mrb[0].mxu0
      %v1857 = vadd.f32 0.0, %v1856
      %v1858 = vpop.f32.mrb[0].mxu0
      %v1859 = vadd.f32 0.0, %v1858
      %1860 = vmatprep.mubr.bf16.mxu0 0
      %1861 = vmatmul.mubr.bf16.gmra.mrb[0].mxu0 %v999
      %v1862 = vpop.f32.mrb[0].mxu0
      %v1863 = vadd.f32 0.0, %v1862
      %v1864 = vpop.f32.mrb[0].mxu0
      %v1865 = vadd.f32 0.0, %v1864
      %v1866 = vpop.f32.mrb[0].mxu0
      %v1867 = vadd.f32 0.0, %v1866
      %v1868 = vpop.f32.mrb[0].mxu0
      %v1869 = vadd.f32 0.0, %v1868
      %1870 = vmatprep.mubr.bf16.mxu0 0
      %1871 = vmatmul.mubr.bf16.gmra.mrb[0].mxu0 %v1000
      %v1872 = vpop.f32.mrb[0].mxu0
      %v1873 = vadd.f32 0.0, %v1872
      %v1874 = vpop.f32.mrb[0].mxu0
      %v1875 = vadd.f32 0.0, %v1874
      %v1876 = vpop.f32.mrb[0].mxu0
      %v1877 = vadd.f32 0.0, %v1876
      %v1878 = vpop.f32.mrb[0].mxu0
      %v1879 = vadd.f32 0.0, %v1878
      %1880 = vmatprep.mubr.bf16.mxu0 0
      %1881 = vmatmul.mubr.bf16.gmra.mrb[0].mxu0 %v1001
      %v1882 = vpop.f32.mrb[0].mxu0
      %v1883 = vadd.f32 0.0, %v1882
      %v1884 = vpop.f32.mrb[0].mxu0
      %v1885 = vadd.f32 0.0, %v1884
      %v1886 = vpop.f32.mrb[0].mxu0
      %v1887 = vadd.f32 0.0, %v1886
      %v1888 = vpop.f32.mrb[0].mxu0
      %v1889 = vadd.f32 0.0, %v1888
      %1890 = vmatprep.mubr.bf16.mxu0 0
      %1891 = vmatmul.mubr.bf16.gmra.mrb[0].mxu0 %v1002
      %v1892 = vpop.f32.mrb[0].mxu0
      %v1893 = vadd.f32 0.0, %v1892
      %v1894 = vpop.f32.mrb[0].mxu0
      %v1895 = vadd.f32 0.0, %v1894
      %v1896 = vpop.f32.mrb[0].mxu0
      %v1897 = vadd.f32 0.0, %v1896
      %v1898 = vpop.f32.mrb[0].mxu0
      %v1899 = vadd.f32 0.0, %v1898
      %1900 = vdwg.mxu0
      %v1901 = vpack.c.bf16 %v1234, %v1230
      %v1902 = vpack.c.bf16 %v1236, %v1232
      %v1903 = vpack.c.bf16 %v1587, %v1583
      %v1904 = vpack.c.bf16 %v1589, %v1585
      %v1905 = vpack.c.bf16 %v1244, %v1240
      %v1906 = vpack.c.bf16 %v1246, %v1242
      %v1907 = vpack.c.bf16 %v1597, %v1593
      %v1908 = vpack.c.bf16 %v1599, %v1595
      %v1909 = vpack.c.bf16 %v1254, %v1250
      %v1910 = vpack.c.bf16 %v1256, %v1252
      %v1911 = vpack.c.bf16 %v1607, %v1603
      %v1912 = vpack.c.bf16 %v1609, %v1605
      %v1913 = vpack.c.bf16 %v1264, %v1260
      %v1914 = vpack.c.bf16 %v1266, %v1262
      %v1915 = vpack.c.bf16 %v1617, %v1613
      %v1916 = vpack.c.bf16 %v1619, %v1615
      %v1917 = vpack.c.bf16 %v1274, %v1270
      %v1918 = vpack.c.bf16 %v1276, %v1272
      %v1919 = vpack.c.bf16 %v1627, %v1623
      %v1920 = vpack.c.bf16 %v1629, %v1625
      %v1921 = vpack.c.bf16 %v1284, %v1280
      %v1922 = vpack.c.bf16 %v1286, %v1282
      %v1923 = vpack.c.bf16 %v1637, %v1633
      %v1924 = vpack.c.bf16 %v1639, %v1635
      %v1925 = vpack.c.bf16 %v1294, %v1290
      %v1926 = vpack.c.bf16 %v1296, %v1292
      %v1927 = vpack.c.bf16 %v1647, %v1643
      %v1928 = vpack.c.bf16 %v1649, %v1645
      %v1929 = vpack.c.bf16 %v1304, %v1300
      %v1930 = vpack.c.bf16 %v1306, %v1302
      %v1931 = vpack.c.bf16 %v1657, %v1653
      %v1932 = vpack.c.bf16 %v1659, %v1655
      %v1933 = vpack.c.bf16 %v1314, %v1310
      %v1934 = vpack.c.bf16 %v1316, %v1312
      %v1935 = vpack.c.bf16 %v1667, %v1663
      %v1936 = vpack.c.bf16 %v1669, %v1665
      %v1937 = vpack.c.bf16 %v1324, %v1320
      %v1938 = vpack.c.bf16 %v1326, %v1322
      %v1939 = vpack.c.bf16 %v1677, %v1673
      %v1940 = vpack.c.bf16 %v1679, %v1675
      %v1941 = vpack.c.bf16 %v1334, %v1330
      %v1942 = vpack.c.bf16 %v1336, %v1332
      %v1943 = vpack.c.bf16 %v1687, %v1683
      %v1944 = vpack.c.bf16 %v1689, %v1685
      %v1945 = vpack.c.bf16 %v1344, %v1340
      %v1946 = vpack.c.bf16 %v1346, %v1342
      %v1947 = vpack.c.bf16 %v1697, %v1693
      %v1948 = vpack.c.bf16 %v1699, %v1695
      %v1949 = vpack.c.bf16 %v1354, %v1350
      %v1950 = vpack.c.bf16 %v1356, %v1352
      %v1951 = vpack.c.bf16 %v1707, %v1703
      %v1952 = vpack.c.bf16 %v1709, %v1705
      %v1953 = vpack.c.bf16 %v1364, %v1360
      %v1954 = vpack.c.bf16 %v1366, %v1362
      %v1955 = vpack.c.bf16 %v1717, %v1713
      %v1956 = vpack.c.bf16 %v1719, %v1715
      %v1957 = vpack.c.bf16 %v1374, %v1370
      %v1958 = vpack.c.bf16 %v1376, %v1372
      %v1959 = vpack.c.bf16 %v1727, %v1723
      %v1960 = vpack.c.bf16 %v1729, %v1725
      %v1961 = vpack.c.bf16 %v1384, %v1380
      %v1962 = vpack.c.bf16 %v1386, %v1382
      %v1963 = vpack.c.bf16 %v1737, %v1733
      %v1964 = vpack.c.bf16 %v1739, %v1735
      %v1965 = vpack.c.bf16 %v1394, %v1390
      %v1966 = vpack.c.bf16 %v1396, %v1392
      %v1967 = vpack.c.bf16 %v1747, %v1743
      %v1968 = vpack.c.bf16 %v1749, %v1745
      %v1969 = vpack.c.bf16 %v1404, %v1400
      %v1970 = vpack.c.bf16 %v1406, %v1402
      %v1971 = vpack.c.bf16 %v1757, %v1753
      %v1972 = vpack.c.bf16 %v1759, %v1755
      %v1973 = vpack.c.bf16 %v1414, %v1410
      %v1974 = vpack.c.bf16 %v1416, %v1412
      %v1975 = vpack.c.bf16 %v1767, %v1763
      %v1976 = vpack.c.bf16 %v1769, %v1765
      %v1977 = vpack.c.bf16 %v1424, %v1420
      %v1978 = vpack.c.bf16 %v1426, %v1422
      %v1979 = vpack.c.bf16 %v1777, %v1773
      %v1980 = vpack.c.bf16 %v1779, %v1775
      %v1981 = vpack.c.bf16 %v1434, %v1430
      %v1982 = vpack.c.bf16 %v1436, %v1432
      %v1983 = vpack.c.bf16 %v1787, %v1783
      %v1984 = vpack.c.bf16 %v1789, %v1785
      %v1985 = vpack.c.bf16 %v1444, %v1440
      %v1986 = vpack.c.bf16 %v1446, %v1442
      %v1987 = vpack.c.bf16 %v1797, %v1793
      %v1988 = vpack.c.bf16 %v1799, %v1795
      %v1989 = vpack.c.bf16 %v1454, %v1450
      %v1990 = vpack.c.bf16 %v1456, %v1452
      %v1991 = vpack.c.bf16 %v1807, %v1803
      %v1992 = vpack.c.bf16 %v1809, %v1805
      %v1993 = vpack.c.bf16 %v1464, %v1460
      %v1994 = vpack.c.bf16 %v1466, %v1462
      %v1995 = vpack.c.bf16 %v1817, %v1813
      %v1996 = vpack.c.bf16 %v1819, %v1815
      %v1997 = vpack.c.bf16 %v1474, %v1470
      %v1998 = vpack.c.bf16 %v1476, %v1472
      %v1999 = vpack.c.bf16 %v1827, %v1823
      %v2000 = vpack.c.bf16 %v1829, %v1825
      %v2001 = vpack.c.bf16 %v1484, %v1480
      %v2002 = vpack.c.bf16 %v1486, %v1482
      %v2003 = vpack.c.bf16 %v1837, %v1833
      %v2004 = vpack.c.bf16 %v1839, %v1835
      %v2005 = vpack.c.bf16 %v1494, %v1490
      %v2006 = vpack.c.bf16 %v1496, %v1492
      %v2007 = vpack.c.bf16 %v1847, %v1843
      %v2008 = vpack.c.bf16 %v1849, %v1845
      %v2009 = vpack.c.bf16 %v1504, %v1500
      %v2010 = vpack.c.bf16 %v1506, %v1502
      %v2011 = vpack.c.bf16 %v1857, %v1853
      %v2012 = vpack.c.bf16 %v1859, %v1855
      %v2013 = vpack.c.bf16 %v1514, %v1510
      %v2014 = vpack.c.bf16 %v1516, %v1512
      %v2015 = vpack.c.bf16 %v1867, %v1863
      %v2016 = vpack.c.bf16 %v1869, %v1865
      %v2017 = vpack.c.bf16 %v1524, %v1520
      %v2018 = vpack.c.bf16 %v1526, %v1522
      %v2019 = vpack.c.bf16 %v1877, %v1873
      %v2020 = vpack.c.bf16 %v1879, %v1875
      %v2021 = vpack.c.bf16 %v1534, %v1530
      %v2022 = vpack.c.bf16 %v1536, %v1532
      %v2023 = vpack.c.bf16 %v1887, %v1883
      %v2024 = vpack.c.bf16 %v1889, %v1885
      %v2025 = vpack.c.bf16 %v1544, %v1540
      %v2026 = vpack.c.bf16 %v1546, %v1542
      %v2027 = vpack.c.bf16 %v1897, %v1893
      %v2028 = vpack.c.bf16 %v1899, %v1895
      %v2029 = vld [vmem:[%s3] sm:$0xff]
      %v2030 = vld [vmem:[%s3 + $0x8] sm:$0xff]
      %v2031 = vld [vmem:[%s3 + $0x10] sm:$0xff]
      %v2032 = vld [vmem:[%s3 + $0x18] sm:$0xff]
      %v2033 = vld [vmem:[%s3 + $0x20] sm:$0xff]
      %v2034 = vld [vmem:[%s3 + $0x28] sm:$0xff]
      %v2035 = vld [vmem:[%s3 + $0x30] sm:$0xff]
      %v2036 = vld [vmem:[%s3 + $0x38] sm:$0xff]
      %v2037 = vld [vmem:[%s3 + $0x40] sm:$0xff]
      %v2038 = vld [vmem:[%s3 + $0x48] sm:$0xff]
      %v2039 = vld [vmem:[%s3 + $0x50] sm:$0xff]
      %v2040 = vld [vmem:[%s3 + $0x58] sm:$0xff]
      %v2041 = vld [vmem:[%s3 + $0x60] sm:$0xff]
      %v2042 = vld [vmem:[%s3 + $0x68] sm:$0xff]
      %v2043 = vld [vmem:[%s3 + $0x70] sm:$0xff]
      %v2044 = vld [vmem:[%s3 + $0x78] sm:$0xff]
      %v2045 = vld [vmem:[%s3 + $0x80] sm:$0xff]
      %v2046 = vld [vmem:[%s3 + $0x88] sm:$0xff]
      %v2047 = vld [vmem:[%s3 + $0x90] sm:$0xff]
      %v2048 = vld [vmem:[%s3 + $0x98] sm:$0xff]
      %v2049 = vld [vmem:[%s3 + $0xa0] sm:$0xff]
      %v2050 = vld [vmem:[%s3 + $0xa8] sm:$0xff]
      %v2051 = vld [vmem:[%s3 + $0xb0] sm:$0xff]
      %v2052 = vld [vmem:[%s3 + $0xb8] sm:$0xff]
      %v2053 = vld [vmem:[%s3 + $0xc0] sm:$0xff]
      %v2054 = vld [vmem:[%s3 + $0xc8] sm:$0xff]
      %v2055 = vld [vmem:[%s3 + $0xd0] sm:$0xff]
      %v2056 = vld [vmem:[%s3 + $0xd8] sm:$0xff]
      %v2057 = vld [vmem:[%s3 + $0xe0] sm:$0xff]
      %v2058 = vld [vmem:[%s3 + $0xe8] sm:$0xff]
      %v2059 = vld [vmem:[%s3 + $0xf0] sm:$0xff]
      %v2060 = vld [vmem:[%s3 + $0xf8] sm:$0xff]
      %v2061 = vld [vmem:[%s3 + $0x100] sm:$0xff]
      %v2062 = vld [vmem:[%s3 + $0x108] sm:$0xff]
      %v2063 = vld [vmem:[%s3 + $0x110] sm:$0xff]
      %v2064 = vld [vmem:[%s3 + $0x118] sm:$0xff]
      %v2065 = vld [vmem:[%s3 + $0x120] sm:$0xff]
      %v2066 = vld [vmem:[%s3 + $0x128] sm:$0xff]
      %v2067 = vld [vmem:[%s3 + $0x130] sm:$0xff]
      %v2068 = vld [vmem:[%s3 + $0x138] sm:$0xff]
      %v2069 = vld [vmem:[%s3 + $0x140] sm:$0xff]
      %v2070 = vld [vmem:[%s3 + $0x148] sm:$0xff]
      %v2071 = vld [vmem:[%s3 + $0x150] sm:$0xff]
      %v2072 = vld [vmem:[%s3 + $0x158] sm:$0xff]
      %v2073 = vld [vmem:[%s3 + $0x160] sm:$0xff]
      %v2074 = vld [vmem:[%s3 + $0x168] sm:$0xff]
      %v2075 = vld [vmem:[%s3 + $0x170] sm:$0xff]
      %v2076 = vld [vmem:[%s3 + $0x178] sm:$0xff]
      %v2077 = vld [vmem:[%s3 + $0x180] sm:$0xff]
      %v2078 = vld [vmem:[%s3 + $0x188] sm:$0xff]
      %v2079 = vld [vmem:[%s3 + $0x190] sm:$0xff]
      %v2080 = vld [vmem:[%s3 + $0x198] sm:$0xff]
      %v2081 = vld [vmem:[%s3 + $0x1a0] sm:$0xff]
      %v2082 = vld [vmem:[%s3 + $0x1a8] sm:$0xff]
      %v2083 = vld [vmem:[%s3 + $0x1b0] sm:$0xff]
      %v2084 = vld [vmem:[%s3 + $0x1b8] sm:$0xff]
      %v2085 = vld [vmem:[%s3 + $0x1c0] sm:$0xff]
      %v2086 = vld [vmem:[%s3 + $0x1c8] sm:$0xff]
      %v2087 = vld [vmem:[%s3 + $0x1d0] sm:$0xff]
      %v2088 = vld [vmem:[%s3 + $0x1d8] sm:$0xff]
      %v2089 = vld [vmem:[%s3 + $0x1e0] sm:$0xff]
      %v2090 = vld [vmem:[%s3 + $0x1e8] sm:$0xff]
      %v2091 = vld [vmem:[%s3 + $0x1f0] sm:$0xff]
      %v2092 = vld [vmem:[%s3 + $0x1f8] sm:$0xff]
      %v2093 = vld [vmem:[%s4] sm:$0x3]
      %v2095 = vlaneseq
      %v2096 = vshrl.u32 %v2095, 7
      %v2097 = vsub.s32 0, %v2096
      %v2098 = vrot.slane %v2093, %v2097
      %v2099 = vlaneseq
      %v2100 = vshrl.u32 %v2099, 7
      %v2101 = vsub.s32 1, %v2100
      %v2102 = vrot.slane %v2093, %v2101
      %v2169 = vunpack.c.l.b16 %v2029
      %v2170 = vunpack.c.h.b16 %v2029
      %v2171 = vunpack.c.l.b16 %v2030
      %v2172 = vunpack.c.h.b16 %v2030
      %v2173 = vunpack.c.l.b16 %v2031
      %v2174 = vunpack.c.h.b16 %v2031
      %v2175 = vunpack.c.l.b16 %v2032
      %v2176 = vunpack.c.h.b16 %v2032
      %v2177 = vunpack.c.l.b16 %v2033
      %v2178 = vunpack.c.h.b16 %v2033
      %v2179 = vunpack.c.l.b16 %v2034
      %v2180 = vunpack.c.h.b16 %v2034
      %v2181 = vunpack.c.l.b16 %v2035
      %v2182 = vunpack.c.h.b16 %v2035
      %v2183 = vunpack.c.l.b16 %v2036
      %v2184 = vunpack.c.h.b16 %v2036
      %v2185 = vunpack.c.l.b16 %v2037
      %v2186 = vunpack.c.h.b16 %v2037
      %v2187 = vunpack.c.l.b16 %v2038
      %v2188 = vunpack.c.h.b16 %v2038
      %v2189 = vunpack.c.l.b16 %v2039
      %v2190 = vunpack.c.h.b16 %v2039
      %v2191 = vunpack.c.l.b16 %v2040
      %v2192 = vunpack.c.h.b16 %v2040
      %v2193 = vunpack.c.l.b16 %v2041
      %v2194 = vunpack.c.h.b16 %v2041
      %v2195 = vunpack.c.l.b16 %v2042
      %v2196 = vunpack.c.h.b16 %v2042
      %v2197 = vunpack.c.l.b16 %v2043
      %v2198 = vunpack.c.h.b16 %v2043
      %v2199 = vunpack.c.l.b16 %v2044
      %v2200 = vunpack.c.h.b16 %v2044
      %v2201 = vunpack.c.l.b16 %v2045
      %v2202 = vunpack.c.h.b16 %v2045
      %v2203 = vunpack.c.l.b16 %v2046
      %v2204 = vunpack.c.h.b16 %v2046
      %v2205 = vunpack.c.l.b16 %v2047
      %v2206 = vunpack.c.h.b16 %v2047
      %v2207 = vunpack.c.l.b16 %v2048
      %v2208 = vunpack.c.h.b16 %v2048
      %v2209 = vunpack.c.l.b16 %v2049
      %v2210 = vunpack.c.h.b16 %v2049
      %v2211 = vunpack.c.l.b16 %v2050
      %v2212 = vunpack.c.h.b16 %v2050
      %v2213 = vunpack.c.l.b16 %v2051
      %v2214 = vunpack.c.h.b16 %v2051
      %v2215 = vunpack.c.l.b16 %v2052
      %v2216 = vunpack.c.h.b16 %v2052
      %v2217 = vunpack.c.l.b16 %v2053
      %v2218 = vunpack.c.h.b16 %v2053
      %v2219 = vunpack.c.l.b16 %v2054
      %v2220 = vunpack.c.h.b16 %v2054
      %v2221 = vunpack.c.l.b16 %v2055
      %v2222 = vunpack.c.h.b16 %v2055
      %v2223 = vunpack.c.l.b16 %v2056
      %v2224 = vunpack.c.h.b16 %v2056
      %v2225 = vunpack.c.l.b16 %v2057
      %v2226 = vunpack.c.h.b16 %v2057
      %v2227 = vunpack.c.l.b16 %v2058
      %v2228 = vunpack.c.h.b16 %v2058
      %v2229 = vunpack.c.l.b16 %v2059
      %v2230 = vunpack.c.h.b16 %v2059
      %v2231 = vunpack.c.l.b16 %v2060
      %v2232 = vunpack.c.h.b16 %v2060
      %v2233 = vunpack.c.l.b16 %v2061
      %v2234 = vunpack.c.h.b16 %v2061
      %v2235 = vunpack.c.l.b16 %v2062
      %v2236 = vunpack.c.h.b16 %v2062
      %v2237 = vunpack.c.l.b16 %v2063
      %v2238 = vunpack.c.h.b16 %v2063
      %v2239 = vunpack.c.l.b16 %v2064
      %v2240 = vunpack.c.h.b16 %v2064
      %v2241 = vunpack.c.l.b16 %v2065
      %v2242 = vunpack.c.h.b16 %v2065
      %v2243 = vunpack.c.l.b16 %v2066
      %v2244 = vunpack.c.h.b16 %v2066
      %v2245 = vunpack.c.l.b16 %v2067
      %v2246 = vunpack.c.h.b16 %v2067
      %v2247 = vunpack.c.l.b16 %v2068
      %v2248 = vunpack.c.h.b16 %v2068
      %v2249 = vunpack.c.l.b16 %v2069
      %v2250 = vunpack.c.h.b16 %v2069
      %v2251 = vunpack.c.l.b16 %v2070
      %v2252 = vunpack.c.h.b16 %v2070
      %v2253 = vunpack.c.l.b16 %v2071
      %v2254 = vunpack.c.h.b16 %v2071
      %v2255 = vunpack.c.l.b16 %v2072
      %v2256 = vunpack.c.h.b16 %v2072
      %v2257 = vunpack.c.l.b16 %v2073
      %v2258 = vunpack.c.h.b16 %v2073
      %v2259 = vunpack.c.l.b16 %v2074
      %v2260 = vunpack.c.h.b16 %v2074
      %v2261 = vunpack.c.l.b16 %v2075
      %v2262 = vunpack.c.h.b16 %v2075
      %v2263 = vunpack.c.l.b16 %v2076
      %v2264 = vunpack.c.h.b16 %v2076
      %v2265 = vunpack.c.l.b16 %v2077
      %v2266 = vunpack.c.h.b16 %v2077
      %v2267 = vunpack.c.l.b16 %v2078
      %v2268 = vunpack.c.h.b16 %v2078
      %v2269 = vunpack.c.l.b16 %v2079
      %v2270 = vunpack.c.h.b16 %v2079
      %v2271 = vunpack.c.l.b16 %v2080
      %v2272 = vunpack.c.h.b16 %v2080
      %v2273 = vunpack.c.l.b16 %v2081
      %v2274 = vunpack.c.h.b16 %v2081
      %v2275 = vunpack.c.l.b16 %v2082
      %v2276 = vunpack.c.h.b16 %v2082
      %v2277 = vunpack.c.l.b16 %v2083
      %v2278 = vunpack.c.h.b16 %v2083
      %v2279 = vunpack.c.l.b16 %v2084
      %v2280 = vunpack.c.h.b16 %v2084
      %v2281 = vunpack.c.l.b16 %v2085
      %v2282 = vunpack.c.h.b16 %v2085
      %v2283 = vunpack.c.l.b16 %v2086
      %v2284 = vunpack.c.h.b16 %v2086
      %v2285 = vunpack.c.l.b16 %v2087
      %v2286 = vunpack.c.h.b16 %v2087
      %v2287 = vunpack.c.l.b16 %v2088
      %v2288 = vunpack.c.h.b16 %v2088
      %v2289 = vunpack.c.l.b16 %v2089
      %v2290 = vunpack.c.h.b16 %v2089
      %v2291 = vunpack.c.l.b16 %v2090
      %v2292 = vunpack.c.h.b16 %v2090
      %v2293 = vunpack.c.l.b16 %v2091
      %v2294 = vunpack.c.h.b16 %v2091
      %v2295 = vunpack.c.l.b16 %v2092
      %v2296 = vunpack.c.h.b16 %v2092
      %v2297 = vpack.c.b16 %v2171, %v2169
      %v2298 = vpack.c.b16 %v2172, %v2170
      %v2299 = vpack.c.b16 %v2175, %v2173
      %v2300 = vpack.c.b16 %v2176, %v2174
      %v2301 = vpack.c.b16 %v2179, %v2177
      %v2302 = vpack.c.b16 %v2180, %v2178
      %v2303 = vpack.c.b16 %v2183, %v2181
      %v2304 = vpack.c.b16 %v2184, %v2182
      %v2305 = vpack.c.b16 %v2187, %v2185
      %v2306 = vpack.c.b16 %v2188, %v2186
      %v2307 = vpack.c.b16 %v2191, %v2189
      %v2308 = vpack.c.b16 %v2192, %v2190
      %v2309 = vpack.c.b16 %v2195, %v2193
      %v2310 = vpack.c.b16 %v2196, %v2194
      %v2311 = vpack.c.b16 %v2199, %v2197
      %v2312 = vpack.c.b16 %v2200, %v2198
      %v2313 = vpack.c.b16 %v2203, %v2201
      %v2314 = vpack.c.b16 %v2204, %v2202
      %v2315 = vpack.c.b16 %v2207, %v2205
      %v2316 = vpack.c.b16 %v2208, %v2206
      %v2317 = vpack.c.b16 %v2211, %v2209
      %v2318 = vpack.c.b16 %v2212, %v2210
      %v2319 = vpack.c.b16 %v2215, %v2213
      %v2320 = vpack.c.b16 %v2216, %v2214
      %v2321 = vpack.c.b16 %v2219, %v2217
      %v2322 = vpack.c.b16 %v2220, %v2218
      %v2323 = vpack.c.b16 %v2223, %v2221
      %v2324 = vpack.c.b16 %v2224, %v2222
      %v2325 = vpack.c.b16 %v2227, %v2225
      %v2326 = vpack.c.b16 %v2228, %v2226
      %v2327 = vpack.c.b16 %v2231, %v2229
      %v2328 = vpack.c.b16 %v2232, %v2230
      %v2329 = vpack.c.b16 %v2235, %v2233
      %v2330 = vpack.c.b16 %v2236, %v2234
      %v2331 = vpack.c.b16 %v2239, %v2237
      %v2332 = vpack.c.b16 %v2240, %v2238
      %v2333 = vpack.c.b16 %v2243, %v2241
      %v2334 = vpack.c.b16 %v2244, %v2242
      %v2335 = vpack.c.b16 %v2247, %v2245
      %v2336 = vpack.c.b16 %v2248, %v2246
      %v2337 = vpack.c.b16 %v2251, %v2249
      %v2338 = vpack.c.b16 %v2252, %v2250
      %v2339 = vpack.c.b16 %v2255, %v2253
      %v2340 = vpack.c.b16 %v2256, %v2254
      %v2341 = vpack.c.b16 %v2259, %v2257
      %v2342 = vpack.c.b16 %v2260, %v2258
      %v2343 = vpack.c.b16 %v2263, %v2261
      %v2344 = vpack.c.b16 %v2264, %v2262
      %v2345 = vpack.c.b16 %v2267, %v2265
      %v2346 = vpack.c.b16 %v2268, %v2266
      %v2347 = vpack.c.b16 %v2271, %v2269
      %v2348 = vpack.c.b16 %v2272, %v2270
      %v2349 = vpack.c.b16 %v2275, %v2273
      %v2350 = vpack.c.b16 %v2276, %v2274
      %v2351 = vpack.c.b16 %v2279, %v2277
      %v2352 = vpack.c.b16 %v2280, %v2278
      %v2353 = vpack.c.b16 %v2283, %v2281
      %v2354 = vpack.c.b16 %v2284, %v2282
      %v2355 = vpack.c.b16 %v2287, %v2285
      %v2356 = vpack.c.b16 %v2288, %v2286
      %v2357 = vpack.c.b16 %v2291, %v2289
      %v2358 = vpack.c.b16 %v2292, %v2290
      %v2359 = vpack.c.b16 %v2295, %v2293
      %v2360 = vpack.c.b16 %v2296, %v2294
      %2425 = vmatprep.subr.bf16.mxu0 %v2298
      %2426 = vmatpush1.bf16.msra.mxu0 %v2297
      %2427 = vmatprep.subr.bf16.mxu0 %v2300
      %2428 = vmatpush1.bf16.msra.mxu0 %v2299
      %2429 = vmatprep.subr.bf16.mxu0 %v2302
      %2430 = vmatpush1.bf16.msra.mxu0 %v2301
      %2431 = vmatprep.subr.bf16.mxu0 %v2304
      %2432 = vmatpush1.bf16.msra.mxu0 %v2303
      %2433 = vmatprep.subr.bf16.mxu0 %v2306
      %2434 = vmatpush1.bf16.msra.mxu0 %v2305
      %2435 = vmatprep.subr.bf16.mxu0 %v2308
      %2436 = vmatpush1.bf16.msra.mxu0 %v2307
      %2437 = vmatprep.subr.bf16.mxu0 %v2310
      %2438 = vmatpush1.bf16.msra.mxu0 %v2309
      %2439 = vmatprep.subr.bf16.mxu0 %v2312
      %2440 = vmatpush1.bf16.msra.mxu0 %v2311
      %2441 = vmatprep.subr.bf16.mxu0 %v2314
      %2442 = vmatpush1.bf16.msra.mxu0 %v2313
      %2443 = vmatprep.subr.bf16.mxu0 %v2316
      %2444 = vmatpush1.bf16.msra.mxu0 %v2315
      %2445 = vmatprep.subr.bf16.mxu0 %v2318
      %2446 = vmatpush1.bf16.msra.mxu0 %v2317
      %2447 = vmatprep.subr.bf16.mxu0 %v2320
      %2448 = vmatpush1.bf16.msra.mxu0 %v2319
      %2449 = vmatprep.subr.bf16.mxu0 %v2322
      %2450 = vmatpush1.bf16.msra.mxu0 %v2321
      %2451 = vmatprep.subr.bf16.mxu0 %v2324
      %2452 = vmatpush1.bf16.msra.mxu0 %v2323
      %2453 = vmatprep.subr.bf16.mxu0 %v2326
      %2454 = vmatpush1.bf16.msra.mxu0 %v2325
      %2455 = vmatprep.subr.bf16.mxu0 %v2328
      %2456 = vmatpush1.bf16.msra.mxu0 %v2327
      %2457 = vmatprep.mubr.bf16.mxu0 %v1902
      %2458 = vmatmul.mubr.bf16.gmra.mrb[0].mxu0 %v1901
      %v2459 = vpop.f32.mrb[0].mxu0
      %v2460 = vadd.f32 %v2098, %v2459
      %v2461 = vpop.f32.mrb[0].mxu0
      %v2462 = vadd.f32 %v2102, %v2461
      %v2463 = vpop.f32.mrb[0].mxu0
      %v2464 = vadd.f32 %v2098, %v2463
      %v2465 = vpop.f32.mrb[0].mxu0
      %v2466 = vadd.f32 %v2102, %v2465
      %2467 = vmatprep.mubr.bf16.mxu0 %v1906
      %2468 = vmatmul.mubr.bf16.gmra.mrb[0].mxu0 %v1905
      %v2469 = vpop.f32.mrb[0].mxu0
      %v2470 = vadd.f32 %v2098, %v2469
      %v2471 = vpop.f32.mrb[0].mxu0
      %v2472 = vadd.f32 %v2102, %v2471
      %v2473 = vpop.f32.mrb[0].mxu0
      %v2474 = vadd.f32 %v2098, %v2473
      %v2475 = vpop.f32.mrb[0].mxu0
      %v2476 = vadd.f32 %v2102, %v2475
      %2477 = vmatprep.mubr.bf16.mxu0 %v1910
      %2478 = vmatmul.mubr.bf16.gmra.mrb[0].mxu0 %v1909
      %v2479 = vpop.f32.mrb[0].mxu0
      %v2480 = vadd.f32 %v2098, %v2479
      %v2481 = vpop.f32.mrb[0].mxu0
      %v2482 = vadd.f32 %v2102, %v2481
      %v2483 = vpop.f32.mrb[0].mxu0
      %v2484 = vadd.f32 %v2098, %v2483
      %v2485 = vpop.f32.mrb[0].mxu0
      %v2486 = vadd.f32 %v2102, %v2485
      %2487 = vmatprep.mubr.bf16.mxu0 %v1914
      %2488 = vmatmul.mubr.bf16.gmra.mrb[0].mxu0 %v1913
      %v2489 = vpop.f32.mrb[0].mxu0
      %v2490 = vadd.f32 %v2098, %v2489
      %v2491 = vpop.f32.mrb[0].mxu0
      %v2492 = vadd.f32 %v2102, %v2491
      %v2493 = vpop.f32.mrb[0].mxu0
      %v2494 = vadd.f32 %v2098, %v2493
      %v2495 = vpop.f32.mrb[0].mxu0
      %v2496 = vadd.f32 %v2102, %v2495
      %2497 = vmatprep.mubr.bf16.mxu0 %v1918
      %2498 = vmatmul.mubr.bf16.gmra.mrb[0].mxu0 %v1917
      %v2499 = vpop.f32.mrb[0].mxu0
      %v2500 = vadd.f32 %v2098, %v2499
      %v2501 = vpop.f32.mrb[0].mxu0
      %v2502 = vadd.f32 %v2102, %v2501
      %v2503 = vpop.f32.mrb[0].mxu0
      %v2504 = vadd.f32 %v2098, %v2503
      %v2505 = vpop.f32.mrb[0].mxu0
      %v2506 = vadd.f32 %v2102, %v2505
      %2507 = vmatprep.mubr.bf16.mxu0 %v1922
      %2508 = vmatmul.mubr.bf16.gmra.mrb[0].mxu0 %v1921
      %v2509 = vpop.f32.mrb[0].mxu0
      %v2510 = vadd.f32 %v2098, %v2509
      %v2511 = vpop.f32.mrb[0].mxu0
      %v2512 = vadd.f32 %v2102, %v2511
      %v2513 = vpop.f32.mrb[0].mxu0
      %v2514 = vadd.f32 %v2098, %v2513
      %v2515 = vpop.f32.mrb[0].mxu0
      %v2516 = vadd.f32 %v2102, %v2515
      %2517 = vmatprep.mubr.bf16.mxu0 %v1926
      %2518 = vmatmul.mubr.bf16.gmra.mrb[0].mxu0 %v1925
      %v2519 = vpop.f32.mrb[0].mxu0
      %v2520 = vadd.f32 %v2098, %v2519
      %v2521 = vpop.f32.mrb[0].mxu0
      %v2522 = vadd.f32 %v2102, %v2521
      %v2523 = vpop.f32.mrb[0].mxu0
      %v2524 = vadd.f32 %v2098, %v2523
      %v2525 = vpop.f32.mrb[0].mxu0
      %v2526 = vadd.f32 %v2102, %v2525
      %2527 = vmatprep.mubr.bf16.mxu0 %v1930
      %2528 = vmatmul.mubr.bf16.gmra.mrb[0].mxu0 %v1929
      %v2529 = vpop.f32.mrb[0].mxu0
      %v2530 = vadd.f32 %v2098, %v2529
      %v2531 = vpop.f32.mrb[0].mxu0
      %v2532 = vadd.f32 %v2102, %v2531
      %v2533 = vpop.f32.mrb[0].mxu0
      %v2534 = vadd.f32 %v2098, %v2533
      %v2535 = vpop.f32.mrb[0].mxu0
      %v2536 = vadd.f32 %v2102, %v2535
      %2537 = vmatprep.mubr.bf16.mxu0 %v1934
      %2538 = vmatmul.mubr.bf16.gmra.mrb[0].mxu0 %v1933
      %v2539 = vpop.f32.mrb[0].mxu0
      %v2540 = vadd.f32 %v2098, %v2539
      %v2541 = vpop.f32.mrb[0].mxu0
      %v2542 = vadd.f32 %v2102, %v2541
      %v2543 = vpop.f32.mrb[0].mxu0
      %v2544 = vadd.f32 %v2098, %v2543
      %v2545 = vpop.f32.mrb[0].mxu0
      %v2546 = vadd.f32 %v2102, %v2545
      %2547 = vmatprep.mubr.bf16.mxu0 %v1938
      %2548 = vmatmul.mubr.bf16.gmra.mrb[0].mxu0 %v1937
      %v2549 = vpop.f32.mrb[0].mxu0
      %v2550 = vadd.f32 %v2098, %v2549
      %v2551 = vpop.f32.mrb[0].mxu0
      %v2552 = vadd.f32 %v2102, %v2551
      %v2553 = vpop.f32.mrb[0].mxu0
      %v2554 = vadd.f32 %v2098, %v2553
      %v2555 = vpop.f32.mrb[0].mxu0
      %v2556 = vadd.f32 %v2102, %v2555
      %2557 = vmatprep.mubr.bf16.mxu0 %v1942
      %2558 = vmatmul.mubr.bf16.gmra.mrb[0].mxu0 %v1941
      %v2559 = vpop.f32.mrb[0].mxu0
      %v2560 = vadd.f32 %v2098, %v2559
      %v2561 = vpop.f32.mrb[0].mxu0
      %v2562 = vadd.f32 %v2102, %v2561
      %v2563 = vpop.f32.mrb[0].mxu0
      %v2564 = vadd.f32 %v2098, %v2563
      %v2565 = vpop.f32.mrb[0].mxu0
      %v2566 = vadd.f32 %v2102, %v2565
      %2567 = vmatprep.mubr.bf16.mxu0 %v1946
      %2568 = vmatmul.mubr.bf16.gmra.mrb[0].mxu0 %v1945
      %v2569 = vpop.f32.mrb[0].mxu0
      %v2570 = vadd.f32 %v2098, %v2569
      %v2571 = vpop.f32.mrb[0].mxu0
      %v2572 = vadd.f32 %v2102, %v2571
      %v2573 = vpop.f32.mrb[0].mxu0
      %v2574 = vadd.f32 %v2098, %v2573
      %v2575 = vpop.f32.mrb[0].mxu0
      %v2576 = vadd.f32 %v2102, %v2575
      %2577 = vmatprep.mubr.bf16.mxu0 %v1950
      %2578 = vmatmul.mubr.bf16.gmra.mrb[0].mxu0 %v1949
      %v2579 = vpop.f32.mrb[0].mxu0
      %v2580 = vadd.f32 %v2098, %v2579
      %v2581 = vpop.f32.mrb[0].mxu0
      %v2582 = vadd.f32 %v2102, %v2581
      %v2583 = vpop.f32.mrb[0].mxu0
      %v2584 = vadd.f32 %v2098, %v2583
      %v2585 = vpop.f32.mrb[0].mxu0
      %v2586 = vadd.f32 %v2102, %v2585
      %2587 = vmatprep.mubr.bf16.mxu0 %v1954
      %2588 = vmatmul.mubr.bf16.gmra.mrb[0].mxu0 %v1953
      %v2589 = vpop.f32.mrb[0].mxu0
      %v2590 = vadd.f32 %v2098, %v2589
      %v2591 = vpop.f32.mrb[0].mxu0
      %v2592 = vadd.f32 %v2102, %v2591
      %v2593 = vpop.f32.mrb[0].mxu0
      %v2594 = vadd.f32 %v2098, %v2593
      %v2595 = vpop.f32.mrb[0].mxu0
      %v2596 = vadd.f32 %v2102, %v2595
      %2597 = vmatprep.mubr.bf16.mxu0 %v1958
      %2598 = vmatmul.mubr.bf16.gmra.mrb[0].mxu0 %v1957
      %v2599 = vpop.f32.mrb[0].mxu0
      %v2600 = vadd.f32 %v2098, %v2599
      %v2601 = vpop.f32.mrb[0].mxu0
      %v2602 = vadd.f32 %v2102, %v2601
      %v2603 = vpop.f32.mrb[0].mxu0
      %v2604 = vadd.f32 %v2098, %v2603
      %v2605 = vpop.f32.mrb[0].mxu0
      %v2606 = vadd.f32 %v2102, %v2605
      %2607 = vmatprep.mubr.bf16.mxu0 %v1962
      %2608 = vmatmul.mubr.bf16.gmra.mrb[0].mxu0 %v1961
      %v2609 = vpop.f32.mrb[0].mxu0
      %v2610 = vadd.f32 %v2098, %v2609
      %v2611 = vpop.f32.mrb[0].mxu0
      %v2612 = vadd.f32 %v2102, %v2611
      %v2613 = vpop.f32.mrb[0].mxu0
      %v2614 = vadd.f32 %v2098, %v2613
      %v2615 = vpop.f32.mrb[0].mxu0
      %v2616 = vadd.f32 %v2102, %v2615
      %2617 = vmatprep.mubr.bf16.mxu0 %v1966
      %2618 = vmatmul.mubr.bf16.gmra.mrb[0].mxu0 %v1965
      %v2619 = vpop.f32.mrb[0].mxu0
      %v2620 = vadd.f32 %v2098, %v2619
      %v2621 = vpop.f32.mrb[0].mxu0
      %v2622 = vadd.f32 %v2102, %v2621
      %v2623 = vpop.f32.mrb[0].mxu0
      %v2624 = vadd.f32 %v2098, %v2623
      %v2625 = vpop.f32.mrb[0].mxu0
      %v2626 = vadd.f32 %v2102, %v2625
      %2627 = vmatprep.mubr.bf16.mxu0 %v1970
      %2628 = vmatmul.mubr.bf16.gmra.mrb[0].mxu0 %v1969
      %v2629 = vpop.f32.mrb[0].mxu0
      %v2630 = vadd.f32 %v2098, %v2629
      %v2631 = vpop.f32.mrb[0].mxu0
      %v2632 = vadd.f32 %v2102, %v2631
      %v2633 = vpop.f32.mrb[0].mxu0
      %v2634 = vadd.f32 %v2098, %v2633
      %v2635 = vpop.f32.mrb[0].mxu0
      %v2636 = vadd.f32 %v2102, %v2635
      %2637 = vmatprep.mubr.bf16.mxu0 %v1974
      %2638 = vmatmul.mubr.bf16.gmra.mrb[0].mxu0 %v1973
      %v2639 = vpop.f32.mrb[0].mxu0
      %v2640 = vadd.f32 %v2098, %v2639
      %v2641 = vpop.f32.mrb[0].mxu0
      %v2642 = vadd.f32 %v2102, %v2641
      %v2643 = vpop.f32.mrb[0].mxu0
      %v2644 = vadd.f32 %v2098, %v2643
      %v2645 = vpop.f32.mrb[0].mxu0
      %v2646 = vadd.f32 %v2102, %v2645
      %2647 = vmatprep.mubr.bf16.mxu0 %v1978
      %2648 = vmatmul.mubr.bf16.gmra.mrb[0].mxu0 %v1977
      %v2649 = vpop.f32.mrb[0].mxu0
      %v2650 = vadd.f32 %v2098, %v2649
      %v2651 = vpop.f32.mrb[0].mxu0
      %v2652 = vadd.f32 %v2102, %v2651
      %v2653 = vpop.f32.mrb[0].mxu0
      %v2654 = vadd.f32 %v2098, %v2653
      %v2655 = vpop.f32.mrb[0].mxu0
      %v2656 = vadd.f32 %v2102, %v2655
      %2657 = vmatprep.mubr.bf16.mxu0 %v1982
      %2658 = vmatmul.mubr.bf16.gmra.mrb[0].mxu0 %v1981
      %v2659 = vpop.f32.mrb[0].mxu0
      %v2660 = vadd.f32 %v2098, %v2659
      %v2661 = vpop.f32.mrb[0].mxu0
      %v2662 = vadd.f32 %v2102, %v2661
      %v2663 = vpop.f32.mrb[0].mxu0
      %v2664 = vadd.f32 %v2098, %v2663
      %v2665 = vpop.f32.mrb[0].mxu0
      %v2666 = vadd.f32 %v2102, %v2665
      %2667 = vmatprep.mubr.bf16.mxu0 %v1986
      %2668 = vmatmul.mubr.bf16.gmra.mrb[0].mxu0 %v1985
      %v2669 = vpop.f32.mrb[0].mxu0
      %v2670 = vadd.f32 %v2098, %v2669
      %v2671 = vpop.f32.mrb[0].mxu0
      %v2672 = vadd.f32 %v2102, %v2671
      %v2673 = vpop.f32.mrb[0].mxu0
      %v2674 = vadd.f32 %v2098, %v2673
      %v2675 = vpop.f32.mrb[0].mxu0
      %v2676 = vadd.f32 %v2102, %v2675
      %2677 = vmatprep.mubr.bf16.mxu0 %v1990
      %2678 = vmatmul.mubr.bf16.gmra.mrb[0].mxu0 %v1989
      %v2679 = vpop.f32.mrb[0].mxu0
      %v2680 = vadd.f32 %v2098, %v2679
      %v2681 = vpop.f32.mrb[0].mxu0
      %v2682 = vadd.f32 %v2102, %v2681
      %v2683 = vpop.f32.mrb[0].mxu0
      %v2684 = vadd.f32 %v2098, %v2683
      %v2685 = vpop.f32.mrb[0].mxu0
      %v2686 = vadd.f32 %v2102, %v2685
      %2687 = vmatprep.mubr.bf16.mxu0 %v1994
      %2688 = vmatmul.mubr.bf16.gmra.mrb[0].mxu0 %v1993
      %v2689 = vpop.f32.mrb[0].mxu0
      %v2690 = vadd.f32 %v2098, %v2689
      %v2691 = vpop.f32.mrb[0].mxu0
      %v2692 = vadd.f32 %v2102, %v2691
      %v2693 = vpop.f32.mrb[0].mxu0
      %v2694 = vadd.f32 %v2098, %v2693
      %v2695 = vpop.f32.mrb[0].mxu0
      %v2696 = vadd.f32 %v2102, %v2695
      %2697 = vmatprep.mubr.bf16.mxu0 %v1998
      %2698 = vmatmul.mubr.bf16.gmra.mrb[0].mxu0 %v1997
      %v2699 = vpop.f32.mrb[0].mxu0
      %v2700 = vadd.f32 %v2098, %v2699
      %v2701 = vpop.f32.mrb[0].mxu0
      %v2702 = vadd.f32 %v2102, %v2701
      %v2703 = vpop.f32.mrb[0].mxu0
      %v2704 = vadd.f32 %v2098, %v2703
      %v2705 = vpop.f32.mrb[0].mxu0
      %v2706 = vadd.f32 %v2102, %v2705
      %2707 = vmatprep.mubr.bf16.mxu0 %v2002
      %2708 = vmatmul.mubr.bf16.gmra.mrb[0].mxu0 %v2001
      %v2709 = vpop.f32.mrb[0].mxu0
      %v2710 = vadd.f32 %v2098, %v2709
      %v2711 = vpop.f32.mrb[0].mxu0
      %v2712 = vadd.f32 %v2102, %v2711
      %v2713 = vpop.f32.mrb[0].mxu0
      %v2714 = vadd.f32 %v2098, %v2713
      %v2715 = vpop.f32.mrb[0].mxu0
      %v2716 = vadd.f32 %v2102, %v2715
      %2717 = vmatprep.mubr.bf16.mxu0 %v2006
      %2718 = vmatmul.mubr.bf16.gmra.mrb[0].mxu0 %v2005
      %v2719 = vpop.f32.mrb[0].mxu0
      %v2720 = vadd.f32 %v2098, %v2719
      %v2721 = vpop.f32.mrb[0].mxu0
      %v2722 = vadd.f32 %v2102, %v2721
      %v2723 = vpop.f32.mrb[0].mxu0
      %v2724 = vadd.f32 %v2098, %v2723
      %v2725 = vpop.f32.mrb[0].mxu0
      %v2726 = vadd.f32 %v2102, %v2725
      %2727 = vmatprep.mubr.bf16.mxu0 %v2010
      %2728 = vmatmul.mubr.bf16.gmra.mrb[0].mxu0 %v2009
      %v2729 = vpop.f32.mrb[0].mxu0
      %v2730 = vadd.f32 %v2098, %v2729
      %v2731 = vpop.f32.mrb[0].mxu0
      %v2732 = vadd.f32 %v2102, %v2731
      %v2733 = vpop.f32.mrb[0].mxu0
      %v2734 = vadd.f32 %v2098, %v2733
      %v2735 = vpop.f32.mrb[0].mxu0
      %v2736 = vadd.f32 %v2102, %v2735
      %2737 = vmatprep.mubr.bf16.mxu0 %v2014
      %2738 = vmatmul.mubr.bf16.gmra.mrb[0].mxu0 %v2013
      %v2739 = vpop.f32.mrb[0].mxu0
      %v2740 = vadd.f32 %v2098, %v2739
      %v2741 = vpop.f32.mrb[0].mxu0
      %v2742 = vadd.f32 %v2102, %v2741
      %v2743 = vpop.f32.mrb[0].mxu0
      %v2744 = vadd.f32 %v2098, %v2743
      %v2745 = vpop.f32.mrb[0].mxu0
      %v2746 = vadd.f32 %v2102, %v2745
      %2747 = vmatprep.mubr.bf16.mxu0 %v2018
      %2748 = vmatmul.mubr.bf16.gmra.mrb[0].mxu0 %v2017
      %v2749 = vpop.f32.mrb[0].mxu0
      %v2750 = vadd.f32 %v2098, %v2749
      %v2751 = vpop.f32.mrb[0].mxu0
      %v2752 = vadd.f32 %v2102, %v2751
      %v2753 = vpop.f32.mrb[0].mxu0
      %v2754 = vadd.f32 %v2098, %v2753
      %v2755 = vpop.f32.mrb[0].mxu0
      %v2756 = vadd.f32 %v2102, %v2755
      %2757 = vmatprep.mubr.bf16.mxu0 %v2022
      %2758 = vmatmul.mubr.bf16.gmra.mrb[0].mxu0 %v2021
      %v2759 = vpop.f32.mrb[0].mxu0
      %v2760 = vadd.f32 %v2098, %v2759
      %v2761 = vpop.f32.mrb[0].mxu0
      %v2762 = vadd.f32 %v2102, %v2761
      %v2763 = vpop.f32.mrb[0].mxu0
      %v2764 = vadd.f32 %v2098, %v2763
      %v2765 = vpop.f32.mrb[0].mxu0
      %v2766 = vadd.f32 %v2102, %v2765
      %2767 = vmatprep.mubr.bf16.mxu0 %v2026
      %2768 = vmatmul.mubr.bf16.gmra.mrb[0].mxu0 %v2025
      %v2769 = vpop.f32.mrb[0].mxu0
      %v2770 = vadd.f32 %v2098, %v2769
      %v2771 = vpop.f32.mrb[0].mxu0
      %v2772 = vadd.f32 %v2102, %v2771
      %v2773 = vpop.f32.mrb[0].mxu0
      %v2774 = vadd.f32 %v2098, %v2773
      %v2775 = vpop.f32.mrb[0].mxu0
      %v2776 = vadd.f32 %v2102, %v2775
      %2777 = vdwg.mxu0
      %2778 = vmatprep.subr.bf16.mxu0 %v2330
      %2779 = vmatpush1.bf16.msra.mxu0 %v2329
      %2780 = vmatprep.subr.bf16.mxu0 %v2332
      %2781 = vmatpush1.bf16.msra.mxu0 %v2331
      %2782 = vmatprep.subr.bf16.mxu0 %v2334
      %2783 = vmatpush1.bf16.msra.mxu0 %v2333
      %2784 = vmatprep.subr.bf16.mxu0 %v2336
      %2785 = vmatpush1.bf16.msra.mxu0 %v2335
      %2786 = vmatprep.subr.bf16.mxu0 %v2338
      %2787 = vmatpush1.bf16.msra.mxu0 %v2337
      %2788 = vmatprep.subr.bf16.mxu0 %v2340
      %2789 = vmatpush1.bf16.msra.mxu0 %v2339
      %2790 = vmatprep.subr.bf16.mxu0 %v2342
      %2791 = vmatpush1.bf16.msra.mxu0 %v2341
      %2792 = vmatprep.subr.bf16.mxu0 %v2344
      %2793 = vmatpush1.bf16.msra.mxu0 %v2343
      %2794 = vmatprep.subr.bf16.mxu0 %v2346
      %2795 = vmatpush1.bf16.msra.mxu0 %v2345
      %2796 = vmatprep.subr.bf16.mxu0 %v2348
      %2797 = vmatpush1.bf16.msra.mxu0 %v2347
      %2798 = vmatprep.subr.bf16.mxu0 %v2350
      %2799 = vmatpush1.bf16.msra.mxu0 %v2349
      %2800 = vmatprep.subr.bf16.mxu0 %v2352
      %2801 = vmatpush1.bf16.msra.mxu0 %v2351
      %2802 = vmatprep.subr.bf16.mxu0 %v2354
      %2803 = vmatpush1.bf16.msra.mxu0 %v2353
      %2804 = vmatprep.subr.bf16.mxu0 %v2356
      %2805 = vmatpush1.bf16.msra.mxu0 %v2355
      %2806 = vmatprep.subr.bf16.mxu0 %v2358
      %2807 = vmatpush1.bf16.msra.mxu0 %v2357
      %2808 = vmatprep.subr.bf16.mxu0 %v2360
      %2809 = vmatpush1.bf16.msra.mxu0 %v2359
      %2810 = vmatprep.mubr.bf16.mxu0 %v1904
      %2811 = vmatmul.mubr.bf16.gmra.mrb[0].mxu0 %v1903
      %v2812 = vpop.f32.mrb[0].mxu0
      %v2813 = vadd.f32 %v2460, %v2812
      %v2814 = vpop.f32.mrb[0].mxu0
      %v2815 = vadd.f32 %v2462, %v2814
      %v2816 = vpop.f32.mrb[0].mxu0
      %v2817 = vadd.f32 %v2464, %v2816
      %v2818 = vpop.f32.mrb[0].mxu0
      %v2819 = vadd.f32 %v2466, %v2818
      %2820 = vmatprep.mubr.bf16.mxu0 %v1908
      %2821 = vmatmul.mubr.bf16.gmra.mrb[0].mxu0 %v1907
      %v2822 = vpop.f32.mrb[0].mxu0
      %v2823 = vadd.f32 %v2470, %v2822
      %v2824 = vpop.f32.mrb[0].mxu0
      %v2825 = vadd.f32 %v2472, %v2824
      %v2826 = vpop.f32.mrb[0].mxu0
      %v2827 = vadd.f32 %v2474, %v2826
      %v2828 = vpop.f32.mrb[0].mxu0
      %v2829 = vadd.f32 %v2476, %v2828
      %2830 = vmatprep.mubr.bf16.mxu0 %v1912
      %2831 = vmatmul.mubr.bf16.gmra.mrb[0].mxu0 %v1911
      %v2832 = vpop.f32.mrb[0].mxu0
      %v2833 = vadd.f32 %v2480, %v2832
      %v2834 = vpop.f32.mrb[0].mxu0
      %v2835 = vadd.f32 %v2482, %v2834
      %v2836 = vpop.f32.mrb[0].mxu0
      %v2837 = vadd.f32 %v2484, %v2836
      %v2838 = vpop.f32.mrb[0].mxu0
      %v2839 = vadd.f32 %v2486, %v2838
      %2840 = vmatprep.mubr.bf16.mxu0 %v1916
      %2841 = vmatmul.mubr.bf16.gmra.mrb[0].mxu0 %v1915
      %v2842 = vpop.f32.mrb[0].mxu0
      %v2843 = vadd.f32 %v2490, %v2842
      %v2844 = vpop.f32.mrb[0].mxu0
      %v2845 = vadd.f32 %v2492, %v2844
      %v2846 = vpop.f32.mrb[0].mxu0
      %v2847 = vadd.f32 %v2494, %v2846
      %v2848 = vpop.f32.mrb[0].mxu0
      %v2849 = vadd.f32 %v2496, %v2848
      %2850 = vmatprep.mubr.bf16.mxu0 %v1920
      %2851 = vmatmul.mubr.bf16.gmra.mrb[0].mxu0 %v1919
      %v2852 = vpop.f32.mrb[0].mxu0
      %v2853 = vadd.f32 %v2500, %v2852
      %v2854 = vpop.f32.mrb[0].mxu0
      %v2855 = vadd.f32 %v2502, %v2854
      %v2856 = vpop.f32.mrb[0].mxu0
      %v2857 = vadd.f32 %v2504, %v2856
      %v2858 = vpop.f32.mrb[0].mxu0
      %v2859 = vadd.f32 %v2506, %v2858
      %2860 = vmatprep.mubr.bf16.mxu0 %v1924
      %2861 = vmatmul.mubr.bf16.gmra.mrb[0].mxu0 %v1923
      %v2862 = vpop.f32.mrb[0].mxu0
      %v2863 = vadd.f32 %v2510, %v2862
      %v2864 = vpop.f32.mrb[0].mxu0
      %v2865 = vadd.f32 %v2512, %v2864
      %v2866 = vpop.f32.mrb[0].mxu0
      %v2867 = vadd.f32 %v2514, %v2866
      %v2868 = vpop.f32.mrb[0].mxu0
      %v2869 = vadd.f32 %v2516, %v2868
      %2870 = vmatprep.mubr.bf16.mxu0 %v1928
      %2871 = vmatmul.mubr.bf16.gmra.mrb[0].mxu0 %v1927
      %v2872 = vpop.f32.mrb[0].mxu0
      %v2873 = vadd.f32 %v2520, %v2872
      %v2874 = vpop.f32.mrb[0].mxu0
      %v2875 = vadd.f32 %v2522, %v2874
      %v2876 = vpop.f32.mrb[0].mxu0
      %v2877 = vadd.f32 %v2524, %v2876
      %v2878 = vpop.f32.mrb[0].mxu0
      %v2879 = vadd.f32 %v2526, %v2878
      %2880 = vmatprep.mubr.bf16.mxu0 %v1932
      %2881 = vmatmul.mubr.bf16.gmra.mrb[0].mxu0 %v1931
      %v2882 = vpop.f32.mrb[0].mxu0
      %v2883 = vadd.f32 %v2530, %v2882
      %v2884 = vpop.f32.mrb[0].mxu0
      %v2885 = vadd.f32 %v2532, %v2884
      %v2886 = vpop.f32.mrb[0].mxu0
      %v2887 = vadd.f32 %v2534, %v2886
      %v2888 = vpop.f32.mrb[0].mxu0
      %v2889 = vadd.f32 %v2536, %v2888
      %2890 = vmatprep.mubr.bf16.mxu0 %v1936
      %2891 = vmatmul.mubr.bf16.gmra.mrb[0].mxu0 %v1935
      %v2892 = vpop.f32.mrb[0].mxu0
      %v2893 = vadd.f32 %v2540, %v2892
      %v2894 = vpop.f32.mrb[0].mxu0
      %v2895 = vadd.f32 %v2542, %v2894
      %v2896 = vpop.f32.mrb[0].mxu0
      %v2897 = vadd.f32 %v2544, %v2896
      %v2898 = vpop.f32.mrb[0].mxu0
      %v2899 = vadd.f32 %v2546, %v2898
      %2900 = vmatprep.mubr.bf16.mxu0 %v1940
      %2901 = vmatmul.mubr.bf16.gmra.mrb[0].mxu0 %v1939
      %v2902 = vpop.f32.mrb[0].mxu0
      %v2903 = vadd.f32 %v2550, %v2902
      %v2904 = vpop.f32.mrb[0].mxu0
      %v2905 = vadd.f32 %v2552, %v2904
      %v2906 = vpop.f32.mrb[0].mxu0
      %v2907 = vadd.f32 %v2554, %v2906
      %v2908 = vpop.f32.mrb[0].mxu0
      %v2909 = vadd.f32 %v2556, %v2908
      %2910 = vmatprep.mubr.bf16.mxu0 %v1944
      %2911 = vmatmul.mubr.bf16.gmra.mrb[0].mxu0 %v1943
      %v2912 = vpop.f32.mrb[0].mxu0
      %v2913 = vadd.f32 %v2560, %v2912
      %v2914 = vpop.f32.mrb[0].mxu0
      %v2915 = vadd.f32 %v2562, %v2914
      %v2916 = vpop.f32.mrb[0].mxu0
      %v2917 = vadd.f32 %v2564, %v2916
      %v2918 = vpop.f32.mrb[0].mxu0
      %v2919 = vadd.f32 %v2566, %v2918
      %2920 = vmatprep.mubr.bf16.mxu0 %v1948
      %2921 = vmatmul.mubr.bf16.gmra.mrb[0].mxu0 %v1947
      %v2922 = vpop.f32.mrb[0].mxu0
      %v2923 = vadd.f32 %v2570, %v2922
      %v2924 = vpop.f32.mrb[0].mxu0
      %v2925 = vadd.f32 %v2572, %v2924
      %v2926 = vpop.f32.mrb[0].mxu0
      %v2927 = vadd.f32 %v2574, %v2926
      %v2928 = vpop.f32.mrb[0].mxu0
      %v2929 = vadd.f32 %v2576, %v2928
      %2930 = vmatprep.mubr.bf16.mxu0 %v1952
      %2931 = vmatmul.mubr.bf16.gmra.mrb[0].mxu0 %v1951
      %v2932 = vpop.f32.mrb[0].mxu0
      %v2933 = vadd.f32 %v2580, %v2932
      %v2934 = vpop.f32.mrb[0].mxu0
      %v2935 = vadd.f32 %v2582, %v2934
      %v2936 = vpop.f32.mrb[0].mxu0
      %v2937 = vadd.f32 %v2584, %v2936
      %v2938 = vpop.f32.mrb[0].mxu0
      %v2939 = vadd.f32 %v2586, %v2938
      %2940 = vmatprep.mubr.bf16.mxu0 %v1956
      %2941 = vmatmul.mubr.bf16.gmra.mrb[0].mxu0 %v1955
      %v2942 = vpop.f32.mrb[0].mxu0
      %v2943 = vadd.f32 %v2590, %v2942
      %v2944 = vpop.f32.mrb[0].mxu0
      %v2945 = vadd.f32 %v2592, %v2944
      %v2946 = vpop.f32.mrb[0].mxu0
      %v2947 = vadd.f32 %v2594, %v2946
      %v2948 = vpop.f32.mrb[0].mxu0
      %v2949 = vadd.f32 %v2596, %v2948
      %2950 = vmatprep.mubr.bf16.mxu0 %v1960
      %2951 = vmatmul.mubr.bf16.gmra.mrb[0].mxu0 %v1959
      %v2952 = vpop.f32.mrb[0].mxu0
      %v2953 = vadd.f32 %v2600, %v2952
      %v2954 = vpop.f32.mrb[0].mxu0
      %v2955 = vadd.f32 %v2602, %v2954
      %v2956 = vpop.f32.mrb[0].mxu0
      %v2957 = vadd.f32 %v2604, %v2956
      %v2958 = vpop.f32.mrb[0].mxu0
      %v2959 = vadd.f32 %v2606, %v2958
      %2960 = vmatprep.mubr.bf16.mxu0 %v1964
      %2961 = vmatmul.mubr.bf16.gmra.mrb[0].mxu0 %v1963
      %v2962 = vpop.f32.mrb[0].mxu0
      %v2963 = vadd.f32 %v2610, %v2962
      %v2964 = vpop.f32.mrb[0].mxu0
      %v2965 = vadd.f32 %v2612, %v2964
      %v2966 = vpop.f32.mrb[0].mxu0
      %v2967 = vadd.f32 %v2614, %v2966
      %v2968 = vpop.f32.mrb[0].mxu0
      %v2969 = vadd.f32 %v2616, %v2968
      %2970 = vmatprep.mubr.bf16.mxu0 %v1968
      %2971 = vmatmul.mubr.bf16.gmra.mrb[0].mxu0 %v1967
      %v2972 = vpop.f32.mrb[0].mxu0
      %v2973 = vadd.f32 %v2620, %v2972
      %v2974 = vpop.f32.mrb[0].mxu0
      %v2975 = vadd.f32 %v2622, %v2974
      %v2976 = vpop.f32.mrb[0].mxu0
      %v2977 = vadd.f32 %v2624, %v2976
      %v2978 = vpop.f32.mrb[0].mxu0
      %v2979 = vadd.f32 %v2626, %v2978
      %2980 = vmatprep.mubr.bf16.mxu0 %v1972
      %2981 = vmatmul.mubr.bf16.gmra.mrb[0].mxu0 %v1971
      %v2982 = vpop.f32.mrb[0].mxu0
      %v2983 = vadd.f32 %v2630, %v2982
      %v2984 = vpop.f32.mrb[0].mxu0
      %v2985 = vadd.f32 %v2632, %v2984
      %v2986 = vpop.f32.mrb[0].mxu0
      %v2987 = vadd.f32 %v2634, %v2986
      %v2988 = vpop.f32.mrb[0].mxu0
      %v2989 = vadd.f32 %v2636, %v2988
      %2990 = vmatprep.mubr.bf16.mxu0 %v1976
      %2991 = vmatmul.mubr.bf16.gmra.mrb[0].mxu0 %v1975
      %v2992 = vpop.f32.mrb[0].mxu0
      %v2993 = vadd.f32 %v2640, %v2992
      %v2994 = vpop.f32.mrb[0].mxu0
      %v2995 = vadd.f32 %v2642, %v2994
      %v2996 = vpop.f32.mrb[0].mxu0
      %v2997 = vadd.f32 %v2644, %v2996
      %v2998 = vpop.f32.mrb[0].mxu0
      %v2999 = vadd.f32 %v2646, %v2998
      %3000 = vmatprep.mubr.bf16.mxu0 %v1980
      %3001 = vmatmul.mubr.bf16.gmra.mrb[0].mxu0 %v1979
      %v3002 = vpop.f32.mrb[0].mxu0
      %v3003 = vadd.f32 %v2650, %v3002
      %v3004 = vpop.f32.mrb[0].mxu0
      %v3005 = vadd.f32 %v2652, %v3004
      %v3006 = vpop.f32.mrb[0].mxu0
      %v3007 = vadd.f32 %v2654, %v3006
      %v3008 = vpop.f32.mrb[0].mxu0
      %v3009 = vadd.f32 %v2656, %v3008
      %3010 = vmatprep.mubr.bf16.mxu0 %v1984
      %3011 = vmatmul.mubr.bf16.gmra.mrb[0].mxu0 %v1983
      %v3012 = vpop.f32.mrb[0].mxu0
      %v3013 = vadd.f32 %v2660, %v3012
      %v3014 = vpop.f32.mrb[0].mxu0
      %v3015 = vadd.f32 %v2662, %v3014
      %v3016 = vpop.f32.mrb[0].mxu0
      %v3017 = vadd.f32 %v2664, %v3016
      %v3018 = vpop.f32.mrb[0].mxu0
      %v3019 = vadd.f32 %v2666, %v3018
      %3020 = vmatprep.mubr.bf16.mxu0 %v1988
      %3021 = vmatmul.mubr.bf16.gmra.mrb[0].mxu0 %v1987
      %v3022 = vpop.f32.mrb[0].mxu0
      %v3023 = vadd.f32 %v2670, %v3022
      %v3024 = vpop.f32.mrb[0].mxu0
      %v3025 = vadd.f32 %v2672, %v3024
      %v3026 = vpop.f32.mrb[0].mxu0
      %v3027 = vadd.f32 %v2674, %v3026
      %v3028 = vpop.f32.mrb[0].mxu0
      %v3029 = vadd.f32 %v2676, %v3028
      %3030 = vmatprep.mubr.bf16.mxu0 %v1992
      %3031 = vmatmul.mubr.bf16.gmra.mrb[0].mxu0 %v1991
      %v3032 = vpop.f32.mrb[0].mxu0
      %v3033 = vadd.f32 %v2680, %v3032
      %v3034 = vpop.f32.mrb[0].mxu0
      %v3035 = vadd.f32 %v2682, %v3034
      %v3036 = vpop.f32.mrb[0].mxu0
      %v3037 = vadd.f32 %v2684, %v3036
      %v3038 = vpop.f32.mrb[0].mxu0
      %v3039 = vadd.f32 %v2686, %v3038
      %3040 = vmatprep.mubr.bf16.mxu0 %v1996
      %3041 = vmatmul.mubr.bf16.gmra.mrb[0].mxu0 %v1995
      %v3042 = vpop.f32.mrb[0].mxu0
      %v3043 = vadd.f32 %v2690, %v3042
      %v3044 = vpop.f32.mrb[0].mxu0
      %v3045 = vadd.f32 %v2692, %v3044
      %v3046 = vpop.f32.mrb[0].mxu0
      %v3047 = vadd.f32 %v2694, %v3046
      %v3048 = vpop.f32.mrb[0].mxu0
      %v3049 = vadd.f32 %v2696, %v3048
      %3050 = vmatprep.mubr.bf16.mxu0 %v2000
      %3051 = vmatmul.mubr.bf16.gmra.mrb[0].mxu0 %v1999
      %v3052 = vpop.f32.mrb[0].mxu0
      %v3053 = vadd.f32 %v2700, %v3052
      %v3054 = vpop.f32.mrb[0].mxu0
      %v3055 = vadd.f32 %v2702, %v3054
      %v3056 = vpop.f32.mrb[0].mxu0
      %v3057 = vadd.f32 %v2704, %v3056
      %v3058 = vpop.f32.mrb[0].mxu0
      %v3059 = vadd.f32 %v2706, %v3058
      %3060 = vmatprep.mubr.bf16.mxu0 %v2004
      %3061 = vmatmul.mubr.bf16.gmra.mrb[0].mxu0 %v2003
      %v3062 = vpop.f32.mrb[0].mxu0
      %v3063 = vadd.f32 %v2710, %v3062
      %v3064 = vpop.f32.mrb[0].mxu0
      %v3065 = vadd.f32 %v2712, %v3064
      %v3066 = vpop.f32.mrb[0].mxu0
      %v3067 = vadd.f32 %v2714, %v3066
      %v3068 = vpop.f32.mrb[0].mxu0
      %v3069 = vadd.f32 %v2716, %v3068
      %3070 = vmatprep.mubr.bf16.mxu0 %v2008
      %3071 = vmatmul.mubr.bf16.gmra.mrb[0].mxu0 %v2007
      %v3072 = vpop.f32.mrb[0].mxu0
      %v3073 = vadd.f32 %v2720, %v3072
      %v3074 = vpop.f32.mrb[0].mxu0
      %v3075 = vadd.f32 %v2722, %v3074
      %v3076 = vpop.f32.mrb[0].mxu0
      %v3077 = vadd.f32 %v2724, %v3076
      %v3078 = vpop.f32.mrb[0].mxu0
      %v3079 = vadd.f32 %v2726, %v3078
      %3080 = vmatprep.mubr.bf16.mxu0 %v2012
      %3081 = vmatmul.mubr.bf16.gmra.mrb[0].mxu0 %v2011
      %v3082 = vpop.f32.mrb[0].mxu0
      %v3083 = vadd.f32 %v2730, %v3082
      %v3084 = vpop.f32.mrb[0].mxu0
      %v3085 = vadd.f32 %v2732, %v3084
      %v3086 = vpop.f32.mrb[0].mxu0
      %v3087 = vadd.f32 %v2734, %v3086
      %v3088 = vpop.f32.mrb[0].mxu0
      %v3089 = vadd.f32 %v2736, %v3088
      %3090 = vmatprep.mubr.bf16.mxu0 %v2016
      %3091 = vmatmul.mubr.bf16.gmra.mrb[0].mxu0 %v2015
      %v3092 = vpop.f32.mrb[0].mxu0
      %v3093 = vadd.f32 %v2740, %v3092
      %v3094 = vpop.f32.mrb[0].mxu0
      %v3095 = vadd.f32 %v2742, %v3094
      %v3096 = vpop.f32.mrb[0].mxu0
      %v3097 = vadd.f32 %v2744, %v3096
      %v3098 = vpop.f32.mrb[0].mxu0
      %v3099 = vadd.f32 %v2746, %v3098
      %3100 = vmatprep.mubr.bf16.mxu0 %v2020
      %3101 = vmatmul.mubr.bf16.gmra.mrb[0].mxu0 %v2019
      %v3102 = vpop.f32.mrb[0].mxu0
      %v3103 = vadd.f32 %v2750, %v3102
      %v3104 = vpop.f32.mrb[0].mxu0
      %v3105 = vadd.f32 %v2752, %v3104
      %v3106 = vpop.f32.mrb[0].mxu0
      %v3107 = vadd.f32 %v2754, %v3106
      %v3108 = vpop.f32.mrb[0].mxu0
      %v3109 = vadd.f32 %v2756, %v3108
      %3110 = vmatprep.mubr.bf16.mxu0 %v2024
      %3111 = vmatmul.mubr.bf16.gmra.mrb[0].mxu0 %v2023
      %v3112 = vpop.f32.mrb[0].mxu0
      %v3113 = vadd.f32 %v2760, %v3112
      %v3114 = vpop.f32.mrb[0].mxu0
      %v3115 = vadd.f32 %v2762, %v3114
      %v3116 = vpop.f32.mrb[0].mxu0
      %v3117 = vadd.f32 %v2764, %v3116
      %v3118 = vpop.f32.mrb[0].mxu0
      %v3119 = vadd.f32 %v2766, %v3118
      %3120 = vmatprep.mubr.bf16.mxu0 %v2028
      %3121 = vmatmul.mubr.bf16.gmra.mrb[0].mxu0 %v2027
      %v3122 = vpop.f32.mrb[0].mxu0
      %v3123 = vadd.f32 %v2770, %v3122
      %v3124 = vpop.f32.mrb[0].mxu0
      %v3125 = vadd.f32 %v2772, %v3124
      %v3126 = vpop.f32.mrb[0].mxu0
      %v3127 = vadd.f32 %v2774, %v3126
      %v3128 = vpop.f32.mrb[0].mxu0
      %v3129 = vadd.f32 %v2776, %v3128
      %3130 = vdwg.mxu0
      %v3131 = vmax.f32 %v2813, 0.0
      %v3132 = vmax.f32 %v2815, 0.0
      %v3133 = vmax.f32 %v2817, 0.0
      %v3134 = vmax.f32 %v2819, 0.0
      %v3135 = vmax.f32 %v2823, 0.0
      %v3136 = vmax.f32 %v2825, 0.0
      %v3137 = vmax.f32 %v2827, 0.0
      %v3138 = vmax.f32 %v2829, 0.0
      %v3139 = vmax.f32 %v2833, 0.0
      %v3140 = vmax.f32 %v2835, 0.0
      %v3141 = vmax.f32 %v2837, 0.0
      %v3142 = vmax.f32 %v2839, 0.0
      %v3143 = vmax.f32 %v2843, 0.0
      %v3144 = vmax.f32 %v2845, 0.0
      %v3145 = vmax.f32 %v2847, 0.0
      %v3146 = vmax.f32 %v2849, 0.0
      %v3147 = vmax.f32 %v2853, 0.0
      %v3148 = vmax.f32 %v2855, 0.0
      %v3149 = vmax.f32 %v2857, 0.0
      %v3150 = vmax.f32 %v2859, 0.0
      %v3151 = vmax.f32 %v2863, 0.0
      %v3152 = vmax.f32 %v2865, 0.0
      %v3153 = vmax.f32 %v2867, 0.0
      %v3154 = vmax.f32 %v2869, 0.0
      %v3155 = vmax.f32 %v2873, 0.0
      %v3156 = vmax.f32 %v2875, 0.0
      %v3157 = vmax.f32 %v2877, 0.0
      %v3158 = vmax.f32 %v2879, 0.0
      %v3159 = vmax.f32 %v2883, 0.0
      %v3160 = vmax.f32 %v2885, 0.0
      %v3161 = vmax.f32 %v2887, 0.0
      %v3162 = vmax.f32 %v2889, 0.0
      %v3163 = vmax.f32 %v2893, 0.0
      %v3164 = vmax.f32 %v2895, 0.0
      %v3165 = vmax.f32 %v2897, 0.0
      %v3166 = vmax.f32 %v2899, 0.0
      %v3167 = vmax.f32 %v2903, 0.0
      %v3168 = vmax.f32 %v2905, 0.0
      %v3169 = vmax.f32 %v2907, 0.0
      %v3170 = vmax.f32 %v2909, 0.0
      %v3171 = vmax.f32 %v2913, 0.0
      %v3172 = vmax.f32 %v2915, 0.0
      %v3173 = vmax.f32 %v2917, 0.0
      %v3174 = vmax.f32 %v2919, 0.0
      %v3175 = vmax.f32 %v2923, 0.0
      %v3176 = vmax.f32 %v2925, 0.0
      %v3177 = vmax.f32 %v2927, 0.0
      %v3178 = vmax.f32 %v2929, 0.0
      %v3179 = vmax.f32 %v2933, 0.0
      %v3180 = vmax.f32 %v2935, 0.0
      %v3181 = vmax.f32 %v2937, 0.0
      %v3182 = vmax.f32 %v2939, 0.0
      %v3183 = vmax.f32 %v2943, 0.0
      %v3184 = vmax.f32 %v2945, 0.0
      %v3185 = vmax.f32 %v2947, 0.0
      %v3186 = vmax.f32 %v2949, 0.0
      %v3187 = vmax.f32 %v2953, 0.0
      %v3188 = vmax.f32 %v2955, 0.0
      %v3189 = vmax.f32 %v2957, 0.0
      %v3190 = vmax.f32 %v2959, 0.0
      %v3191 = vmax.f32 %v2963, 0.0
      %v3192 = vmax.f32 %v2965, 0.0
      %v3193 = vmax.f32 %v2967, 0.0
      %v3194 = vmax.f32 %v2969, 0.0
      %v3195 = vmax.f32 %v2973, 0.0
      %v3196 = vmax.f32 %v2975, 0.0
      %v3197 = vmax.f32 %v2977, 0.0
      %v3198 = vmax.f32 %v2979, 0.0
      %v3199 = vmax.f32 %v2983, 0.0
      %v3200 = vmax.f32 %v2985, 0.0
      %v3201 = vmax.f32 %v2987, 0.0
      %v3202 = vmax.f32 %v2989, 0.0
      %v3203 = vmax.f32 %v2993, 0.0
      %v3204 = vmax.f32 %v2995, 0.0
      %v3205 = vmax.f32 %v2997, 0.0
      %v3206 = vmax.f32 %v2999, 0.0
      %v3207 = vmax.f32 %v3003, 0.0
      %v3208 = vmax.f32 %v3005, 0.0
      %v3209 = vmax.f32 %v3007, 0.0
      %v3210 = vmax.f32 %v3009, 0.0
      %v3211 = vmax.f32 %v3013, 0.0
      %v3212 = vmax.f32 %v3015, 0.0
      %v3213 = vmax.f32 %v3017, 0.0
      %v3214 = vmax.f32 %v3019, 0.0
      %v3215 = vmax.f32 %v3023, 0.0
      %v3216 = vmax.f32 %v3025, 0.0
      %v3217 = vmax.f32 %v3027, 0.0
      %v3218 = vmax.f32 %v3029, 0.0
      %v3219 = vmax.f32 %v3033, 0.0
      %v3220 = vmax.f32 %v3035, 0.0
      %v3221 = vmax.f32 %v3037, 0.0
      %v3222 = vmax.f32 %v3039, 0.0
      %v3223 = vmax.f32 %v3043, 0.0
      %v3224 = vmax.f32 %v3045, 0.0
      %v3225 = vmax.f32 %v3047, 0.0
      %v3226 = vmax.f32 %v3049, 0.0
      %v3227 = vmax.f32 %v3053, 0.0
      %v3228 = vmax.f32 %v3055, 0.0
      %v3229 = vmax.f32 %v3057, 0.0
      %v3230 = vmax.f32 %v3059, 0.0
      %v3231 = vmax.f32 %v3063, 0.0
      %v3232 = vmax.f32 %v3065, 0.0
      %v3233 = vmax.f32 %v3067, 0.0
      %v3234 = vmax.f32 %v3069, 0.0
      %v3235 = vmax.f32 %v3073, 0.0
      %v3236 = vmax.f32 %v3075, 0.0
      %v3237 = vmax.f32 %v3077, 0.0
      %v3238 = vmax.f32 %v3079, 0.0
      %v3239 = vmax.f32 %v3083, 0.0
      %v3240 = vmax.f32 %v3085, 0.0
      %v3241 = vmax.f32 %v3087, 0.0
      %v3242 = vmax.f32 %v3089, 0.0
      %v3243 = vmax.f32 %v3093, 0.0
      %v3244 = vmax.f32 %v3095, 0.0
      %v3245 = vmax.f32 %v3097, 0.0
      %v3246 = vmax.f32 %v3099, 0.0
      %v3247 = vmax.f32 %v3103, 0.0
      %v3248 = vmax.f32 %v3105, 0.0
      %v3249 = vmax.f32 %v3107, 0.0
      %v3250 = vmax.f32 %v3109, 0.0
      %v3251 = vmax.f32 %v3113, 0.0
      %v3252 = vmax.f32 %v3115, 0.0
      %v3253 = vmax.f32 %v3117, 0.0
      %v3254 = vmax.f32 %v3119, 0.0
      %v3255 = vmax.f32 %v3123, 0.0
      %v3256 = vmax.f32 %v3125, 0.0
      %v3257 = vmax.f32 %v3127, 0.0
      %v3258 = vmax.f32 %v3129, 0.0
      %v3259 = vpack.c.bf16 %v3133, %v3131
      %v3260 = vpack.c.bf16 %v3134, %v3132
      %v3261 = vpack.c.bf16 %v3137, %v3135
      %v3262 = vpack.c.bf16 %v3138, %v3136
      %v3263 = vpack.c.bf16 %v3141, %v3139
      %v3264 = vpack.c.bf16 %v3142, %v3140
      %v3265 = vpack.c.bf16 %v3145, %v3143
      %v3266 = vpack.c.bf16 %v3146, %v3144
      %v3267 = vpack.c.bf16 %v3149, %v3147
      %v3268 = vpack.c.bf16 %v3150, %v3148
      %v3269 = vpack.c.bf16 %v3153, %v3151
      %v3270 = vpack.c.bf16 %v3154, %v3152
      %v3271 = vpack.c.bf16 %v3157, %v3155
      %v3272 = vpack.c.bf16 %v3158, %v3156
      %v3273 = vpack.c.bf16 %v3161, %v3159
      %v3274 = vpack.c.bf16 %v3162, %v3160
      %v3275 = vpack.c.bf16 %v3165, %v3163
      %v3276 = vpack.c.bf16 %v3166, %v3164
      %v3277 = vpack.c.bf16 %v3169, %v3167
      %v3278 = vpack.c.bf16 %v3170, %v3168
      %v3279 = vpack.c.bf16 %v3173, %v3171
      %v3280 = vpack.c.bf16 %v3174, %v3172
      %v3281 = vpack.c.bf16 %v3177, %v3175
      %v3282 = vpack.c.bf16 %v3178, %v3176
      %v3283 = vpack.c.bf16 %v3181, %v3179
      %v3284 = vpack.c.bf16 %v3182, %v3180
      %v3285 = vpack.c.bf16 %v3185, %v3183
      %v3286 = vpack.c.bf16 %v3186, %v3184
      %v3287 = vpack.c.bf16 %v3189, %v3187
      %v3288 = vpack.c.bf16 %v3190, %v3188
      %v3289 = vpack.c.bf16 %v3193, %v3191
      %v3290 = vpack.c.bf16 %v3194, %v3192
      %v3291 = vpack.c.bf16 %v3197, %v3195
      %v3292 = vpack.c.bf16 %v3198, %v3196
      %v3293 = vpack.c.bf16 %v3201, %v3199
      %v3294 = vpack.c.bf16 %v3202, %v3200
      %v3295 = vpack.c.bf16 %v3205, %v3203
      %v3296 = vpack.c.bf16 %v3206, %v3204
      %v3297 = vpack.c.bf16 %v3209, %v3207
      %v3298 = vpack.c.bf16 %v3210, %v3208
      %v3299 = vpack.c.bf16 %v3213, %v3211
      %v3300 = vpack.c.bf16 %v3214, %v3212
      %v3301 = vpack.c.bf16 %v3217, %v3215
      %v3302 = vpack.c.bf16 %v3218, %v3216
      %v3303 = vpack.c.bf16 %v3221, %v3219
      %v3304 = vpack.c.bf16 %v3222, %v3220
      %v3305 = vpack.c.bf16 %v3225, %v3223
      %v3306 = vpack.c.bf16 %v3226, %v3224
      %v3307 = vpack.c.bf16 %v3229, %v3227
      %v3308 = vpack.c.bf16 %v3230, %v3228
      %v3309 = vpack.c.bf16 %v3233, %v3231
      %v3310 = vpack.c.bf16 %v3234, %v3232
      %v3311 = vpack.c.bf16 %v3237, %v3235
      %v3312 = vpack.c.bf16 %v3238, %v3236
      %v3313 = vpack.c.bf16 %v3241, %v3239
      %v3314 = vpack.c.bf16 %v3242, %v3240
      %v3315 = vpack.c.bf16 %v3245, %v3243
      %v3316 = vpack.c.bf16 %v3246, %v3244
      %v3317 = vpack.c.bf16 %v3249, %v3247
      %v3318 = vpack.c.bf16 %v3250, %v3248
      %v3319 = vpack.c.bf16 %v3253, %v3251
      %v3320 = vpack.c.bf16 %v3254, %v3252
      %v3321 = vpack.c.bf16 %v3257, %v3255
      %v3322 = vpack.c.bf16 %v3258, %v3256
      %v3323 = vld [vmem:[%s5] sm:$0xf]
      %v3324 = vld [vmem:[%s5 + $0x4] sm:$0xf]
      %v3325 = vld [vmem:[%s5 + $0x8] sm:$0xf]
      %v3326 = vld [vmem:[%s5 + $0xc] sm:$0xf]
      %v3327 = vld [vmem:[%s5 + $0x10] sm:$0xf]
      %v3328 = vld [vmem:[%s5 + $0x14] sm:$0xf]
      %v3329 = vld [vmem:[%s5 + $0x18] sm:$0xf]
      %v3330 = vld [vmem:[%s5 + $0x1c] sm:$0xf]
      %v3331 = vld [vmem:[%s5 + $0x20] sm:$0xf]
      %v3332 = vld [vmem:[%s5 + $0x24] sm:$0xf]
      %v3333 = vld [vmem:[%s5 + $0x28] sm:$0xf]
      %v3334 = vld [vmem:[%s5 + $0x2c] sm:$0xf]
      %v3335 = vld [vmem:[%s5 + $0x30] sm:$0xf]
      %v3336 = vld [vmem:[%s5 + $0x34] sm:$0xf]
      %v3337 = vld [vmem:[%s5 + $0x38] sm:$0xf]
      %v3338 = vld [vmem:[%s5 + $0x3c] sm:$0xf]
      %v3339 = vld [vmem:[%s5 + $0x40] sm:$0xf]
      %v3340 = vld [vmem:[%s5 + $0x44] sm:$0xf]
      %v3341 = vld [vmem:[%s5 + $0x48] sm:$0xf]
      %v3342 = vld [vmem:[%s5 + $0x4c] sm:$0xf]
      %v3343 = vld [vmem:[%s5 + $0x50] sm:$0xf]
      %v3344 = vld [vmem:[%s5 + $0x54] sm:$0xf]
      %v3345 = vld [vmem:[%s5 + $0x58] sm:$0xf]
      %v3346 = vld [vmem:[%s5 + $0x5c] sm:$0xf]
      %v3347 = vld [vmem:[%s5 + $0x60] sm:$0xf]
      %v3348 = vld [vmem:[%s5 + $0x64] sm:$0xf]
      %v3349 = vld [vmem:[%s5 + $0x68] sm:$0xf]
      %v3350 = vld [vmem:[%s5 + $0x6c] sm:$0xf]
      %v3351 = vld [vmem:[%s5 + $0x70] sm:$0xf]
      %v3352 = vld [vmem:[%s5 + $0x74] sm:$0xf]
      %v3353 = vld [vmem:[%s5 + $0x78] sm:$0xf]
      %v3354 = vld [vmem:[%s5 + $0x7c] sm:$0xf]
      %v3355 = vld [vmem:[%s6] sm:$0x1]
      %v3357 = vlaneseq
      %v3358 = vshrl.u32 %v3357, 7
      %v3359 = vsub.s32 0, %v3358
      %v3360 = vrot.slane %v3355, %v3359
      %v3394 = vunpack.c.l.b16 %v3323
      %v3395 = vunpack.c.l.b16 %v3324
      %v3396 = vunpack.c.l.b16 %v3325
      %v3397 = vunpack.c.l.b16 %v3326
      %v3398 = vunpack.c.l.b16 %v3327
      %v3399 = vunpack.c.l.b16 %v3328
      %v3400 = vunpack.c.l.b16 %v3329
      %v3401 = vunpack.c.l.b16 %v3330
      %v3402 = vunpack.c.l.b16 %v3331
      %v3403 = vunpack.c.l.b16 %v3332
      %v3404 = vunpack.c.l.b16 %v3333
      %v3405 = vunpack.c.l.b16 %v3334
      %v3406 = vunpack.c.l.b16 %v3335
      %v3407 = vunpack.c.l.b16 %v3336
      %v3408 = vunpack.c.l.b16 %v3337
      %v3409 = vunpack.c.l.b16 %v3338
      %v3410 = vunpack.c.l.b16 %v3339
      %v3411 = vunpack.c.l.b16 %v3340
      %v3412 = vunpack.c.l.b16 %v3341
      %v3413 = vunpack.c.l.b16 %v3342
      %v3414 = vunpack.c.l.b16 %v3343
      %v3415 = vunpack.c.l.b16 %v3344
      %v3416 = vunpack.c.l.b16 %v3345
      %v3417 = vunpack.c.l.b16 %v3346
      %v3418 = vunpack.c.l.b16 %v3347
      %v3419 = vunpack.c.l.b16 %v3348
      %v3420 = vunpack.c.l.b16 %v3349
      %v3421 = vunpack.c.l.b16 %v3350
      %v3422 = vunpack.c.l.b16 %v3351
      %v3423 = vunpack.c.l.b16 %v3352
      %v3424 = vunpack.c.l.b16 %v3353
      %v3425 = vunpack.c.l.b16 %v3354
      %v3426 = vpack.c.b16 %v3395, %v3394
      %v3427 = vpack.c.b16 %v3397, %v3396
      %v3428 = vpack.c.b16 %v3399, %v3398
      %v3429 = vpack.c.b16 %v3401, %v3400
      %v3430 = vpack.c.b16 %v3403, %v3402
      %v3431 = vpack.c.b16 %v3405, %v3404
      %v3432 = vpack.c.b16 %v3407, %v3406
      %v3433 = vpack.c.b16 %v3409, %v3408
      %v3434 = vpack.c.b16 %v3411, %v3410
      %v3435 = vpack.c.b16 %v3413, %v3412
      %v3436 = vpack.c.b16 %v3415, %v3414
      %v3437 = vpack.c.b16 %v3417, %v3416
      %v3438 = vpack.c.b16 %v3419, %v3418
      %v3439 = vpack.c.b16 %v3421, %v3420
      %v3440 = vpack.c.b16 %v3423, %v3422
      %v3441 = vpack.c.b16 %v3425, %v3424
      %3458 = vmatprep.subr.bf16.mxu0 0
      %3459 = vmatpush1.bf16.msra.mxu0 %v3426
      %3460 = vmatprep.subr.bf16.mxu0 0
      %3461 = vmatpush1.bf16.msra.mxu0 %v3427
      %3462 = vmatprep.subr.bf16.mxu0 0
      %3463 = vmatpush1.bf16.msra.mxu0 %v3428
      %3464 = vmatprep.subr.bf16.mxu0 0
      %3465 = vmatpush1.bf16.msra.mxu0 %v3429
      %3466 = vmatprep.subr.bf16.mxu0 0
      %3467 = vmatpush1.bf16.msra.mxu0 %v3430
      %3468 = vmatprep.subr.bf16.mxu0 0
      %3469 = vmatpush1.bf16.msra.mxu0 %v3431
      %3470 = vmatprep.subr.bf16.mxu0 0
      %3471 = vmatpush1.bf16.msra.mxu0 %v3432
      %3472 = vmatprep.subr.bf16.mxu0 0
      %3473 = vmatpush1.bf16.msra.mxu0 %v3433
      %3474 = vmatprep.subr.bf16.mxu0 0
      %3475 = vmatpush1.bf16.msra.mxu0 %v3434
      %3476 = vmatprep.subr.bf16.mxu0 0
      %3477 = vmatpush1.bf16.msra.mxu0 %v3435
      %3478 = vmatprep.subr.bf16.mxu0 0
      %3479 = vmatpush1.bf16.msra.mxu0 %v3436
      %3480 = vmatprep.subr.bf16.mxu0 0
      %3481 = vmatpush1.bf16.msra.mxu0 %v3437
      %3482 = vmatprep.subr.bf16.mxu0 0
      %3483 = vmatpush1.bf16.msra.mxu0 %v3438
      %3484 = vmatprep.subr.bf16.mxu0 0
      %3485 = vmatpush1.bf16.msra.mxu0 %v3439
      %3486 = vmatprep.subr.bf16.mxu0 0
      %3487 = vmatpush1.bf16.msra.mxu0 %v3440
      %3488 = vmatprep.subr.bf16.mxu0 0
      %3489 = vmatpush1.bf16.msra.mxu0 %v3441
      %3490 = vmatprep.mubr.bf16.mxu0 %v3260
      %3491 = vmatmul.mubr.bf16.gmra.mrb[0].mxu0 %v3259
      %v3492 = vpop.f32.mrb[0].mxu0
      %v3493 = vadd.f32 %v3360, %v3492
      %v3494 = vpop.f32.mrb[0].mxu0
      %v3495 = vpop.f32.mrb[0].mxu0
      %v3496 = vadd.f32 %v3360, %v3495
      %v3497 = vpop.f32.mrb[0].mxu0
      %3498 = vmatprep.mubr.bf16.mxu0 %v3262
      %3499 = vmatmul.mubr.bf16.gmra.mrb[0].mxu0 %v3261
      %v3500 = vpop.f32.mrb[0].mxu0
      %v3501 = vadd.f32 %v3360, %v3500
      %v3502 = vpop.f32.mrb[0].mxu0
      %v3503 = vpop.f32.mrb[0].mxu0
      %v3504 = vadd.f32 %v3360, %v3503
      %v3505 = vpop.f32.mrb[0].mxu0
      %3506 = vmatprep.mubr.bf16.mxu0 %v3264
      %3507 = vmatmul.mubr.bf16.gmra.mrb[0].mxu0 %v3263
      %v3508 = vpop.f32.mrb[0].mxu0
      %v3509 = vadd.f32 %v3360, %v3508
      %v3510 = vpop.f32.mrb[0].mxu0
      %v3511 = vpop.f32.mrb[0].mxu0
      %v3512 = vadd.f32 %v3360, %v3511
      %v3513 = vpop.f32.mrb[0].mxu0
      %3514 = vmatprep.mubr.bf16.mxu0 %v3266
      %3515 = vmatmul.mubr.bf16.gmra.mrb[0].mxu0 %v3265
      %v3516 = vpop.f32.mrb[0].mxu0
      %v3517 = vadd.f32 %v3360, %v3516
      %v3518 = vpop.f32.mrb[0].mxu0
      %v3519 = vpop.f32.mrb[0].mxu0
      %v3520 = vadd.f32 %v3360, %v3519
      %v3521 = vpop.f32.mrb[0].mxu0
      %3522 = vmatprep.mubr.bf16.mxu0 %v3268
      %3523 = vmatmul.mubr.bf16.gmra.mrb[0].mxu0 %v3267
      %v3524 = vpop.f32.mrb[0].mxu0
      %v3525 = vadd.f32 %v3360, %v3524
      %v3526 = vpop.f32.mrb[0].mxu0
      %v3527 = vpop.f32.mrb[0].mxu0
      %v3528 = vadd.f32 %v3360, %v3527
      %v3529 = vpop.f32.mrb[0].mxu0
      %3530 = vmatprep.mubr.bf16.mxu0 %v3270
      %3531 = vmatmul.mubr.bf16.gmra.mrb[0].mxu0 %v3269
      %v3532 = vpop.f32.mrb[0].mxu0
      %v3533 = vadd.f32 %v3360, %v3532
      %v3534 = vpop.f32.mrb[0].mxu0
      %v3535 = vpop.f32.mrb[0].mxu0
      %v3536 = vadd.f32 %v3360, %v3535
      %v3537 = vpop.f32.mrb[0].mxu0
      %3538 = vmatprep.mubr.bf16.mxu0 %v3272
      %3539 = vmatmul.mubr.bf16.gmra.mrb[0].mxu0 %v3271
      %v3540 = vpop.f32.mrb[0].mxu0
      %v3541 = vadd.f32 %v3360, %v3540
      %v3542 = vpop.f32.mrb[0].mxu0
      %v3543 = vpop.f32.mrb[0].mxu0
      %v3544 = vadd.f32 %v3360, %v3543
      %v3545 = vpop.f32.mrb[0].mxu0
      %3546 = vmatprep.mubr.bf16.mxu0 %v3274
      %3547 = vmatmul.mubr.bf16.gmra.mrb[0].mxu0 %v3273
      %v3548 = vpop.f32.mrb[0].mxu0
      %v3549 = vadd.f32 %v3360, %v3548
      %v3550 = vpop.f32.mrb[0].mxu0
      %v3551 = vpop.f32.mrb[0].mxu0
      %v3552 = vadd.f32 %v3360, %v3551
      %v3553 = vpop.f32.mrb[0].mxu0
      %3554 = vmatprep.mubr.bf16.mxu0 %v3276
      %3555 = vmatmul.mubr.bf16.gmra.mrb[0].mxu0 %v3275
      %v3556 = vpop.f32.mrb[0].mxu0
      %v3557 = vadd.f32 %v3360, %v3556
      %v3558 = vpop.f32.mrb[0].mxu0
      %v3559 = vpop.f32.mrb[0].mxu0
      %v3560 = vadd.f32 %v3360, %v3559
      %v3561 = vpop.f32.mrb[0].mxu0
      %3562 = vmatprep.mubr.bf16.mxu0 %v3278
      %3563 = vmatmul.mubr.bf16.gmra.mrb[0].mxu0 %v3277
      %v3564 = vpop.f32.mrb[0].mxu0
      %v3565 = vadd.f32 %v3360, %v3564
      %v3566 = vpop.f32.mrb[0].mxu0
      %v3567 = vpop.f32.mrb[0].mxu0
      %v3568 = vadd.f32 %v3360, %v3567
      %v3569 = vpop.f32.mrb[0].mxu0
      %3570 = vmatprep.mubr.bf16.mxu0 %v3280
      %3571 = vmatmul.mubr.bf16.gmra.mrb[0].mxu0 %v3279
      %v3572 = vpop.f32.mrb[0].mxu0
      %v3573 = vadd.f32 %v3360, %v3572
      %v3574 = vpop.f32.mrb[0].mxu0
      %v3575 = vpop.f32.mrb[0].mxu0
      %v3576 = vadd.f32 %v3360, %v3575
      %v3577 = vpop.f32.mrb[0].mxu0
      %3578 = vmatprep.mubr.bf16.mxu0 %v3282
      %3579 = vmatmul.mubr.bf16.gmra.mrb[0].mxu0 %v3281
      %v3580 = vpop.f32.mrb[0].mxu0
      %v3581 = vadd.f32 %v3360, %v3580
      %v3582 = vpop.f32.mrb[0].mxu0
      %v3583 = vpop.f32.mrb[0].mxu0
      %v3584 = vadd.f32 %v3360, %v3583
      %v3585 = vpop.f32.mrb[0].mxu0
      %3586 = vmatprep.mubr.bf16.mxu0 %v3284
      %3587 = vmatmul.mubr.bf16.gmra.mrb[0].mxu0 %v3283
      %v3588 = vpop.f32.mrb[0].mxu0
      %v3589 = vadd.f32 %v3360, %v3588
      %v3590 = vpop.f32.mrb[0].mxu0
      %v3591 = vpop.f32.mrb[0].mxu0
      %v3592 = vadd.f32 %v3360, %v3591
      %v3593 = vpop.f32.mrb[0].mxu0
      %3594 = vmatprep.mubr.bf16.mxu0 %v3286
      %3595 = vmatmul.mubr.bf16.gmra.mrb[0].mxu0 %v3285
      %v3596 = vpop.f32.mrb[0].mxu0
      %v3597 = vadd.f32 %v3360, %v3596
      %v3598 = vpop.f32.mrb[0].mxu0
      %v3599 = vpop.f32.mrb[0].mxu0
      %v3600 = vadd.f32 %v3360, %v3599
      %v3601 = vpop.f32.mrb[0].mxu0
      %3602 = vmatprep.mubr.bf16.mxu0 %v3288
      %3603 = vmatmul.mubr.bf16.gmra.mrb[0].mxu0 %v3287
      %v3604 = vpop.f32.mrb[0].mxu0
      %v3605 = vadd.f32 %v3360, %v3604
      %v3606 = vpop.f32.mrb[0].mxu0
      %v3607 = vpop.f32.mrb[0].mxu0
      %v3608 = vadd.f32 %v3360, %v3607
      %v3609 = vpop.f32.mrb[0].mxu0
      %3610 = vmatprep.mubr.bf16.mxu0 %v3290
      %3611 = vmatmul.mubr.bf16.gmra.mrb[0].mxu0 %v3289
      %v3612 = vpop.f32.mrb[0].mxu0
      %v3613 = vadd.f32 %v3360, %v3612
      %v3614 = vpop.f32.mrb[0].mxu0
      %v3615 = vpop.f32.mrb[0].mxu0
      %v3616 = vadd.f32 %v3360, %v3615
      %v3617 = vpop.f32.mrb[0].mxu0
      %3618 = vmatprep.mubr.bf16.mxu0 %v3292
      %3619 = vmatmul.mubr.bf16.gmra.mrb[0].mxu0 %v3291
      %v3620 = vpop.f32.mrb[0].mxu0
      %v3621 = vadd.f32 %v3360, %v3620
      %v3622 = vpop.f32.mrb[0].mxu0
      %v3623 = vpop.f32.mrb[0].mxu0
      %v3624 = vadd.f32 %v3360, %v3623
      %v3625 = vpop.f32.mrb[0].mxu0
      %3626 = vmatprep.mubr.bf16.mxu0 %v3294
      %3627 = vmatmul.mubr.bf16.gmra.mrb[0].mxu0 %v3293
      %v3628 = vpop.f32.mrb[0].mxu0
      %v3629 = vadd.f32 %v3360, %v3628
      %v3630 = vpop.f32.mrb[0].mxu0
      %v3631 = vpop.f32.mrb[0].mxu0
      %v3632 = vadd.f32 %v3360, %v3631
      %v3633 = vpop.f32.mrb[0].mxu0
      %3634 = vmatprep.mubr.bf16.mxu0 %v3296
      %3635 = vmatmul.mubr.bf16.gmra.mrb[0].mxu0 %v3295
      %v3636 = vpop.f32.mrb[0].mxu0
      %v3637 = vadd.f32 %v3360, %v3636
      %v3638 = vpop.f32.mrb[0].mxu0
      %v3639 = vpop.f32.mrb[0].mxu0
      %v3640 = vadd.f32 %v3360, %v3639
      %v3641 = vpop.f32.mrb[0].mxu0
      %3642 = vmatprep.mubr.bf16.mxu0 %v3298
      %3643 = vmatmul.mubr.bf16.gmra.mrb[0].mxu0 %v3297
      %v3644 = vpop.f32.mrb[0].mxu0
      %v3645 = vadd.f32 %v3360, %v3644
      %v3646 = vpop.f32.mrb[0].mxu0
      %v3647 = vpop.f32.mrb[0].mxu0
      %v3648 = vadd.f32 %v3360, %v3647
      %v3649 = vpop.f32.mrb[0].mxu0
      %3650 = vmatprep.mubr.bf16.mxu0 %v3300
      %3651 = vmatmul.mubr.bf16.gmra.mrb[0].mxu0 %v3299
      %v3652 = vpop.f32.mrb[0].mxu0
      %v3653 = vadd.f32 %v3360, %v3652
      %v3654 = vpop.f32.mrb[0].mxu0
      %v3655 = vpop.f32.mrb[0].mxu0
      %v3656 = vadd.f32 %v3360, %v3655
      %v3657 = vpop.f32.mrb[0].mxu0
      %3658 = vmatprep.mubr.bf16.mxu0 %v3302
      %3659 = vmatmul.mubr.bf16.gmra.mrb[0].mxu0 %v3301
      %v3660 = vpop.f32.mrb[0].mxu0
      %v3661 = vadd.f32 %v3360, %v3660
      %v3662 = vpop.f32.mrb[0].mxu0
      %v3663 = vpop.f32.mrb[0].mxu0
      %v3664 = vadd.f32 %v3360, %v3663
      %v3665 = vpop.f32.mrb[0].mxu0
      %3666 = vmatprep.mubr.bf16.mxu0 %v3304
      %3667 = vmatmul.mubr.bf16.gmra.mrb[0].mxu0 %v3303
      %v3668 = vpop.f32.mrb[0].mxu0
      %v3669 = vadd.f32 %v3360, %v3668
      %v3670 = vpop.f32.mrb[0].mxu0
      %v3671 = vpop.f32.mrb[0].mxu0
      %v3672 = vadd.f32 %v3360, %v3671
      %v3673 = vpop.f32.mrb[0].mxu0
      %3674 = vmatprep.mubr.bf16.mxu0 %v3306
      %3675 = vmatmul.mubr.bf16.gmra.mrb[0].mxu0 %v3305
      %v3676 = vpop.f32.mrb[0].mxu0
      %v3677 = vadd.f32 %v3360, %v3676
      %v3678 = vpop.f32.mrb[0].mxu0
      %v3679 = vpop.f32.mrb[0].mxu0
      %v3680 = vadd.f32 %v3360, %v3679
      %v3681 = vpop.f32.mrb[0].mxu0
      %3682 = vmatprep.mubr.bf16.mxu0 %v3308
      %3683 = vmatmul.mubr.bf16.gmra.mrb[0].mxu0 %v3307
      %v3684 = vpop.f32.mrb[0].mxu0
      %v3685 = vadd.f32 %v3360, %v3684
      %v3686 = vpop.f32.mrb[0].mxu0
      %v3687 = vpop.f32.mrb[0].mxu0
      %v3688 = vadd.f32 %v3360, %v3687
      %v3689 = vpop.f32.mrb[0].mxu0
      %3690 = vmatprep.mubr.bf16.mxu0 %v3310
      %3691 = vmatmul.mubr.bf16.gmra.mrb[0].mxu0 %v3309
      %v3692 = vpop.f32.mrb[0].mxu0
      %v3693 = vadd.f32 %v3360, %v3692
      %v3694 = vpop.f32.mrb[0].mxu0
      %v3695 = vpop.f32.mrb[0].mxu0
      %v3696 = vadd.f32 %v3360, %v3695
      %v3697 = vpop.f32.mrb[0].mxu0
      %3698 = vmatprep.mubr.bf16.mxu0 %v3312
      %3699 = vmatmul.mubr.bf16.gmra.mrb[0].mxu0 %v3311
      %v3700 = vpop.f32.mrb[0].mxu0
      %v3701 = vadd.f32 %v3360, %v3700
      %v3702 = vpop.f32.mrb[0].mxu0
      %v3703 = vpop.f32.mrb[0].mxu0
      %v3704 = vadd.f32 %v3360, %v3703
      %v3705 = vpop.f32.mrb[0].mxu0
      %3706 = vmatprep.mubr.bf16.mxu0 %v3314
      %3707 = vmatmul.mubr.bf16.gmra.mrb[0].mxu0 %v3313
      %v3708 = vpop.f32.mrb[0].mxu0
      %v3709 = vadd.f32 %v3360, %v3708
      %v3710 = vpop.f32.mrb[0].mxu0
      %v3711 = vpop.f32.mrb[0].mxu0
      %v3712 = vadd.f32 %v3360, %v3711
      %v3713 = vpop.f32.mrb[0].mxu0
      %3714 = vmatprep.mubr.bf16.mxu0 %v3316
      %3715 = vmatmul.mubr.bf16.gmra.mrb[0].mxu0 %v3315
      %v3716 = vpop.f32.mrb[0].mxu0
      %v3717 = vadd.f32 %v3360, %v3716
      %v3718 = vpop.f32.mrb[0].mxu0
      %v3719 = vpop.f32.mrb[0].mxu0
      %v3720 = vadd.f32 %v3360, %v3719
      %v3721 = vpop.f32.mrb[0].mxu0
      %3722 = vmatprep.mubr.bf16.mxu0 %v3318
      %3723 = vmatmul.mubr.bf16.gmra.mrb[0].mxu0 %v3317
      %v3724 = vpop.f32.mrb[0].mxu0
      %v3725 = vadd.f32 %v3360, %v3724
      %v3726 = vpop.f32.mrb[0].mxu0
      %v3727 = vpop.f32.mrb[0].mxu0
      %v3728 = vadd.f32 %v3360, %v3727
      %v3729 = vpop.f32.mrb[0].mxu0
      %3730 = vmatprep.mubr.bf16.mxu0 %v3320
      %3731 = vmatmul.mubr.bf16.gmra.mrb[0].mxu0 %v3319
      %v3732 = vpop.f32.mrb[0].mxu0
      %v3733 = vadd.f32 %v3360, %v3732
      %v3734 = vpop.f32.mrb[0].mxu0
      %v3735 = vpop.f32.mrb[0].mxu0
      %v3736 = vadd.f32 %v3360, %v3735
      %v3737 = vpop.f32.mrb[0].mxu0
      %3738 = vmatprep.mubr.bf16.mxu0 %v3322
      %3739 = vmatmul.mubr.bf16.gmra.mrb[0].mxu0 %v3321
      %v3740 = vpop.f32.mrb[0].mxu0
      %v3741 = vadd.f32 %v3360, %v3740
      %v3742 = vpop.f32.mrb[0].mxu0
      %v3743 = vpop.f32.mrb[0].mxu0
      %v3744 = vadd.f32 %v3360, %v3743
      %v3745 = vpop.f32.mrb[0].mxu0
      %3746 = vdwg.mxu0
      %v3747 = vmax.f32 %v3493, 0.0
      %v3748 = vmax.f32 %v3496, 0.0
      %v3749 = vmax.f32 %v3501, 0.0
      %v3750 = vmax.f32 %v3504, 0.0
      %v3751 = vmax.f32 %v3509, 0.0
      %v3752 = vmax.f32 %v3512, 0.0
      %v3753 = vmax.f32 %v3517, 0.0
      %v3754 = vmax.f32 %v3520, 0.0
      %v3755 = vmax.f32 %v3525, 0.0
      %v3756 = vmax.f32 %v3528, 0.0
      %v3757 = vmax.f32 %v3533, 0.0
      %v3758 = vmax.f32 %v3536, 0.0
      %v3759 = vmax.f32 %v3541, 0.0
      %v3760 = vmax.f32 %v3544, 0.0
      %v3761 = vmax.f32 %v3549, 0.0
      %v3762 = vmax.f32 %v3552, 0.0
      %v3763 = vmax.f32 %v3557, 0.0
      %v3764 = vmax.f32 %v3560, 0.0
      %v3765 = vmax.f32 %v3565, 0.0
      %v3766 = vmax.f32 %v3568, 0.0
      %v3767 = vmax.f32 %v3573, 0.0
      %v3768 = vmax.f32 %v3576, 0.0
      %v3769 = vmax.f32 %v3581, 0.0
      %v3770 = vmax.f32 %v3584, 0.0
      %v3771 = vmax.f32 %v3589, 0.0
      %v3772 = vmax.f32 %v3592, 0.0
      %v3773 = vmax.f32 %v3597, 0.0
      %v3774 = vmax.f32 %v3600, 0.0
      %v3775 = vmax.f32 %v3605, 0.0
      %v3776 = vmax.f32 %v3608, 0.0
      %v3777 = vmax.f32 %v3613, 0.0
      %v3778 = vmax.f32 %v3616, 0.0
      %v3779 = vmax.f32 %v3621, 0.0
      %v3780 = vmax.f32 %v3624, 0.0
      %v3781 = vmax.f32 %v3629, 0.0
      %v3782 = vmax.f32 %v3632, 0.0
      %v3783 = vmax.f32 %v3637, 0.0
      %v3784 = vmax.f32 %v3640, 0.0
      %v3785 = vmax.f32 %v3645, 0.0
      %v3786 = vmax.f32 %v3648, 0.0
      %v3787 = vmax.f32 %v3653, 0.0
      %v3788 = vmax.f32 %v3656, 0.0
      %v3789 = vmax.f32 %v3661, 0.0
      %v3790 = vmax.f32 %v3664, 0.0
      %v3791 = vmax.f32 %v3669, 0.0
      %v3792 = vmax.f32 %v3672, 0.0
      %v3793 = vmax.f32 %v3677, 0.0
      %v3794 = vmax.f32 %v3680, 0.0
      %v3795 = vmax.f32 %v3685, 0.0
      %v3796 = vmax.f32 %v3688, 0.0
      %v3797 = vmax.f32 %v3693, 0.0
      %v3798 = vmax.f32 %v3696, 0.0
      %v3799 = vmax.f32 %v3701, 0.0
      %v3800 = vmax.f32 %v3704, 0.0
      %v3801 = vmax.f32 %v3709, 0.0
      %v3802 = vmax.f32 %v3712, 0.0
      %v3803 = vmax.f32 %v3717, 0.0
      %v3804 = vmax.f32 %v3720, 0.0
      %v3805 = vmax.f32 %v3725, 0.0
      %v3806 = vmax.f32 %v3728, 0.0
      %v3807 = vmax.f32 %v3733, 0.0
      %v3808 = vmax.f32 %v3736, 0.0
      %v3809 = vmax.f32 %v3741, 0.0
      %v3810 = vmax.f32 %v3744, 0.0
      %v3811 = vpack.c.bf16 %v3748, %v3747
      %v3812 = vpack.c.bf16 %v3750, %v3749
      %v3813 = vpack.c.bf16 %v3752, %v3751
      %v3814 = vpack.c.bf16 %v3754, %v3753
      %v3815 = vpack.c.bf16 %v3756, %v3755
      %v3816 = vpack.c.bf16 %v3758, %v3757
      %v3817 = vpack.c.bf16 %v3760, %v3759
      %v3818 = vpack.c.bf16 %v3762, %v3761
      %v3819 = vpack.c.bf16 %v3764, %v3763
      %v3820 = vpack.c.bf16 %v3766, %v3765
      %v3821 = vpack.c.bf16 %v3768, %v3767
      %v3822 = vpack.c.bf16 %v3770, %v3769
      %v3823 = vpack.c.bf16 %v3772, %v3771
      %v3824 = vpack.c.bf16 %v3774, %v3773
      %v3825 = vpack.c.bf16 %v3776, %v3775
      %v3826 = vpack.c.bf16 %v3778, %v3777
      %v3827 = vpack.c.bf16 %v3780, %v3779
      %v3828 = vpack.c.bf16 %v3782, %v3781
      %v3829 = vpack.c.bf16 %v3784, %v3783
      %v3830 = vpack.c.bf16 %v3786, %v3785
      %v3831 = vpack.c.bf16 %v3788, %v3787
      %v3832 = vpack.c.bf16 %v3790, %v3789
      %v3833 = vpack.c.bf16 %v3792, %v3791
      %v3834 = vpack.c.bf16 %v3794, %v3793
      %v3835 = vpack.c.bf16 %v3796, %v3795
      %v3836 = vpack.c.bf16 %v3798, %v3797
      %v3837 = vpack.c.bf16 %v3800, %v3799
      %v3838 = vpack.c.bf16 %v3802, %v3801
      %v3839 = vpack.c.bf16 %v3804, %v3803
      %v3840 = vpack.c.bf16 %v3806, %v3805
      %v3841 = vpack.c.bf16 %v3808, %v3807
      %v3842 = vpack.c.bf16 %v3810, %v3809
      %v3843 = vld [vmem:[%s7] sm:$0xff]
      %v3844 = vld [vmem:[%s7 + $0x8] sm:$0xff]
      %v3845 = vld [vmem:[%s7 + $0x10] sm:$0xff]
      %v3846 = vld [vmem:[%s7 + $0x18] sm:$0xff]
      %v3847 = vld [vmem:[%s7 + $0x20] sm:$0xff]
      %v3848 = vld [vmem:[%s7 + $0x28] sm:$0xff]
      %v3849 = vld [vmem:[%s7 + $0x30] sm:$0xff]
      %v3850 = vld [vmem:[%s7 + $0x38] sm:$0xff]
      %v3851 = vld [vmem:[%s7 + $0x40] sm:$0xff]
      %v3852 = vld [vmem:[%s7 + $0x48] sm:$0xff]
      %v3853 = vld [vmem:[%s7 + $0x50] sm:$0xff]
      %v3854 = vld [vmem:[%s7 + $0x58] sm:$0xff]
      %v3855 = vld [vmem:[%s7 + $0x60] sm:$0xff]
      %v3856 = vld [vmem:[%s7 + $0x68] sm:$0xff]
      %v3857 = vld [vmem:[%s7 + $0x70] sm:$0xff]
      %v3858 = vld [vmem:[%s7 + $0x78] sm:$0xff]
      %v3859 = vld [vmem:[%s8] sm:$0x3]
      %v3861 = vlaneseq
      %v3862 = vshrl.u32 %v3861, 7
      %v3863 = vsub.s32 0, %v3862
      %v3864 = vrot.slane %v3859, %v3863
      %v3865 = vlaneseq
      %v3866 = vshrl.u32 %v3865, 7
      %v3867 = vsub.s32 1, %v3866
      %v3868 = vrot.slane %v3859, %v3867
      %v3887 = vunpack.c.l.b16 %v3843
      %v3888 = vunpack.c.h.b16 %v3843
      %v3889 = vunpack.c.l.b16 %v3844
      %v3890 = vunpack.c.h.b16 %v3844
      %v3891 = vunpack.c.l.b16 %v3845
      %v3892 = vunpack.c.h.b16 %v3845
      %v3893 = vunpack.c.l.b16 %v3846
      %v3894 = vunpack.c.h.b16 %v3846
      %v3895 = vunpack.c.l.b16 %v3847
      %v3896 = vunpack.c.h.b16 %v3847
      %v3897 = vunpack.c.l.b16 %v3848
      %v3898 = vunpack.c.h.b16 %v3848
      %v3899 = vunpack.c.l.b16 %v3849
      %v3900 = vunpack.c.h.b16 %v3849
      %v3901 = vunpack.c.l.b16 %v3850
      %v3902 = vunpack.c.h.b16 %v3850
      %v3903 = vunpack.c.l.b16 %v3851
      %v3904 = vunpack.c.h.b16 %v3851
      %v3905 = vunpack.c.l.b16 %v3852
      %v3906 = vunpack.c.h.b16 %v3852
      %v3907 = vunpack.c.l.b16 %v3853
      %v3908 = vunpack.c.h.b16 %v3853
      %v3909 = vunpack.c.l.b16 %v3854
      %v3910 = vunpack.c.h.b16 %v3854
      %v3911 = vunpack.c.l.b16 %v3855
      %v3912 = vunpack.c.h.b16 %v3855
      %v3913 = vunpack.c.l.b16 %v3856
      %v3914 = vunpack.c.h.b16 %v3856
      %v3915 = vunpack.c.l.b16 %v3857
      %v3916 = vunpack.c.h.b16 %v3857
      %v3917 = vunpack.c.l.b16 %v3858
      %v3918 = vunpack.c.h.b16 %v3858
      %v3919 = vpack.c.b16 %v3889, %v3887
      %v3920 = vpack.c.b16 %v3890, %v3888
      %v3921 = vpack.c.b16 %v3893, %v3891
      %v3922 = vpack.c.b16 %v3894, %v3892
      %v3923 = vpack.c.b16 %v3897, %v3895
      %v3924 = vpack.c.b16 %v3898, %v3896
      %v3925 = vpack.c.b16 %v3901, %v3899
      %v3926 = vpack.c.b16 %v3902, %v3900
      %v3927 = vpack.c.b16 %v3905, %v3903
      %v3928 = vpack.c.b16 %v3906, %v3904
      %v3929 = vpack.c.b16 %v3909, %v3907
      %v3930 = vpack.c.b16 %v3910, %v3908
      %v3931 = vpack.c.b16 %v3913, %v3911
      %v3932 = vpack.c.b16 %v3914, %v3912
      %v3933 = vpack.c.b16 %v3917, %v3915
      %v3934 = vpack.c.b16 %v3918, %v3916
      %3951 = vmatprep.subr.bf16.mxu0 %v3920
      %3952 = vmatpush1.bf16.msra.mxu0 %v3919
      %3953 = vmatprep.subr.bf16.mxu0 %v3922
      %3954 = vmatpush1.bf16.msra.mxu0 %v3921
      %3955 = vmatprep.subr.bf16.mxu0 %v3924
      %3956 = vmatpush1.bf16.msra.mxu0 %v3923
      %3957 = vmatprep.subr.bf16.mxu0 %v3926
      %3958 = vmatpush1.bf16.msra.mxu0 %v3925
      %3959 = vmatprep.subr.bf16.mxu0 %v3928
      %3960 = vmatpush1.bf16.msra.mxu0 %v3927
      %3961 = vmatprep.subr.bf16.mxu0 %v3930
      %3962 = vmatpush1.bf16.msra.mxu0 %v3929
      %3963 = vmatprep.subr.bf16.mxu0 %v3932
      %3964 = vmatpush1.bf16.msra.mxu0 %v3931
      %3965 = vmatprep.subr.bf16.mxu0 %v3934
      %3966 = vmatpush1.bf16.msra.mxu0 %v3933
      %3967 = vmatprep.subr.bf16.mxu0 0
      %3968 = vmatpush1.bf16.msra.mxu0 0
      %3969 = vmatprep.subr.bf16.mxu0 0
      %3970 = vmatpush1.bf16.msra.mxu0 0
      %3971 = vmatprep.subr.bf16.mxu0 0
      %3972 = vmatpush1.bf16.msra.mxu0 0
      %3973 = vmatprep.subr.bf16.mxu0 0
      %3974 = vmatpush1.bf16.msra.mxu0 0
      %3975 = vmatprep.subr.bf16.mxu0 0
      %3976 = vmatpush1.bf16.msra.mxu0 0
      %3977 = vmatprep.subr.bf16.mxu0 0
      %3978 = vmatpush1.bf16.msra.mxu0 0
      %3979 = vmatprep.subr.bf16.mxu0 0
      %3980 = vmatpush1.bf16.msra.mxu0 0
      %3981 = vmatprep.subr.bf16.mxu0 0
      %3982 = vmatpush1.bf16.msra.mxu0 0
      %3983 = vmatprep.mubr.bf16.mxu0 0
      %3984 = vmatmul.mubr.bf16.gmra.mrb[0].mxu0 %v3811
      %v3985 = vpop.f32.mrb[0].mxu0
      %v3986 = vadd.f32 %v3864, %v3985
      %v3987 = vpop.f32.mrb[0].mxu0
      %v3988 = vadd.f32 %v3868, %v3987
      %v3989 = vpop.f32.mrb[0].mxu0
      %v3990 = vadd.f32 %v3864, %v3989
      %v3991 = vpop.f32.mrb[0].mxu0
      %v3992 = vadd.f32 %v3868, %v3991
      %3993 = vmatprep.mubr.bf16.mxu0 0
      %3994 = vmatmul.mubr.bf16.gmra.mrb[0].mxu0 %v3812
      %v3995 = vpop.f32.mrb[0].mxu0
      %v3996 = vadd.f32 %v3864, %v3995
      %v3997 = vpop.f32.mrb[0].mxu0
      %v3998 = vadd.f32 %v3868, %v3997
      %v3999 = vpop.f32.mrb[0].mxu0
      %v4000 = vadd.f32 %v3864, %v3999
      %v4001 = vpop.f32.mrb[0].mxu0
      %v4002 = vadd.f32 %v3868, %v4001
      %4003 = vmatprep.mubr.bf16.mxu0 0
      %4004 = vmatmul.mubr.bf16.gmra.mrb[0].mxu0 %v3813
      %v4005 = vpop.f32.mrb[0].mxu0
      %v4006 = vadd.f32 %v3864, %v4005
      %v4007 = vpop.f32.mrb[0].mxu0
      %v4008 = vadd.f32 %v3868, %v4007
      %v4009 = vpop.f32.mrb[0].mxu0
      %v4010 = vadd.f32 %v3864, %v4009
      %v4011 = vpop.f32.mrb[0].mxu0
      %v4012 = vadd.f32 %v3868, %v4011
      %4013 = vmatprep.mubr.bf16.mxu0 0
      %4014 = vmatmul.mubr.bf16.gmra.mrb[0].mxu0 %v3814
      %v4015 = vpop.f32.mrb[0].mxu0
      %v4016 = vadd.f32 %v3864, %v4015
      %v4017 = vpop.f32.mrb[0].mxu0
      %v4018 = vadd.f32 %v3868, %v4017
      %v4019 = vpop.f32.mrb[0].mxu0
      %v4020 = vadd.f32 %v3864, %v4019
      %v4021 = vpop.f32.mrb[0].mxu0
      %v4022 = vadd.f32 %v3868, %v4021
      %4023 = vmatprep.mubr.bf16.mxu0 0
      %4024 = vmatmul.mubr.bf16.gmra.mrb[0].mxu0 %v3815
      %v4025 = vpop.f32.mrb[0].mxu0
      %v4026 = vadd.f32 %v3864, %v4025
      %v4027 = vpop.f32.mrb[0].mxu0
      %v4028 = vadd.f32 %v3868, %v4027
      %v4029 = vpop.f32.mrb[0].mxu0
      %v4030 = vadd.f32 %v3864, %v4029
      %v4031 = vpop.f32.mrb[0].mxu0
      %v4032 = vadd.f32 %v3868, %v4031
      %4033 = vmatprep.mubr.bf16.mxu0 0
      %4034 = vmatmul.mubr.bf16.gmra.mrb[0].mxu0 %v3816
      %v4035 = vpop.f32.mrb[0].mxu0
      %v4036 = vadd.f32 %v3864, %v4035
      %v4037 = vpop.f32.mrb[0].mxu0
      %v4038 = vadd.f32 %v3868, %v4037
      %v4039 = vpop.f32.mrb[0].mxu0
      %v4040 = vadd.f32 %v3864, %v4039
      %v4041 = vpop.f32.mrb[0].mxu0
      %v4042 = vadd.f32 %v3868, %v4041
      %4043 = vmatprep.mubr.bf16.mxu0 0
      %4044 = vmatmul.mubr.bf16.gmra.mrb[0].mxu0 %v3817
      %v4045 = vpop.f32.mrb[0].mxu0
      %v4046 = vadd.f32 %v3864, %v4045
      %v4047 = vpop.f32.mrb[0].mxu0
      %v4048 = vadd.f32 %v3868, %v4047
      %v4049 = vpop.f32.mrb[0].mxu0
      %v4050 = vadd.f32 %v3864, %v4049
      %v4051 = vpop.f32.mrb[0].mxu0
      %v4052 = vadd.f32 %v3868, %v4051
      %4053 = vmatprep.mubr.bf16.mxu0 0
      %4054 = vmatmul.mubr.bf16.gmra.mrb[0].mxu0 %v3818
      %v4055 = vpop.f32.mrb[0].mxu0
      %v4056 = vadd.f32 %v3864, %v4055
      %v4057 = vpop.f32.mrb[0].mxu0
      %v4058 = vadd.f32 %v3868, %v4057
      %v4059 = vpop.f32.mrb[0].mxu0
      %v4060 = vadd.f32 %v3864, %v4059
      %v4061 = vpop.f32.mrb[0].mxu0
      %v4062 = vadd.f32 %v3868, %v4061
      %4063 = vmatprep.mubr.bf16.mxu0 0
      %4064 = vmatmul.mubr.bf16.gmra.mrb[0].mxu0 %v3819
      %v4065 = vpop.f32.mrb[0].mxu0
      %v4066 = vadd.f32 %v3864, %v4065
      %v4067 = vpop.f32.mrb[0].mxu0
      %v4068 = vadd.f32 %v3868, %v4067
      %v4069 = vpop.f32.mrb[0].mxu0
      %v4070 = vadd.f32 %v3864, %v4069
      %v4071 = vpop.f32.mrb[0].mxu0
      %v4072 = vadd.f32 %v3868, %v4071
      %4073 = vmatprep.mubr.bf16.mxu0 0
      %4074 = vmatmul.mubr.bf16.gmra.mrb[0].mxu0 %v3820
      %v4075 = vpop.f32.mrb[0].mxu0
      %v4076 = vadd.f32 %v3864, %v4075
      %v4077 = vpop.f32.mrb[0].mxu0
      %v4078 = vadd.f32 %v3868, %v4077
      %v4079 = vpop.f32.mrb[0].mxu0
      %v4080 = vadd.f32 %v3864, %v4079
      %v4081 = vpop.f32.mrb[0].mxu0
      %v4082 = vadd.f32 %v3868, %v4081
      %4083 = vmatprep.mubr.bf16.mxu0 0
      %4084 = vmatmul.mubr.bf16.gmra.mrb[0].mxu0 %v3821
      %v4085 = vpop.f32.mrb[0].mxu0
      %v4086 = vadd.f32 %v3864, %v4085
      %v4087 = vpop.f32.mrb[0].mxu0
      %v4088 = vadd.f32 %v3868, %v4087
      %v4089 = vpop.f32.mrb[0].mxu0
      %v4090 = vadd.f32 %v3864, %v4089
      %v4091 = vpop.f32.mrb[0].mxu0
      %v4092 = vadd.f32 %v3868, %v4091
      %4093 = vmatprep.mubr.bf16.mxu0 0
      %4094 = vmatmul.mubr.bf16.gmra.mrb[0].mxu0 %v3822
      %v4095 = vpop.f32.mrb[0].mxu0
      %v4096 = vadd.f32 %v3864, %v4095
      %v4097 = vpop.f32.mrb[0].mxu0
      %v4098 = vadd.f32 %v3868, %v4097
      %v4099 = vpop.f32.mrb[0].mxu0
      %v4100 = vadd.f32 %v3864, %v4099
      %v4101 = vpop.f32.mrb[0].mxu0
      %v4102 = vadd.f32 %v3868, %v4101
      %4103 = vmatprep.mubr.bf16.mxu0 0
      %4104 = vmatmul.mubr.bf16.gmra.mrb[0].mxu0 %v3823
      %v4105 = vpop.f32.mrb[0].mxu0
      %v4106 = vadd.f32 %v3864, %v4105
      %v4107 = vpop.f32.mrb[0].mxu0
      %v4108 = vadd.f32 %v3868, %v4107
      %v4109 = vpop.f32.mrb[0].mxu0
      %v4110 = vadd.f32 %v3864, %v4109
      %v4111 = vpop.f32.mrb[0].mxu0
      %v4112 = vadd.f32 %v3868, %v4111
      %4113 = vmatprep.mubr.bf16.mxu0 0
      %4114 = vmatmul.mubr.bf16.gmra.mrb[0].mxu0 %v3824
      %v4115 = vpop.f32.mrb[0].mxu0
      %v4116 = vadd.f32 %v3864, %v4115
      %v4117 = vpop.f32.mrb[0].mxu0
      %v4118 = vadd.f32 %v3868, %v4117
      %v4119 = vpop.f32.mrb[0].mxu0
      %v4120 = vadd.f32 %v3864, %v4119
      %v4121 = vpop.f32.mrb[0].mxu0
      %v4122 = vadd.f32 %v3868, %v4121
      %4123 = vmatprep.mubr.bf16.mxu0 0
      %4124 = vmatmul.mubr.bf16.gmra.mrb[0].mxu0 %v3825
      %v4125 = vpop.f32.mrb[0].mxu0
      %v4126 = vadd.f32 %v3864, %v4125
      %v4127 = vpop.f32.mrb[0].mxu0
      %v4128 = vadd.f32 %v3868, %v4127
      %v4129 = vpop.f32.mrb[0].mxu0
      %v4130 = vadd.f32 %v3864, %v4129
      %v4131 = vpop.f32.mrb[0].mxu0
      %v4132 = vadd.f32 %v3868, %v4131
      %4133 = vmatprep.mubr.bf16.mxu0 0
      %4134 = vmatmul.mubr.bf16.gmra.mrb[0].mxu0 %v3826
      %v4135 = vpop.f32.mrb[0].mxu0
      %v4136 = vadd.f32 %v3864, %v4135
      %v4137 = vpop.f32.mrb[0].mxu0
      %v4138 = vadd.f32 %v3868, %v4137
      %v4139 = vpop.f32.mrb[0].mxu0
      %v4140 = vadd.f32 %v3864, %v4139
      %v4141 = vpop.f32.mrb[0].mxu0
      %v4142 = vadd.f32 %v3868, %v4141
      %4143 = vmatprep.mubr.bf16.mxu0 0
      %4144 = vmatmul.mubr.bf16.gmra.mrb[0].mxu0 %v3827
      %v4145 = vpop.f32.mrb[0].mxu0
      %v4146 = vadd.f32 %v3864, %v4145
      %v4147 = vpop.f32.mrb[0].mxu0
      %v4148 = vadd.f32 %v3868, %v4147
      %v4149 = vpop.f32.mrb[0].mxu0
      %v4150 = vadd.f32 %v3864, %v4149
      %v4151 = vpop.f32.mrb[0].mxu0
      %v4152 = vadd.f32 %v3868, %v4151
      %4153 = vmatprep.mubr.bf16.mxu0 0
      %4154 = vmatmul.mubr.bf16.gmra.mrb[0].mxu0 %v3828
      %v4155 = vpop.f32.mrb[0].mxu0
      %v4156 = vadd.f32 %v3864, %v4155
      %v4157 = vpop.f32.mrb[0].mxu0
      %v4158 = vadd.f32 %v3868, %v4157
      %v4159 = vpop.f32.mrb[0].mxu0
      %v4160 = vadd.f32 %v3864, %v4159
      %v4161 = vpop.f32.mrb[0].mxu0
      %v4162 = vadd.f32 %v3868, %v4161
      %4163 = vmatprep.mubr.bf16.mxu0 0
      %4164 = vmatmul.mubr.bf16.gmra.mrb[0].mxu0 %v3829
      %v4165 = vpop.f32.mrb[0].mxu0
      %v4166 = vadd.f32 %v3864, %v4165
      %v4167 = vpop.f32.mrb[0].mxu0
      %v4168 = vadd.f32 %v3868, %v4167
      %v4169 = vpop.f32.mrb[0].mxu0
      %v4170 = vadd.f32 %v3864, %v4169
      %v4171 = vpop.f32.mrb[0].mxu0
      %v4172 = vadd.f32 %v3868, %v4171
      %4173 = vmatprep.mubr.bf16.mxu0 0
      %4174 = vmatmul.mubr.bf16.gmra.mrb[0].mxu0 %v3830
      %v4175 = vpop.f32.mrb[0].mxu0
      %v4176 = vadd.f32 %v3864, %v4175
      %v4177 = vpop.f32.mrb[0].mxu0
      %v4178 = vadd.f32 %v3868, %v4177
      %v4179 = vpop.f32.mrb[0].mxu0
      %v4180 = vadd.f32 %v3864, %v4179
      %v4181 = vpop.f32.mrb[0].mxu0
      %v4182 = vadd.f32 %v3868, %v4181
      %4183 = vmatprep.mubr.bf16.mxu0 0
      %4184 = vmatmul.mubr.bf16.gmra.mrb[0].mxu0 %v3831
      %v4185 = vpop.f32.mrb[0].mxu0
      %v4186 = vadd.f32 %v3864, %v4185
      %v4187 = vpop.f32.mrb[0].mxu0
      %v4188 = vadd.f32 %v3868, %v4187
      %v4189 = vpop.f32.mrb[0].mxu0
      %v4190 = vadd.f32 %v3864, %v4189
      %v4191 = vpop.f32.mrb[0].mxu0
      %v4192 = vadd.f32 %v3868, %v4191
      %4193 = vmatprep.mubr.bf16.mxu0 0
      %4194 = vmatmul.mubr.bf16.gmra.mrb[0].mxu0 %v3832
      %v4195 = vpop.f32.mrb[0].mxu0
      %v4196 = vadd.f32 %v3864, %v4195
      %v4197 = vpop.f32.mrb[0].mxu0
      %v4198 = vadd.f32 %v3868, %v4197
      %v4199 = vpop.f32.mrb[0].mxu0
      %v4200 = vadd.f32 %v3864, %v4199
      %v4201 = vpop.f32.mrb[0].mxu0
      %v4202 = vadd.f32 %v3868, %v4201
      %4203 = vmatprep.mubr.bf16.mxu0 0
      %4204 = vmatmul.mubr.bf16.gmra.mrb[0].mxu0 %v3833
      %v4205 = vpop.f32.mrb[0].mxu0
      %v4206 = vadd.f32 %v3864, %v4205
      %v4207 = vpop.f32.mrb[0].mxu0
      %v4208 = vadd.f32 %v3868, %v4207
      %v4209 = vpop.f32.mrb[0].mxu0
      %v4210 = vadd.f32 %v3864, %v4209
      %v4211 = vpop.f32.mrb[0].mxu0
      %v4212 = vadd.f32 %v3868, %v4211
      %4213 = vmatprep.mubr.bf16.mxu0 0
      %4214 = vmatmul.mubr.bf16.gmra.mrb[0].mxu0 %v3834
      %v4215 = vpop.f32.mrb[0].mxu0
      %v4216 = vadd.f32 %v3864, %v4215
      %v4217 = vpop.f32.mrb[0].mxu0
      %v4218 = vadd.f32 %v3868, %v4217
      %v4219 = vpop.f32.mrb[0].mxu0
      %v4220 = vadd.f32 %v3864, %v4219
      %v4221 = vpop.f32.mrb[0].mxu0
      %v4222 = vadd.f32 %v3868, %v4221
      %4223 = vmatprep.mubr.bf16.mxu0 0
      %4224 = vmatmul.mubr.bf16.gmra.mrb[0].mxu0 %v3835
      %v4225 = vpop.f32.mrb[0].mxu0
      %v4226 = vadd.f32 %v3864, %v4225
      %v4227 = vpop.f32.mrb[0].mxu0
      %v4228 = vadd.f32 %v3868, %v4227
      %v4229 = vpop.f32.mrb[0].mxu0
      %v4230 = vadd.f32 %v3864, %v4229
      %v4231 = vpop.f32.mrb[0].mxu0
      %v4232 = vadd.f32 %v3868, %v4231
      %4233 = vmatprep.mubr.bf16.mxu0 0
      %4234 = vmatmul.mubr.bf16.gmra.mrb[0].mxu0 %v3836
      %v4235 = vpop.f32.mrb[0].mxu0
      %v4236 = vadd.f32 %v3864, %v4235
      %v4237 = vpop.f32.mrb[0].mxu0
      %v4238 = vadd.f32 %v3868, %v4237
      %v4239 = vpop.f32.mrb[0].mxu0
      %v4240 = vadd.f32 %v3864, %v4239
      %v4241 = vpop.f32.mrb[0].mxu0
      %v4242 = vadd.f32 %v3868, %v4241
      %4243 = vmatprep.mubr.bf16.mxu0 0
      %4244 = vmatmul.mubr.bf16.gmra.mrb[0].mxu0 %v3837
      %v4245 = vpop.f32.mrb[0].mxu0
      %v4246 = vadd.f32 %v3864, %v4245
      %v4247 = vpop.f32.mrb[0].mxu0
      %v4248 = vadd.f32 %v3868, %v4247
      %v4249 = vpop.f32.mrb[0].mxu0
      %v4250 = vadd.f32 %v3864, %v4249
      %v4251 = vpop.f32.mrb[0].mxu0
      %v4252 = vadd.f32 %v3868, %v4251
      %4253 = vmatprep.mubr.bf16.mxu0 0
      %4254 = vmatmul.mubr.bf16.gmra.mrb[0].mxu0 %v3838
      %v4255 = vpop.f32.mrb[0].mxu0
      %v4256 = vadd.f32 %v3864, %v4255
      %v4257 = vpop.f32.mrb[0].mxu0
      %v4258 = vadd.f32 %v3868, %v4257
      %v4259 = vpop.f32.mrb[0].mxu0
      %v4260 = vadd.f32 %v3864, %v4259
      %v4261 = vpop.f32.mrb[0].mxu0
      %v4262 = vadd.f32 %v3868, %v4261
      %4263 = vmatprep.mubr.bf16.mxu0 0
      %4264 = vmatmul.mubr.bf16.gmra.mrb[0].mxu0 %v3839
      %v4265 = vpop.f32.mrb[0].mxu0
      %v4266 = vadd.f32 %v3864, %v4265
      %v4267 = vpop.f32.mrb[0].mxu0
      %v4268 = vadd.f32 %v3868, %v4267
      %v4269 = vpop.f32.mrb[0].mxu0
      %v4270 = vadd.f32 %v3864, %v4269
      %v4271 = vpop.f32.mrb[0].mxu0
      %v4272 = vadd.f32 %v3868, %v4271
      %4273 = vmatprep.mubr.bf16.mxu0 0
      %4274 = vmatmul.mubr.bf16.gmra.mrb[0].mxu0 %v3840
      %v4275 = vpop.f32.mrb[0].mxu0
      %v4276 = vadd.f32 %v3864, %v4275
      %v4277 = vpop.f32.mrb[0].mxu0
      %v4278 = vadd.f32 %v3868, %v4277
      %v4279 = vpop.f32.mrb[0].mxu0
      %v4280 = vadd.f32 %v3864, %v4279
      %v4281 = vpop.f32.mrb[0].mxu0
      %v4282 = vadd.f32 %v3868, %v4281
      %4283 = vmatprep.mubr.bf16.mxu0 0
      %4284 = vmatmul.mubr.bf16.gmra.mrb[0].mxu0 %v3841
      %v4285 = vpop.f32.mrb[0].mxu0
      %v4286 = vadd.f32 %v3864, %v4285
      %v4287 = vpop.f32.mrb[0].mxu0
      %v4288 = vadd.f32 %v3868, %v4287
      %v4289 = vpop.f32.mrb[0].mxu0
      %v4290 = vadd.f32 %v3864, %v4289
      %v4291 = vpop.f32.mrb[0].mxu0
      %v4292 = vadd.f32 %v3868, %v4291
      %4293 = vmatprep.mubr.bf16.mxu0 0
      %4294 = vmatmul.mubr.bf16.gmra.mrb[0].mxu0 %v3842
      %v4295 = vpop.f32.mrb[0].mxu0
      %v4296 = vadd.f32 %v3864, %v4295
      %v4297 = vpop.f32.mrb[0].mxu0
      %v4298 = vadd.f32 %v3868, %v4297
      %v4299 = vpop.f32.mrb[0].mxu0
      %v4300 = vadd.f32 %v3864, %v4299
      %v4301 = vpop.f32.mrb[0].mxu0
      %v4302 = vadd.f32 %v3868, %v4301
      %4303 = vdwg.mxu0
      %v4304 = vmul.f32 %v3988, 0.5
      %v4305 = vmul.f32 %v3992, 0.5
      %v4306 = vmul.f32 %v3998, 0.5
      %v4307 = vmul.f32 %v4002, 0.5
      %v4308 = vmul.f32 %v4008, 0.5
      %v4309 = vmul.f32 %v4012, 0.5
      %v4310 = vmul.f32 %v4018, 0.5
      %v4311 = vmul.f32 %v4022, 0.5
      %v4312 = vmul.f32 %v4028, 0.5
      %v4313 = vmul.f32 %v4032, 0.5
      %v4314 = vmul.f32 %v4038, 0.5
      %v4315 = vmul.f32 %v4042, 0.5
      %v4316 = vmul.f32 %v4048, 0.5
      %v4317 = vmul.f32 %v4052, 0.5
      %v4318 = vmul.f32 %v4058, 0.5
      %v4319 = vmul.f32 %v4062, 0.5
      %v4320 = vmul.f32 %v4068, 0.5
      %v4321 = vmul.f32 %v4072, 0.5
      %v4322 = vmul.f32 %v4078, 0.5
      %v4323 = vmul.f32 %v4082, 0.5
      %v4324 = vmul.f32 %v4088, 0.5
      %v4325 = vmul.f32 %v4092, 0.5
      %v4326 = vmul.f32 %v4098, 0.5
      %v4327 = vmul.f32 %v4102, 0.5
      %v4328 = vmul.f32 %v4108, 0.5
      %v4329 = vmul.f32 %v4112, 0.5
      %v4330 = vmul.f32 %v4118, 0.5
      %v4331 = vmul.f32 %v4122, 0.5
      %v4332 = vmul.f32 %v4128, 0.5
      %v4333 = vmul.f32 %v4132, 0.5
      %v4334 = vmul.f32 %v4138, 0.5
      %v4335 = vmul.f32 %v4142, 0.5
      %v4336 = vmul.f32 %v4148, 0.5
      %v4337 = vmul.f32 %v4152, 0.5
      %v4338 = vmul.f32 %v4158, 0.5
      %v4339 = vmul.f32 %v4162, 0.5
      %v4340 = vmul.f32 %v4168, 0.5
      %v4341 = vmul.f32 %v4172, 0.5
      %v4342 = vmul.f32 %v4178, 0.5
      %v4343 = vmul.f32 %v4182, 0.5
      %v4344 = vmul.f32 %v4188, 0.5
      %v4345 = vmul.f32 %v4192, 0.5
      %v4346 = vmul.f32 %v4198, 0.5
      %v4347 = vmul.f32 %v4202, 0.5
      %v4348 = vmul.f32 %v4208, 0.5
      %v4349 = vmul.f32 %v4212, 0.5
      %v4350 = vmul.f32 %v4218, 0.5
      %v4351 = vmul.f32 %v4222, 0.5
      %v4352 = vmul.f32 %v4228, 0.5
      %v4353 = vmul.f32 %v4232, 0.5
      %v4354 = vmul.f32 %v4238, 0.5
      %v4355 = vmul.f32 %v4242, 0.5
      %v4356 = vmul.f32 %v4248, 0.5
      %v4357 = vmul.f32 %v4252, 0.5
      %v4358 = vmul.f32 %v4258, 0.5
      %v4359 = vmul.f32 %v4262, 0.5
      %v4360 = vmul.f32 %v4268, 0.5
      %v4361 = vmul.f32 %v4272, 0.5
      %v4362 = vmul.f32 %v4278, 0.5
      %v4363 = vmul.f32 %v4282, 0.5
      %v4364 = vmul.f32 %v4288, 0.5
      %v4365 = vmul.f32 %v4292, 0.5
      %v4366 = vmul.f32 %v4298, 0.5
      %v4367 = vmul.f32 %v4302, 0.5
      %v4368 = vmul.f32 %v4304, 1.442695
      %v4369 = vpow.pop %v4368
      %v4370 = vmul.f32 %v4305, 1.442695
      %v4371 = vpow.pop %v4370
      %v4372 = vmul.f32 %v4306, 1.442695
      %v4373 = vpow.pop %v4372
      %v4374 = vmul.f32 %v4307, 1.442695
      %v4375 = vpow.pop %v4374
      %v4376 = vmul.f32 %v4308, 1.442695
      %v4377 = vpow.pop %v4376
      %v4378 = vmul.f32 %v4309, 1.442695
      %v4379 = vpow.pop %v4378
      %v4380 = vmul.f32 %v4310, 1.442695
      %v4381 = vpow.pop %v4380
      %v4382 = vmul.f32 %v4311, 1.442695
      %v4383 = vpow.pop %v4382
      %v4384 = vmul.f32 %v4312, 1.442695
      %v4385 = vpow.pop %v4384
      %v4386 = vmul.f32 %v4313, 1.442695
      %v4387 = vpow.pop %v4386
      %v4388 = vmul.f32 %v4314, 1.442695
      %v4389 = vpow.pop %v4388
      %v4390 = vmul.f32 %v4315, 1.442695
      %v4391 = vpow.pop %v4390
      %v4392 = vmul.f32 %v4316, 1.442695
      %v4393 = vpow.pop %v4392
      %v4394 = vmul.f32 %v4317, 1.442695
      %v4395 = vpow.pop %v4394
      %v4396 = vmul.f32 %v4318, 1.442695
      %v4397 = vpow.pop %v4396
      %v4398 = vmul.f32 %v4319, 1.442695
      %v4399 = vpow.pop %v4398
      %v4400 = vmul.f32 %v4320, 1.442695
      %v4401 = vpow.pop %v4400
      %v4402 = vmul.f32 %v4321, 1.442695
      %v4403 = vpow.pop %v4402
      %v4404 = vmul.f32 %v4322, 1.442695
      %v4405 = vpow.pop %v4404
      %v4406 = vmul.f32 %v4323, 1.442695
      %v4407 = vpow.pop %v4406
      %v4408 = vmul.f32 %v4324, 1.442695
      %v4409 = vpow.pop %v4408
      %v4410 = vmul.f32 %v4325, 1.442695
      %v4411 = vpow.pop %v4410
      %v4412 = vmul.f32 %v4326, 1.442695
      %v4413 = vpow.pop %v4412
      %v4414 = vmul.f32 %v4327, 1.442695
      %v4415 = vpow.pop %v4414
      %v4416 = vmul.f32 %v4328, 1.442695
      %v4417 = vpow.pop %v4416
      %v4418 = vmul.f32 %v4329, 1.442695
      %v4419 = vpow.pop %v4418
      %v4420 = vmul.f32 %v4330, 1.442695
      %v4421 = vpow.pop %v4420
      %v4422 = vmul.f32 %v4331, 1.442695
      %v4423 = vpow.pop %v4422
      %v4424 = vmul.f32 %v4332, 1.442695
      %v4425 = vpow.pop %v4424
      %v4426 = vmul.f32 %v4333, 1.442695
      %v4427 = vpow.pop %v4426
      %v4428 = vmul.f32 %v4334, 1.442695
      %v4429 = vpow.pop %v4428
      %v4430 = vmul.f32 %v4335, 1.442695
      %v4431 = vpow.pop %v4430
      %v4432 = vmul.f32 %v4336, 1.442695
      %v4433 = vpow.pop %v4432
      %v4434 = vmul.f32 %v4337, 1.442695
      %v4435 = vpow.pop %v4434
      %v4436 = vmul.f32 %v4338, 1.442695
      %v4437 = vpow.pop %v4436
      %v4438 = vmul.f32 %v4339, 1.442695
      %v4439 = vpow.pop %v4438
      %v4440 = vmul.f32 %v4340, 1.442695
      %v4441 = vpow.pop %v4440
      %v4442 = vmul.f32 %v4341, 1.442695
      %v4443 = vpow.pop %v4442
      %v4444 = vmul.f32 %v4342, 1.442695
      %v4445 = vpow.pop %v4444
      %v4446 = vmul.f32 %v4343, 1.442695
      %v4447 = vpow.pop %v4446
      %v4448 = vmul.f32 %v4344, 1.442695
      %v4449 = vpow.pop %v4448
      %v4450 = vmul.f32 %v4345, 1.442695
      %v4451 = vpow.pop %v4450
      %v4452 = vmul.f32 %v4346, 1.442695
      %v4453 = vpow.pop %v4452
      %v4454 = vmul.f32 %v4347, 1.442695
      %v4455 = vpow.pop %v4454
      %v4456 = vmul.f32 %v4348, 1.442695
      %v4457 = vpow.pop %v4456
      %v4458 = vmul.f32 %v4349, 1.442695
      %v4459 = vpow.pop %v4458
      %v4460 = vmul.f32 %v4350, 1.442695
      %v4461 = vpow.pop %v4460
      %v4462 = vmul.f32 %v4351, 1.442695
      %v4463 = vpow.pop %v4462
      %v4464 = vmul.f32 %v4352, 1.442695
      %v4465 = vpow.pop %v4464
      %v4466 = vmul.f32 %v4353, 1.442695
      %v4467 = vpow.pop %v4466
      %v4468 = vmul.f32 %v4354, 1.442695
      %v4469 = vpow.pop %v4468
      %v4470 = vmul.f32 %v4355, 1.442695
      %v4471 = vpow.pop %v4470
      %v4472 = vmul.f32 %v4356, 1.442695
      %v4473 = vpow.pop %v4472
      %v4474 = vmul.f32 %v4357, 1.442695
      %v4475 = vpow.pop %v4474
      %v4476 = vmul.f32 %v4358, 1.442695
      %v4477 = vpow.pop %v4476
      %v4478 = vmul.f32 %v4359, 1.442695
      %v4479 = vpow.pop %v4478
      %v4480 = vmul.f32 %v4360, 1.442695
      %v4481 = vpow.pop %v4480
      %v4482 = vmul.f32 %v4361, 1.442695
      %v4483 = vpow.pop %v4482
      %v4484 = vmul.f32 %v4362, 1.442695
      %v4485 = vpow.pop %v4484
      %v4486 = vmul.f32 %v4363, 1.442695
      %v4487 = vpow.pop %v4486
      %v4488 = vmul.f32 %v4364, 1.442695
      %v4489 = vpow.pop %v4488
      %v4490 = vmul.f32 %v4365, 1.442695
      %v4491 = vpow.pop %v4490
      %v4492 = vmul.f32 %v4366, 1.442695
      %v4493 = vpow.pop %v4492
      %v4494 = vmul.f32 %v4367, 1.442695
      %v4495 = vpow.pop %v4494
      %v4496 = vld [vmem:[%s512] sm:$0xff]
      %v4497 = vld [vmem:[%s512 + $0x8] sm:$0xff]
      %v4498 = vld [vmem:[%s512 + $0x10] sm:$0xff]
      %v4499 = vld [vmem:[%s512 + $0x18] sm:$0xff]
      %v4500 = vld [vmem:[%s512 + $0x20] sm:$0xff]
      %v4501 = vld [vmem:[%s512 + $0x28] sm:$0xff]
      %v4502 = vld [vmem:[%s512 + $0x30] sm:$0xff]
      %v4503 = vld [vmem:[%s512 + $0x38] sm:$0xff]
      %v4504 = vld [vmem:[%s512 + $0x40] sm:$0xff]
      %v4505 = vld [vmem:[%s512 + $0x48] sm:$0xff]
      %v4506 = vld [vmem:[%s512 + $0x50] sm:$0xff]
      %v4507 = vld [vmem:[%s512 + $0x58] sm:$0xff]
      %v4508 = vld [vmem:[%s512 + $0x60] sm:$0xff]
      %v4509 = vld [vmem:[%s512 + $0x68] sm:$0xff]
      %v4510 = vld [vmem:[%s512 + $0x70] sm:$0xff]
      %v4511 = vld [vmem:[%s512 + $0x78] sm:$0xff]
      %v4512 = vld [vmem:[%s512 + $0x80] sm:$0xff]
      %v4513 = vld [vmem:[%s512 + $0x88] sm:$0xff]
      %v4514 = vld [vmem:[%s512 + $0x90] sm:$0xff]
      %v4515 = vld [vmem:[%s512 + $0x98] sm:$0xff]
      %v4516 = vld [vmem:[%s512 + $0xa0] sm:$0xff]
      %v4517 = vld [vmem:[%s512 + $0xa8] sm:$0xff]
      %v4518 = vld [vmem:[%s512 + $0xb0] sm:$0xff]
      %v4519 = vld [vmem:[%s512 + $0xb8] sm:$0xff]
      %v4520 = vld [vmem:[%s512 + $0xc0] sm:$0xff]
      %v4521 = vld [vmem:[%s512 + $0xc8] sm:$0xff]
      %v4522 = vld [vmem:[%s512 + $0xd0] sm:$0xff]
      %v4523 = vld [vmem:[%s512 + $0xd8] sm:$0xff]
      %v4524 = vld [vmem:[%s512 + $0xe0] sm:$0xff]
      %v4525 = vld [vmem:[%s512 + $0xe8] sm:$0xff]
      %v4526 = vld [vmem:[%s512 + $0xf0] sm:$0xff]
      %v4527 = vld [vmem:[%s512 + $0xf8] sm:$0xff]
      %v4528 = vld [vmem:[%s512 + $0x100] sm:$0xff]
      %v4529 = vld [vmem:[%s512 + $0x108] sm:$0xff]
      %v4530 = vld [vmem:[%s512 + $0x110] sm:$0xff]
      %v4531 = vld [vmem:[%s512 + $0x118] sm:$0xff]
      %v4532 = vld [vmem:[%s512 + $0x120] sm:$0xff]
      %v4533 = vld [vmem:[%s512 + $0x128] sm:$0xff]
      %v4534 = vld [vmem:[%s512 + $0x130] sm:$0xff]
      %v4535 = vld [vmem:[%s512 + $0x138] sm:$0xff]
      %v4536 = vld [vmem:[%s512 + $0x140] sm:$0xff]
      %v4537 = vld [vmem:[%s512 + $0x148] sm:$0xff]
      %v4538 = vld [vmem:[%s512 + $0x150] sm:$0xff]
      %v4539 = vld [vmem:[%s512 + $0x158] sm:$0xff]
      %v4540 = vld [vmem:[%s512 + $0x160] sm:$0xff]
      %v4541 = vld [vmem:[%s512 + $0x168] sm:$0xff]
      %v4542 = vld [vmem:[%s512 + $0x170] sm:$0xff]
      %v4543 = vld [vmem:[%s512 + $0x178] sm:$0xff]
      %v4544 = vld [vmem:[%s512 + $0x180] sm:$0xff]
      %v4545 = vld [vmem:[%s512 + $0x188] sm:$0xff]
      %v4546 = vld [vmem:[%s512 + $0x190] sm:$0xff]
      %v4547 = vld [vmem:[%s512 + $0x198] sm:$0xff]
      %v4548 = vld [vmem:[%s512 + $0x1a0] sm:$0xff]
      %v4549 = vld [vmem:[%s512 + $0x1a8] sm:$0xff]
      %v4550 = vld [vmem:[%s512 + $0x1b0] sm:$0xff]
      %v4551 = vld [vmem:[%s512 + $0x1b8] sm:$0xff]
      %v4552 = vld [vmem:[%s512 + $0x1c0] sm:$0xff]
      %v4553 = vld [vmem:[%s512 + $0x1c8] sm:$0xff]
      %v4554 = vld [vmem:[%s512 + $0x1d0] sm:$0xff]
      %v4555 = vld [vmem:[%s512 + $0x1d8] sm:$0xff]
      %v4556 = vld [vmem:[%s512 + $0x1e0] sm:$0xff]
      %v4557 = vld [vmem:[%s512 + $0x1e8] sm:$0xff]
      %v4558 = vld [vmem:[%s512 + $0x1f0] sm:$0xff]
      %v4559 = vld [vmem:[%s512 + $0x1f8] sm:$0xff]
      %v4560 = vmul.f32 %v4369, %v4496
      %v4561 = vmul.f32 %v4371, %v4497
      %v4562 = vmul.f32 %v4373, %v4498
      %v4563 = vmul.f32 %v4375, %v4499
      %v4564 = vmul.f32 %v4377, %v4500
      %v4565 = vmul.f32 %v4379, %v4501
      %v4566 = vmul.f32 %v4381, %v4502
      %v4567 = vmul.f32 %v4383, %v4503
      %v4568 = vmul.f32 %v4385, %v4504
      %v4569 = vmul.f32 %v4387, %v4505
      %v4570 = vmul.f32 %v4389, %v4506
      %v4571 = vmul.f32 %v4391, %v4507
      %v4572 = vmul.f32 %v4393, %v4508
      %v4573 = vmul.f32 %v4395, %v4509
      %v4574 = vmul.f32 %v4397, %v4510
      %v4575 = vmul.f32 %v4399, %v4511
      %v4576 = vmul.f32 %v4401, %v4512
      %v4577 = vmul.f32 %v4403, %v4513
      %v4578 = vmul.f32 %v4405, %v4514
      %v4579 = vmul.f32 %v4407, %v4515
      %v4580 = vmul.f32 %v4409, %v4516
      %v4581 = vmul.f32 %v4411, %v4517
      %v4582 = vmul.f32 %v4413, %v4518
      %v4583 = vmul.f32 %v4415, %v4519
      %v4584 = vmul.f32 %v4417, %v4520
      %v4585 = vmul.f32 %v4419, %v4521
      %v4586 = vmul.f32 %v4421, %v4522
      %v4587 = vmul.f32 %v4423, %v4523
      %v4588 = vmul.f32 %v4425, %v4524
      %v4589 = vmul.f32 %v4427, %v4525
      %v4590 = vmul.f32 %v4429, %v4526
      %v4591 = vmul.f32 %v4431, %v4527
      %v4592 = vmul.f32 %v4433, %v4528
      %v4593 = vmul.f32 %v4435, %v4529
      %v4594 = vmul.f32 %v4437, %v4530
      %v4595 = vmul.f32 %v4439, %v4531
      %v4596 = vmul.f32 %v4441, %v4532
      %v4597 = vmul.f32 %v4443, %v4533
      %v4598 = vmul.f32 %v4445, %v4534
      %v4599 = vmul.f32 %v4447, %v4535
      %v4600 = vmul.f32 %v4449, %v4536
      %v4601 = vmul.f32 %v4451, %v4537
      %v4602 = vmul.f32 %v4453, %v4538
      %v4603 = vmul.f32 %v4455, %v4539
      %v4604 = vmul.f32 %v4457, %v4540
      %v4605 = vmul.f32 %v4459, %v4541
      %v4606 = vmul.f32 %v4461, %v4542
      %v4607 = vmul.f32 %v4463, %v4543
      %v4608 = vmul.f32 %v4465, %v4544
      %v4609 = vmul.f32 %v4467, %v4545
      %v4610 = vmul.f32 %v4469, %v4546
      %v4611 = vmul.f32 %v4471, %v4547
      %v4612 = vmul.f32 %v4473, %v4548
      %v4613 = vmul.f32 %v4475, %v4549
      %v4614 = vmul.f32 %v4477, %v4550
      %v4615 = vmul.f32 %v4479, %v4551
      %v4616 = vmul.f32 %v4481, %v4552
      %v4617 = vmul.f32 %v4483, %v4553
      %v4618 = vmul.f32 %v4485, %v4554
      %v4619 = vmul.f32 %v4487, %v4555
      %v4620 = vmul.f32 %v4489, %v4556
      %v4621 = vmul.f32 %v4491, %v4557
      %v4622 = vmul.f32 %v4493, %v4558
      %v4623 = vmul.f32 %v4495, %v4559
      %v4624 = vadd.f32 %v3986, %v4560
      %v4625 = vadd.f32 %v3990, %v4561
      %v4626 = vadd.f32 %v3996, %v4562
      %v4627 = vadd.f32 %v4000, %v4563
      %v4628 = vadd.f32 %v4006, %v4564
      %v4629 = vadd.f32 %v4010, %v4565
      %v4630 = vadd.f32 %v4016, %v4566
      %v4631 = vadd.f32 %v4020, %v4567
      %v4632 = vadd.f32 %v4026, %v4568
      %v4633 = vadd.f32 %v4030, %v4569
      %v4634 = vadd.f32 %v4036, %v4570
      %v4635 = vadd.f32 %v4040, %v4571
      %v4636 = vadd.f32 %v4046, %v4572
      %v4637 = vadd.f32 %v4050, %v4573
      %v4638 = vadd.f32 %v4056, %v4574
      %v4639 = vadd.f32 %v4060, %v4575
      %v4640 = vadd.f32 %v4066, %v4576
      %v4641 = vadd.f32 %v4070, %v4577
      %v4642 = vadd.f32 %v4076, %v4578
      %v4643 = vadd.f32 %v4080, %v4579
      %v4644 = vadd.f32 %v4086, %v4580
      %v4645 = vadd.f32 %v4090, %v4581
      %v4646 = vadd.f32 %v4096, %v4582
      %v4647 = vadd.f32 %v4100, %v4583
      %v4648 = vadd.f32 %v4106, %v4584
      %v4649 = vadd.f32 %v4110, %v4585
      %v4650 = vadd.f32 %v4116, %v4586
      %v4651 = vadd.f32 %v4120, %v4587
      %v4652 = vadd.f32 %v4126, %v4588
      %v4653 = vadd.f32 %v4130, %v4589
      %v4654 = vadd.f32 %v4136, %v4590
      %v4655 = vadd.f32 %v4140, %v4591
      %v4656 = vadd.f32 %v4146, %v4592
      %v4657 = vadd.f32 %v4150, %v4593
      %v4658 = vadd.f32 %v4156, %v4594
      %v4659 = vadd.f32 %v4160, %v4595
      %v4660 = vadd.f32 %v4166, %v4596
      %v4661 = vadd.f32 %v4170, %v4597
      %v4662 = vadd.f32 %v4176, %v4598
      %v4663 = vadd.f32 %v4180, %v4599
      %v4664 = vadd.f32 %v4186, %v4600
      %v4665 = vadd.f32 %v4190, %v4601
      %v4666 = vadd.f32 %v4196, %v4602
      %v4667 = vadd.f32 %v4200, %v4603
      %v4668 = vadd.f32 %v4206, %v4604
      %v4669 = vadd.f32 %v4210, %v4605
      %v4670 = vadd.f32 %v4216, %v4606
      %v4671 = vadd.f32 %v4220, %v4607
      %v4672 = vadd.f32 %v4226, %v4608
      %v4673 = vadd.f32 %v4230, %v4609
      %v4674 = vadd.f32 %v4236, %v4610
      %v4675 = vadd.f32 %v4240, %v4611
      %v4676 = vadd.f32 %v4246, %v4612
      %v4677 = vadd.f32 %v4250, %v4613
      %v4678 = vadd.f32 %v4256, %v4614
      %v4679 = vadd.f32 %v4260, %v4615
      %v4680 = vadd.f32 %v4266, %v4616
      %v4681 = vadd.f32 %v4270, %v4617
      %v4682 = vadd.f32 %v4276, %v4618
      %v4683 = vadd.f32 %v4280, %v4619
      %v4684 = vadd.f32 %v4286, %v4620
      %v4685 = vadd.f32 %v4290, %v4621
      %v4686 = vadd.f32 %v4296, %v4622
      %v4687 = vadd.f32 %v4300, %v4623
      %v4688 = vpack.c.bf16 %v4625, %v4624
      %v4689 = vpack.c.bf16 %v4627, %v4626
      %v4690 = vpack.c.bf16 %v4629, %v4628
      %v4691 = vpack.c.bf16 %v4631, %v4630
      %v4692 = vpack.c.bf16 %v4633, %v4632
      %v4693 = vpack.c.bf16 %v4635, %v4634
      %v4694 = vpack.c.bf16 %v4637, %v4636
      %v4695 = vpack.c.bf16 %v4639, %v4638
      %v4696 = vpack.c.bf16 %v4641, %v4640
      %v4697 = vpack.c.bf16 %v4643, %v4642
      %v4698 = vpack.c.bf16 %v4645, %v4644
      %v4699 = vpack.c.bf16 %v4647, %v4646
      %v4700 = vpack.c.bf16 %v4649, %v4648
      %v4701 = vpack.c.bf16 %v4651, %v4650
      %v4702 = vpack.c.bf16 %v4653, %v4652
      %v4703 = vpack.c.bf16 %v4655, %v4654
      %v4704 = vpack.c.bf16 %v4657, %v4656
      %v4705 = vpack.c.bf16 %v4659, %v4658
      %v4706 = vpack.c.bf16 %v4661, %v4660
      %v4707 = vpack.c.bf16 %v4663, %v4662
      %v4708 = vpack.c.bf16 %v4665, %v4664
      %v4709 = vpack.c.bf16 %v4667, %v4666
      %v4710 = vpack.c.bf16 %v4669, %v4668
      %v4711 = vpack.c.bf16 %v4671, %v4670
      %v4712 = vpack.c.bf16 %v4673, %v4672
      %v4713 = vpack.c.bf16 %v4675, %v4674
      %v4714 = vpack.c.bf16 %v4677, %v4676
      %v4715 = vpack.c.bf16 %v4679, %v4678
      %v4716 = vpack.c.bf16 %v4681, %v4680
      %v4717 = vpack.c.bf16 %v4683, %v4682
      %v4718 = vpack.c.bf16 %v4685, %v4684
      %v4719 = vpack.c.bf16 %v4687, %v4686
      %v4720 = vld [vmem:[%s9] sm:$0xff]
      %v4721 = vld [vmem:[%s9 + $0x8] sm:$0xff]
      %v4722 = vld [vmem:[%s9 + $0x10] sm:$0xff]
      %v4723 = vld [vmem:[%s9 + $0x18] sm:$0xff]
      %v4724 = vld [vmem:[%s9 + $0x20] sm:$0xff]
      %v4725 = vld [vmem:[%s9 + $0x28] sm:$0xff]
      %v4726 = vld [vmem:[%s9 + $0x30] sm:$0xff]
      %v4727 = vld [vmem:[%s9 + $0x38] sm:$0xff]
      %v4728 = vld [vmem:[%s9 + $0x40] sm:$0xff]
      %v4729 = vld [vmem:[%s9 + $0x48] sm:$0xff]
      %v4730 = vld [vmem:[%s9 + $0x50] sm:$0xff]
      %v4731 = vld [vmem:[%s9 + $0x58] sm:$0xff]
      %v4732 = vld [vmem:[%s9 + $0x60] sm:$0xff]
      %v4733 = vld [vmem:[%s9 + $0x68] sm:$0xff]
      %v4734 = vld [vmem:[%s9 + $0x70] sm:$0xff]
      %v4735 = vld [vmem:[%s9 + $0x78] sm:$0xff]
      %v4736 = vld [vmem:[%s10] sm:$0x3]
      %v4738 = vlaneseq
      %v4739 = vshrl.u32 %v4738, 7
      %v4740 = vsub.s32 0, %v4739
      %v4741 = vrot.slane %v4736, %v4740
      %v4742 = vlaneseq
      %v4743 = vshrl.u32 %v4742, 7
      %v4744 = vsub.s32 1, %v4743
      %v4745 = vrot.slane %v4736, %v4744
      %v4764 = vunpack.c.l.b16 %v4720
      %v4765 = vunpack.c.h.b16 %v4720
      %v4766 = vunpack.c.l.b16 %v4721
      %v4767 = vunpack.c.h.b16 %v4721
      %v4768 = vunpack.c.l.b16 %v4722
      %v4769 = vunpack.c.h.b16 %v4722
      %v4770 = vunpack.c.l.b16 %v4723
      %v4771 = vunpack.c.h.b16 %v4723
      %v4772 = vunpack.c.l.b16 %v4724
      %v4773 = vunpack.c.h.b16 %v4724
      %v4774 = vunpack.c.l.b16 %v4725
      %v4775 = vunpack.c.h.b16 %v4725
      %v4776 = vunpack.c.l.b16 %v4726
      %v4777 = vunpack.c.h.b16 %v4726
      %v4778 = vunpack.c.l.b16 %v4727
      %v4779 = vunpack.c.h.b16 %v4727
      %v4780 = vunpack.c.l.b16 %v4728
      %v4781 = vunpack.c.h.b16 %v4728
      %v4782 = vunpack.c.l.b16 %v4729
      %v4783 = vunpack.c.h.b16 %v4729
      %v4784 = vunpack.c.l.b16 %v4730
      %v4785 = vunpack.c.h.b16 %v4730
      %v4786 = vunpack.c.l.b16 %v4731
      %v4787 = vunpack.c.h.b16 %v4731
      %v4788 = vunpack.c.l.b16 %v4732
      %v4789 = vunpack.c.h.b16 %v4732
      %v4790 = vunpack.c.l.b16 %v4733
      %v4791 = vunpack.c.h.b16 %v4733
      %v4792 = vunpack.c.l.b16 %v4734
      %v4793 = vunpack.c.h.b16 %v4734
      %v4794 = vunpack.c.l.b16 %v4735
      %v4795 = vunpack.c.h.b16 %v4735
      %v4796 = vpack.c.b16 %v4766, %v4764
      %v4797 = vpack.c.b16 %v4767, %v4765
      %v4798 = vpack.c.b16 %v4770, %v4768
      %v4799 = vpack.c.b16 %v4771, %v4769
      %v4800 = vpack.c.b16 %v4774, %v4772
      %v4801 = vpack.c.b16 %v4775, %v4773
      %v4802 = vpack.c.b16 %v4778, %v4776
      %v4803 = vpack.c.b16 %v4779, %v4777
      %v4804 = vpack.c.b16 %v4782, %v4780
      %v4805 = vpack.c.b16 %v4783, %v4781
      %v4806 = vpack.c.b16 %v4786, %v4784
      %v4807 = vpack.c.b16 %v4787, %v4785
      %v4808 = vpack.c.b16 %v4790, %v4788
      %v4809 = vpack.c.b16 %v4791, %v4789
      %v4810 = vpack.c.b16 %v4794, %v4792
      %v4811 = vpack.c.b16 %v4795, %v4793
      %4828 = vmatprep.subr.bf16.mxu0 %v4797
      %4829 = vmatpush1.bf16.msra.mxu0 %v4796
      %4830 = vmatprep.subr.bf16.mxu0 %v4799
      %4831 = vmatpush1.bf16.msra.mxu0 %v4798
      %4832 = vmatprep.subr.bf16.mxu0 %v4801
      %4833 = vmatpush1.bf16.msra.mxu0 %v4800
      %4834 = vmatprep.subr.bf16.mxu0 %v4803
      %4835 = vmatpush1.bf16.msra.mxu0 %v4802
      %4836 = vmatprep.subr.bf16.mxu0 %v4805
      %4837 = vmatpush1.bf16.msra.mxu0 %v4804
      %4838 = vmatprep.subr.bf16.mxu0 %v4807
      %4839 = vmatpush1.bf16.msra.mxu0 %v4806
      %4840 = vmatprep.subr.bf16.mxu0 %v4809
      %4841 = vmatpush1.bf16.msra.mxu0 %v4808
      %4842 = vmatprep.subr.bf16.mxu0 %v4811
      %4843 = vmatpush1.bf16.msra.mxu0 %v4810
      %4844 = vmatprep.subr.bf16.mxu0 0
      %4845 = vmatpush1.bf16.msra.mxu0 0
      %4846 = vmatprep.subr.bf16.mxu0 0
      %4847 = vmatpush1.bf16.msra.mxu0 0
      %4848 = vmatprep.subr.bf16.mxu0 0
      %4849 = vmatpush1.bf16.msra.mxu0 0
      %4850 = vmatprep.subr.bf16.mxu0 0
      %4851 = vmatpush1.bf16.msra.mxu0 0
      %4852 = vmatprep.subr.bf16.mxu0 0
      %4853 = vmatpush1.bf16.msra.mxu0 0
      %4854 = vmatprep.subr.bf16.mxu0 0
      %4855 = vmatpush1.bf16.msra.mxu0 0
      %4856 = vmatprep.subr.bf16.mxu0 0
      %4857 = vmatpush1.bf16.msra.mxu0 0
      %4858 = vmatprep.subr.bf16.mxu0 0
      %4859 = vmatpush1.bf16.msra.mxu0 0
      %4860 = vmatprep.mubr.bf16.mxu0 0
      %4861 = vmatmul.mubr.bf16.gmra.mrb[0].mxu0 %v4688
      %v4862 = vpop.f32.mrb[0].mxu0
      %v4863 = vadd.f32 %v4741, %v4862
      %v4864 = vpop.f32.mrb[0].mxu0
      %v4865 = vadd.f32 %v4745, %v4864
      %v4866 = vpop.f32.mrb[0].mxu0
      %v4867 = vadd.f32 %v4741, %v4866
      %v4868 = vpop.f32.mrb[0].mxu0
      %v4869 = vadd.f32 %v4745, %v4868
      %4870 = vmatprep.mubr.bf16.mxu0 0
      %4871 = vmatmul.mubr.bf16.gmra.mrb[0].mxu0 %v4689
      %v4872 = vpop.f32.mrb[0].mxu0
      %v4873 = vadd.f32 %v4741, %v4872
      %v4874 = vpop.f32.mrb[0].mxu0
      %v4875 = vadd.f32 %v4745, %v4874
      %v4876 = vpop.f32.mrb[0].mxu0
      %v4877 = vadd.f32 %v4741, %v4876
      %v4878 = vpop.f32.mrb[0].mxu0
      %v4879 = vadd.f32 %v4745, %v4878
      %4880 = vmatprep.mubr.bf16.mxu0 0
      %4881 = vmatmul.mubr.bf16.gmra.mrb[0].mxu0 %v4690
      %v4882 = vpop.f32.mrb[0].mxu0
      %v4883 = vadd.f32 %v4741, %v4882
      %v4884 = vpop.f32.mrb[0].mxu0
      %v4885 = vadd.f32 %v4745, %v4884
      %v4886 = vpop.f32.mrb[0].mxu0
      %v4887 = vadd.f32 %v4741, %v4886
      %v4888 = vpop.f32.mrb[0].mxu0
      %v4889 = vadd.f32 %v4745, %v4888
      %4890 = vmatprep.mubr.bf16.mxu0 0
      %4891 = vmatmul.mubr.bf16.gmra.mrb[0].mxu0 %v4691
      %v4892 = vpop.f32.mrb[0].mxu0
      %v4893 = vadd.f32 %v4741, %v4892
      %v4894 = vpop.f32.mrb[0].mxu0
      %v4895 = vadd.f32 %v4745, %v4894
      %v4896 = vpop.f32.mrb[0].mxu0
      %v4897 = vadd.f32 %v4741, %v4896
      %v4898 = vpop.f32.mrb[0].mxu0
      %v4899 = vadd.f32 %v4745, %v4898
      %4900 = vmatprep.mubr.bf16.mxu0 0
      %4901 = vmatmul.mubr.bf16.gmra.mrb[0].mxu0 %v4692
      %v4902 = vpop.f32.mrb[0].mxu0
      %v4903 = vadd.f32 %v4741, %v4902
      %v4904 = vpop.f32.mrb[0].mxu0
      %v4905 = vadd.f32 %v4745, %v4904
      %v4906 = vpop.f32.mrb[0].mxu0
      %v4907 = vadd.f32 %v4741, %v4906
      %v4908 = vpop.f32.mrb[0].mxu0
      %v4909 = vadd.f32 %v4745, %v4908
      %4910 = vmatprep.mubr.bf16.mxu0 0
      %4911 = vmatmul.mubr.bf16.gmra.mrb[0].mxu0 %v4693
      %v4912 = vpop.f32.mrb[0].mxu0
      %v4913 = vadd.f32 %v4741, %v4912
      %v4914 = vpop.f32.mrb[0].mxu0
      %v4915 = vadd.f32 %v4745, %v4914
      %v4916 = vpop.f32.mrb[0].mxu0
      %v4917 = vadd.f32 %v4741, %v4916
      %v4918 = vpop.f32.mrb[0].mxu0
      %v4919 = vadd.f32 %v4745, %v4918
      %4920 = vmatprep.mubr.bf16.mxu0 0
      %4921 = vmatmul.mubr.bf16.gmra.mrb[0].mxu0 %v4694
      %v4922 = vpop.f32.mrb[0].mxu0
      %v4923 = vadd.f32 %v4741, %v4922
      %v4924 = vpop.f32.mrb[0].mxu0
      %v4925 = vadd.f32 %v4745, %v4924
      %v4926 = vpop.f32.mrb[0].mxu0
      %v4927 = vadd.f32 %v4741, %v4926
      %v4928 = vpop.f32.mrb[0].mxu0
      %v4929 = vadd.f32 %v4745, %v4928
      %4930 = vmatprep.mubr.bf16.mxu0 0
      %4931 = vmatmul.mubr.bf16.gmra.mrb[0].mxu0 %v4695
      %v4932 = vpop.f32.mrb[0].mxu0
      %v4933 = vadd.f32 %v4741, %v4932
      %v4934 = vpop.f32.mrb[0].mxu0
      %v4935 = vadd.f32 %v4745, %v4934
      %v4936 = vpop.f32.mrb[0].mxu0
      %v4937 = vadd.f32 %v4741, %v4936
      %v4938 = vpop.f32.mrb[0].mxu0
      %v4939 = vadd.f32 %v4745, %v4938
      %4940 = vmatprep.mubr.bf16.mxu0 0
      %4941 = vmatmul.mubr.bf16.gmra.mrb[0].mxu0 %v4696
      %v4942 = vpop.f32.mrb[0].mxu0
      %v4943 = vadd.f32 %v4741, %v4942
      %v4944 = vpop.f32.mrb[0].mxu0
      %v4945 = vadd.f32 %v4745, %v4944
      %v4946 = vpop.f32.mrb[0].mxu0
      %v4947 = vadd.f32 %v4741, %v4946
      %v4948 = vpop.f32.mrb[0].mxu0
      %v4949 = vadd.f32 %v4745, %v4948
      %4950 = vmatprep.mubr.bf16.mxu0 0
      %4951 = vmatmul.mubr.bf16.gmra.mrb[0].mxu0 %v4697
      %v4952 = vpop.f32.mrb[0].mxu0
      %v4953 = vadd.f32 %v4741, %v4952
      %v4954 = vpop.f32.mrb[0].mxu0
      %v4955 = vadd.f32 %v4745, %v4954
      %v4956 = vpop.f32.mrb[0].mxu0
      %v4957 = vadd.f32 %v4741, %v4956
      %v4958 = vpop.f32.mrb[0].mxu0
      %v4959 = vadd.f32 %v4745, %v4958
      %4960 = vmatprep.mubr.bf16.mxu0 0
      %4961 = vmatmul.mubr.bf16.gmra.mrb[0].mxu0 %v4698
      %v4962 = vpop.f32.mrb[0].mxu0
      %v4963 = vadd.f32 %v4741, %v4962
      %v4964 = vpop.f32.mrb[0].mxu0
      %v4965 = vadd.f32 %v4745, %v4964
      %v4966 = vpop.f32.mrb[0].mxu0
      %v4967 = vadd.f32 %v4741, %v4966
      %v4968 = vpop.f32.mrb[0].mxu0
      %v4969 = vadd.f32 %v4745, %v4968
      %4970 = vmatprep.mubr.bf16.mxu0 0
      %4971 = vmatmul.mubr.bf16.gmra.mrb[0].mxu0 %v4699
      %v4972 = vpop.f32.mrb[0].mxu0
      %v4973 = vadd.f32 %v4741, %v4972
      %v4974 = vpop.f32.mrb[0].mxu0
      %v4975 = vadd.f32 %v4745, %v4974
      %v4976 = vpop.f32.mrb[0].mxu0
      %v4977 = vadd.f32 %v4741, %v4976
      %v4978 = vpop.f32.mrb[0].mxu0
      %v4979 = vadd.f32 %v4745, %v4978
      %4980 = vmatprep.mubr.bf16.mxu0 0
      %4981 = vmatmul.mubr.bf16.gmra.mrb[0].mxu0 %v4700
      %v4982 = vpop.f32.mrb[0].mxu0
      %v4983 = vadd.f32 %v4741, %v4982
      %v4984 = vpop.f32.mrb[0].mxu0
      %v4985 = vadd.f32 %v4745, %v4984
      %v4986 = vpop.f32.mrb[0].mxu0
      %v4987 = vadd.f32 %v4741, %v4986
      %v4988 = vpop.f32.mrb[0].mxu0
      %v4989 = vadd.f32 %v4745, %v4988
      %4990 = vmatprep.mubr.bf16.mxu0 0
      %4991 = vmatmul.mubr.bf16.gmra.mrb[0].mxu0 %v4701
      %v4992 = vpop.f32.mrb[0].mxu0
      %v4993 = vadd.f32 %v4741, %v4992
      %v4994 = vpop.f32.mrb[0].mxu0
      %v4995 = vadd.f32 %v4745, %v4994
      %v4996 = vpop.f32.mrb[0].mxu0
      %v4997 = vadd.f32 %v4741, %v4996
      %v4998 = vpop.f32.mrb[0].mxu0
      %v4999 = vadd.f32 %v4745, %v4998
      %5000 = vmatprep.mubr.bf16.mxu0 0
      %5001 = vmatmul.mubr.bf16.gmra.mrb[0].mxu0 %v4702
      %v5002 = vpop.f32.mrb[0].mxu0
      %v5003 = vadd.f32 %v4741, %v5002
      %v5004 = vpop.f32.mrb[0].mxu0
      %v5005 = vadd.f32 %v4745, %v5004
      %v5006 = vpop.f32.mrb[0].mxu0
      %v5007 = vadd.f32 %v4741, %v5006
      %v5008 = vpop.f32.mrb[0].mxu0
      %v5009 = vadd.f32 %v4745, %v5008
      %5010 = vmatprep.mubr.bf16.mxu0 0
      %5011 = vmatmul.mubr.bf16.gmra.mrb[0].mxu0 %v4703
      %v5012 = vpop.f32.mrb[0].mxu0
      %v5013 = vadd.f32 %v4741, %v5012
      %v5014 = vpop.f32.mrb[0].mxu0
      %v5015 = vadd.f32 %v4745, %v5014
      %v5016 = vpop.f32.mrb[0].mxu0
      %v5017 = vadd.f32 %v4741, %v5016
      %v5018 = vpop.f32.mrb[0].mxu0
      %v5019 = vadd.f32 %v4745, %v5018
      %5020 = vmatprep.mubr.bf16.mxu0 0
      %5021 = vmatmul.mubr.bf16.gmra.mrb[0].mxu0 %v4704
      %v5022 = vpop.f32.mrb[0].mxu0
      %v5023 = vadd.f32 %v4741, %v5022
      %v5024 = vpop.f32.mrb[0].mxu0
      %v5025 = vadd.f32 %v4745, %v5024
      %v5026 = vpop.f32.mrb[0].mxu0
      %v5027 = vadd.f32 %v4741, %v5026
      %v5028 = vpop.f32.mrb[0].mxu0
      %v5029 = vadd.f32 %v4745, %v5028
      %5030 = vmatprep.mubr.bf16.mxu0 0
      %5031 = vmatmul.mubr.bf16.gmra.mrb[0].mxu0 %v4705
      %v5032 = vpop.f32.mrb[0].mxu0
      %v5033 = vadd.f32 %v4741, %v5032
      %v5034 = vpop.f32.mrb[0].mxu0
      %v5035 = vadd.f32 %v4745, %v5034
      %v5036 = vpop.f32.mrb[0].mxu0
      %v5037 = vadd.f32 %v4741, %v5036
      %v5038 = vpop.f32.mrb[0].mxu0
      %v5039 = vadd.f32 %v4745, %v5038
      %5040 = vmatprep.mubr.bf16.mxu0 0
      %5041 = vmatmul.mubr.bf16.gmra.mrb[0].mxu0 %v4706
      %v5042 = vpop.f32.mrb[0].mxu0
      %v5043 = vadd.f32 %v4741, %v5042
      %v5044 = vpop.f32.mrb[0].mxu0
      %v5045 = vadd.f32 %v4745, %v5044
      %v5046 = vpop.f32.mrb[0].mxu0
      %v5047 = vadd.f32 %v4741, %v5046
      %v5048 = vpop.f32.mrb[0].mxu0
      %v5049 = vadd.f32 %v4745, %v5048
      %5050 = vmatprep.mubr.bf16.mxu0 0
      %5051 = vmatmul.mubr.bf16.gmra.mrb[0].mxu0 %v4707
      %v5052 = vpop.f32.mrb[0].mxu0
      %v5053 = vadd.f32 %v4741, %v5052
      %v5054 = vpop.f32.mrb[0].mxu0
      %v5055 = vadd.f32 %v4745, %v5054
      %v5056 = vpop.f32.mrb[0].mxu0
      %v5057 = vadd.f32 %v4741, %v5056
      %v5058 = vpop.f32.mrb[0].mxu0
      %v5059 = vadd.f32 %v4745, %v5058
      %5060 = vmatprep.mubr.bf16.mxu0 0
      %5061 = vmatmul.mubr.bf16.gmra.mrb[0].mxu0 %v4708
      %v5062 = vpop.f32.mrb[0].mxu0
      %v5063 = vadd.f32 %v4741, %v5062
      %v5064 = vpop.f32.mrb[0].mxu0
      %v5065 = vadd.f32 %v4745, %v5064
      %v5066 = vpop.f32.mrb[0].mxu0
      %v5067 = vadd.f32 %v4741, %v5066
      %v5068 = vpop.f32.mrb[0].mxu0
      %v5069 = vadd.f32 %v4745, %v5068
      %5070 = vmatprep.mubr.bf16.mxu0 0
      %5071 = vmatmul.mubr.bf16.gmra.mrb[0].mxu0 %v4709
      %v5072 = vpop.f32.mrb[0].mxu0
      %v5073 = vadd.f32 %v4741, %v5072
      %v5074 = vpop.f32.mrb[0].mxu0
      %v5075 = vadd.f32 %v4745, %v5074
      %v5076 = vpop.f32.mrb[0].mxu0
      %v5077 = vadd.f32 %v4741, %v5076
      %v5078 = vpop.f32.mrb[0].mxu0
      %v5079 = vadd.f32 %v4745, %v5078
      %5080 = vmatprep.mubr.bf16.mxu0 0
      %5081 = vmatmul.mubr.bf16.gmra.mrb[0].mxu0 %v4710
      %v5082 = vpop.f32.mrb[0].mxu0
      %v5083 = vadd.f32 %v4741, %v5082
      %v5084 = vpop.f32.mrb[0].mxu0
      %v5085 = vadd.f32 %v4745, %v5084
      %v5086 = vpop.f32.mrb[0].mxu0
      %v5087 = vadd.f32 %v4741, %v5086
      %v5088 = vpop.f32.mrb[0].mxu0
      %v5089 = vadd.f32 %v4745, %v5088
      %5090 = vmatprep.mubr.bf16.mxu0 0
      %5091 = vmatmul.mubr.bf16.gmra.mrb[0].mxu0 %v4711
      %v5092 = vpop.f32.mrb[0].mxu0
      %v5093 = vadd.f32 %v4741, %v5092
      %v5094 = vpop.f32.mrb[0].mxu0
      %v5095 = vadd.f32 %v4745, %v5094
      %v5096 = vpop.f32.mrb[0].mxu0
      %v5097 = vadd.f32 %v4741, %v5096
      %v5098 = vpop.f32.mrb[0].mxu0
      %v5099 = vadd.f32 %v4745, %v5098
      %5100 = vmatprep.mubr.bf16.mxu0 0
      %5101 = vmatmul.mubr.bf16.gmra.mrb[0].mxu0 %v4712
      %v5102 = vpop.f32.mrb[0].mxu0
      %v5103 = vadd.f32 %v4741, %v5102
      %v5104 = vpop.f32.mrb[0].mxu0
      %v5105 = vadd.f32 %v4745, %v5104
      %v5106 = vpop.f32.mrb[0].mxu0
      %v5107 = vadd.f32 %v4741, %v5106
      %v5108 = vpop.f32.mrb[0].mxu0
      %v5109 = vadd.f32 %v4745, %v5108
      %5110 = vmatprep.mubr.bf16.mxu0 0
      %5111 = vmatmul.mubr.bf16.gmra.mrb[0].mxu0 %v4713
      %v5112 = vpop.f32.mrb[0].mxu0
      %v5113 = vadd.f32 %v4741, %v5112
      %v5114 = vpop.f32.mrb[0].mxu0
      %v5115 = vadd.f32 %v4745, %v5114
      %v5116 = vpop.f32.mrb[0].mxu0
      %v5117 = vadd.f32 %v4741, %v5116
      %v5118 = vpop.f32.mrb[0].mxu0
      %v5119 = vadd.f32 %v4745, %v5118
      %5120 = vmatprep.mubr.bf16.mxu0 0
      %5121 = vmatmul.mubr.bf16.gmra.mrb[0].mxu0 %v4714
      %v5122 = vpop.f32.mrb[0].mxu0
      %v5123 = vadd.f32 %v4741, %v5122
      %v5124 = vpop.f32.mrb[0].mxu0
      %v5125 = vadd.f32 %v4745, %v5124
      %v5126 = vpop.f32.mrb[0].mxu0
      %v5127 = vadd.f32 %v4741, %v5126
      %v5128 = vpop.f32.mrb[0].mxu0
      %v5129 = vadd.f32 %v4745, %v5128
      %5130 = vmatprep.mubr.bf16.mxu0 0
      %5131 = vmatmul.mubr.bf16.gmra.mrb[0].mxu0 %v4715
      %v5132 = vpop.f32.mrb[0].mxu0
      %v5133 = vadd.f32 %v4741, %v5132
      %v5134 = vpop.f32.mrb[0].mxu0
      %v5135 = vadd.f32 %v4745, %v5134
      %v5136 = vpop.f32.mrb[0].mxu0
      %v5137 = vadd.f32 %v4741, %v5136
      %v5138 = vpop.f32.mrb[0].mxu0
      %v5139 = vadd.f32 %v4745, %v5138
      %5140 = vmatprep.mubr.bf16.mxu0 0
      %5141 = vmatmul.mubr.bf16.gmra.mrb[0].mxu0 %v4716
      %v5142 = vpop.f32.mrb[0].mxu0
      %v5143 = vadd.f32 %v4741, %v5142
      %v5144 = vpop.f32.mrb[0].mxu0
      %v5145 = vadd.f32 %v4745, %v5144
      %v5146 = vpop.f32.mrb[0].mxu0
      %v5147 = vadd.f32 %v4741, %v5146
      %v5148 = vpop.f32.mrb[0].mxu0
      %v5149 = vadd.f32 %v4745, %v5148
      %5150 = vmatprep.mubr.bf16.mxu0 0
      %5151 = vmatmul.mubr.bf16.gmra.mrb[0].mxu0 %v4717
      %v5152 = vpop.f32.mrb[0].mxu0
      %v5153 = vadd.f32 %v4741, %v5152
      %v5154 = vpop.f32.mrb[0].mxu0
      %v5155 = vadd.f32 %v4745, %v5154
      %v5156 = vpop.f32.mrb[0].mxu0
      %v5157 = vadd.f32 %v4741, %v5156
      %v5158 = vpop.f32.mrb[0].mxu0
      %v5159 = vadd.f32 %v4745, %v5158
      %5160 = vmatprep.mubr.bf16.mxu0 0
      %5161 = vmatmul.mubr.bf16.gmra.mrb[0].mxu0 %v4718
      %v5162 = vpop.f32.mrb[0].mxu0
      %v5163 = vadd.f32 %v4741, %v5162
      %v5164 = vpop.f32.mrb[0].mxu0
      %v5165 = vadd.f32 %v4745, %v5164
      %v5166 = vpop.f32.mrb[0].mxu0
      %v5167 = vadd.f32 %v4741, %v5166
      %v5168 = vpop.f32.mrb[0].mxu0
      %v5169 = vadd.f32 %v4745, %v5168
      %5170 = vmatprep.mubr.bf16.mxu0 0
      %5171 = vmatmul.mubr.bf16.gmra.mrb[0].mxu0 %v4719
      %v5172 = vpop.f32.mrb[0].mxu0
      %v5173 = vadd.f32 %v4741, %v5172
      %v5174 = vpop.f32.mrb[0].mxu0
      %v5175 = vadd.f32 %v4745, %v5174
      %v5176 = vpop.f32.mrb[0].mxu0
      %v5177 = vadd.f32 %v4741, %v5176
      %v5178 = vpop.f32.mrb[0].mxu0
      %v5179 = vadd.f32 %v4745, %v5178
      %5180 = vdwg.mxu0
      %v5181 = vmax.f32 %v4863, 0.0
      %v5182 = vmax.f32 %v4865, 0.0
      %v5183 = vmax.f32 %v4867, 0.0
      %v5184 = vmax.f32 %v4869, 0.0
      %v5185 = vmax.f32 %v4873, 0.0
      %v5186 = vmax.f32 %v4875, 0.0
      %v5187 = vmax.f32 %v4877, 0.0
      %v5188 = vmax.f32 %v4879, 0.0
      %v5189 = vmax.f32 %v4883, 0.0
      %v5190 = vmax.f32 %v4885, 0.0
      %v5191 = vmax.f32 %v4887, 0.0
      %v5192 = vmax.f32 %v4889, 0.0
      %v5193 = vmax.f32 %v4893, 0.0
      %v5194 = vmax.f32 %v4895, 0.0
      %v5195 = vmax.f32 %v4897, 0.0
      %v5196 = vmax.f32 %v4899, 0.0
      %v5197 = vmax.f32 %v4903, 0.0
      %v5198 = vmax.f32 %v4905, 0.0
      %v5199 = vmax.f32 %v4907, 0.0
      %v5200 = vmax.f32 %v4909, 0.0
      %v5201 = vmax.f32 %v4913, 0.0
      %v5202 = vmax.f32 %v4915, 0.0
      %v5203 = vmax.f32 %v4917, 0.0
      %v5204 = vmax.f32 %v4919, 0.0
      %v5205 = vmax.f32 %v4923, 0.0
      %v5206 = vmax.f32 %v4925, 0.0
      %v5207 = vmax.f32 %v4927, 0.0
      %v5208 = vmax.f32 %v4929, 0.0
      %v5209 = vmax.f32 %v4933, 0.0
      %v5210 = vmax.f32 %v4935, 0.0
      %v5211 = vmax.f32 %v4937, 0.0
      %v5212 = vmax.f32 %v4939, 0.0
      %v5213 = vmax.f32 %v4943, 0.0
      %v5214 = vmax.f32 %v4945, 0.0
      %v5215 = vmax.f32 %v4947, 0.0
      %v5216 = vmax.f32 %v4949, 0.0
      %v5217 = vmax.f32 %v4953, 0.0
      %v5218 = vmax.f32 %v4955, 0.0
      %v5219 = vmax.f32 %v4957, 0.0
      %v5220 = vmax.f32 %v4959, 0.0
      %v5221 = vmax.f32 %v4963, 0.0
      %v5222 = vmax.f32 %v4965, 0.0
      %v5223 = vmax.f32 %v4967, 0.0
      %v5224 = vmax.f32 %v4969, 0.0
      %v5225 = vmax.f32 %v4973, 0.0
      %v5226 = vmax.f32 %v4975, 0.0
      %v5227 = vmax.f32 %v4977, 0.0
      %v5228 = vmax.f32 %v4979, 0.0
      %v5229 = vmax.f32 %v4983, 0.0
      %v5230 = vmax.f32 %v4985, 0.0
      %v5231 = vmax.f32 %v4987, 0.0
      %v5232 = vmax.f32 %v4989, 0.0
      %v5233 = vmax.f32 %v4993, 0.0
      %v5234 = vmax.f32 %v4995, 0.0
      %v5235 = vmax.f32 %v4997, 0.0
      %v5236 = vmax.f32 %v4999, 0.0
      %v5237 = vmax.f32 %v5003, 0.0
      %v5238 = vmax.f32 %v5005, 0.0
      %v5239 = vmax.f32 %v5007, 0.0
      %v5240 = vmax.f32 %v5009, 0.0
      %v5241 = vmax.f32 %v5013, 0.0
      %v5242 = vmax.f32 %v5015, 0.0
      %v5243 = vmax.f32 %v5017, 0.0
      %v5244 = vmax.f32 %v5019, 0.0
      %v5245 = vmax.f32 %v5023, 0.0
      %v5246 = vmax.f32 %v5025, 0.0
      %v5247 = vmax.f32 %v5027, 0.0
      %v5248 = vmax.f32 %v5029, 0.0
      %v5249 = vmax.f32 %v5033, 0.0
      %v5250 = vmax.f32 %v5035, 0.0
      %v5251 = vmax.f32 %v5037, 0.0
      %v5252 = vmax.f32 %v5039, 0.0
      %v5253 = vmax.f32 %v5043, 0.0
      %v5254 = vmax.f32 %v5045, 0.0
      %v5255 = vmax.f32 %v5047, 0.0
      %v5256 = vmax.f32 %v5049, 0.0
      %v5257 = vmax.f32 %v5053, 0.0
      %v5258 = vmax.f32 %v5055, 0.0
      %v5259 = vmax.f32 %v5057, 0.0
      %v5260 = vmax.f32 %v5059, 0.0
      %v5261 = vmax.f32 %v5063, 0.0
      %v5262 = vmax.f32 %v5065, 0.0
      %v5263 = vmax.f32 %v5067, 0.0
      %v5264 = vmax.f32 %v5069, 0.0
      %v5265 = vmax.f32 %v5073, 0.0
      %v5266 = vmax.f32 %v5075, 0.0
      %v5267 = vmax.f32 %v5077, 0.0
      %v5268 = vmax.f32 %v5079, 0.0
      %v5269 = vmax.f32 %v5083, 0.0
      %v5270 = vmax.f32 %v5085, 0.0
      %v5271 = vmax.f32 %v5087, 0.0
      %v5272 = vmax.f32 %v5089, 0.0
      %v5273 = vmax.f32 %v5093, 0.0
      %v5274 = vmax.f32 %v5095, 0.0
      %v5275 = vmax.f32 %v5097, 0.0
      %v5276 = vmax.f32 %v5099, 0.0
      %v5277 = vmax.f32 %v5103, 0.0
      %v5278 = vmax.f32 %v5105, 0.0
      %v5279 = vmax.f32 %v5107, 0.0
      %v5280 = vmax.f32 %v5109, 0.0
      %v5281 = vmax.f32 %v5113, 0.0
      %v5282 = vmax.f32 %v5115, 0.0
      %v5283 = vmax.f32 %v5117, 0.0
      %v5284 = vmax.f32 %v5119, 0.0
      %v5285 = vmax.f32 %v5123, 0.0
      %v5286 = vmax.f32 %v5125, 0.0
      %v5287 = vmax.f32 %v5127, 0.0
      %v5288 = vmax.f32 %v5129, 0.0
      %v5289 = vmax.f32 %v5133, 0.0
      %v5290 = vmax.f32 %v5135, 0.0
      %v5291 = vmax.f32 %v5137, 0.0
      %v5292 = vmax.f32 %v5139, 0.0
      %v5293 = vmax.f32 %v5143, 0.0
      %v5294 = vmax.f32 %v5145, 0.0
      %v5295 = vmax.f32 %v5147, 0.0
      %v5296 = vmax.f32 %v5149, 0.0
      %v5297 = vmax.f32 %v5153, 0.0
      %v5298 = vmax.f32 %v5155, 0.0
      %v5299 = vmax.f32 %v5157, 0.0
      %v5300 = vmax.f32 %v5159, 0.0
      %v5301 = vmax.f32 %v5163, 0.0
      %v5302 = vmax.f32 %v5165, 0.0
      %v5303 = vmax.f32 %v5167, 0.0
      %v5304 = vmax.f32 %v5169, 0.0
      %v5305 = vmax.f32 %v5173, 0.0
      %v5306 = vmax.f32 %v5175, 0.0
      %v5307 = vmax.f32 %v5177, 0.0
      %v5308 = vmax.f32 %v5179, 0.0
      %v5309 = vpack.c.bf16 %v5183, %v5181
      %v5310 = vpack.c.bf16 %v5184, %v5182
      %v5311 = vpack.c.bf16 %v5187, %v5185
      %v5312 = vpack.c.bf16 %v5188, %v5186
      %v5313 = vpack.c.bf16 %v5191, %v5189
      %v5314 = vpack.c.bf16 %v5192, %v5190
      %v5315 = vpack.c.bf16 %v5195, %v5193
      %v5316 = vpack.c.bf16 %v5196, %v5194
      %v5317 = vpack.c.bf16 %v5199, %v5197
      %v5318 = vpack.c.bf16 %v5200, %v5198
      %v5319 = vpack.c.bf16 %v5203, %v5201
      %v5320 = vpack.c.bf16 %v5204, %v5202
      %v5321 = vpack.c.bf16 %v5207, %v5205
      %v5322 = vpack.c.bf16 %v5208, %v5206
      %v5323 = vpack.c.bf16 %v5211, %v5209
      %v5324 = vpack.c.bf16 %v5212, %v5210
      %v5325 = vpack.c.bf16 %v5215, %v5213
      %v5326 = vpack.c.bf16 %v5216, %v5214
      %v5327 = vpack.c.bf16 %v5219, %v5217
      %v5328 = vpack.c.bf16 %v5220, %v5218
      %v5329 = vpack.c.bf16 %v5223, %v5221
      %v5330 = vpack.c.bf16 %v5224, %v5222
      %v5331 = vpack.c.bf16 %v5227, %v5225
      %v5332 = vpack.c.bf16 %v5228, %v5226
      %v5333 = vpack.c.bf16 %v5231, %v5229
      %v5334 = vpack.c.bf16 %v5232, %v5230
      %v5335 = vpack.c.bf16 %v5235, %v5233
      %v5336 = vpack.c.bf16 %v5236, %v5234
      %v5337 = vpack.c.bf16 %v5239, %v5237
      %v5338 = vpack.c.bf16 %v5240, %v5238
      %v5339 = vpack.c.bf16 %v5243, %v5241
      %v5340 = vpack.c.bf16 %v5244, %v5242
      %v5341 = vpack.c.bf16 %v5247, %v5245
      %v5342 = vpack.c.bf16 %v5248, %v5246
      %v5343 = vpack.c.bf16 %v5251, %v5249
      %v5344 = vpack.c.bf16 %v5252, %v5250
      %v5345 = vpack.c.bf16 %v5255, %v5253
      %v5346 = vpack.c.bf16 %v5256, %v5254
      %v5347 = vpack.c.bf16 %v5259, %v5257
      %v5348 = vpack.c.bf16 %v5260, %v5258
      %v5349 = vpack.c.bf16 %v5263, %v5261
      %v5350 = vpack.c.bf16 %v5264, %v5262
      %v5351 = vpack.c.bf16 %v5267, %v5265
      %v5352 = vpack.c.bf16 %v5268, %v5266
      %v5353 = vpack.c.bf16 %v5271, %v5269
      %v5354 = vpack.c.bf16 %v5272, %v5270
      %v5355 = vpack.c.bf16 %v5275, %v5273
      %v5356 = vpack.c.bf16 %v5276, %v5274
      %v5357 = vpack.c.bf16 %v5279, %v5277
      %v5358 = vpack.c.bf16 %v5280, %v5278
      %v5359 = vpack.c.bf16 %v5283, %v5281
      %v5360 = vpack.c.bf16 %v5284, %v5282
      %v5361 = vpack.c.bf16 %v5287, %v5285
      %v5362 = vpack.c.bf16 %v5288, %v5286
      %v5363 = vpack.c.bf16 %v5291, %v5289
      %v5364 = vpack.c.bf16 %v5292, %v5290
      %v5365 = vpack.c.bf16 %v5295, %v5293
      %v5366 = vpack.c.bf16 %v5296, %v5294
      %v5367 = vpack.c.bf16 %v5299, %v5297
      %v5368 = vpack.c.bf16 %v5300, %v5298
      %v5369 = vpack.c.bf16 %v5303, %v5301
      %v5370 = vpack.c.bf16 %v5304, %v5302
      %v5371 = vpack.c.bf16 %v5307, %v5305
      %v5372 = vpack.c.bf16 %v5308, %v5306
      %v5373 = vld [vmem:[%s11] sm:$0xff]
      %v5374 = vld [vmem:[%s11 + $0x8] sm:$0xff]
      %v5375 = vld [vmem:[%s11 + $0x10] sm:$0xff]
      %v5376 = vld [vmem:[%s11 + $0x18] sm:$0xff]
      %v5377 = vld [vmem:[%s11 + $0x20] sm:$0xff]
      %v5378 = vld [vmem:[%s11 + $0x28] sm:$0xff]
      %v5379 = vld [vmem:[%s11 + $0x30] sm:$0xff]
      %v5380 = vld [vmem:[%s11 + $0x38] sm:$0xff]
      %v5381 = vld [vmem:[%s11 + $0x40] sm:$0xff]
      %v5382 = vld [vmem:[%s11 + $0x48] sm:$0xff]
      %v5383 = vld [vmem:[%s11 + $0x50] sm:$0xff]
      %v5384 = vld [vmem:[%s11 + $0x58] sm:$0xff]
      %v5385 = vld [vmem:[%s11 + $0x60] sm:$0xff]
      %v5386 = vld [vmem:[%s11 + $0x68] sm:$0xff]
      %v5387 = vld [vmem:[%s11 + $0x70] sm:$0xff]
      %v5388 = vld [vmem:[%s11 + $0x78] sm:$0xff]
      %v5389 = vld [vmem:[%s11 + $0x80] sm:$0xff]
      %v5390 = vld [vmem:[%s11 + $0x88] sm:$0xff]
      %v5391 = vld [vmem:[%s11 + $0x90] sm:$0xff]
      %v5392 = vld [vmem:[%s11 + $0x98] sm:$0xff]
      %v5393 = vld [vmem:[%s11 + $0xa0] sm:$0xff]
      %v5394 = vld [vmem:[%s11 + $0xa8] sm:$0xff]
      %v5395 = vld [vmem:[%s11 + $0xb0] sm:$0xff]
      %v5396 = vld [vmem:[%s11 + $0xb8] sm:$0xff]
      %v5397 = vld [vmem:[%s11 + $0xc0] sm:$0xff]
      %v5398 = vld [vmem:[%s11 + $0xc8] sm:$0xff]
      %v5399 = vld [vmem:[%s11 + $0xd0] sm:$0xff]
      %v5400 = vld [vmem:[%s11 + $0xd8] sm:$0xff]
      %v5401 = vld [vmem:[%s11 + $0xe0] sm:$0xff]
      %v5402 = vld [vmem:[%s11 + $0xe8] sm:$0xff]
      %v5403 = vld [vmem:[%s11 + $0xf0] sm:$0xff]
      %v5404 = vld [vmem:[%s11 + $0xf8] sm:$0xff]
      %v5405 = vld [vmem:[%s11 + $0x100] sm:$0xff]
      %v5406 = vld [vmem:[%s11 + $0x108] sm:$0xff]
      %v5407 = vld [vmem:[%s11 + $0x110] sm:$0xff]
      %v5408 = vld [vmem:[%s11 + $0x118] sm:$0xff]
      %v5409 = vld [vmem:[%s11 + $0x120] sm:$0xff]
      %v5410 = vld [vmem:[%s11 + $0x128] sm:$0xff]
      %v5411 = vld [vmem:[%s11 + $0x130] sm:$0xff]
      %v5412 = vld [vmem:[%s11 + $0x138] sm:$0xff]
      %v5413 = vld [vmem:[%s11 + $0x140] sm:$0xff]
      %v5414 = vld [vmem:[%s11 + $0x148] sm:$0xff]
      %v5415 = vld [vmem:[%s11 + $0x150] sm:$0xff]
      %v5416 = vld [vmem:[%s11 + $0x158] sm:$0xff]
      %v5417 = vld [vmem:[%s11 + $0x160] sm:$0xff]
      %v5418 = vld [vmem:[%s11 + $0x168] sm:$0xff]
      %v5419 = vld [vmem:[%s11 + $0x170] sm:$0xff]
      %v5420 = vld [vmem:[%s11 + $0x178] sm:$0xff]
      %v5421 = vld [vmem:[%s11 + $0x180] sm:$0xff]
      %v5422 = vld [vmem:[%s11 + $0x188] sm:$0xff]
      %v5423 = vld [vmem:[%s11 + $0x190] sm:$0xff]
      %v5424 = vld [vmem:[%s11 + $0x198] sm:$0xff]
      %v5425 = vld [vmem:[%s11 + $0x1a0] sm:$0xff]
      %v5426 = vld [vmem:[%s11 + $0x1a8] sm:$0xff]
      %v5427 = vld [vmem:[%s11 + $0x1b0] sm:$0xff]
      %v5428 = vld [vmem:[%s11 + $0x1b8] sm:$0xff]
      %v5429 = vld [vmem:[%s11 + $0x1c0] sm:$0xff]
      %v5430 = vld [vmem:[%s11 + $0x1c8] sm:$0xff]
      %v5431 = vld [vmem:[%s11 + $0x1d0] sm:$0xff]
      %v5432 = vld [vmem:[%s11 + $0x1d8] sm:$0xff]
      %v5433 = vld [vmem:[%s11 + $0x1e0] sm:$0xff]
      %v5434 = vld [vmem:[%s11 + $0x1e8] sm:$0xff]
      %v5435 = vld [vmem:[%s11 + $0x1f0] sm:$0xff]
      %v5436 = vld [vmem:[%s11 + $0x1f8] sm:$0xff]
      %v5437 = vld [vmem:[%s12] sm:$0xf]
      %v5439 = vlaneseq
      %v5440 = vshrl.u32 %v5439, 7
      %v5441 = vsub.s32 0, %v5440
      %v5442 = vrot.slane %v5437, %v5441
      %v5443 = vlaneseq
      %v5444 = vshrl.u32 %v5443, 7
      %v5445 = vsub.s32 1, %v5444
      %v5446 = vrot.slane %v5437, %v5445
      %v5447 = vlaneseq
      %v5448 = vshrl.u32 %v5447, 7
      %v5449 = vsub.s32 2, %v5448
      %v5450 = vrot.slane %v5437, %v5449
      %v5451 = vlaneseq
      %v5452 = vshrl.u32 %v5451, 7
      %v5453 = vsub.s32 3, %v5452
      %v5454 = vrot.slane %v5437, %v5453
      %v5523 = vunpack.c.l.b16 %v5373
      %v5524 = vunpack.c.h.b16 %v5373
      %v5525 = vunpack.c.l.b16 %v5374
      %v5526 = vunpack.c.h.b16 %v5374
      %v5527 = vunpack.c.l.b16 %v5375
      %v5528 = vunpack.c.h.b16 %v5375
      %v5529 = vunpack.c.l.b16 %v5376
      %v5530 = vunpack.c.h.b16 %v5376
      %v5531 = vunpack.c.l.b16 %v5377
      %v5532 = vunpack.c.h.b16 %v5377
      %v5533 = vunpack.c.l.b16 %v5378
      %v5534 = vunpack.c.h.b16 %v5378
      %v5535 = vunpack.c.l.b16 %v5379
      %v5536 = vunpack.c.h.b16 %v5379
      %v5537 = vunpack.c.l.b16 %v5380
      %v5538 = vunpack.c.h.b16 %v5380
      %v5539 = vunpack.c.l.b16 %v5381
      %v5540 = vunpack.c.h.b16 %v5381
      %v5541 = vunpack.c.l.b16 %v5382
      %v5542 = vunpack.c.h.b16 %v5382
      %v5543 = vunpack.c.l.b16 %v5383
      %v5544 = vunpack.c.h.b16 %v5383
      %v5545 = vunpack.c.l.b16 %v5384
      %v5546 = vunpack.c.h.b16 %v5384
      %v5547 = vunpack.c.l.b16 %v5385
      %v5548 = vunpack.c.h.b16 %v5385
      %v5549 = vunpack.c.l.b16 %v5386
      %v5550 = vunpack.c.h.b16 %v5386
      %v5551 = vunpack.c.l.b16 %v5387
      %v5552 = vunpack.c.h.b16 %v5387
      %v5553 = vunpack.c.l.b16 %v5388
      %v5554 = vunpack.c.h.b16 %v5388
      %v5555 = vunpack.c.l.b16 %v5389
      %v5556 = vunpack.c.h.b16 %v5389
      %v5557 = vunpack.c.l.b16 %v5390
      %v5558 = vunpack.c.h.b16 %v5390
      %v5559 = vunpack.c.l.b16 %v5391
      %v5560 = vunpack.c.h.b16 %v5391
      %v5561 = vunpack.c.l.b16 %v5392
      %v5562 = vunpack.c.h.b16 %v5392
      %v5563 = vunpack.c.l.b16 %v5393
      %v5564 = vunpack.c.h.b16 %v5393
      %v5565 = vunpack.c.l.b16 %v5394
      %v5566 = vunpack.c.h.b16 %v5394
      %v5567 = vunpack.c.l.b16 %v5395
      %v5568 = vunpack.c.h.b16 %v5395
      %v5569 = vunpack.c.l.b16 %v5396
      %v5570 = vunpack.c.h.b16 %v5396
      %v5571 = vunpack.c.l.b16 %v5397
      %v5572 = vunpack.c.h.b16 %v5397
      %v5573 = vunpack.c.l.b16 %v5398
      %v5574 = vunpack.c.h.b16 %v5398
      %v5575 = vunpack.c.l.b16 %v5399
      %v5576 = vunpack.c.h.b16 %v5399
      %v5577 = vunpack.c.l.b16 %v5400
      %v5578 = vunpack.c.h.b16 %v5400
      %v5579 = vunpack.c.l.b16 %v5401
      %v5580 = vunpack.c.h.b16 %v5401
      %v5581 = vunpack.c.l.b16 %v5402
      %v5582 = vunpack.c.h.b16 %v5402
      %v5583 = vunpack.c.l.b16 %v5403
      %v5584 = vunpack.c.h.b16 %v5403
      %v5585 = vunpack.c.l.b16 %v5404
      %v5586 = vunpack.c.h.b16 %v5404
      %v5587 = vunpack.c.l.b16 %v5405
      %v5588 = vunpack.c.h.b16 %v5405
      %v5589 = vunpack.c.l.b16 %v5406
      %v5590 = vunpack.c.h.b16 %v5406
      %v5591 = vunpack.c.l.b16 %v5407
      %v5592 = vunpack.c.h.b16 %v5407
      %v5593 = vunpack.c.l.b16 %v5408
      %v5594 = vunpack.c.h.b16 %v5408
      %v5595 = vunpack.c.l.b16 %v5409
      %v5596 = vunpack.c.h.b16 %v5409
      %v5597 = vunpack.c.l.b16 %v5410
      %v5598 = vunpack.c.h.b16 %v5410
      %v5599 = vunpack.c.l.b16 %v5411
      %v5600 = vunpack.c.h.b16 %v5411
      %v5601 = vunpack.c.l.b16 %v5412
      %v5602 = vunpack.c.h.b16 %v5412
      %v5603 = vunpack.c.l.b16 %v5413
      %v5604 = vunpack.c.h.b16 %v5413
      %v5605 = vunpack.c.l.b16 %v5414
      %v5606 = vunpack.c.h.b16 %v5414
      %v5607 = vunpack.c.l.b16 %v5415
      %v5608 = vunpack.c.h.b16 %v5415
      %v5609 = vunpack.c.l.b16 %v5416
      %v5610 = vunpack.c.h.b16 %v5416
      %v5611 = vunpack.c.l.b16 %v5417
      %v5612 = vunpack.c.h.b16 %v5417
      %v5613 = vunpack.c.l.b16 %v5418
      %v5614 = vunpack.c.h.b16 %v5418
      %v5615 = vunpack.c.l.b16 %v5419
      %v5616 = vunpack.c.h.b16 %v5419
      %v5617 = vunpack.c.l.b16 %v5420
      %v5618 = vunpack.c.h.b16 %v5420
      %v5619 = vunpack.c.l.b16 %v5421
      %v5620 = vunpack.c.h.b16 %v5421
      %v5621 = vunpack.c.l.b16 %v5422
      %v5622 = vunpack.c.h.b16 %v5422
      %v5623 = vunpack.c.l.b16 %v5423
      %v5624 = vunpack.c.h.b16 %v5423
      %v5625 = vunpack.c.l.b16 %v5424
      %v5626 = vunpack.c.h.b16 %v5424
      %v5627 = vunpack.c.l.b16 %v5425
      %v5628 = vunpack.c.h.b16 %v5425
      %v5629 = vunpack.c.l.b16 %v5426
      %v5630 = vunpack.c.h.b16 %v5426
      %v5631 = vunpack.c.l.b16 %v5427
      %v5632 = vunpack.c.h.b16 %v5427
      %v5633 = vunpack.c.l.b16 %v5428
      %v5634 = vunpack.c.h.b16 %v5428
      %v5635 = vunpack.c.l.b16 %v5429
      %v5636 = vunpack.c.h.b16 %v5429
      %v5637 = vunpack.c.l.b16 %v5430
      %v5638 = vunpack.c.h.b16 %v5430
      %v5639 = vunpack.c.l.b16 %v5431
      %v5640 = vunpack.c.h.b16 %v5431
      %v5641 = vunpack.c.l.b16 %v5432
      %v5642 = vunpack.c.h.b16 %v5432
      %v5643 = vunpack.c.l.b16 %v5433
      %v5644 = vunpack.c.h.b16 %v5433
      %v5645 = vunpack.c.l.b16 %v5434
      %v5646 = vunpack.c.h.b16 %v5434
      %v5647 = vunpack.c.l.b16 %v5435
      %v5648 = vunpack.c.h.b16 %v5435
      %v5649 = vunpack.c.l.b16 %v5436
      %v5650 = vunpack.c.h.b16 %v5436
      %v5651 = vpack.c.b16 %v5527, %v5523
      %v5652 = vpack.c.b16 %v5528, %v5524
      %v5653 = vpack.c.b16 %v5529, %v5525
      %v5654 = vpack.c.b16 %v5530, %v5526
      %v5655 = vpack.c.b16 %v5535, %v5531
      %v5656 = vpack.c.b16 %v5536, %v5532
      %v5657 = vpack.c.b16 %v5537, %v5533
      %v5658 = vpack.c.b16 %v5538, %v5534
      %v5659 = vpack.c.b16 %v5543, %v5539
      %v5660 = vpack.c.b16 %v5544, %v5540
      %v5661 = vpack.c.b16 %v5545, %v5541
      %v5662 = vpack.c.b16 %v5546, %v5542
      %v5663 = vpack.c.b16 %v5551, %v5547
      %v5664 = vpack.c.b16 %v5552, %v5548
      %v5665 = vpack.c.b16 %v5553, %v5549
      %v5666 = vpack.c.b16 %v5554, %v5550
      %v5667 = vpack.c.b16 %v5559, %v5555
      %v5668 = vpack.c.b16 %v5560, %v5556
      %v5669 = vpack.c.b16 %v5561, %v5557
      %v5670 = vpack.c.b16 %v5562, %v5558
      %v5671 = vpack.c.b16 %v5567, %v5563
      %v5672 = vpack.c.b16 %v5568, %v5564
      %v5673 = vpack.c.b16 %v5569, %v5565
      %v5674 = vpack.c.b16 %v5570, %v5566
      %v5675 = vpack.c.b16 %v5575, %v5571
      %v5676 = vpack.c.b16 %v5576, %v5572
      %v5677 = vpack.c.b16 %v5577, %v5573
      %v5678 = vpack.c.b16 %v5578, %v5574
      %v5679 = vpack.c.b16 %v5583, %v5579
      %v5680 = vpack.c.b16 %v5584, %v5580
      %v5681 = vpack.c.b16 %v5585, %v5581
      %v5682 = vpack.c.b16 %v5586, %v5582
      %v5683 = vpack.c.b16 %v5591, %v5587
      %v5684 = vpack.c.b16 %v5592, %v5588
      %v5685 = vpack.c.b16 %v5593, %v5589
      %v5686 = vpack.c.b16 %v5594, %v5590
      %v5687 = vpack.c.b16 %v5599, %v5595
      %v5688 = vpack.c.b16 %v5600, %v5596
      %v5689 = vpack.c.b16 %v5601, %v5597
      %v5690 = vpack.c.b16 %v5602, %v5598
      %v5691 = vpack.c.b16 %v5607, %v5603
      %v5692 = vpack.c.b16 %v5608, %v5604
      %v5693 = vpack.c.b16 %v5609, %v5605
      %v5694 = vpack.c.b16 %v5610, %v5606
      %v5695 = vpack.c.b16 %v5615, %v5611
      %v5696 = vpack.c.b16 %v5616, %v5612
      %v5697 = vpack.c.b16 %v5617, %v5613
      %v5698 = vpack.c.b16 %v5618, %v5614
      %v5699 = vpack.c.b16 %v5623, %v5619
      %v5700 = vpack.c.b16 %v5624, %v5620
      %v5701 = vpack.c.b16 %v5625, %v5621
      %v5702 = vpack.c.b16 %v5626, %v5622
      %v5703 = vpack.c.b16 %v5631, %v5627
      %v5704 = vpack.c.b16 %v5632, %v5628
      %v5705 = vpack.c.b16 %v5633, %v5629
      %v5706 = vpack.c.b16 %v5634, %v5630
      %v5707 = vpack.c.b16 %v5639, %v5635
      %v5708 = vpack.c.b16 %v5640, %v5636
      %v5709 = vpack.c.b16 %v5641, %v5637
      %v5710 = vpack.c.b16 %v5642, %v5638
      %v5711 = vpack.c.b16 %v5647, %v5643
      %v5712 = vpack.c.b16 %v5648, %v5644
      %v5713 = vpack.c.b16 %v5649, %v5645
      %v5714 = vpack.c.b16 %v5650, %v5646
      %5779 = vmatprep.subr.bf16.mxu0 %v5652
      %5780 = vmatpush1.bf16.msra.mxu0 %v5651
      %5781 = vmatprep.subr.bf16.mxu0 %v5656
      %5782 = vmatpush1.bf16.msra.mxu0 %v5655
      %5783 = vmatprep.subr.bf16.mxu0 %v5660
      %5784 = vmatpush1.bf16.msra.mxu0 %v5659
      %5785 = vmatprep.subr.bf16.mxu0 %v5664
      %5786 = vmatpush1.bf16.msra.mxu0 %v5663
      %5787 = vmatprep.subr.bf16.mxu0 %v5668
      %5788 = vmatpush1.bf16.msra.mxu0 %v5667
      %5789 = vmatprep.subr.bf16.mxu0 %v5672
      %5790 = vmatpush1.bf16.msra.mxu0 %v5671
      %5791 = vmatprep.subr.bf16.mxu0 %v5676
      %5792 = vmatpush1.bf16.msra.mxu0 %v5675
      %5793 = vmatprep.subr.bf16.mxu0 %v5680
      %5794 = vmatpush1.bf16.msra.mxu0 %v5679
      %5795 = vmatprep.subr.bf16.mxu0 %v5684
      %5796 = vmatpush1.bf16.msra.mxu0 %v5683
      %5797 = vmatprep.subr.bf16.mxu0 %v5688
      %5798 = vmatpush1.bf16.msra.mxu0 %v5687
      %5799 = vmatprep.subr.bf16.mxu0 %v5692
      %5800 = vmatpush1.bf16.msra.mxu0 %v5691
      %5801 = vmatprep.subr.bf16.mxu0 %v5696
      %5802 = vmatpush1.bf16.msra.mxu0 %v5695
      %5803 = vmatprep.subr.bf16.mxu0 %v5700
      %5804 = vmatpush1.bf16.msra.mxu0 %v5699
      %5805 = vmatprep.subr.bf16.mxu0 %v5704
      %5806 = vmatpush1.bf16.msra.mxu0 %v5703
      %5807 = vmatprep.subr.bf16.mxu0 %v5708
      %5808 = vmatpush1.bf16.msra.mxu0 %v5707
      %5809 = vmatprep.subr.bf16.mxu0 %v5712
      %5810 = vmatpush1.bf16.msra.mxu0 %v5711
      %5811 = vmatprep.mubr.bf16.mxu0 %v5310
      %5812 = vmatmul.mubr.bf16.gmra.mrb[0].mxu0 %v5309
      %v5813 = vpop.f32.mrb[0].mxu0
      %v5814 = vadd.f32 %v5442, %v5813
      %v5815 = vpop.f32.mrb[0].mxu0
      %v5816 = vadd.f32 %v5446, %v5815
      %v5817 = vpop.f32.mrb[0].mxu0
      %v5818 = vadd.f32 %v5442, %v5817
      %v5819 = vpop.f32.mrb[0].mxu0
      %v5820 = vadd.f32 %v5446, %v5819
      %5821 = vmatprep.mubr.bf16.mxu0 %v5312
      %5822 = vmatmul.mubr.bf16.gmra.mrb[0].mxu0 %v5311
      %v5823 = vpop.f32.mrb[0].mxu0
      %v5824 = vadd.f32 %v5442, %v5823
      %v5825 = vpop.f32.mrb[0].mxu0
      %v5826 = vadd.f32 %v5446, %v5825
      %v5827 = vpop.f32.mrb[0].mxu0
      %v5828 = vadd.f32 %v5442, %v5827
      %v5829 = vpop.f32.mrb[0].mxu0
      %v5830 = vadd.f32 %v5446, %v5829
      %5831 = vmatprep.mubr.bf16.mxu0 %v5314
      %5832 = vmatmul.mubr.bf16.gmra.mrb[0].mxu0 %v5313
      %v5833 = vpop.f32.mrb[0].mxu0
      %v5834 = vadd.f32 %v5442, %v5833
      %v5835 = vpop.f32.mrb[0].mxu0
      %v5836 = vadd.f32 %v5446, %v5835
      %v5837 = vpop.f32.mrb[0].mxu0
      %v5838 = vadd.f32 %v5442, %v5837
      %v5839 = vpop.f32.mrb[0].mxu0
      %v5840 = vadd.f32 %v5446, %v5839
      %5841 = vmatprep.mubr.bf16.mxu0 %v5316
      %5842 = vmatmul.mubr.bf16.gmra.mrb[0].mxu0 %v5315
      %v5843 = vpop.f32.mrb[0].mxu0
      %v5844 = vadd.f32 %v5442, %v5843
      %v5845 = vpop.f32.mrb[0].mxu0
      %v5846 = vadd.f32 %v5446, %v5845
      %v5847 = vpop.f32.mrb[0].mxu0
      %v5848 = vadd.f32 %v5442, %v5847
      %v5849 = vpop.f32.mrb[0].mxu0
      %v5850 = vadd.f32 %v5446, %v5849
      %5851 = vmatprep.mubr.bf16.mxu0 %v5318
      %5852 = vmatmul.mubr.bf16.gmra.mrb[0].mxu0 %v5317
      %v5853 = vpop.f32.mrb[0].mxu0
      %v5854 = vadd.f32 %v5442, %v5853
      %v5855 = vpop.f32.mrb[0].mxu0
      %v5856 = vadd.f32 %v5446, %v5855
      %v5857 = vpop.f32.mrb[0].mxu0
      %v5858 = vadd.f32 %v5442, %v5857
      %v5859 = vpop.f32.mrb[0].mxu0
      %v5860 = vadd.f32 %v5446, %v5859
      %5861 = vmatprep.mubr.bf16.mxu0 %v5320
      %5862 = vmatmul.mubr.bf16.gmra.mrb[0].mxu0 %v5319
      %v5863 = vpop.f32.mrb[0].mxu0
      %v5864 = vadd.f32 %v5442, %v5863
      %v5865 = vpop.f32.mrb[0].mxu0
      %v5866 = vadd.f32 %v5446, %v5865
      %v5867 = vpop.f32.mrb[0].mxu0
      %v5868 = vadd.f32 %v5442, %v5867
      %v5869 = vpop.f32.mrb[0].mxu0
      %v5870 = vadd.f32 %v5446, %v5869
      %5871 = vmatprep.mubr.bf16.mxu0 %v5322
      %5872 = vmatmul.mubr.bf16.gmra.mrb[0].mxu0 %v5321
      %v5873 = vpop.f32.mrb[0].mxu0
      %v5874 = vadd.f32 %v5442, %v5873
      %v5875 = vpop.f32.mrb[0].mxu0
      %v5876 = vadd.f32 %v5446, %v5875
      %v5877 = vpop.f32.mrb[0].mxu0
      %v5878 = vadd.f32 %v5442, %v5877
      %v5879 = vpop.f32.mrb[0].mxu0
      %v5880 = vadd.f32 %v5446, %v5879
      %5881 = vmatprep.mubr.bf16.mxu0 %v5324
      %5882 = vmatmul.mubr.bf16.gmra.mrb[0].mxu0 %v5323
      %v5883 = vpop.f32.mrb[0].mxu0
      %v5884 = vadd.f32 %v5442, %v5883
      %v5885 = vpop.f32.mrb[0].mxu0
      %v5886 = vadd.f32 %v5446, %v5885
      %v5887 = vpop.f32.mrb[0].mxu0
      %v5888 = vadd.f32 %v5442, %v5887
      %v5889 = vpop.f32.mrb[0].mxu0
      %v5890 = vadd.f32 %v5446, %v5889
      %5891 = vmatprep.mubr.bf16.mxu0 %v5326
      %5892 = vmatmul.mubr.bf16.gmra.mrb[0].mxu0 %v5325
      %v5893 = vpop.f32.mrb[0].mxu0
      %v5894 = vadd.f32 %v5442, %v5893
      %v5895 = vpop.f32.mrb[0].mxu0
      %v5896 = vadd.f32 %v5446, %v5895
      %v5897 = vpop.f32.mrb[0].mxu0
      %v5898 = vadd.f32 %v5442, %v5897
      %v5899 = vpop.f32.mrb[0].mxu0
      %v5900 = vadd.f32 %v5446, %v5899
      %5901 = vmatprep.mubr.bf16.mxu0 %v5328
      %5902 = vmatmul.mubr.bf16.gmra.mrb[0].mxu0 %v5327
      %v5903 = vpop.f32.mrb[0].mxu0
      %v5904 = vadd.f32 %v5442, %v5903
      %v5905 = vpop.f32.mrb[0].mxu0
      %v5906 = vadd.f32 %v5446, %v5905
      %v5907 = vpop.f32.mrb[0].mxu0
      %v5908 = vadd.f32 %v5442, %v5907
      %v5909 = vpop.f32.mrb[0].mxu0
      %v5910 = vadd.f32 %v5446, %v5909
      %5911 = vmatprep.mubr.bf16.mxu0 %v5330
      %5912 = vmatmul.mubr.bf16.gmra.mrb[0].mxu0 %v5329
      %v5913 = vpop.f32.mrb[0].mxu0
      %v5914 = vadd.f32 %v5442, %v5913
      %v5915 = vpop.f32.mrb[0].mxu0
      %v5916 = vadd.f32 %v5446, %v5915
      %v5917 = vpop.f32.mrb[0].mxu0
      %v5918 = vadd.f32 %v5442, %v5917
      %v5919 = vpop.f32.mrb[0].mxu0
      %v5920 = vadd.f32 %v5446, %v5919
      %5921 = vmatprep.mubr.bf16.mxu0 %v5332
      %5922 = vmatmul.mubr.bf16.gmra.mrb[0].mxu0 %v5331
      %v5923 = vpop.f32.mrb[0].mxu0
      %v5924 = vadd.f32 %v5442, %v5923
      %v5925 = vpop.f32.mrb[0].mxu0
      %v5926 = vadd.f32 %v5446, %v5925
      %v5927 = vpop.f32.mrb[0].mxu0
      %v5928 = vadd.f32 %v5442, %v5927
      %v5929 = vpop.f32.mrb[0].mxu0
      %v5930 = vadd.f32 %v5446, %v5929
      %5931 = vmatprep.mubr.bf16.mxu0 %v5334
      %5932 = vmatmul.mubr.bf16.gmra.mrb[0].mxu0 %v5333
      %v5933 = vpop.f32.mrb[0].mxu0
      %v5934 = vadd.f32 %v5442, %v5933
      %v5935 = vpop.f32.mrb[0].mxu0
      %v5936 = vadd.f32 %v5446, %v5935
      %v5937 = vpop.f32.mrb[0].mxu0
      %v5938 = vadd.f32 %v5442, %v5937
      %v5939 = vpop.f32.mrb[0].mxu0
      %v5940 = vadd.f32 %v5446, %v5939
      %5941 = vmatprep.mubr.bf16.mxu0 %v5336
      %5942 = vmatmul.mubr.bf16.gmra.mrb[0].mxu0 %v5335
      %v5943 = vpop.f32.mrb[0].mxu0
      %v5944 = vadd.f32 %v5442, %v5943
      %v5945 = vpop.f32.mrb[0].mxu0
      %v5946 = vadd.f32 %v5446, %v5945
      %v5947 = vpop.f32.mrb[0].mxu0
      %v5948 = vadd.f32 %v5442, %v5947
      %v5949 = vpop.f32.mrb[0].mxu0
      %v5950 = vadd.f32 %v5446, %v5949
      %5951 = vmatprep.mubr.bf16.mxu0 %v5338
      %5952 = vmatmul.mubr.bf16.gmra.mrb[0].mxu0 %v5337
      %v5953 = vpop.f32.mrb[0].mxu0
      %v5954 = vadd.f32 %v5442, %v5953
      %v5955 = vpop.f32.mrb[0].mxu0
      %v5956 = vadd.f32 %v5446, %v5955
      %v5957 = vpop.f32.mrb[0].mxu0
      %v5958 = vadd.f32 %v5442, %v5957
      %v5959 = vpop.f32.mrb[0].mxu0
      %v5960 = vadd.f32 %v5446, %v5959
      %5961 = vmatprep.mubr.bf16.mxu0 %v5340
      %5962 = vmatmul.mubr.bf16.gmra.mrb[0].mxu0 %v5339
      %v5963 = vpop.f32.mrb[0].mxu0
      %v5964 = vadd.f32 %v5442, %v5963
      %v5965 = vpop.f32.mrb[0].mxu0
      %v5966 = vadd.f32 %v5446, %v5965
      %v5967 = vpop.f32.mrb[0].mxu0
      %v5968 = vadd.f32 %v5442, %v5967
      %v5969 = vpop.f32.mrb[0].mxu0
      %v5970 = vadd.f32 %v5446, %v5969
      %5971 = vmatprep.mubr.bf16.mxu0 %v5342
      %5972 = vmatmul.mubr.bf16.gmra.mrb[0].mxu0 %v5341
      %v5973 = vpop.f32.mrb[0].mxu0
      %v5974 = vadd.f32 %v5442, %v5973
      %v5975 = vpop.f32.mrb[0].mxu0
      %v5976 = vadd.f32 %v5446, %v5975
      %v5977 = vpop.f32.mrb[0].mxu0
      %v5978 = vadd.f32 %v5442, %v5977
      %v5979 = vpop.f32.mrb[0].mxu0
      %v5980 = vadd.f32 %v5446, %v5979
      %5981 = vmatprep.mubr.bf16.mxu0 %v5344
      %5982 = vmatmul.mubr.bf16.gmra.mrb[0].mxu0 %v5343
      %v5983 = vpop.f32.mrb[0].mxu0
      %v5984 = vadd.f32 %v5442, %v5983
      %v5985 = vpop.f32.mrb[0].mxu0
      %v5986 = vadd.f32 %v5446, %v5985
      %v5987 = vpop.f32.mrb[0].mxu0
      %v5988 = vadd.f32 %v5442, %v5987
      %v5989 = vpop.f32.mrb[0].mxu0
      %v5990 = vadd.f32 %v5446, %v5989
      %5991 = vmatprep.mubr.bf16.mxu0 %v5346
      %5992 = vmatmul.mubr.bf16.gmra.mrb[0].mxu0 %v5345
      %v5993 = vpop.f32.mrb[0].mxu0
      %v5994 = vadd.f32 %v5442, %v5993
      %v5995 = vpop.f32.mrb[0].mxu0
      %v5996 = vadd.f32 %v5446, %v5995
      %v5997 = vpop.f32.mrb[0].mxu0
      %v5998 = vadd.f32 %v5442, %v5997
      %v5999 = vpop.f32.mrb[0].mxu0
      %v6000 = vadd.f32 %v5446, %v5999
      %6001 = vmatprep.mubr.bf16.mxu0 %v5348
      %6002 = vmatmul.mubr.bf16.gmra.mrb[0].mxu0 %v5347
      %v6003 = vpop.f32.mrb[0].mxu0
      %v6004 = vadd.f32 %v5442, %v6003
      %v6005 = vpop.f32.mrb[0].mxu0
      %v6006 = vadd.f32 %v5446, %v6005
      %v6007 = vpop.f32.mrb[0].mxu0
      %v6008 = vadd.f32 %v5442, %v6007
      %v6009 = vpop.f32.mrb[0].mxu0
      %v6010 = vadd.f32 %v5446, %v6009
      %6011 = vmatprep.mubr.bf16.mxu0 %v5350
      %6012 = vmatmul.mubr.bf16.gmra.mrb[0].mxu0 %v5349
      %v6013 = vpop.f32.mrb[0].mxu0
      %v6014 = vadd.f32 %v5442, %v6013
      %v6015 = vpop.f32.mrb[0].mxu0
      %v6016 = vadd.f32 %v5446, %v6015
      %v6017 = vpop.f32.mrb[0].mxu0
      %v6018 = vadd.f32 %v5442, %v6017
      %v6019 = vpop.f32.mrb[0].mxu0
      %v6020 = vadd.f32 %v5446, %v6019
      %6021 = vmatprep.mubr.bf16.mxu0 %v5352
      %6022 = vmatmul.mubr.bf16.gmra.mrb[0].mxu0 %v5351
      %v6023 = vpop.f32.mrb[0].mxu0
      %v6024 = vadd.f32 %v5442, %v6023
      %v6025 = vpop.f32.mrb[0].mxu0
      %v6026 = vadd.f32 %v5446, %v6025
      %v6027 = vpop.f32.mrb[0].mxu0
      %v6028 = vadd.f32 %v5442, %v6027
      %v6029 = vpop.f32.mrb[0].mxu0
      %v6030 = vadd.f32 %v5446, %v6029
      %6031 = vmatprep.mubr.bf16.mxu0 %v5354
      %6032 = vmatmul.mubr.bf16.gmra.mrb[0].mxu0 %v5353
      %v6033 = vpop.f32.mrb[0].mxu0
      %v6034 = vadd.f32 %v5442, %v6033
      %v6035 = vpop.f32.mrb[0].mxu0
      %v6036 = vadd.f32 %v5446, %v6035
      %v6037 = vpop.f32.mrb[0].mxu0
      %v6038 = vadd.f32 %v5442, %v6037
      %v6039 = vpop.f32.mrb[0].mxu0
      %v6040 = vadd.f32 %v5446, %v6039
      %6041 = vmatprep.mubr.bf16.mxu0 %v5356
      %6042 = vmatmul.mubr.bf16.gmra.mrb[0].mxu0 %v5355
      %v6043 = vpop.f32.mrb[0].mxu0
      %v6044 = vadd.f32 %v5442, %v6043
      %v6045 = vpop.f32.mrb[0].mxu0
      %v6046 = vadd.f32 %v5446, %v6045
      %v6047 = vpop.f32.mrb[0].mxu0
      %v6048 = vadd.f32 %v5442, %v6047
      %v6049 = vpop.f32.mrb[0].mxu0
      %v6050 = vadd.f32 %v5446, %v6049
      %6051 = vmatprep.mubr.bf16.mxu0 %v5358
      %6052 = vmatmul.mubr.bf16.gmra.mrb[0].mxu0 %v5357
      %v6053 = vpop.f32.mrb[0].mxu0
      %v6054 = vadd.f32 %v5442, %v6053
      %v6055 = vpop.f32.mrb[0].mxu0
      %v6056 = vadd.f32 %v5446, %v6055
      %v6057 = vpop.f32.mrb[0].mxu0
      %v6058 = vadd.f32 %v5442, %v6057
      %v6059 = vpop.f32.mrb[0].mxu0
      %v6060 = vadd.f32 %v5446, %v6059
      %6061 = vmatprep.mubr.bf16.mxu0 %v5360
      %6062 = vmatmul.mubr.bf16.gmra.mrb[0].mxu0 %v5359
      %v6063 = vpop.f32.mrb[0].mxu0
      %v6064 = vadd.f32 %v5442, %v6063
      %v6065 = vpop.f32.mrb[0].mxu0
      %v6066 = vadd.f32 %v5446, %v6065
      %v6067 = vpop.f32.mrb[0].mxu0
      %v6068 = vadd.f32 %v5442, %v6067
      %v6069 = vpop.f32.mrb[0].mxu0
      %v6070 = vadd.f32 %v5446, %v6069
      %6071 = vmatprep.mubr.bf16.mxu0 %v5362
      %6072 = vmatmul.mubr.bf16.gmra.mrb[0].mxu0 %v5361
      %v6073 = vpop.f32.mrb[0].mxu0
      %v6074 = vadd.f32 %v5442, %v6073
      %v6075 = vpop.f32.mrb[0].mxu0
      %v6076 = vadd.f32 %v5446, %v6075
      %v6077 = vpop.f32.mrb[0].mxu0
      %v6078 = vadd.f32 %v5442, %v6077
      %v6079 = vpop.f32.mrb[0].mxu0
      %v6080 = vadd.f32 %v5446, %v6079
      %6081 = vmatprep.mubr.bf16.mxu0 %v5364
      %6082 = vmatmul.mubr.bf16.gmra.mrb[0].mxu0 %v5363
      %v6083 = vpop.f32.mrb[0].mxu0
      %v6084 = vadd.f32 %v5442, %v6083
      %v6085 = vpop.f32.mrb[0].mxu0
      %v6086 = vadd.f32 %v5446, %v6085
      %v6087 = vpop.f32.mrb[0].mxu0
      %v6088 = vadd.f32 %v5442, %v6087
      %v6089 = vpop.f32.mrb[0].mxu0
      %v6090 = vadd.f32 %v5446, %v6089
      %6091 = vmatprep.mubr.bf16.mxu0 %v5366
      %6092 = vmatmul.mubr.bf16.gmra.mrb[0].mxu0 %v5365
      %v6093 = vpop.f32.mrb[0].mxu0
      %v6094 = vadd.f32 %v5442, %v6093
      %v6095 = vpop.f32.mrb[0].mxu0
      %v6096 = vadd.f32 %v5446, %v6095
      %v6097 = vpop.f32.mrb[0].mxu0
      %v6098 = vadd.f32 %v5442, %v6097
      %v6099 = vpop.f32.mrb[0].mxu0
      %v6100 = vadd.f32 %v5446, %v6099
      %6101 = vmatprep.mubr.bf16.mxu0 %v5368
      %6102 = vmatmul.mubr.bf16.gmra.mrb[0].mxu0 %v5367
      %v6103 = vpop.f32.mrb[0].mxu0
      %v6104 = vadd.f32 %v5442, %v6103
      %v6105 = vpop.f32.mrb[0].mxu0
      %v6106 = vadd.f32 %v5446, %v6105
      %v6107 = vpop.f32.mrb[0].mxu0
      %v6108 = vadd.f32 %v5442, %v6107
      %v6109 = vpop.f32.mrb[0].mxu0
      %v6110 = vadd.f32 %v5446, %v6109
      %6111 = vmatprep.mubr.bf16.mxu0 %v5370
      %6112 = vmatmul.mubr.bf16.gmra.mrb[0].mxu0 %v5369
      %v6113 = vpop.f32.mrb[0].mxu0
      %v6114 = vadd.f32 %v5442, %v6113
      %v6115 = vpop.f32.mrb[0].mxu0
      %v6116 = vadd.f32 %v5446, %v6115
      %v6117 = vpop.f32.mrb[0].mxu0
      %v6118 = vadd.f32 %v5442, %v6117
      %v6119 = vpop.f32.mrb[0].mxu0
      %v6120 = vadd.f32 %v5446, %v6119
      %6121 = vmatprep.mubr.bf16.mxu0 %v5372
      %6122 = vmatmul.mubr.bf16.gmra.mrb[0].mxu0 %v5371
      %v6123 = vpop.f32.mrb[0].mxu0
      %v6124 = vadd.f32 %v5442, %v6123
      %v6125 = vpop.f32.mrb[0].mxu0
      %v6126 = vadd.f32 %v5446, %v6125
      %v6127 = vpop.f32.mrb[0].mxu0
      %v6128 = vadd.f32 %v5442, %v6127
      %v6129 = vpop.f32.mrb[0].mxu0
      %v6130 = vadd.f32 %v5446, %v6129
      %6131 = vdwg.mxu0
      %6132 = vmatprep.subr.bf16.mxu0 %v5654
      %6133 = vmatpush1.bf16.msra.mxu0 %v5653
      %6134 = vmatprep.subr.bf16.mxu0 %v5658
      %6135 = vmatpush1.bf16.msra.mxu0 %v5657
      %6136 = vmatprep.subr.bf16.mxu0 %v5662
      %6137 = vmatpush1.bf16.msra.mxu0 %v5661
      %6138 = vmatprep.subr.bf16.mxu0 %v5666
      %6139 = vmatpush1.bf16.msra.mxu0 %v5665
      %6140 = vmatprep.subr.bf16.mxu0 %v5670
      %6141 = vmatpush1.bf16.msra.mxu0 %v5669
      %6142 = vmatprep.subr.bf16.mxu0 %v5674
      %6143 = vmatpush1.bf16.msra.mxu0 %v5673
      %6144 = vmatprep.subr.bf16.mxu0 %v5678
      %6145 = vmatpush1.bf16.msra.mxu0 %v5677
      %6146 = vmatprep.subr.bf16.mxu0 %v5682
      %6147 = vmatpush1.bf16.msra.mxu0 %v5681
      %6148 = vmatprep.subr.bf16.mxu0 %v5686
      %6149 = vmatpush1.bf16.msra.mxu0 %v5685
      %6150 = vmatprep.subr.bf16.mxu0 %v5690
      %6151 = vmatpush1.bf16.msra.mxu0 %v5689
      %6152 = vmatprep.subr.bf16.mxu0 %v5694
      %6153 = vmatpush1.bf16.msra.mxu0 %v5693
      %6154 = vmatprep.subr.bf16.mxu0 %v5698
      %6155 = vmatpush1.bf16.msra.mxu0 %v5697
      %6156 = vmatprep.subr.bf16.mxu0 %v5702
      %6157 = vmatpush1.bf16.msra.mxu0 %v5701
      %6158 = vmatprep.subr.bf16.mxu0 %v5706
      %6159 = vmatpush1.bf16.msra.mxu0 %v5705
      %6160 = vmatprep.subr.bf16.mxu0 %v5710
      %6161 = vmatpush1.bf16.msra.mxu0 %v5709
      %6162 = vmatprep.subr.bf16.mxu0 %v5714
      %6163 = vmatpush1.bf16.msra.mxu0 %v5713
      %6164 = vmatprep.mubr.bf16.mxu0 %v5310
      %6165 = vmatmul.mubr.bf16.gmra.mrb[0].mxu0 %v5309
      %v6166 = vpop.f32.mrb[0].mxu0
      %v6167 = vadd.f32 %v5450, %v6166
      %v6168 = vpop.f32.mrb[0].mxu0
      %v6169 = vadd.f32 %v5454, %v6168
      %v6170 = vpop.f32.mrb[0].mxu0
      %v6171 = vadd.f32 %v5450, %v6170
      %v6172 = vpop.f32.mrb[0].mxu0
      %v6173 = vadd.f32 %v5454, %v6172
      %6174 = vmatprep.mubr.bf16.mxu0 %v5312
      %6175 = vmatmul.mubr.bf16.gmra.mrb[0].mxu0 %v5311
      %v6176 = vpop.f32.mrb[0].mxu0
      %v6177 = vadd.f32 %v5450, %v6176
      %v6178 = vpop.f32.mrb[0].mxu0
      %v6179 = vadd.f32 %v5454, %v6178
      %v6180 = vpop.f32.mrb[0].mxu0
      %v6181 = vadd.f32 %v5450, %v6180
      %v6182 = vpop.f32.mrb[0].mxu0
      %v6183 = vadd.f32 %v5454, %v6182
      %6184 = vmatprep.mubr.bf16.mxu0 %v5314
      %6185 = vmatmul.mubr.bf16.gmra.mrb[0].mxu0 %v5313
      %v6186 = vpop.f32.mrb[0].mxu0
      %v6187 = vadd.f32 %v5450, %v6186
      %v6188 = vpop.f32.mrb[0].mxu0
      %v6189 = vadd.f32 %v5454, %v6188
      %v6190 = vpop.f32.mrb[0].mxu0
      %v6191 = vadd.f32 %v5450, %v6190
      %v6192 = vpop.f32.mrb[0].mxu0
      %v6193 = vadd.f32 %v5454, %v6192
      %6194 = vmatprep.mubr.bf16.mxu0 %v5316
      %6195 = vmatmul.mubr.bf16.gmra.mrb[0].mxu0 %v5315
      %v6196 = vpop.f32.mrb[0].mxu0
      %v6197 = vadd.f32 %v5450, %v6196
      %v6198 = vpop.f32.mrb[0].mxu0
      %v6199 = vadd.f32 %v5454, %v6198
      %v6200 = vpop.f32.mrb[0].mxu0
      %v6201 = vadd.f32 %v5450, %v6200
      %v6202 = vpop.f32.mrb[0].mxu0
      %v6203 = vadd.f32 %v5454, %v6202
      %6204 = vmatprep.mubr.bf16.mxu0 %v5318
      %6205 = vmatmul.mubr.bf16.gmra.mrb[0].mxu0 %v5317
      %v6206 = vpop.f32.mrb[0].mxu0
      %v6207 = vadd.f32 %v5450, %v6206
      %v6208 = vpop.f32.mrb[0].mxu0
      %v6209 = vadd.f32 %v5454, %v6208
      %v6210 = vpop.f32.mrb[0].mxu0
      %v6211 = vadd.f32 %v5450, %v6210
      %v6212 = vpop.f32.mrb[0].mxu0
      %v6213 = vadd.f32 %v5454, %v6212
      %6214 = vmatprep.mubr.bf16.mxu0 %v5320
      %6215 = vmatmul.mubr.bf16.gmra.mrb[0].mxu0 %v5319
      %v6216 = vpop.f32.mrb[0].mxu0
      %v6217 = vadd.f32 %v5450, %v6216
      %v6218 = vpop.f32.mrb[0].mxu0
      %v6219 = vadd.f32 %v5454, %v6218
      %v6220 = vpop.f32.mrb[0].mxu0
      %v6221 = vadd.f32 %v5450, %v6220
      %v6222 = vpop.f32.mrb[0].mxu0
      %v6223 = vadd.f32 %v5454, %v6222
      %6224 = vmatprep.mubr.bf16.mxu0 %v5322
      %6225 = vmatmul.mubr.bf16.gmra.mrb[0].mxu0 %v5321
      %v6226 = vpop.f32.mrb[0].mxu0
      %v6227 = vadd.f32 %v5450, %v6226
      %v6228 = vpop.f32.mrb[0].mxu0
      %v6229 = vadd.f32 %v5454, %v6228
      %v6230 = vpop.f32.mrb[0].mxu0
      %v6231 = vadd.f32 %v5450, %v6230
      %v6232 = vpop.f32.mrb[0].mxu0
      %v6233 = vadd.f32 %v5454, %v6232
      %6234 = vmatprep.mubr.bf16.mxu0 %v5324
      %6235 = vmatmul.mubr.bf16.gmra.mrb[0].mxu0 %v5323
      %v6236 = vpop.f32.mrb[0].mxu0
      %v6237 = vadd.f32 %v5450, %v6236
      %v6238 = vpop.f32.mrb[0].mxu0
      %v6239 = vadd.f32 %v5454, %v6238
      %v6240 = vpop.f32.mrb[0].mxu0
      %v6241 = vadd.f32 %v5450, %v6240
      %v6242 = vpop.f32.mrb[0].mxu0
      %v6243 = vadd.f32 %v5454, %v6242
      %6244 = vmatprep.mubr.bf16.mxu0 %v5326
      %6245 = vmatmul.mubr.bf16.gmra.mrb[0].mxu0 %v5325
      %v6246 = vpop.f32.mrb[0].mxu0
      %v6247 = vadd.f32 %v5450, %v6246
      %v6248 = vpop.f32.mrb[0].mxu0
      %v6249 = vadd.f32 %v5454, %v6248
      %v6250 = vpop.f32.mrb[0].mxu0
      %v6251 = vadd.f32 %v5450, %v6250
      %v6252 = vpop.f32.mrb[0].mxu0
      %v6253 = vadd.f32 %v5454, %v6252
      %6254 = vmatprep.mubr.bf16.mxu0 %v5328
      %6255 = vmatmul.mubr.bf16.gmra.mrb[0].mxu0 %v5327
      %v6256 = vpop.f32.mrb[0].mxu0
      %v6257 = vadd.f32 %v5450, %v6256
      %v6258 = vpop.f32.mrb[0].mxu0
      %v6259 = vadd.f32 %v5454, %v6258
      %v6260 = vpop.f32.mrb[0].mxu0
      %v6261 = vadd.f32 %v5450, %v6260
      %v6262 = vpop.f32.mrb[0].mxu0
      %v6263 = vadd.f32 %v5454, %v6262
      %6264 = vmatprep.mubr.bf16.mxu0 %v5330
      %6265 = vmatmul.mubr.bf16.gmra.mrb[0].mxu0 %v5329
      %v6266 = vpop.f32.mrb[0].mxu0
      %v6267 = vadd.f32 %v5450, %v6266
      %v6268 = vpop.f32.mrb[0].mxu0
      %v6269 = vadd.f32 %v5454, %v6268
      %v6270 = vpop.f32.mrb[0].mxu0
      %v6271 = vadd.f32 %v5450, %v6270
      %v6272 = vpop.f32.mrb[0].mxu0
      %v6273 = vadd.f32 %v5454, %v6272
      %6274 = vmatprep.mubr.bf16.mxu0 %v5332
      %6275 = vmatmul.mubr.bf16.gmra.mrb[0].mxu0 %v5331
      %v6276 = vpop.f32.mrb[0].mxu0
      %v6277 = vadd.f32 %v5450, %v6276
      %v6278 = vpop.f32.mrb[0].mxu0
      %v6279 = vadd.f32 %v5454, %v6278
      %v6280 = vpop.f32.mrb[0].mxu0
      %v6281 = vadd.f32 %v5450, %v6280
      %v6282 = vpop.f32.mrb[0].mxu0
      %v6283 = vadd.f32 %v5454, %v6282
      %6284 = vmatprep.mubr.bf16.mxu0 %v5334
      %6285 = vmatmul.mubr.bf16.gmra.mrb[0].mxu0 %v5333
      %v6286 = vpop.f32.mrb[0].mxu0
      %v6287 = vadd.f32 %v5450, %v6286
      %v6288 = vpop.f32.mrb[0].mxu0
      %v6289 = vadd.f32 %v5454, %v6288
      %v6290 = vpop.f32.mrb[0].mxu0
      %v6291 = vadd.f32 %v5450, %v6290
      %v6292 = vpop.f32.mrb[0].mxu0
      %v6293 = vadd.f32 %v5454, %v6292
      %6294 = vmatprep.mubr.bf16.mxu0 %v5336
      %6295 = vmatmul.mubr.bf16.gmra.mrb[0].mxu0 %v5335
      %v6296 = vpop.f32.mrb[0].mxu0
      %v6297 = vadd.f32 %v5450, %v6296
      %v6298 = vpop.f32.mrb[0].mxu0
      %v6299 = vadd.f32 %v5454, %v6298
      %v6300 = vpop.f32.mrb[0].mxu0
      %v6301 = vadd.f32 %v5450, %v6300
      %v6302 = vpop.f32.mrb[0].mxu0
      %v6303 = vadd.f32 %v5454, %v6302
      %6304 = vmatprep.mubr.bf16.mxu0 %v5338
      %6305 = vmatmul.mubr.bf16.gmra.mrb[0].mxu0 %v5337
      %v6306 = vpop.f32.mrb[0].mxu0
      %v6307 = vadd.f32 %v5450, %v6306
      %v6308 = vpop.f32.mrb[0].mxu0
      %v6309 = vadd.f32 %v5454, %v6308
      %v6310 = vpop.f32.mrb[0].mxu0
      %v6311 = vadd.f32 %v5450, %v6310
      %v6312 = vpop.f32.mrb[0].mxu0
      %v6313 = vadd.f32 %v5454, %v6312
      %6314 = vmatprep.mubr.bf16.mxu0 %v5340
      %6315 = vmatmul.mubr.bf16.gmra.mrb[0].mxu0 %v5339
      %v6316 = vpop.f32.mrb[0].mxu0
      %v6317 = vadd.f32 %v5450, %v6316
      %v6318 = vpop.f32.mrb[0].mxu0
      %v6319 = vadd.f32 %v5454, %v6318
      %v6320 = vpop.f32.mrb[0].mxu0
      %v6321 = vadd.f32 %v5450, %v6320
      %v6322 = vpop.f32.mrb[0].mxu0
      %v6323 = vadd.f32 %v5454, %v6322
      %6324 = vmatprep.mubr.bf16.mxu0 %v5342
      %6325 = vmatmul.mubr.bf16.gmra.mrb[0].mxu0 %v5341
      %v6326 = vpop.f32.mrb[0].mxu0
      %v6327 = vadd.f32 %v5450, %v6326
      %v6328 = vpop.f32.mrb[0].mxu0
      %v6329 = vadd.f32 %v5454, %v6328
      %v6330 = vpop.f32.mrb[0].mxu0
      %v6331 = vadd.f32 %v5450, %v6330
      %v6332 = vpop.f32.mrb[0].mxu0
      %v6333 = vadd.f32 %v5454, %v6332
      %6334 = vmatprep.mubr.bf16.mxu0 %v5344
      %6335 = vmatmul.mubr.bf16.gmra.mrb[0].mxu0 %v5343
      %v6336 = vpop.f32.mrb[0].mxu0
      %v6337 = vadd.f32 %v5450, %v6336
      %v6338 = vpop.f32.mrb[0].mxu0
      %v6339 = vadd.f32 %v5454, %v6338
      %v6340 = vpop.f32.mrb[0].mxu0
      %v6341 = vadd.f32 %v5450, %v6340
      %v6342 = vpop.f32.mrb[0].mxu0
      %v6343 = vadd.f32 %v5454, %v6342
      %6344 = vmatprep.mubr.bf16.mxu0 %v5346
      %6345 = vmatmul.mubr.bf16.gmra.mrb[0].mxu0 %v5345
      %v6346 = vpop.f32.mrb[0].mxu0
      %v6347 = vadd.f32 %v5450, %v6346
      %v6348 = vpop.f32.mrb[0].mxu0
      %v6349 = vadd.f32 %v5454, %v6348
      %v6350 = vpop.f32.mrb[0].mxu0
      %v6351 = vadd.f32 %v5450, %v6350
      %v6352 = vpop.f32.mrb[0].mxu0
      %v6353 = vadd.f32 %v5454, %v6352
      %6354 = vmatprep.mubr.bf16.mxu0 %v5348
      %6355 = vmatmul.mubr.bf16.gmra.mrb[0].mxu0 %v5347
      %v6356 = vpop.f32.mrb[0].mxu0
      %v6357 = vadd.f32 %v5450, %v6356
      %v6358 = vpop.f32.mrb[0].mxu0
      %v6359 = vadd.f32 %v5454, %v6358
      %v6360 = vpop.f32.mrb[0].mxu0
      %v6361 = vadd.f32 %v5450, %v6360
      %v6362 = vpop.f32.mrb[0].mxu0
      %v6363 = vadd.f32 %v5454, %v6362
      %6364 = vmatprep.mubr.bf16.mxu0 %v5350
      %6365 = vmatmul.mubr.bf16.gmra.mrb[0].mxu0 %v5349
      %v6366 = vpop.f32.mrb[0].mxu0
      %v6367 = vadd.f32 %v5450, %v6366
      %v6368 = vpop.f32.mrb[0].mxu0
      %v6369 = vadd.f32 %v5454, %v6368
      %v6370 = vpop.f32.mrb[0].mxu0
      %v6371 = vadd.f32 %v5450, %v6370
      %v6372 = vpop.f32.mrb[0].mxu0
      %v6373 = vadd.f32 %v5454, %v6372
      %6374 = vmatprep.mubr.bf16.mxu0 %v5352
      %6375 = vmatmul.mubr.bf16.gmra.mrb[0].mxu0 %v5351
      %v6376 = vpop.f32.mrb[0].mxu0
      %v6377 = vadd.f32 %v5450, %v6376
      %v6378 = vpop.f32.mrb[0].mxu0
      %v6379 = vadd.f32 %v5454, %v6378
      %v6380 = vpop.f32.mrb[0].mxu0
      %v6381 = vadd.f32 %v5450, %v6380
      %v6382 = vpop.f32.mrb[0].mxu0
      %v6383 = vadd.f32 %v5454, %v6382
      %6384 = vmatprep.mubr.bf16.mxu0 %v5354
      %6385 = vmatmul.mubr.bf16.gmra.mrb[0].mxu0 %v5353
      %v6386 = vpop.f32.mrb[0].mxu0
      %v6387 = vadd.f32 %v5450, %v6386
      %v6388 = vpop.f32.mrb[0].mxu0
      %v6389 = vadd.f32 %v5454, %v6388
      %v6390 = vpop.f32.mrb[0].mxu0
      %v6391 = vadd.f32 %v5450, %v6390
      %v6392 = vpop.f32.mrb[0].mxu0
      %v6393 = vadd.f32 %v5454, %v6392
      %6394 = vmatprep.mubr.bf16.mxu0 %v5356
      %6395 = vmatmul.mubr.bf16.gmra.mrb[0].mxu0 %v5355
      %v6396 = vpop.f32.mrb[0].mxu0
      %v6397 = vadd.f32 %v5450, %v6396
      %v6398 = vpop.f32.mrb[0].mxu0
      %v6399 = vadd.f32 %v5454, %v6398
      %v6400 = vpop.f32.mrb[0].mxu0
      %v6401 = vadd.f32 %v5450, %v6400
      %v6402 = vpop.f32.mrb[0].mxu0
      %v6403 = vadd.f32 %v5454, %v6402
      %6404 = vmatprep.mubr.bf16.mxu0 %v5358
      %6405 = vmatmul.mubr.bf16.gmra.mrb[0].mxu0 %v5357
      %v6406 = vpop.f32.mrb[0].mxu0
      %v6407 = vadd.f32 %v5450, %v6406
      %v6408 = vpop.f32.mrb[0].mxu0
      %v6409 = vadd.f32 %v5454, %v6408
      %v6410 = vpop.f32.mrb[0].mxu0
      %v6411 = vadd.f32 %v5450, %v6410
      %v6412 = vpop.f32.mrb[0].mxu0
      %v6413 = vadd.f32 %v5454, %v6412
      %6414 = vmatprep.mubr.bf16.mxu0 %v5360
      %6415 = vmatmul.mubr.bf16.gmra.mrb[0].mxu0 %v5359
      %v6416 = vpop.f32.mrb[0].mxu0
      %v6417 = vadd.f32 %v5450, %v6416
      %v6418 = vpop.f32.mrb[0].mxu0
      %v6419 = vadd.f32 %v5454, %v6418
      %v6420 = vpop.f32.mrb[0].mxu0
      %v6421 = vadd.f32 %v5450, %v6420
      %v6422 = vpop.f32.mrb[0].mxu0
      %v6423 = vadd.f32 %v5454, %v6422
      %6424 = vmatprep.mubr.bf16.mxu0 %v5362
      %6425 = vmatmul.mubr.bf16.gmra.mrb[0].mxu0 %v5361
      %v6426 = vpop.f32.mrb[0].mxu0
      %v6427 = vadd.f32 %v5450, %v6426
      %v6428 = vpop.f32.mrb[0].mxu0
      %v6429 = vadd.f32 %v5454, %v6428
      %v6430 = vpop.f32.mrb[0].mxu0
      %v6431 = vadd.f32 %v5450, %v6430
      %v6432 = vpop.f32.mrb[0].mxu0
      %v6433 = vadd.f32 %v5454, %v6432
      %6434 = vmatprep.mubr.bf16.mxu0 %v5364
      %6435 = vmatmul.mubr.bf16.gmra.mrb[0].mxu0 %v5363
      %v6436 = vpop.f32.mrb[0].mxu0
      %v6437 = vadd.f32 %v5450, %v6436
      %v6438 = vpop.f32.mrb[0].mxu0
      %v6439 = vadd.f32 %v5454, %v6438
      %v6440 = vpop.f32.mrb[0].mxu0
      %v6441 = vadd.f32 %v5450, %v6440
      %v6442 = vpop.f32.mrb[0].mxu0
      %v6443 = vadd.f32 %v5454, %v6442
      %6444 = vmatprep.mubr.bf16.mxu0 %v5366
      %6445 = vmatmul.mubr.bf16.gmra.mrb[0].mxu0 %v5365
      %v6446 = vpop.f32.mrb[0].mxu0
      %v6447 = vadd.f32 %v5450, %v6446
      %v6448 = vpop.f32.mrb[0].mxu0
      %v6449 = vadd.f32 %v5454, %v6448
      %v6450 = vpop.f32.mrb[0].mxu0
      %v6451 = vadd.f32 %v5450, %v6450
      %v6452 = vpop.f32.mrb[0].mxu0
      %v6453 = vadd.f32 %v5454, %v6452
      %6454 = vmatprep.mubr.bf16.mxu0 %v5368
      %6455 = vmatmul.mubr.bf16.gmra.mrb[0].mxu0 %v5367
      %v6456 = vpop.f32.mrb[0].mxu0
      %v6457 = vadd.f32 %v5450, %v6456
      %v6458 = vpop.f32.mrb[0].mxu0
      %v6459 = vadd.f32 %v5454, %v6458
      %v6460 = vpop.f32.mrb[0].mxu0
      %v6461 = vadd.f32 %v5450, %v6460
      %v6462 = vpop.f32.mrb[0].mxu0
      %v6463 = vadd.f32 %v5454, %v6462
      %6464 = vmatprep.mubr.bf16.mxu0 %v5370
      %6465 = vmatmul.mubr.bf16.gmra.mrb[0].mxu0 %v5369
      %v6466 = vpop.f32.mrb[0].mxu0
      %v6467 = vadd.f32 %v5450, %v6466
      %v6468 = vpop.f32.mrb[0].mxu0
      %v6469 = vadd.f32 %v5454, %v6468
      %v6470 = vpop.f32.mrb[0].mxu0
      %v6471 = vadd.f32 %v5450, %v6470
      %v6472 = vpop.f32.mrb[0].mxu0
      %v6473 = vadd.f32 %v5454, %v6472
      %6474 = vmatprep.mubr.bf16.mxu0 %v5372
      %6475 = vmatmul.mubr.bf16.gmra.mrb[0].mxu0 %v5371
      %v6476 = vpop.f32.mrb[0].mxu0
      %v6477 = vadd.f32 %v5450, %v6476
      %v6478 = vpop.f32.mrb[0].mxu0
      %v6479 = vadd.f32 %v5454, %v6478
      %v6480 = vpop.f32.mrb[0].mxu0
      %v6481 = vadd.f32 %v5450, %v6480
      %v6482 = vpop.f32.mrb[0].mxu0
      %v6483 = vadd.f32 %v5454, %v6482
      %6484 = vdwg.mxu0
      %v6485 = vmax.f32 %v5814, 0.0
      %v6486 = vmax.f32 %v5816, 0.0
      %v6487 = vmax.f32 %v6167, 0.0
      %v6488 = vmax.f32 %v6169, 0.0
      %v6489 = vmax.f32 %v5818, 0.0
      %v6490 = vmax.f32 %v5820, 0.0
      %v6491 = vmax.f32 %v6171, 0.0
      %v6492 = vmax.f32 %v6173, 0.0
      %v6493 = vmax.f32 %v5824, 0.0
      %v6494 = vmax.f32 %v5826, 0.0
      %v6495 = vmax.f32 %v6177, 0.0
      %v6496 = vmax.f32 %v6179, 0.0
      %v6497 = vmax.f32 %v5828, 0.0
      %v6498 = vmax.f32 %v5830, 0.0
      %v6499 = vmax.f32 %v6181, 0.0
      %v6500 = vmax.f32 %v6183, 0.0
      %v6501 = vmax.f32 %v5834, 0.0
      %v6502 = vmax.f32 %v5836, 0.0
      %v6503 = vmax.f32 %v6187, 0.0
      %v6504 = vmax.f32 %v6189, 0.0
      %v6505 = vmax.f32 %v5838, 0.0
      %v6506 = vmax.f32 %v5840, 0.0
      %v6507 = vmax.f32 %v6191, 0.0
      %v6508 = vmax.f32 %v6193, 0.0
      %v6509 = vmax.f32 %v5844, 0.0
      %v6510 = vmax.f32 %v5846, 0.0
      %v6511 = vmax.f32 %v6197, 0.0
      %v6512 = vmax.f32 %v6199, 0.0
      %v6513 = vmax.f32 %v5848, 0.0
      %v6514 = vmax.f32 %v5850, 0.0
      %v6515 = vmax.f32 %v6201, 0.0
      %v6516 = vmax.f32 %v6203, 0.0
      %v6517 = vmax.f32 %v5854, 0.0
      %v6518 = vmax.f32 %v5856, 0.0
      %v6519 = vmax.f32 %v6207, 0.0
      %v6520 = vmax.f32 %v6209, 0.0
      %v6521 = vmax.f32 %v5858, 0.0
      %v6522 = vmax.f32 %v5860, 0.0
      %v6523 = vmax.f32 %v6211, 0.0
      %v6524 = vmax.f32 %v6213, 0.0
      %v6525 = vmax.f32 %v5864, 0.0
      %v6526 = vmax.f32 %v5866, 0.0
      %v6527 = vmax.f32 %v6217, 0.0
      %v6528 = vmax.f32 %v6219, 0.0
      %v6529 = vmax.f32 %v5868, 0.0
      %v6530 = vmax.f32 %v5870, 0.0
      %v6531 = vmax.f32 %v6221, 0.0
      %v6532 = vmax.f32 %v6223, 0.0
      %v6533 = vmax.f32 %v5874, 0.0
      %v6534 = vmax.f32 %v5876, 0.0
      %v6535 = vmax.f32 %v6227, 0.0
      %v6536 = vmax.f32 %v6229, 0.0
      %v6537 = vmax.f32 %v5878, 0.0
      %v6538 = vmax.f32 %v5880, 0.0
      %v6539 = vmax.f32 %v6231, 0.0
      %v6540 = vmax.f32 %v6233, 0.0
      %v6541 = vmax.f32 %v5884, 0.0
      %v6542 = vmax.f32 %v5886, 0.0
      %v6543 = vmax.f32 %v6237, 0.0
      %v6544 = vmax.f32 %v6239, 0.0
      %v6545 = vmax.f32 %v5888, 0.0
      %v6546 = vmax.f32 %v5890, 0.0
      %v6547 = vmax.f32 %v6241, 0.0
      %v6548 = vmax.f32 %v6243, 0.0
      %v6549 = vmax.f32 %v5894, 0.0
      %v6550 = vmax.f32 %v5896, 0.0
      %v6551 = vmax.f32 %v6247, 0.0
      %v6552 = vmax.f32 %v6249, 0.0
      %v6553 = vmax.f32 %v5898, 0.0
      %v6554 = vmax.f32 %v5900, 0.0
      %v6555 = vmax.f32 %v6251, 0.0
      %v6556 = vmax.f32 %v6253, 0.0
      %v6557 = vmax.f32 %v5904, 0.0
      %v6558 = vmax.f32 %v5906, 0.0
      %v6559 = vmax.f32 %v6257, 0.0
      %v6560 = vmax.f32 %v6259, 0.0
      %v6561 = vmax.f32 %v5908, 0.0
      %v6562 = vmax.f32 %v5910, 0.0
      %v6563 = vmax.f32 %v6261, 0.0
      %v6564 = vmax.f32 %v6263, 0.0
      %v6565 = vmax.f32 %v5914, 0.0
      %v6566 = vmax.f32 %v5916, 0.0
      %v6567 = vmax.f32 %v6267, 0.0
      %v6568 = vmax.f32 %v6269, 0.0
      %v6569 = vmax.f32 %v5918, 0.0
      %v6570 = vmax.f32 %v5920, 0.0
      %v6571 = vmax.f32 %v6271, 0.0
      %v6572 = vmax.f32 %v6273, 0.0
      %v6573 = vmax.f32 %v5924, 0.0
      %v6574 = vmax.f32 %v5926, 0.0
      %v6575 = vmax.f32 %v6277, 0.0
      %v6576 = vmax.f32 %v6279, 0.0
      %v6577 = vmax.f32 %v5928, 0.0
      %v6578 = vmax.f32 %v5930, 0.0
      %v6579 = vmax.f32 %v6281, 0.0
      %v6580 = vmax.f32 %v6283, 0.0
      %v6581 = vmax.f32 %v5934, 0.0
      %v6582 = vmax.f32 %v5936, 0.0
      %v6583 = vmax.f32 %v6287, 0.0
      %v6584 = vmax.f32 %v6289, 0.0
      %v6585 = vmax.f32 %v5938, 0.0
      %v6586 = vmax.f32 %v5940, 0.0
      %v6587 = vmax.f32 %v6291, 0.0
      %v6588 = vmax.f32 %v6293, 0.0
      %v6589 = vmax.f32 %v5944, 0.0
      %v6590 = vmax.f32 %v5946, 0.0
      %v6591 = vmax.f32 %v6297, 0.0
      %v6592 = vmax.f32 %v6299, 0.0
      %v6593 = vmax.f32 %v5948, 0.0
      %v6594 = vmax.f32 %v5950, 0.0
      %v6595 = vmax.f32 %v6301, 0.0
      %v6596 = vmax.f32 %v6303, 0.0
      %v6597 = vmax.f32 %v5954, 0.0
      %v6598 = vmax.f32 %v5956, 0.0
      %v6599 = vmax.f32 %v6307, 0.0
      %v6600 = vmax.f32 %v6309, 0.0
      %v6601 = vmax.f32 %v5958, 0.0
      %v6602 = vmax.f32 %v5960, 0.0
      %v6603 = vmax.f32 %v6311, 0.0
      %v6604 = vmax.f32 %v6313, 0.0
      %v6605 = vmax.f32 %v5964, 0.0
      %v6606 = vmax.f32 %v5966, 0.0
      %v6607 = vmax.f32 %v6317, 0.0
      %v6608 = vmax.f32 %v6319, 0.0
      %v6609 = vmax.f32 %v5968, 0.0
      %v6610 = vmax.f32 %v5970, 0.0
      %v6611 = vmax.f32 %v6321, 0.0
      %v6612 = vmax.f32 %v6323, 0.0
      %v6613 = vmax.f32 %v5974, 0.0
      %v6614 = vmax.f32 %v5976, 0.0
      %v6615 = vmax.f32 %v6327, 0.0
      %v6616 = vmax.f32 %v6329, 0.0
      %v6617 = vmax.f32 %v5978, 0.0
      %v6618 = vmax.f32 %v5980, 0.0
      %v6619 = vmax.f32 %v6331, 0.0
      %v6620 = vmax.f32 %v6333, 0.0
      %v6621 = vmax.f32 %v5984, 0.0
      %v6622 = vmax.f32 %v5986, 0.0
      %v6623 = vmax.f32 %v6337, 0.0
      %v6624 = vmax.f32 %v6339, 0.0
      %v6625 = vmax.f32 %v5988, 0.0
      %v6626 = vmax.f32 %v5990, 0.0
      %v6627 = vmax.f32 %v6341, 0.0
      %v6628 = vmax.f32 %v6343, 0.0
      %v6629 = vmax.f32 %v5994, 0.0
      %v6630 = vmax.f32 %v5996, 0.0
      %v6631 = vmax.f32 %v6347, 0.0
      %v6632 = vmax.f32 %v6349, 0.0
      %v6633 = vmax.f32 %v5998, 0.0
      %v6634 = vmax.f32 %v6000, 0.0
      %v6635 = vmax.f32 %v6351, 0.0
      %v6636 = vmax.f32 %v6353, 0.0
      %v6637 = vmax.f32 %v6004, 0.0
      %v6638 = vmax.f32 %v6006, 0.0
      %v6639 = vmax.f32 %v6357, 0.0
      %v6640 = vmax.f32 %v6359, 0.0
      %v6641 = vmax.f32 %v6008, 0.0
      %v6642 = vmax.f32 %v6010, 0.0
      %v6643 = vmax.f32 %v6361, 0.0
      %v6644 = vmax.f32 %v6363, 0.0
      %v6645 = vmax.f32 %v6014, 0.0
      %v6646 = vmax.f32 %v6016, 0.0
      %v6647 = vmax.f32 %v6367, 0.0
      %v6648 = vmax.f32 %v6369, 0.0
      %v6649 = vmax.f32 %v6018, 0.0
      %v6650 = vmax.f32 %v6020, 0.0
      %v6651 = vmax.f32 %v6371, 0.0
      %v6652 = vmax.f32 %v6373, 0.0
      %v6653 = vmax.f32 %v6024, 0.0
      %v6654 = vmax.f32 %v6026, 0.0
      %v6655 = vmax.f32 %v6377, 0.0
      %v6656 = vmax.f32 %v6379, 0.0
      %v6657 = vmax.f32 %v6028, 0.0
      %v6658 = vmax.f32 %v6030, 0.0
      %v6659 = vmax.f32 %v6381, 0.0
      %v6660 = vmax.f32 %v6383, 0.0
      %v6661 = vmax.f32 %v6034, 0.0
      %v6662 = vmax.f32 %v6036, 0.0
      %v6663 = vmax.f32 %v6387, 0.0
      %v6664 = vmax.f32 %v6389, 0.0
      %v6665 = vmax.f32 %v6038, 0.0
      %v6666 = vmax.f32 %v6040, 0.0
      %v6667 = vmax.f32 %v6391, 0.0
      %v6668 = vmax.f32 %v6393, 0.0
      %v6669 = vmax.f32 %v6044, 0.0
      %v6670 = vmax.f32 %v6046, 0.0
      %v6671 = vmax.f32 %v6397, 0.0
      %v6672 = vmax.f32 %v6399, 0.0
      %v6673 = vmax.f32 %v6048, 0.0
      %v6674 = vmax.f32 %v6050, 0.0
      %v6675 = vmax.f32 %v6401, 0.0
      %v6676 = vmax.f32 %v6403, 0.0
      %v6677 = vmax.f32 %v6054, 0.0
      %v6678 = vmax.f32 %v6056, 0.0
      %v6679 = vmax.f32 %v6407, 0.0
      %v6680 = vmax.f32 %v6409, 0.0
      %v6681 = vmax.f32 %v6058, 0.0
      %v6682 = vmax.f32 %v6060, 0.0
      %v6683 = vmax.f32 %v6411, 0.0
      %v6684 = vmax.f32 %v6413, 0.0
      %v6685 = vmax.f32 %v6064, 0.0
      %v6686 = vmax.f32 %v6066, 0.0
      %v6687 = vmax.f32 %v6417, 0.0
      %v6688 = vmax.f32 %v6419, 0.0
      %v6689 = vmax.f32 %v6068, 0.0
      %v6690 = vmax.f32 %v6070, 0.0
      %v6691 = vmax.f32 %v6421, 0.0
      %v6692 = vmax.f32 %v6423, 0.0
      %v6693 = vmax.f32 %v6074, 0.0
      %v6694 = vmax.f32 %v6076, 0.0
      %v6695 = vmax.f32 %v6427, 0.0
      %v6696 = vmax.f32 %v6429, 0.0
      %v6697 = vmax.f32 %v6078, 0.0
      %v6698 = vmax.f32 %v6080, 0.0
      %v6699 = vmax.f32 %v6431, 0.0
      %v6700 = vmax.f32 %v6433, 0.0
      %v6701 = vmax.f32 %v6084, 0.0
      %v6702 = vmax.f32 %v6086, 0.0
      %v6703 = vmax.f32 %v6437, 0.0
      %v6704 = vmax.f32 %v6439, 0.0
      %v6705 = vmax.f32 %v6088, 0.0
      %v6706 = vmax.f32 %v6090, 0.0
      %v6707 = vmax.f32 %v6441, 0.0
      %v6708 = vmax.f32 %v6443, 0.0
      %v6709 = vmax.f32 %v6094, 0.0
      %v6710 = vmax.f32 %v6096, 0.0
      %v6711 = vmax.f32 %v6447, 0.0
      %v6712 = vmax.f32 %v6449, 0.0
      %v6713 = vmax.f32 %v6098, 0.0
      %v6714 = vmax.f32 %v6100, 0.0
      %v6715 = vmax.f32 %v6451, 0.0
      %v6716 = vmax.f32 %v6453, 0.0
      %v6717 = vmax.f32 %v6104, 0.0
      %v6718 = vmax.f32 %v6106, 0.0
      %v6719 = vmax.f32 %v6457, 0.0
      %v6720 = vmax.f32 %v6459, 0.0
      %v6721 = vmax.f32 %v6108, 0.0
      %v6722 = vmax.f32 %v6110, 0.0
      %v6723 = vmax.f32 %v6461, 0.0
      %v6724 = vmax.f32 %v6463, 0.0
      %v6725 = vmax.f32 %v6114, 0.0
      %v6726 = vmax.f32 %v6116, 0.0
      %v6727 = vmax.f32 %v6467, 0.0
      %v6728 = vmax.f32 %v6469, 0.0
      %v6729 = vmax.f32 %v6118, 0.0
      %v6730 = vmax.f32 %v6120, 0.0
      %v6731 = vmax.f32 %v6471, 0.0
      %v6732 = vmax.f32 %v6473, 0.0
      %v6733 = vmax.f32 %v6124, 0.0
      %v6734 = vmax.f32 %v6126, 0.0
      %v6735 = vmax.f32 %v6477, 0.0
      %v6736 = vmax.f32 %v6479, 0.0
      %v6737 = vmax.f32 %v6128, 0.0
      %v6738 = vmax.f32 %v6130, 0.0
      %v6739 = vmax.f32 %v6481, 0.0
      %v6740 = vmax.f32 %v6483, 0.0
      %v6741 = vpack.c.bf16 %v6489, %v6485
      %v6742 = vpack.c.bf16 %v6490, %v6486
      %v6743 = vpack.c.bf16 %v6491, %v6487
      %v6744 = vpack.c.bf16 %v6492, %v6488
      %v6745 = vpack.c.bf16 %v6497, %v6493
      %v6746 = vpack.c.bf16 %v6498, %v6494
      %v6747 = vpack.c.bf16 %v6499, %v6495
      %v6748 = vpack.c.bf16 %v6500, %v6496
      %v6749 = vpack.c.bf16 %v6505, %v6501
      %v6750 = vpack.c.bf16 %v6506, %v6502
      %v6751 = vpack.c.bf16 %v6507, %v6503
      %v6752 = vpack.c.bf16 %v6508, %v6504
      %v6753 = vpack.c.bf16 %v6513, %v6509
      %v6754 = vpack.c.bf16 %v6514, %v6510
      %v6755 = vpack.c.bf16 %v6515, %v6511
      %v6756 = vpack.c.bf16 %v6516, %v6512
      %v6757 = vpack.c.bf16 %v6521, %v6517
      %v6758 = vpack.c.bf16 %v6522, %v6518
      %v6759 = vpack.c.bf16 %v6523, %v6519
      %v6760 = vpack.c.bf16 %v6524, %v6520
      %v6761 = vpack.c.bf16 %v6529, %v6525
      %v6762 = vpack.c.bf16 %v6530, %v6526
      %v6763 = vpack.c.bf16 %v6531, %v6527
      %v6764 = vpack.c.bf16 %v6532, %v6528
      %v6765 = vpack.c.bf16 %v6537, %v6533
      %v6766 = vpack.c.bf16 %v6538, %v6534
      %v6767 = vpack.c.bf16 %v6539, %v6535
      %v6768 = vpack.c.bf16 %v6540, %v6536
      %v6769 = vpack.c.bf16 %v6545, %v6541
      %v6770 = vpack.c.bf16 %v6546, %v6542
      %v6771 = vpack.c.bf16 %v6547, %v6543
      %v6772 = vpack.c.bf16 %v6548, %v6544
      %v6773 = vpack.c.bf16 %v6553, %v6549
      %v6774 = vpack.c.bf16 %v6554, %v6550
      %v6775 = vpack.c.bf16 %v6555, %v6551
      %v6776 = vpack.c.bf16 %v6556, %v6552
      %v6777 = vpack.c.bf16 %v6561, %v6557
      %v6778 = vpack.c.bf16 %v6562, %v6558
      %v6779 = vpack.c.bf16 %v6563, %v6559
      %v6780 = vpack.c.bf16 %v6564, %v6560
      %v6781 = vpack.c.bf16 %v6569, %v6565
      %v6782 = vpack.c.bf16 %v6570, %v6566
      %v6783 = vpack.c.bf16 %v6571, %v6567
      %v6784 = vpack.c.bf16 %v6572, %v6568
      %v6785 = vpack.c.bf16 %v6577, %v6573
      %v6786 = vpack.c.bf16 %v6578, %v6574
      %v6787 = vpack.c.bf16 %v6579, %v6575
      %v6788 = vpack.c.bf16 %v6580, %v6576
      %v6789 = vpack.c.bf16 %v6585, %v6581
      %v6790 = vpack.c.bf16 %v6586, %v6582
      %v6791 = vpack.c.bf16 %v6587, %v6583
      %v6792 = vpack.c.bf16 %v6588, %v6584
      %v6793 = vpack.c.bf16 %v6593, %v6589
      %v6794 = vpack.c.bf16 %v6594, %v6590
      %v6795 = vpack.c.bf16 %v6595, %v6591
      %v6796 = vpack.c.bf16 %v6596, %v6592
      %v6797 = vpack.c.bf16 %v6601, %v6597
      %v6798 = vpack.c.bf16 %v6602, %v6598
      %v6799 = vpack.c.bf16 %v6603, %v6599
      %v6800 = vpack.c.bf16 %v6604, %v6600
      %v6801 = vpack.c.bf16 %v6609, %v6605
      %v6802 = vpack.c.bf16 %v6610, %v6606
      %v6803 = vpack.c.bf16 %v6611, %v6607
      %v6804 = vpack.c.bf16 %v6612, %v6608
      %v6805 = vpack.c.bf16 %v6617, %v6613
      %v6806 = vpack.c.bf16 %v6618, %v6614
      %v6807 = vpack.c.bf16 %v6619, %v6615
      %v6808 = vpack.c.bf16 %v6620, %v6616
      %v6809 = vpack.c.bf16 %v6625, %v6621
      %v6810 = vpack.c.bf16 %v6626, %v6622
      %v6811 = vpack.c.bf16 %v6627, %v6623
      %v6812 = vpack.c.bf16 %v6628, %v6624
      %v6813 = vpack.c.bf16 %v6633, %v6629
      %v6814 = vpack.c.bf16 %v6634, %v6630
      %v6815 = vpack.c.bf16 %v6635, %v6631
      %v6816 = vpack.c.bf16 %v6636, %v6632
      %v6817 = vpack.c.bf16 %v6641, %v6637
      %v6818 = vpack.c.bf16 %v6642, %v6638
      %v6819 = vpack.c.bf16 %v6643, %v6639
      %v6820 = vpack.c.bf16 %v6644, %v6640
      %v6821 = vpack.c.bf16 %v6649, %v6645
      %v6822 = vpack.c.bf16 %v6650, %v6646
      %v6823 = vpack.c.bf16 %v6651, %v6647
      %v6824 = vpack.c.bf16 %v6652, %v6648
      %v6825 = vpack.c.bf16 %v6657, %v6653
      %v6826 = vpack.c.bf16 %v6658, %v6654
      %v6827 = vpack.c.bf16 %v6659, %v6655
      %v6828 = vpack.c.bf16 %v6660, %v6656
      %v6829 = vpack.c.bf16 %v6665, %v6661
      %v6830 = vpack.c.bf16 %v6666, %v6662
      %v6831 = vpack.c.bf16 %v6667, %v6663
      %v6832 = vpack.c.bf16 %v6668, %v6664
      %v6833 = vpack.c.bf16 %v6673, %v6669
      %v6834 = vpack.c.bf16 %v6674, %v6670
      %v6835 = vpack.c.bf16 %v6675, %v6671
      %v6836 = vpack.c.bf16 %v6676, %v6672
      %v6837 = vpack.c.bf16 %v6681, %v6677
      %v6838 = vpack.c.bf16 %v6682, %v6678
      %v6839 = vpack.c.bf16 %v6683, %v6679
      %v6840 = vpack.c.bf16 %v6684, %v6680
      %v6841 = vpack.c.bf16 %v6689, %v6685
      %v6842 = vpack.c.bf16 %v6690, %v6686
      %v6843 = vpack.c.bf16 %v6691, %v6687
      %v6844 = vpack.c.bf16 %v6692, %v6688
      %v6845 = vpack.c.bf16 %v6697, %v6693
      %v6846 = vpack.c.bf16 %v6698, %v6694
      %v6847 = vpack.c.bf16 %v6699, %v6695
      %v6848 = vpack.c.bf16 %v6700, %v6696
      %v6849 = vpack.c.bf16 %v6705, %v6701
      %v6850 = vpack.c.bf16 %v6706, %v6702
      %v6851 = vpack.c.bf16 %v6707, %v6703
      %v6852 = vpack.c.bf16 %v6708, %v6704
      %v6853 = vpack.c.bf16 %v6713, %v6709
      %v6854 = vpack.c.bf16 %v6714, %v6710
      %v6855 = vpack.c.bf16 %v6715, %v6711
      %v6856 = vpack.c.bf16 %v6716, %v6712
      %v6857 = vpack.c.bf16 %v6721, %v6717
      %v6858 = vpack.c.bf16 %v6722, %v6718
      %v6859 = vpack.c.bf16 %v6723, %v6719
      %v6860 = vpack.c.bf16 %v6724, %v6720
      %v6861 = vpack.c.bf16 %v6729, %v6725
      %v6862 = vpack.c.bf16 %v6730, %v6726
      %v6863 = vpack.c.bf16 %v6731, %v6727
      %v6864 = vpack.c.bf16 %v6732, %v6728
      %v6865 = vpack.c.bf16 %v6737, %v6733
      %v6866 = vpack.c.bf16 %v6738, %v6734
      %v6867 = vpack.c.bf16 %v6739, %v6735
      %v6868 = vpack.c.bf16 %v6740, %v6736
      %v6869 = vld [vmem:[%s13] sm:$0xf]
      %v6870 = vld [vmem:[%s13 + $0x4] sm:$0xf]
      %v6871 = vld [vmem:[%s13 + $0x8] sm:$0xf]
      %v6872 = vld [vmem:[%s13 + $0xc] sm:$0xf]
      %v6873 = vld [vmem:[%s13 + $0x10] sm:$0xf]
      %v6874 = vld [vmem:[%s13 + $0x14] sm:$0xf]
      %v6875 = vld [vmem:[%s13 + $0x18] sm:$0xf]
      %v6876 = vld [vmem:[%s13 + $0x1c] sm:$0xf]
      %v6877 = vld [vmem:[%s13 + $0x20] sm:$0xf]
      %v6878 = vld [vmem:[%s13 + $0x24] sm:$0xf]
      %v6879 = vld [vmem:[%s13 + $0x28] sm:$0xf]
      %v6880 = vld [vmem:[%s13 + $0x2c] sm:$0xf]
      %v6881 = vld [vmem:[%s13 + $0x30] sm:$0xf]
      %v6882 = vld [vmem:[%s13 + $0x34] sm:$0xf]
      %v6883 = vld [vmem:[%s13 + $0x38] sm:$0xf]
      %v6884 = vld [vmem:[%s13 + $0x3c] sm:$0xf]
      %v6885 = vld [vmem:[%s13 + $0x40] sm:$0xf]
      %v6886 = vld [vmem:[%s13 + $0x44] sm:$0xf]
      %v6887 = vld [vmem:[%s13 + $0x48] sm:$0xf]
      %v6888 = vld [vmem:[%s13 + $0x4c] sm:$0xf]
      %v6889 = vld [vmem:[%s13 + $0x50] sm:$0xf]
      %v6890 = vld [vmem:[%s13 + $0x54] sm:$0xf]
      %v6891 = vld [vmem:[%s13 + $0x58] sm:$0xf]
      %v6892 = vld [vmem:[%s13 + $0x5c] sm:$0xf]
      %v6893 = vld [vmem:[%s13 + $0x60] sm:$0xf]
      %v6894 = vld [vmem:[%s13 + $0x64] sm:$0xf]
      %v6895 = vld [vmem:[%s13 + $0x68] sm:$0xf]
      %v6896 = vld [vmem:[%s13 + $0x6c] sm:$0xf]
      %v6897 = vld [vmem:[%s13 + $0x70] sm:$0xf]
      %v6898 = vld [vmem:[%s13 + $0x74] sm:$0xf]
      %v6899 = vld [vmem:[%s13 + $0x78] sm:$0xf]
      %v6900 = vld [vmem:[%s13 + $0x7c] sm:$0xf]
      %v6901 = vld [vmem:[%s13 + $0x80] sm:$0xf]
      %v6902 = vld [vmem:[%s13 + $0x84] sm:$0xf]
      %v6903 = vld [vmem:[%s13 + $0x88] sm:$0xf]
      %v6904 = vld [vmem:[%s13 + $0x8c] sm:$0xf]
      %v6905 = vld [vmem:[%s13 + $0x90] sm:$0xf]
      %v6906 = vld [vmem:[%s13 + $0x94] sm:$0xf]
      %v6907 = vld [vmem:[%s13 + $0x98] sm:$0xf]
      %v6908 = vld [vmem:[%s13 + $0x9c] sm:$0xf]
      %v6909 = vld [vmem:[%s13 + $0xa0] sm:$0xf]
      %v6910 = vld [vmem:[%s13 + $0xa4] sm:$0xf]
      %v6911 = vld [vmem:[%s13 + $0xa8] sm:$0xf]
      %v6912 = vld [vmem:[%s13 + $0xac] sm:$0xf]
      %v6913 = vld [vmem:[%s13 + $0xb0] sm:$0xf]
      %v6914 = vld [vmem:[%s13 + $0xb4] sm:$0xf]
      %v6915 = vld [vmem:[%s13 + $0xb8] sm:$0xf]
      %v6916 = vld [vmem:[%s13 + $0xbc] sm:$0xf]
      %v6917 = vld [vmem:[%s13 + $0xc0] sm:$0xf]
      %v6918 = vld [vmem:[%s13 + $0xc4] sm:$0xf]
      %v6919 = vld [vmem:[%s13 + $0xc8] sm:$0xf]
      %v6920 = vld [vmem:[%s13 + $0xcc] sm:$0xf]
      %v6921 = vld [vmem:[%s13 + $0xd0] sm:$0xf]
      %v6922 = vld [vmem:[%s13 + $0xd4] sm:$0xf]
      %v6923 = vld [vmem:[%s13 + $0xd8] sm:$0xf]
      %v6924 = vld [vmem:[%s13 + $0xdc] sm:$0xf]
      %v6925 = vld [vmem:[%s13 + $0xe0] sm:$0xf]
      %v6926 = vld [vmem:[%s13 + $0xe4] sm:$0xf]
      %v6927 = vld [vmem:[%s13 + $0xe8] sm:$0xf]
      %v6928 = vld [vmem:[%s13 + $0xec] sm:$0xf]
      %v6929 = vld [vmem:[%s13 + $0xf0] sm:$0xf]
      %v6930 = vld [vmem:[%s13 + $0xf4] sm:$0xf]
      %v6931 = vld [vmem:[%s13 + $0xf8] sm:$0xf]
      %v6932 = vld [vmem:[%s13 + $0xfc] sm:$0xf]
      %v6933 = vld [vmem:[%s14] sm:$0x1]
      %v6935 = vlaneseq
      %v6936 = vshrl.u32 %v6935, 7
      %v6937 = vsub.s32 0, %v6936
      %v6938 = vrot.slane %v6933, %v6937
      %v7004 = vunpack.c.l.b16 %v6869
      %v7005 = vunpack.c.l.b16 %v6870
      %v7006 = vunpack.c.l.b16 %v6871
      %v7007 = vunpack.c.l.b16 %v6872
      %v7008 = vunpack.c.l.b16 %v6873
      %v7009 = vunpack.c.l.b16 %v6874
      %v7010 = vunpack.c.l.b16 %v6875
      %v7011 = vunpack.c.l.b16 %v6876
      %v7012 = vunpack.c.l.b16 %v6877
      %v7013 = vunpack.c.l.b16 %v6878
      %v7014 = vunpack.c.l.b16 %v6879
      %v7015 = vunpack.c.l.b16 %v6880
      %v7016 = vunpack.c.l.b16 %v6881
      %v7017 = vunpack.c.l.b16 %v6882
      %v7018 = vunpack.c.l.b16 %v6883
      %v7019 = vunpack.c.l.b16 %v6884
      %v7020 = vunpack.c.l.b16 %v6885
      %v7021 = vunpack.c.l.b16 %v6886
      %v7022 = vunpack.c.l.b16 %v6887
      %v7023 = vunpack.c.l.b16 %v6888
      %v7024 = vunpack.c.l.b16 %v6889
      %v7025 = vunpack.c.l.b16 %v6890
      %v7026 = vunpack.c.l.b16 %v6891
      %v7027 = vunpack.c.l.b16 %v6892
      %v7028 = vunpack.c.l.b16 %v6893
      %v7029 = vunpack.c.l.b16 %v6894
      %v7030 = vunpack.c.l.b16 %v6895
      %v7031 = vunpack.c.l.b16 %v6896
      %v7032 = vunpack.c.l.b16 %v6897
      %v7033 = vunpack.c.l.b16 %v6898
      %v7034 = vunpack.c.l.b16 %v6899
      %v7035 = vunpack.c.l.b16 %v6900
      %v7036 = vunpack.c.l.b16 %v6901
      %v7037 = vunpack.c.l.b16 %v6902
      %v7038 = vunpack.c.l.b16 %v6903
      %v7039 = vunpack.c.l.b16 %v6904
      %v7040 = vunpack.c.l.b16 %v6905
      %v7041 = vunpack.c.l.b16 %v6906
      %v7042 = vunpack.c.l.b16 %v6907
      %v7043 = vunpack.c.l.b16 %v6908
      %v7044 = vunpack.c.l.b16 %v6909
      %v7045 = vunpack.c.l.b16 %v6910
      %v7046 = vunpack.c.l.b16 %v6911
      %v7047 = vunpack.c.l.b16 %v6912
      %v7048 = vunpack.c.l.b16 %v6913
      %v7049 = vunpack.c.l.b16 %v6914
      %v7050 = vunpack.c.l.b16 %v6915
      %v7051 = vunpack.c.l.b16 %v6916
      %v7052 = vunpack.c.l.b16 %v6917
      %v7053 = vunpack.c.l.b16 %v6918
      %v7054 = vunpack.c.l.b16 %v6919
      %v7055 = vunpack.c.l.b16 %v6920
      %v7056 = vunpack.c.l.b16 %v6921
      %v7057 = vunpack.c.l.b16 %v6922
      %v7058 = vunpack.c.l.b16 %v6923
      %v7059 = vunpack.c.l.b16 %v6924
      %v7060 = vunpack.c.l.b16 %v6925
      %v7061 = vunpack.c.l.b16 %v6926
      %v7062 = vunpack.c.l.b16 %v6927
      %v7063 = vunpack.c.l.b16 %v6928
      %v7064 = vunpack.c.l.b16 %v6929
      %v7065 = vunpack.c.l.b16 %v6930
      %v7066 = vunpack.c.l.b16 %v6931
      %v7067 = vunpack.c.l.b16 %v6932
      %v7068 = vpack.c.b16 %v7005, %v7004
      %v7069 = vpack.c.b16 %v7007, %v7006
      %v7070 = vpack.c.b16 %v7009, %v7008
      %v7071 = vpack.c.b16 %v7011, %v7010
      %v7072 = vpack.c.b16 %v7013, %v7012
      %v7073 = vpack.c.b16 %v7015, %v7014
      %v7074 = vpack.c.b16 %v7017, %v7016
      %v7075 = vpack.c.b16 %v7019, %v7018
      %v7076 = vpack.c.b16 %v7021, %v7020
      %v7077 = vpack.c.b16 %v7023, %v7022
      %v7078 = vpack.c.b16 %v7025, %v7024
      %v7079 = vpack.c.b16 %v7027, %v7026
      %v7080 = vpack.c.b16 %v7029, %v7028
      %v7081 = vpack.c.b16 %v7031, %v7030
      %v7082 = vpack.c.b16 %v7033, %v7032
      %v7083 = vpack.c.b16 %v7035, %v7034
      %v7084 = vpack.c.b16 %v7037, %v7036
      %v7085 = vpack.c.b16 %v7039, %v7038
      %v7086 = vpack.c.b16 %v7041, %v7040
      %v7087 = vpack.c.b16 %v7043, %v7042
      %v7088 = vpack.c.b16 %v7045, %v7044
      %v7089 = vpack.c.b16 %v7047, %v7046
      %v7090 = vpack.c.b16 %v7049, %v7048
      %v7091 = vpack.c.b16 %v7051, %v7050
      %v7092 = vpack.c.b16 %v7053, %v7052
      %v7093 = vpack.c.b16 %v7055, %v7054
      %v7094 = vpack.c.b16 %v7057, %v7056
      %v7095 = vpack.c.b16 %v7059, %v7058
      %v7096 = vpack.c.b16 %v7061, %v7060
      %v7097 = vpack.c.b16 %v7063, %v7062
      %v7098 = vpack.c.b16 %v7065, %v7064
      %v7099 = vpack.c.b16 %v7067, %v7066
      %7132 = vmatprep.subr.bf16.mxu0 0
      %7133 = vmatpush1.bf16.msra.mxu0 %v7068
      %7134 = vmatprep.subr.bf16.mxu0 0
      %7135 = vmatpush1.bf16.msra.mxu0 %v7069
      %7136 = vmatprep.subr.bf16.mxu0 0
      %7137 = vmatpush1.bf16.msra.mxu0 %v7070
      %7138 = vmatprep.subr.bf16.mxu0 0
      %7139 = vmatpush1.bf16.msra.mxu0 %v7071
      %7140 = vmatprep.subr.bf16.mxu0 0
      %7141 = vmatpush1.bf16.msra.mxu0 %v7072
      %7142 = vmatprep.subr.bf16.mxu0 0
      %7143 = vmatpush1.bf16.msra.mxu0 %v7073
      %7144 = vmatprep.subr.bf16.mxu0 0
      %7145 = vmatpush1.bf16.msra.mxu0 %v7074
      %7146 = vmatprep.subr.bf16.mxu0 0
      %7147 = vmatpush1.bf16.msra.mxu0 %v7075
      %7148 = vmatprep.subr.bf16.mxu0 0
      %7149 = vmatpush1.bf16.msra.mxu0 %v7076
      %7150 = vmatprep.subr.bf16.mxu0 0
      %7151 = vmatpush1.bf16.msra.mxu0 %v7077
      %7152 = vmatprep.subr.bf16.mxu0 0
      %7153 = vmatpush1.bf16.msra.mxu0 %v7078
      %7154 = vmatprep.subr.bf16.mxu0 0
      %7155 = vmatpush1.bf16.msra.mxu0 %v7079
      %7156 = vmatprep.subr.bf16.mxu0 0
      %7157 = vmatpush1.bf16.msra.mxu0 %v7080
      %7158 = vmatprep.subr.bf16.mxu0 0
      %7159 = vmatpush1.bf16.msra.mxu0 %v7081
      %7160 = vmatprep.subr.bf16.mxu0 0
      %7161 = vmatpush1.bf16.msra.mxu0 %v7082
      %7162 = vmatprep.subr.bf16.mxu0 0
      %7163 = vmatpush1.bf16.msra.mxu0 %v7083
      %7164 = vmatprep.mubr.bf16.mxu0 %v6742
      %7165 = vmatmul.mubr.bf16.gmra.mrb[0].mxu0 %v6741
      %v7166 = vpop.f32.mrb[0].mxu0
      %v7167 = vadd.f32 %v6938, %v7166
      %v7168 = vpop.f32.mrb[0].mxu0
      %v7169 = vpop.f32.mrb[0].mxu0
      %v7170 = vadd.f32 %v6938, %v7169
      %v7171 = vpop.f32.mrb[0].mxu0
      %7172 = vmatprep.mubr.bf16.mxu0 %v6746
      %7173 = vmatmul.mubr.bf16.gmra.mrb[0].mxu0 %v6745
      %v7174 = vpop.f32.mrb[0].mxu0
      %v7175 = vadd.f32 %v6938, %v7174
      %v7176 = vpop.f32.mrb[0].mxu0
      %v7177 = vpop.f32.mrb[0].mxu0
      %v7178 = vadd.f32 %v6938, %v7177
      %v7179 = vpop.f32.mrb[0].mxu0
      %7180 = vmatprep.mubr.bf16.mxu0 %v6750
      %7181 = vmatmul.mubr.bf16.gmra.mrb[0].mxu0 %v6749
      %v7182 = vpop.f32.mrb[0].mxu0
      %v7183 = vadd.f32 %v6938, %v7182
      %v7184 = vpop.f32.mrb[0].mxu0
      %v7185 = vpop.f32.mrb[0].mxu0
      %v7186 = vadd.f32 %v6938, %v7185
      %v7187 = vpop.f32.mrb[0].mxu0
      %7188 = vmatprep.mubr.bf16.mxu0 %v6754
      %7189 = vmatmul.mubr.bf16.gmra.mrb[0].mxu0 %v6753
      %v7190 = vpop.f32.mrb[0].mxu0
      %v7191 = vadd.f32 %v6938, %v7190
      %v7192 = vpop.f32.mrb[0].mxu0
      %v7193 = vpop.f32.mrb[0].mxu0
      %v7194 = vadd.f32 %v6938, %v7193
      %v7195 = vpop.f32.mrb[0].mxu0
      %7196 = vmatprep.mubr.bf16.mxu0 %v6758
      %7197 = vmatmul.mubr.bf16.gmra.mrb[0].mxu0 %v6757
      %v7198 = vpop.f32.mrb[0].mxu0
      %v7199 = vadd.f32 %v6938, %v7198
      %v7200 = vpop.f32.mrb[0].mxu0
      %v7201 = vpop.f32.mrb[0].mxu0
      %v7202 = vadd.f32 %v6938, %v7201
      %v7203 = vpop.f32.mrb[0].mxu0
      %7204 = vmatprep.mubr.bf16.mxu0 %v6762
      %7205 = vmatmul.mubr.bf16.gmra.mrb[0].mxu0 %v6761
      %v7206 = vpop.f32.mrb[0].mxu0
      %v7207 = vadd.f32 %v6938, %v7206
      %v7208 = vpop.f32.mrb[0].mxu0
      %v7209 = vpop.f32.mrb[0].mxu0
      %v7210 = vadd.f32 %v6938, %v7209
      %v7211 = vpop.f32.mrb[0].mxu0
      %7212 = vmatprep.mubr.bf16.mxu0 %v6766
      %7213 = vmatmul.mubr.bf16.gmra.mrb[0].mxu0 %v6765
      %v7214 = vpop.f32.mrb[0].mxu0
      %v7215 = vadd.f32 %v6938, %v7214
      %v7216 = vpop.f32.mrb[0].mxu0
      %v7217 = vpop.f32.mrb[0].mxu0
      %v7218 = vadd.f32 %v6938, %v7217
      %v7219 = vpop.f32.mrb[0].mxu0
      %7220 = vmatprep.mubr.bf16.mxu0 %v6770
      %7221 = vmatmul.mubr.bf16.gmra.mrb[0].mxu0 %v6769
      %v7222 = vpop.f32.mrb[0].mxu0
      %v7223 = vadd.f32 %v6938, %v7222
      %v7224 = vpop.f32.mrb[0].mxu0
      %v7225 = vpop.f32.mrb[0].mxu0
      %v7226 = vadd.f32 %v6938, %v7225
      %v7227 = vpop.f32.mrb[0].mxu0
      %7228 = vmatprep.mubr.bf16.mxu0 %v6774
      %7229 = vmatmul.mubr.bf16.gmra.mrb[0].mxu0 %v6773
      %v7230 = vpop.f32.mrb[0].mxu0
      %v7231 = vadd.f32 %v6938, %v7230
      %v7232 = vpop.f32.mrb[0].mxu0
      %v7233 = vpop.f32.mrb[0].mxu0
      %v7234 = vadd.f32 %v6938, %v7233
      %v7235 = vpop.f32.mrb[0].mxu0
      %7236 = vmatprep.mubr.bf16.mxu0 %v6778
      %7237 = vmatmul.mubr.bf16.gmra.mrb[0].mxu0 %v6777
      %v7238 = vpop.f32.mrb[0].mxu0
      %v7239 = vadd.f32 %v6938, %v7238
      %v7240 = vpop.f32.mrb[0].mxu0
      %v7241 = vpop.f32.mrb[0].mxu0
      %v7242 = vadd.f32 %v6938, %v7241
      %v7243 = vpop.f32.mrb[0].mxu0
      %7244 = vmatprep.mubr.bf16.mxu0 %v6782
      %7245 = vmatmul.mubr.bf16.gmra.mrb[0].mxu0 %v6781
      %v7246 = vpop.f32.mrb[0].mxu0
      %v7247 = vadd.f32 %v6938, %v7246
      %v7248 = vpop.f32.mrb[0].mxu0
      %v7249 = vpop.f32.mrb[0].mxu0
      %v7250 = vadd.f32 %v6938, %v7249
      %v7251 = vpop.f32.mrb[0].mxu0
      %7252 = vmatprep.mubr.bf16.mxu0 %v6786
      %7253 = vmatmul.mubr.bf16.gmra.mrb[0].mxu0 %v6785
      %v7254 = vpop.f32.mrb[0].mxu0
      %v7255 = vadd.f32 %v6938, %v7254
      %v7256 = vpop.f32.mrb[0].mxu0
      %v7257 = vpop.f32.mrb[0].mxu0
      %v7258 = vadd.f32 %v6938, %v7257
      %v7259 = vpop.f32.mrb[0].mxu0
      %7260 = vmatprep.mubr.bf16.mxu0 %v6790
      %7261 = vmatmul.mubr.bf16.gmra.mrb[0].mxu0 %v6789
      %v7262 = vpop.f32.mrb[0].mxu0
      %v7263 = vadd.f32 %v6938, %v7262
      %v7264 = vpop.f32.mrb[0].mxu0
      %v7265 = vpop.f32.mrb[0].mxu0
      %v7266 = vadd.f32 %v6938, %v7265
      %v7267 = vpop.f32.mrb[0].mxu0
      %7268 = vmatprep.mubr.bf16.mxu0 %v6794
      %7269 = vmatmul.mubr.bf16.gmra.mrb[0].mxu0 %v6793
      %v7270 = vpop.f32.mrb[0].mxu0
      %v7271 = vadd.f32 %v6938, %v7270
      %v7272 = vpop.f32.mrb[0].mxu0
      %v7273 = vpop.f32.mrb[0].mxu0
      %v7274 = vadd.f32 %v6938, %v7273
      %v7275 = vpop.f32.mrb[0].mxu0
      %7276 = vmatprep.mubr.bf16.mxu0 %v6798
      %7277 = vmatmul.mubr.bf16.gmra.mrb[0].mxu0 %v6797
      %v7278 = vpop.f32.mrb[0].mxu0
      %v7279 = vadd.f32 %v6938, %v7278
      %v7280 = vpop.f32.mrb[0].mxu0
      %v7281 = vpop.f32.mrb[0].mxu0
      %v7282 = vadd.f32 %v6938, %v7281
      %v7283 = vpop.f32.mrb[0].mxu0
      %7284 = vmatprep.mubr.bf16.mxu0 %v6802
      %7285 = vmatmul.mubr.bf16.gmra.mrb[0].mxu0 %v6801
      %v7286 = vpop.f32.mrb[0].mxu0
      %v7287 = vadd.f32 %v6938, %v7286
      %v7288 = vpop.f32.mrb[0].mxu0
      %v7289 = vpop.f32.mrb[0].mxu0
      %v7290 = vadd.f32 %v6938, %v7289
      %v7291 = vpop.f32.mrb[0].mxu0
      %7292 = vmatprep.mubr.bf16.mxu0 %v6806
      %7293 = vmatmul.mubr.bf16.gmra.mrb[0].mxu0 %v6805
      %v7294 = vpop.f32.mrb[0].mxu0
      %v7295 = vadd.f32 %v6938, %v7294
      %v7296 = vpop.f32.mrb[0].mxu0
      %v7297 = vpop.f32.mrb[0].mxu0
      %v7298 = vadd.f32 %v6938, %v7297
      %v7299 = vpop.f32.mrb[0].mxu0
      %7300 = vmatprep.mubr.bf16.mxu0 %v6810
      %7301 = vmatmul.mubr.bf16.gmra.mrb[0].mxu0 %v6809
      %v7302 = vpop.f32.mrb[0].mxu0
      %v7303 = vadd.f32 %v6938, %v7302
      %v7304 = vpop.f32.mrb[0].mxu0
      %v7305 = vpop.f32.mrb[0].mxu0
      %v7306 = vadd.f32 %v6938, %v7305
      %v7307 = vpop.f32.mrb[0].mxu0
      %7308 = vmatprep.mubr.bf16.mxu0 %v6814
      %7309 = vmatmul.mubr.bf16.gmra.mrb[0].mxu0 %v6813
      %v7310 = vpop.f32.mrb[0].mxu0
      %v7311 = vadd.f32 %v6938, %v7310
      %v7312 = vpop.f32.mrb[0].mxu0
      %v7313 = vpop.f32.mrb[0].mxu0
      %v7314 = vadd.f32 %v6938, %v7313
      %v7315 = vpop.f32.mrb[0].mxu0
      %7316 = vmatprep.mubr.bf16.mxu0 %v6818
      %7317 = vmatmul.mubr.bf16.gmra.mrb[0].mxu0 %v6817
      %v7318 = vpop.f32.mrb[0].mxu0
      %v7319 = vadd.f32 %v6938, %v7318
      %v7320 = vpop.f32.mrb[0].mxu0
      %v7321 = vpop.f32.mrb[0].mxu0
      %v7322 = vadd.f32 %v6938, %v7321
      %v7323 = vpop.f32.mrb[0].mxu0
      %7324 = vmatprep.mubr.bf16.mxu0 %v6822
      %7325 = vmatmul.mubr.bf16.gmra.mrb[0].mxu0 %v6821
      %v7326 = vpop.f32.mrb[0].mxu0
      %v7327 = vadd.f32 %v6938, %v7326
      %v7328 = vpop.f32.mrb[0].mxu0
      %v7329 = vpop.f32.mrb[0].mxu0
      %v7330 = vadd.f32 %v6938, %v7329
      %v7331 = vpop.f32.mrb[0].mxu0
      %7332 = vmatprep.mubr.bf16.mxu0 %v6826
      %7333 = vmatmul.mubr.bf16.gmra.mrb[0].mxu0 %v6825
      %v7334 = vpop.f32.mrb[0].mxu0
      %v7335 = vadd.f32 %v6938, %v7334
      %v7336 = vpop.f32.mrb[0].mxu0
      %v7337 = vpop.f32.mrb[0].mxu0
      %v7338 = vadd.f32 %v6938, %v7337
      %v7339 = vpop.f32.mrb[0].mxu0
      %7340 = vmatprep.mubr.bf16.mxu0 %v6830
      %7341 = vmatmul.mubr.bf16.gmra.mrb[0].mxu0 %v6829
      %v7342 = vpop.f32.mrb[0].mxu0
      %v7343 = vadd.f32 %v6938, %v7342
      %v7344 = vpop.f32.mrb[0].mxu0
      %v7345 = vpop.f32.mrb[0].mxu0
      %v7346 = vadd.f32 %v6938, %v7345
      %v7347 = vpop.f32.mrb[0].mxu0
      %7348 = vmatprep.mubr.bf16.mxu0 %v6834
      %7349 = vmatmul.mubr.bf16.gmra.mrb[0].mxu0 %v6833
      %v7350 = vpop.f32.mrb[0].mxu0
      %v7351 = vadd.f32 %v6938, %v7350
      %v7352 = vpop.f32.mrb[0].mxu0
      %v7353 = vpop.f32.mrb[0].mxu0
      %v7354 = vadd.f32 %v6938, %v7353
      %v7355 = vpop.f32.mrb[0].mxu0
      %7356 = vmatprep.mubr.bf16.mxu0 %v6838
      %7357 = vmatmul.mubr.bf16.gmra.mrb[0].mxu0 %v6837
      %v7358 = vpop.f32.mrb[0].mxu0
      %v7359 = vadd.f32 %v6938, %v7358
      %v7360 = vpop.f32.mrb[0].mxu0
      %v7361 = vpop.f32.mrb[0].mxu0
      %v7362 = vadd.f32 %v6938, %v7361
      %v7363 = vpop.f32.mrb[0].mxu0
      %7364 = vmatprep.mubr.bf16.mxu0 %v6842
      %7365 = vmatmul.mubr.bf16.gmra.mrb[0].mxu0 %v6841
      %v7366 = vpop.f32.mrb[0].mxu0
      %v7367 = vadd.f32 %v6938, %v7366
      %v7368 = vpop.f32.mrb[0].mxu0
      %v7369 = vpop.f32.mrb[0].mxu0
      %v7370 = vadd.f32 %v6938, %v7369
      %v7371 = vpop.f32.mrb[0].mxu0
      %7372 = vmatprep.mubr.bf16.mxu0 %v6846
      %7373 = vmatmul.mubr.bf16.gmra.mrb[0].mxu0 %v6845
      %v7374 = vpop.f32.mrb[0].mxu0
      %v7375 = vadd.f32 %v6938, %v7374
      %v7376 = vpop.f32.mrb[0].mxu0
      %v7377 = vpop.f32.mrb[0].mxu0
      %v7378 = vadd.f32 %v6938, %v7377
      %v7379 = vpop.f32.mrb[0].mxu0
      %7380 = vmatprep.mubr.bf16.mxu0 %v6850
      %7381 = vmatmul.mubr.bf16.gmra.mrb[0].mxu0 %v6849
      %v7382 = vpop.f32.mrb[0].mxu0
      %v7383 = vadd.f32 %v6938, %v7382
      %v7384 = vpop.f32.mrb[0].mxu0
      %v7385 = vpop.f32.mrb[0].mxu0
      %v7386 = vadd.f32 %v6938, %v7385
      %v7387 = vpop.f32.mrb[0].mxu0
      %7388 = vmatprep.mubr.bf16.mxu0 %v6854
      %7389 = vmatmul.mubr.bf16.gmra.mrb[0].mxu0 %v6853
      %v7390 = vpop.f32.mrb[0].mxu0
      %v7391 = vadd.f32 %v6938, %v7390
      %v7392 = vpop.f32.mrb[0].mxu0
      %v7393 = vpop.f32.mrb[0].mxu0
      %v7394 = vadd.f32 %v6938, %v7393
      %v7395 = vpop.f32.mrb[0].mxu0
      %7396 = vmatprep.mubr.bf16.mxu0 %v6858
      %7397 = vmatmul.mubr.bf16.gmra.mrb[0].mxu0 %v6857
      %v7398 = vpop.f32.mrb[0].mxu0
      %v7399 = vadd.f32 %v6938, %v7398
      %v7400 = vpop.f32.mrb[0].mxu0
      %v7401 = vpop.f32.mrb[0].mxu0
      %v7402 = vadd.f32 %v6938, %v7401
      %v7403 = vpop.f32.mrb[0].mxu0
      %7404 = vmatprep.mubr.bf16.mxu0 %v6862
      %7405 = vmatmul.mubr.bf16.gmra.mrb[0].mxu0 %v6861
      %v7406 = vpop.f32.mrb[0].mxu0
      %v7407 = vadd.f32 %v6938, %v7406
      %v7408 = vpop.f32.mrb[0].mxu0
      %v7409 = vpop.f32.mrb[0].mxu0
      %v7410 = vadd.f32 %v6938, %v7409
      %v7411 = vpop.f32.mrb[0].mxu0
      %7412 = vmatprep.mubr.bf16.mxu0 %v6866
      %7413 = vmatmul.mubr.bf16.gmra.mrb[0].mxu0 %v6865
      %v7414 = vpop.f32.mrb[0].mxu0
      %v7415 = vadd.f32 %v6938, %v7414
      %v7416 = vpop.f32.mrb[0].mxu0
      %v7417 = vpop.f32.mrb[0].mxu0
      %v7418 = vadd.f32 %v6938, %v7417
      %v7419 = vpop.f32.mrb[0].mxu0
      %7420 = vdwg.mxu0
      %7421 = vmatprep.subr.bf16.mxu0 0
      %7422 = vmatpush1.bf16.msra.mxu0 %v7084
      %7423 = vmatprep.subr.bf16.mxu0 0
      %7424 = vmatpush1.bf16.msra.mxu0 %v7085
      %7425 = vmatprep.subr.bf16.mxu0 0
      %7426 = vmatpush1.bf16.msra.mxu0 %v7086
      %7427 = vmatprep.subr.bf16.mxu0 0
      %7428 = vmatpush1.bf16.msra.mxu0 %v7087
      %7429 = vmatprep.subr.bf16.mxu0 0
      %7430 = vmatpush1.bf16.msra.mxu0 %v7088
      %7431 = vmatprep.subr.bf16.mxu0 0
      %7432 = vmatpush1.bf16.msra.mxu0 %v7089
      %7433 = vmatprep.subr.bf16.mxu0 0
      %7434 = vmatpush1.bf16.msra.mxu0 %v7090
      %7435 = vmatprep.subr.bf16.mxu0 0
      %7436 = vmatpush1.bf16.msra.mxu0 %v7091
      %7437 = vmatprep.subr.bf16.mxu0 0
      %7438 = vmatpush1.bf16.msra.mxu0 %v7092
      %7439 = vmatprep.subr.bf16.mxu0 0
      %7440 = vmatpush1.bf16.msra.mxu0 %v7093
      %7441 = vmatprep.subr.bf16.mxu0 0
      %7442 = vmatpush1.bf16.msra.mxu0 %v7094
      %7443 = vmatprep.subr.bf16.mxu0 0
      %7444 = vmatpush1.bf16.msra.mxu0 %v7095
      %7445 = vmatprep.subr.bf16.mxu0 0
      %7446 = vmatpush1.bf16.msra.mxu0 %v7096
      %7447 = vmatprep.subr.bf16.mxu0 0
      %7448 = vmatpush1.bf16.msra.mxu0 %v7097
      %7449 = vmatprep.subr.bf16.mxu0 0
      %7450 = vmatpush1.bf16.msra.mxu0 %v7098
      %7451 = vmatprep.subr.bf16.mxu0 0
      %7452 = vmatpush1.bf16.msra.mxu0 %v7099
      %7453 = vmatprep.mubr.bf16.mxu0 %v6744
      %7454 = vmatmul.mubr.bf16.gmra.mrb[0].mxu0 %v6743
      %v7455 = vpop.f32.mrb[0].mxu0
      %v7456 = vadd.f32 %v7167, %v7455
      %v7457 = vpop.f32.mrb[0].mxu0
      %v7458 = vpop.f32.mrb[0].mxu0
      %v7459 = vadd.f32 %v7170, %v7458
      %v7460 = vpop.f32.mrb[0].mxu0
      %7461 = vmatprep.mubr.bf16.mxu0 %v6748
      %7462 = vmatmul.mubr.bf16.gmra.mrb[0].mxu0 %v6747
      %v7463 = vpop.f32.mrb[0].mxu0
      %v7464 = vadd.f32 %v7175, %v7463
      %v7465 = vpop.f32.mrb[0].mxu0
      %v7466 = vpop.f32.mrb[0].mxu0
      %v7467 = vadd.f32 %v7178, %v7466
      %v7468 = vpop.f32.mrb[0].mxu0
      %7469 = vmatprep.mubr.bf16.mxu0 %v6752
      %7470 = vmatmul.mubr.bf16.gmra.mrb[0].mxu0 %v6751
      %v7471 = vpop.f32.mrb[0].mxu0
      %v7472 = vadd.f32 %v7183, %v7471
      %v7473 = vpop.f32.mrb[0].mxu0
      %v7474 = vpop.f32.mrb[0].mxu0
      %v7475 = vadd.f32 %v7186, %v7474
      %v7476 = vpop.f32.mrb[0].mxu0
      %7477 = vmatprep.mubr.bf16.mxu0 %v6756
      %7478 = vmatmul.mubr.bf16.gmra.mrb[0].mxu0 %v6755
      %v7479 = vpop.f32.mrb[0].mxu0
      %v7480 = vadd.f32 %v7191, %v7479
      %v7481 = vpop.f32.mrb[0].mxu0
      %v7482 = vpop.f32.mrb[0].mxu0
      %v7483 = vadd.f32 %v7194, %v7482
      %v7484 = vpop.f32.mrb[0].mxu0
      %7485 = vmatprep.mubr.bf16.mxu0 %v6760
      %7486 = vmatmul.mubr.bf16.gmra.mrb[0].mxu0 %v6759
      %v7487 = vpop.f32.mrb[0].mxu0
      %v7488 = vadd.f32 %v7199, %v7487
      %v7489 = vpop.f32.mrb[0].mxu0
      %v7490 = vpop.f32.mrb[0].mxu0
      %v7491 = vadd.f32 %v7202, %v7490
      %v7492 = vpop.f32.mrb[0].mxu0
      %7493 = vmatprep.mubr.bf16.mxu0 %v6764
      %7494 = vmatmul.mubr.bf16.gmra.mrb[0].mxu0 %v6763
      %v7495 = vpop.f32.mrb[0].mxu0
      %v7496 = vadd.f32 %v7207, %v7495
      %v7497 = vpop.f32.mrb[0].mxu0
      %v7498 = vpop.f32.mrb[0].mxu0
      %v7499 = vadd.f32 %v7210, %v7498
      %v7500 = vpop.f32.mrb[0].mxu0
      %7501 = vmatprep.mubr.bf16.mxu0 %v6768
      %7502 = vmatmul.mubr.bf16.gmra.mrb[0].mxu0 %v6767
      %v7503 = vpop.f32.mrb[0].mxu0
      %v7504 = vadd.f32 %v7215, %v7503
      %v7505 = vpop.f32.mrb[0].mxu0
      %v7506 = vpop.f32.mrb[0].mxu0
      %v7507 = vadd.f32 %v7218, %v7506
      %v7508 = vpop.f32.mrb[0].mxu0
      %7509 = vmatprep.mubr.bf16.mxu0 %v6772
      %7510 = vmatmul.mubr.bf16.gmra.mrb[0].mxu0 %v6771
      %v7511 = vpop.f32.mrb[0].mxu0
      %v7512 = vadd.f32 %v7223, %v7511
      %v7513 = vpop.f32.mrb[0].mxu0
      %v7514 = vpop.f32.mrb[0].mxu0
      %v7515 = vadd.f32 %v7226, %v7514
      %v7516 = vpop.f32.mrb[0].mxu0
      %7517 = vmatprep.mubr.bf16.mxu0 %v6776
      %7518 = vmatmul.mubr.bf16.gmra.mrb[0].mxu0 %v6775
      %v7519 = vpop.f32.mrb[0].mxu0
      %v7520 = vadd.f32 %v7231, %v7519
      %v7521 = vpop.f32.mrb[0].mxu0
      %v7522 = vpop.f32.mrb[0].mxu0
      %v7523 = vadd.f32 %v7234, %v7522
      %v7524 = vpop.f32.mrb[0].mxu0
      %7525 = vmatprep.mubr.bf16.mxu0 %v6780
      %7526 = vmatmul.mubr.bf16.gmra.mrb[0].mxu0 %v6779
      %v7527 = vpop.f32.mrb[0].mxu0
      %v7528 = vadd.f32 %v7239, %v7527
      %v7529 = vpop.f32.mrb[0].mxu0
      %v7530 = vpop.f32.mrb[0].mxu0
      %v7531 = vadd.f32 %v7242, %v7530
      %v7532 = vpop.f32.mrb[0].mxu0
      %7533 = vmatprep.mubr.bf16.mxu0 %v6784
      %7534 = vmatmul.mubr.bf16.gmra.mrb[0].mxu0 %v6783
      %v7535 = vpop.f32.mrb[0].mxu0
      %v7536 = vadd.f32 %v7247, %v7535
      %v7537 = vpop.f32.mrb[0].mxu0
      %v7538 = vpop.f32.mrb[0].mxu0
      %v7539 = vadd.f32 %v7250, %v7538
      %v7540 = vpop.f32.mrb[0].mxu0
      %7541 = vmatprep.mubr.bf16.mxu0 %v6788
      %7542 = vmatmul.mubr.bf16.gmra.mrb[0].mxu0 %v6787
      %v7543 = vpop.f32.mrb[0].mxu0
      %v7544 = vadd.f32 %v7255, %v7543
      %v7545 = vpop.f32.mrb[0].mxu0
      %v7546 = vpop.f32.mrb[0].mxu0
      %v7547 = vadd.f32 %v7258, %v7546
      %v7548 = vpop.f32.mrb[0].mxu0
      %7549 = vmatprep.mubr.bf16.mxu0 %v6792
      %7550 = vmatmul.mubr.bf16.gmra.mrb[0].mxu0 %v6791
      %v7551 = vpop.f32.mrb[0].mxu0
      %v7552 = vadd.f32 %v7263, %v7551
      %v7553 = vpop.f32.mrb[0].mxu0
      %v7554 = vpop.f32.mrb[0].mxu0
      %v7555 = vadd.f32 %v7266, %v7554
      %v7556 = vpop.f32.mrb[0].mxu0
      %7557 = vmatprep.mubr.bf16.mxu0 %v6796
      %7558 = vmatmul.mubr.bf16.gmra.mrb[0].mxu0 %v6795
      %v7559 = vpop.f32.mrb[0].mxu0
      %v7560 = vadd.f32 %v7271, %v7559
      %v7561 = vpop.f32.mrb[0].mxu0
      %v7562 = vpop.f32.mrb[0].mxu0
      %v7563 = vadd.f32 %v7274, %v7562
      %v7564 = vpop.f32.mrb[0].mxu0
      %7565 = vmatprep.mubr.bf16.mxu0 %v6800
      %7566 = vmatmul.mubr.bf16.gmra.mrb[0].mxu0 %v6799
      %v7567 = vpop.f32.mrb[0].mxu0
      %v7568 = vadd.f32 %v7279, %v7567
      %v7569 = vpop.f32.mrb[0].mxu0
      %v7570 = vpop.f32.mrb[0].mxu0
      %v7571 = vadd.f32 %v7282, %v7570
      %v7572 = vpop.f32.mrb[0].mxu0
      %7573 = vmatprep.mubr.bf16.mxu0 %v6804
      %7574 = vmatmul.mubr.bf16.gmra.mrb[0].mxu0 %v6803
      %v7575 = vpop.f32.mrb[0].mxu0
      %v7576 = vadd.f32 %v7287, %v7575
      %v7577 = vpop.f32.mrb[0].mxu0
      %v7578 = vpop.f32.mrb[0].mxu0
      %v7579 = vadd.f32 %v7290, %v7578
      %v7580 = vpop.f32.mrb[0].mxu0
      %7581 = vmatprep.mubr.bf16.mxu0 %v6808
      %7582 = vmatmul.mubr.bf16.gmra.mrb[0].mxu0 %v6807
      %v7583 = vpop.f32.mrb[0].mxu0
      %v7584 = vadd.f32 %v7295, %v7583
      %v7585 = vpop.f32.mrb[0].mxu0
      %v7586 = vpop.f32.mrb[0].mxu0
      %v7587 = vadd.f32 %v7298, %v7586
      %v7588 = vpop.f32.mrb[0].mxu0
      %7589 = vmatprep.mubr.bf16.mxu0 %v6812
      %7590 = vmatmul.mubr.bf16.gmra.mrb[0].mxu0 %v6811
      %v7591 = vpop.f32.mrb[0].mxu0
      %v7592 = vadd.f32 %v7303, %v7591
      %v7593 = vpop.f32.mrb[0].mxu0
      %v7594 = vpop.f32.mrb[0].mxu0
      %v7595 = vadd.f32 %v7306, %v7594
      %v7596 = vpop.f32.mrb[0].mxu0
      %7597 = vmatprep.mubr.bf16.mxu0 %v6816
      %7598 = vmatmul.mubr.bf16.gmra.mrb[0].mxu0 %v6815
      %v7599 = vpop.f32.mrb[0].mxu0
      %v7600 = vadd.f32 %v7311, %v7599
      %v7601 = vpop.f32.mrb[0].mxu0
      %v7602 = vpop.f32.mrb[0].mxu0
      %v7603 = vadd.f32 %v7314, %v7602
      %v7604 = vpop.f32.mrb[0].mxu0
      %7605 = vmatprep.mubr.bf16.mxu0 %v6820
      %7606 = vmatmul.mubr.bf16.gmra.mrb[0].mxu0 %v6819
      %v7607 = vpop.f32.mrb[0].mxu0
      %v7608 = vadd.f32 %v7319, %v7607
      %v7609 = vpop.f32.mrb[0].mxu0
      %v7610 = vpop.f32.mrb[0].mxu0
      %v7611 = vadd.f32 %v7322, %v7610
      %v7612 = vpop.f32.mrb[0].mxu0
      %7613 = vmatprep.mubr.bf16.mxu0 %v6824
      %7614 = vmatmul.mubr.bf16.gmra.mrb[0].mxu0 %v6823
      %v7615 = vpop.f32.mrb[0].mxu0
      %v7616 = vadd.f32 %v7327, %v7615
      %v7617 = vpop.f32.mrb[0].mxu0
      %v7618 = vpop.f32.mrb[0].mxu0
      %v7619 = vadd.f32 %v7330, %v7618
      %v7620 = vpop.f32.mrb[0].mxu0
      %7621 = vmatprep.mubr.bf16.mxu0 %v6828
      %7622 = vmatmul.mubr.bf16.gmra.mrb[0].mxu0 %v6827
      %v7623 = vpop.f32.mrb[0].mxu0
      %v7624 = vadd.f32 %v7335, %v7623
      %v7625 = vpop.f32.mrb[0].mxu0
      %v7626 = vpop.f32.mrb[0].mxu0
      %v7627 = vadd.f32 %v7338, %v7626
      %v7628 = vpop.f32.mrb[0].mxu0
      %7629 = vmatprep.mubr.bf16.mxu0 %v6832
      %7630 = vmatmul.mubr.bf16.gmra.mrb[0].mxu0 %v6831
      %v7631 = vpop.f32.mrb[0].mxu0
      %v7632 = vadd.f32 %v7343, %v7631
      %v7633 = vpop.f32.mrb[0].mxu0
      %v7634 = vpop.f32.mrb[0].mxu0
      %v7635 = vadd.f32 %v7346, %v7634
      %v7636 = vpop.f32.mrb[0].mxu0
      %7637 = vmatprep.mubr.bf16.mxu0 %v6836
      %7638 = vmatmul.mubr.bf16.gmra.mrb[0].mxu0 %v6835
      %v7639 = vpop.f32.mrb[0].mxu0
      %v7640 = vadd.f32 %v7351, %v7639
      %v7641 = vpop.f32.mrb[0].mxu0
      %v7642 = vpop.f32.mrb[0].mxu0
      %v7643 = vadd.f32 %v7354, %v7642
      %v7644 = vpop.f32.mrb[0].mxu0
      %7645 = vmatprep.mubr.bf16.mxu0 %v6840
      %7646 = vmatmul.mubr.bf16.gmra.mrb[0].mxu0 %v6839
      %v7647 = vpop.f32.mrb[0].mxu0
      %v7648 = vadd.f32 %v7359, %v7647
      %v7649 = vpop.f32.mrb[0].mxu0
      %v7650 = vpop.f32.mrb[0].mxu0
      %v7651 = vadd.f32 %v7362, %v7650
      %v7652 = vpop.f32.mrb[0].mxu0
      %7653 = vmatprep.mubr.bf16.mxu0 %v6844
      %7654 = vmatmul.mubr.bf16.gmra.mrb[0].mxu0 %v6843
      %v7655 = vpop.f32.mrb[0].mxu0
      %v7656 = vadd.f32 %v7367, %v7655
      %v7657 = vpop.f32.mrb[0].mxu0
      %v7658 = vpop.f32.mrb[0].mxu0
      %v7659 = vadd.f32 %v7370, %v7658
      %v7660 = vpop.f32.mrb[0].mxu0
      %7661 = vmatprep.mubr.bf16.mxu0 %v6848
      %7662 = vmatmul.mubr.bf16.gmra.mrb[0].mxu0 %v6847
      %v7663 = vpop.f32.mrb[0].mxu0
      %v7664 = vadd.f32 %v7375, %v7663
      %v7665 = vpop.f32.mrb[0].mxu0
      %v7666 = vpop.f32.mrb[0].mxu0
      %v7667 = vadd.f32 %v7378, %v7666
      %v7668 = vpop.f32.mrb[0].mxu0
      %7669 = vmatprep.mubr.bf16.mxu0 %v6852
      %7670 = vmatmul.mubr.bf16.gmra.mrb[0].mxu0 %v6851
      %v7671 = vpop.f32.mrb[0].mxu0
      %v7672 = vadd.f32 %v7383, %v7671
      %v7673 = vpop.f32.mrb[0].mxu0
      %v7674 = vpop.f32.mrb[0].mxu0
      %v7675 = vadd.f32 %v7386, %v7674
      %v7676 = vpop.f32.mrb[0].mxu0
      %7677 = vmatprep.mubr.bf16.mxu0 %v6856
      %7678 = vmatmul.mubr.bf16.gmra.mrb[0].mxu0 %v6855
      %v7679 = vpop.f32.mrb[0].mxu0
      %v7680 = vadd.f32 %v7391, %v7679
      %v7681 = vpop.f32.mrb[0].mxu0
      %v7682 = vpop.f32.mrb[0].mxu0
      %v7683 = vadd.f32 %v7394, %v7682
      %v7684 = vpop.f32.mrb[0].mxu0
      %7685 = vmatprep.mubr.bf16.mxu0 %v6860
      %7686 = vmatmul.mubr.bf16.gmra.mrb[0].mxu0 %v6859
      %v7687 = vpop.f32.mrb[0].mxu0
      %v7688 = vadd.f32 %v7399, %v7687
      %v7689 = vpop.f32.mrb[0].mxu0
      %v7690 = vpop.f32.mrb[0].mxu0
      %v7691 = vadd.f32 %v7402, %v7690
      %v7692 = vpop.f32.mrb[0].mxu0
      %7693 = vmatprep.mubr.bf16.mxu0 %v6864
      %7694 = vmatmul.mubr.bf16.gmra.mrb[0].mxu0 %v6863
      %v7695 = vpop.f32.mrb[0].mxu0
      %v7696 = vadd.f32 %v7407, %v7695
      %v7697 = vpop.f32.mrb[0].mxu0
      %v7698 = vpop.f32.mrb[0].mxu0
      %v7699 = vadd.f32 %v7410, %v7698
      %v7700 = vpop.f32.mrb[0].mxu0
      %7701 = vmatprep.mubr.bf16.mxu0 %v6868
      %7702 = vmatmul.mubr.bf16.gmra.mrb[0].mxu0 %v6867
      %v7703 = vpop.f32.mrb[0].mxu0
      %v7704 = vadd.f32 %v7415, %v7703
      %v7705 = vpop.f32.mrb[0].mxu0
      %v7706 = vpop.f32.mrb[0].mxu0
      %v7707 = vadd.f32 %v7418, %v7706
      %v7708 = vpop.f32.mrb[0].mxu0
      %7709 = vdwg.mxu0
      %7710 = vst [vmem:[%s518] sm:$0xff] %v7456
      %7711 = vst [vmem:[%s518 + $0x8] sm:$0xff] %v7459
      %7712 = vst [vmem:[%s518 + $0x10] sm:$0xff] %v7464
      %7713 = vst [vmem:[%s518 + $0x18] sm:$0xff] %v7467
      %7714 = vst [vmem:[%s518 + $0x20] sm:$0xff] %v7472
      %7715 = vst [vmem:[%s518 + $0x28] sm:$0xff] %v7475
      %7716 = vst [vmem:[%s518 + $0x30] sm:$0xff] %v7480
      %7717 = vst [vmem:[%s518 + $0x38] sm:$0xff] %v7483
      %7718 = vst [vmem:[%s518 + $0x40] sm:$0xff] %v7488
      %7719 = vst [vmem:[%s518 + $0x48] sm:$0xff] %v7491
      %7720 = vst [vmem:[%s518 + $0x50] sm:$0xff] %v7496
      %7721 = vst [vmem:[%s518 + $0x58] sm:$0xff] %v7499
      %7722 = vst [vmem:[%s518 + $0x60] sm:$0xff] %v7504
      %7723 = vst [vmem:[%s518 + $0x68] sm:$0xff] %v7507
      %7724 = vst [vmem:[%s518 + $0x70] sm:$0xff] %v7512
      %7725 = vst [vmem:[%s518 + $0x78] sm:$0xff] %v7515
      %7726 = vst [vmem:[%s518 + $0x80] sm:$0xff] %v7520
      %7727 = vst [vmem:[%s518 + $0x88] sm:$0xff] %v7523
      %7728 = vst [vmem:[%s518 + $0x90] sm:$0xff] %v7528
      %7729 = vst [vmem:[%s518 + $0x98] sm:$0xff] %v7531
      %7730 = vst [vmem:[%s518 + $0xa0] sm:$0xff] %v7536
      %7731 = vst [vmem:[%s518 + $0xa8] sm:$0xff] %v7539
      %7732 = vst [vmem:[%s518 + $0xb0] sm:$0xff] %v7544
      %7733 = vst [vmem:[%s518 + $0xb8] sm:$0xff] %v7547
      %7734 = vst [vmem:[%s518 + $0xc0] sm:$0xff] %v7552
      %7735 = vst [vmem:[%s518 + $0xc8] sm:$0xff] %v7555
      %7736 = vst [vmem:[%s518 + $0xd0] sm:$0xff] %v7560
      %7737 = vst [vmem:[%s518 + $0xd8] sm:$0xff] %v7563
      %7738 = vst [vmem:[%s518 + $0xe0] sm:$0xff] %v7568
      %7739 = vst [vmem:[%s518 + $0xe8] sm:$0xff] %v7571
      %7740 = vst [vmem:[%s518 + $0xf0] sm:$0xff] %v7576
      %7741 = vst [vmem:[%s518 + $0xf8] sm:$0xff] %v7579
      %7742 = vst [vmem:[%s518 + $0x100] sm:$0xff] %v7584
      %7743 = vst [vmem:[%s518 + $0x108] sm:$0xff] %v7587
      %7744 = vst [vmem:[%s518 + $0x110] sm:$0xff] %v7592
      %7745 = vst [vmem:[%s518 + $0x118] sm:$0xff] %v7595
      %7746 = vst [vmem:[%s518 + $0x120] sm:$0xff] %v7600
      %7747 = vst [vmem:[%s518 + $0x128] sm:$0xff] %v7603
      %7748 = vst [vmem:[%s518 + $0x130] sm:$0xff] %v7608
      %7749 = vst [vmem:[%s518 + $0x138] sm:$0xff] %v7611
      %7750 = vst [vmem:[%s518 + $0x140] sm:$0xff] %v7616
      %7751 = vst [vmem:[%s518 + $0x148] sm:$0xff] %v7619
      %7752 = vst [vmem:[%s518 + $0x150] sm:$0xff] %v7624
      %7753 = vst [vmem:[%s518 + $0x158] sm:$0xff] %v7627
      %7754 = vst [vmem:[%s518 + $0x160] sm:$0xff] %v7632
      %7755 = vst [vmem:[%s518 + $0x168] sm:$0xff] %v7635
      %7756 = vst [vmem:[%s518 + $0x170] sm:$0xff] %v7640
      %7757 = vst [vmem:[%s518 + $0x178] sm:$0xff] %v7643
      %7758 = vst [vmem:[%s518 + $0x180] sm:$0xff] %v7648
      %7759 = vst [vmem:[%s518 + $0x188] sm:$0xff] %v7651
      %7760 = vst [vmem:[%s518 + $0x190] sm:$0xff] %v7656
      %7761 = vst [vmem:[%s518 + $0x198] sm:$0xff] %v7659
      %7762 = vst [vmem:[%s518 + $0x1a0] sm:$0xff] %v7664
      %7763 = vst [vmem:[%s518 + $0x1a8] sm:$0xff] %v7667
      %7764 = vst [vmem:[%s518 + $0x1b0] sm:$0xff] %v7672
      %7765 = vst [vmem:[%s518 + $0x1b8] sm:$0xff] %v7675
      %7766 = vst [vmem:[%s518 + $0x1c0] sm:$0xff] %v7680
      %7767 = vst [vmem:[%s518 + $0x1c8] sm:$0xff] %v7683
      %7768 = vst [vmem:[%s518 + $0x1d0] sm:$0xff] %v7688
      %7769 = vst [vmem:[%s518 + $0x1d8] sm:$0xff] %v7691
      %7770 = vst [vmem:[%s518 + $0x1e0] sm:$0xff] %v7696
      %7771 = vst [vmem:[%s518 + $0x1e8] sm:$0xff] %v7699
      %7772 = vst [vmem:[%s518 + $0x1f0] sm:$0xff] %v7704
      %7773 = vst [vmem:[%s518 + $0x1f8] sm:$0xff] %v7707
      %s7774 = smul.u32 64, %s26
      %p7775 = scmp.lt.s32.totalorder %s7774, 255
      %s7776 = scalar_select %p7775, %s7774, 255
      %s7777 = smul.addr %s7776, 8
      %s7778 = scalar_lea.vmem %s15, %s7777
      // Predicated region
      $region81: #{vae_forward.1} parent=79 // pred_check
        %p7779 = pneg %p369
      $region82: #{vae_forward.1} parent=79 // pred_check_branch
        %7781 = sbr.rel (%p7779) target = $region84
      $region83: #{vae_forward.1} parent=79 // pred_region
        %s7782 = smul.u32 64, %s26
      $region84: #{vae_forward.1} parent=79 // pred_fallthru
        _
    $region80: #{vae_forward.1} parent=5 // pred_fallthru
      _
    %p7783 = scmp.le.s32.totalorder 2, %s21
    // Predicated region
    $region85: #{vae_forward.1} parent=5 // pred_check
      %p7784 = pneg %p7783
    $region86: #{vae_forward.1} parent=5 // pred_check_branch
      %7786 = sbr.rel (%p7784) target = $region88
    $region87: #{vae_forward.1} parent=5 // pred_region
      %s7787 = ssub.s32 %s21, 2
      // Predicated region
      $region89: #{vae_forward.1} parent=87 // pred_check
        %p7788 = pneg %p375
      $region90: #{vae_forward.1} parent=87 // pred_check_branch
        %7790 = sbr.rel (%p7788) target = $region92
      $region91: #{vae_forward.1} parent=87 // pred_region
        %s7791 = smul.u32 64, %s27
        %p7792 = scmp.lt.s32.totalorder %s7791, 255
        %s7793 = scalar_select %p7792, %s7791, 255
        %s7794 = smul.addr %s7793, 8
        %s7795 = scalar_lea.vmem %s15, %s7794
      $region92: #{vae_forward.1} parent=87 // pred_fallthru
        _
    $region88: #{vae_forward.1} parent=5 // pred_fallthru
      _
  $region6: #{vae_forward.1} parent=0 // loop_footer
    %s25 = sadd.s32 1, %s21
  $region7: #{vae_forward.1} parent=0 // loop_footer_branch
    %20 = sbr.rel target = $region3
  $region8: #{vae_forward.1} parent=0 // loop_exit
    _

</llo_original>
